<compile_context>
chip_gen: v5e
topology: v5e:2x2
jax: 0.10.0
libtpu: 0.0.40
codegen_flags: <defaults>
</compile_context>

<pallas_src>
import functools

import jax
import jax.numpy as jnp
from jax.experimental import pallas as pl
from jax.experimental.pallas import tpu as pltpu


# ----------------------------- compiler params ------------------------------

def _vmem_limit_bytes():
    # Adapt the scoped-VMEM request to the chip (v7x: 64 MiB physical, v5e/v6e: 128 MiB).
    try:
        cap = pltpu.get_tpu_info().vmem_capacity_bytes
    except Exception:
        cap = 64 * 1024 * 1024
    return int(min(cap * 3 // 4, 96 * 1024 * 1024))


_VMEM_LIMIT = _vmem_limit_bytes()


def _params(*semantics):
    return pltpu.CompilerParams(dimension_semantics=semantics,
                                vmem_limit_bytes=_VMEM_LIMIT)


def _row_tile(rows, bytes_per_row, budget):
    """Largest power-of-two-ish divisor of `rows` whose block stays under `budget` bytes."""
    t = rows
    while t > 1 and t % 2 == 0 and t * bytes_per_row > budget:
        t //= 2
    return t


def _fc_tile(k):
    """Largest 'nice' K tile that divides K exactly (so no per-call padding is needed)."""
    for t in (8192, 4096, 2048, 1024, 512, 256, 128):
        if k % t == 0:
            return t
    return k   # tiny / indivisible K: single grid step


# -------------------- fused conv 5x5 'same' + BN statistics -------------------

def _conv5x5_kernel(x_ref, w_ref, y_ref, s_ref, ss_ref, *, th, W, groups):
    """One (Cout-block, image, row-block) tile of a bias-free 'same' 5x5 conv with
    fused per-channel sum / sum-of-squares (train-mode BatchNorm statistics).

    x_ref : (rows, W, cin)  bf16  -- cin may already carry pre-packed kh taps (conv1)
    w_ref : (5, Ktot, tco)  bf16  -- rows ordered (kh, cin), one matrix per kw tap
    y_ref : (th, W, tco)          -- conv output tile (stored bf16)
    s_ref, ss_ref : (1, tco) f32  -- per-image channel sums, accumulated over row blocks
    """
    cin = x_ref.shape[-1]
    tco = y_ref.shape[-1]
    row0 = pl.multiple_of(pl.program_id(2) * th, th)
    col = jax.lax.broadcasted_iota(jnp.int32, (th, W, 1), 1)

    # Row-tap slabs, loaded once and re-used by all 5 column taps.  Groups of kh taps
    # are packed along the channel axis (lane-aligned concat) so each MXU dot gets a
    # contraction depth of len(group)*cin instead of cin.
    slabs = []
    for g in groups:
        parts = [x_ref[pl.ds(row0 + o, th), :, :] for o in g]
        slabs.append(parts[0] if len(parts) == 1 else jnp.concatenate(parts, axis=-1))

    acc = None
    for kw in range(5):
        pk = None
        for g, xg in zip(groups, slabs):
            k0 = g[0] * cin
            kg = len(g) * cin
            d = jax.lax.dot_general(
                xg.reshape(th * W, kg), w_ref[kw, k0:k0 + kg, :],
                dimension_numbers=(((1,), (0,)), ((), ())),
                preferred_element_type=jnp.float32)
            pk = d if pk is None else pk + d
        pk = pk.reshape(th, W, tco)
        # Output column c takes input column c + kw - 2: realize the shift with an XLU
        # sublane rotate of the f32 partial and mask wrapped columns ('same' W padding).
        s = 2 - kw
        if s % W:
            pk = pltpu.roll(pk, shift=s % W, axis=1)
        if s > 0:
            pk = jnp.where(col >= s, pk, 0.0)
        elif s < 0:
            pk = jnp.where(col < W + s, pk, 0.0)
        acc = pk if acc is None else acc + pk

    # Fused BatchNorm statistics, computed from the f32 accumulator before the bf16
    # down-cast.  The (1, tco) stats blocks stay VMEM-resident across the row axis.
    @pl.when(pl.program_id(2) == 0)
    def _():
        s_ref[...] = jnp.zeros_like(s_ref)
        ss_ref[...] = jnp.zeros_like(ss_ref)

    s_ref[...] += jnp.sum(jnp.sum(acc, axis=0), axis=0, keepdims=True)
    ss_ref[...] += jnp.sum(jnp.sum(acc * acc, axis=0), axis=0, keepdims=True)

    y_ref[...] = acc.astype(y_ref.dtype)


def conv5x5_bn_stats(x, w_packed, *, groups, out_dtype=jnp.bfloat16,
                     row_budget=1024 * 1024):
    """x: (N, rows, W, cin) bf16; w_packed: (5, Ktot, cout) bf16.

    Returns (y, s, ss): y (N, H, W, cout) out_dtype; s/ss (N, 1, cout) f32 per-image
    channel sum / sum-of-squares of the (pre-pool) conv output.
    """
    n, rows, W, cin = x.shape
    cout = w_packed.shape[-1]
    halo = max(o for g in groups for o in g)
    h = rows - halo
    tco = min(cout, 128)
    assert cout % tco == 0
    th = _row_tile(h, W * tco * 2, budget=row_budget)
    grid = (cout // tco, n, h // th)
    kernel = functools.partial(_conv5x5_kernel, th=th, W=W, groups=groups)
    return pl.pallas_call(
        kernel,
        out_shape=(jax.ShapeDtypeStruct((n, h, W, cout), out_dtype),
                   jax.ShapeDtypeStruct((n, 1, cout), jnp.float32),
                   jax.ShapeDtypeStruct((n, 1, cout), jnp.float32)),
        grid=grid,
        in_specs=[
            pl.BlockSpec((None, rows, W, cin), lambda c, b, r: (b, 0, 0, 0)),
            pl.BlockSpec((5, w_packed.shape[1], tco), lambda c, b, r: (0, 0, c)),
        ],
        out_specs=(
            pl.BlockSpec((None, th, W, tco), lambda c, b, r: (b, r, 0, c)),
            pl.BlockSpec((None, 1, tco), lambda c, b, r: (b, 0, c)),
            pl.BlockSpec((None, 1, tco), lambda c, b, r: (b, 0, c)),
        ),
        compiler_params=_params("parallel", "parallel", "arbitrary"),
    )(x, w_packed)


# -------------- fused maxpool(2x2) + BN normalize + leaky_relu ---------------

def _pool_bn_lrelu_kernel(x_ref, s_ref, ss_ref, o_ref, scr_ref, *, count, eps, slope):
    """Pool FIRST (exact: BN normalization has a positive scale and leaky_relu is
    monotone per channel).  H pairs reduce via a major-axis reshape of the bf16 value;
    W pairs use proven stride-2 f32 loads from a VMEM restage scratch (avoids strided
    sublane access on packed bf16 data)."""
    tph, wp, c = o_ref.shape
    xv = x_ref[...]                                           # (2*tph, 2*wp, c) bf16
    m_h = jnp.max(xv.reshape(tph, 2, 2 * wp, c), axis=1)      # (tph, 2*wp, c)
    scr_ref[...] = m_h.astype(jnp.float32)
    even = scr_ref[:, pl.ds(0, wp, 2), :]
    odd = scr_ref[:, pl.ds(1, wp, 2), :]
    m = jnp.maximum(even, odd)                                # (tph, wp, c) f32

    inv_count = 1.0 / count
    mean = s_ref[...] * inv_count                             # (1, c)
    var = ss_ref[...] * inv_count - mean * mean               # biased variance (train mode)
    inv = jax.lax.rsqrt(var + eps)
    y = (m - mean[None]) * inv[None]
    o_ref[...] = jnp.where(y >= 0, y, slope * y).astype(o_ref.dtype)


def pool_bn_lrelu(y, s, ss, *, eps=1e-4, slope=0.01, out_dtype=jnp.bfloat16):
    n, h, wd, c = y.shape
    assert h % 2 == 0 and wd % 2 == 0
    hp, wp = h // 2, wd // 2
    count = n * h * wd
    tph = _row_tile(hp, 2 * wd * c * y.dtype.itemsize, budget=1024 * 1024)
    grid = (n, hp // tph)
    kernel = functools.partial(_pool_bn_lrelu_kernel, count=count, eps=eps, slope=slope)
    return pl.pallas_call(
        kernel,
        out_shape=jax.ShapeDtypeStruct((n, hp, wp, c), out_dtype),
        grid=grid,
        in_specs=[
            pl.BlockSpec((None, 2 * tph, wd, c), lambda b, r: (b, r, 0, 0)),
            pl.BlockSpec((1, c), lambda b, r: (0, 0)),
            pl.BlockSpec((1, c), lambda b, r: (0, 0)),
        ],
        out_specs=pl.BlockSpec((None, tph, wp, c), lambda b, r: (b, r, 0, 0)),
        scratch_shapes=[pltpu.VMEM((tph, wd, c), jnp.float32)],
        compiler_params=_params("parallel", "parallel"),
    )(y, s, ss)


# ----------------------------- fc1 (tiled matmul) ----------------------------

def _fc_kernel(a_ref, b_ref, o_ref, acc_ref):
    @pl.when(pl.program_id(0) == 0)
    def _():
        acc_ref[...] = jnp.zeros_like(acc_ref)

    # Weight is stored lane-dense as (Z, K); contract both operands over their K axis.
    acc_ref[...] += jax.lax.dot_general(
        a_ref[...], b_ref[...],
        dimension_numbers=(((1,), (1,)), ((), ())),
        preferred_element_type=jnp.float32)

    @pl.when(pl.program_id(0) == pl.num_programs(0) - 1)
    def _():
        o_ref[...] = acc_ref[...].astype(o_ref.dtype)


def pallas_linear_zk(a, b_zk):
    """a: (M, K); b_zk: (Z, K) lane-dense weight.  Returns (M, Z) f32 = a @ b_zk.T."""
    m, k = a.shape
    z, k2 = b_zk.shape
    assert k == k2
    a = a.astype(b_zk.dtype)
    tk = _fc_tile(k)
    return pl.pallas_call(
        _fc_kernel,
        out_shape=jax.ShapeDtypeStruct((m, z), jnp.float32),
        grid=(k // tk,),
        in_specs=[pl.BlockSpec((m, tk), lambda kk: (0, kk)),
                  pl.BlockSpec((z, tk), lambda kk: (0, kk))],
        out_specs=pl.BlockSpec((m, z), lambda kk: (0, 0)),
        scratch_shapes=[pltpu.VMEM((m, z), jnp.float32)],
        compiler_params=_params("arbitrary"),
    )(a, b_zk)


# ---------------------- one-time parameter preprocessing ---------------------

CONV1_GROUPS = ((0,),)                  # kh taps pre-packed into channels (K = 5*Cin)
CONV2_GROUPS = ((0, 1), (2, 3), (4,))   # kh pairs packed in-kernel (K = 256/256/128)


def _pack_conv_weight(w):
    """(5, 5, Cin, Cout) HWIO -> (kw, kh*Cin, Cout) bf16: one MXU-ready matrix per kw."""
    kh, kw, cin, cout = w.shape
    assert kh == 5 and kw == 5
    wf = jnp.asarray(w, jnp.float32)
    return wf.transpose(1, 0, 2, 3).reshape(5, 5 * cin, cout).astype(jnp.bfloat16)


def prepare_params(params):
    """Hoisted out of the per-step forward: run ONCE per set of weights."""
    w1, w2, wfc = params
    w1p = _pack_conv_weight(w1)
    w2p = _pack_conv_weight(w2)
    c2 = w2.shape[-1]
    k, z = wfc.shape
    hq = int(round((k // c2) ** 0.5))
    assert hq * hq * c2 == k, "fc1 weight rows must be C*Hq*Wq with Hq == Wq"
    # Fold PyTorch's NCHW flatten into a permutation of the FC weight rows, then store
    # the weight transposed (Z, K) bf16 so streamed K-blocks are lane-dense.
    wfc_nhwc = jnp.asarray(wfc, jnp.float32).reshape(c2, hq, hq, z)
    wfc_nhwc = wfc_nhwc.transpose(1, 2, 0, 3).reshape(k, z)
    wfc_p = wfc_nhwc.T.astype(jnp.bfloat16)
    return w1p, w2p, wfc_p


def _stack_row_taps(x):
    """(N, H, W, C) -> (N, H, W, 5*C): channel (kh*C + c) holds x[h + kh - 2] with zero
    padding, folding conv1's 5 row taps and its H halo into the channel axis (tiny for
    C=3, lets each conv1 MXU dot contract over K = 15 instead of 3)."""
    n, h, w, c = x.shape
    xp = jnp.pad(x, ((0, 0), (2, 2), (0, 0), (0, 0)))
    return jnp.concatenate([xp[:, kh:kh + h] for kh in range(5)], axis=-1)


# --------------------------------- forward -----------------------------------

def deep_svdd_forward(x_nchw, prepped):
    w1p, w2p, wfc_p = prepped
    x = jnp.transpose(x_nchw, (0, 2, 3, 1)).astype(jnp.bfloat16)   # NCHW -> NHWC

    # stage 1: conv1 (+ fused BN stats) -> maxpool + BN + leaky_relu
    xs = _stack_row_taps(x)                                        # (N, H, W, 15) bf16
    y1, s1, ss1 = conv5x5_bn_stats(xs, w1p, groups=CONV1_GROUPS)
    h1 = pool_bn_lrelu(y1, jnp.sum(s1, axis=0), jnp.sum(ss1, axis=0))

    # stage 2: conv2 (+ fused BN stats) -> maxpool + BN + leaky_relu
    # TODO(synk): fold this H-halo pad into pool_bn_lrelu's output buffer.
    h1p = jnp.pad(h1, ((0, 0), (2, 2), (0, 0), (0, 0)))
    y2, s2, ss2 = conv5x5_bn_stats(h1p, w2p, groups=CONV2_GROUPS)
    h2 = pool_bn_lrelu(y2, jnp.sum(s2, axis=0), jnp.sum(ss2, axis=0))

    # fc1: NHWC flatten in place (the NCHW order is folded into wfc_p's rows).
    n = h2.shape[0]
    feat = h2.reshape(n, -1)
    return pallas_linear_zk(feat, wfc_p)


# ------------------------- Pure-JAX reference (check) ------------------------

def reference_forward(x_nchw, params):
    w1, w2, wfc = params
    eps, slope = 1e-4, 0.01

    def bn_lrelu(x):
        mean = jnp.mean(x, axis=(0, 1, 2), keepdims=True)
        var = jnp.mean(jnp.square(x - mean), axis=(0, 1, 2), keepdims=True)
        y = (x - mean) * jax.lax.rsqrt(var + eps)
        return jnp.where(y >= 0, y, slope * y)

    def pool(x):
        return jax.lax.reduce_window(x, -jnp.inf, jax.lax.max,
                                     (1, 2, 2, 1), (1, 2, 2, 1), "VALID")

    def conv(x, w):
        return jax.lax.conv_general_dilated(
            x, w, window_strides=(1, 1), padding="SAME",
            dimension_numbers=("NHWC", "HWIO", "NHWC"))

    x = jnp.transpose(x_nchw, (0, 2, 3, 1)).astype(jnp.float32)
    x = pool(bn_lrelu(conv(x, w1)))
    x = pool(bn_lrelu(conv(x, w2)))
    n = x.shape[0]
    feat = jnp.transpose(x, (0, 3, 1, 2)).reshape(n, -1)
    return feat @ wfc


# ----------------------------------- Main ------------------------------------

if __name__ == "__main__":
    key = jax.random.PRNGKey(0)
    k1, k2, k3, kx = jax.random.split(key, 4)

    N, H, W = 2, 16, 16          # small demo input (PyTorch-style NCHW: (2, 3, 16, 16))
    Z_DIM = 32
    FC_IN = 64 * (H // 4) * (W // 4)   # 64 * 4 * 4 = 1024 (module uses 64*56*56 at 224x224)

    # Deterministic synthetic parameters (shapes from the module's __init__).
    w1 = jax.random.normal(k1, (5, 5, 3, 128), jnp.float32) * 0.05   # Conv2d(3, 128, 5, bias=False)
    w2 = jax.random.normal(k2, (5, 5, 128, 64), jnp.float32) * 0.02  # Conv2d(128, 64, 5, bias=False)
    wfc = jax.random.normal(k3, (FC_IN, Z_DIM), jnp.float32) * 0.02  # Linear(FC_IN, 32, bias=False)
    x = jax.random.normal(kx, (N, 3, H, W), jnp.float32)             # NCHW input, like PyTorch

    params = (w1, w2, wfc)
    prepped = prepare_params(params)                   # one-time weight preprocessing
    fwd = jax.jit(deep_svdd_forward)

    out = jax.block_until_ready(fwd(x, prepped))
    ref = jax.block_until_ready(jax.jit(reference_forward)(x, params))

    assert out.shape == (N, Z_DIM), out.shape
    # bf16 conv operands / activations / fc weight (f32 accumulation) -> loose tolerance.
    max_err = jnp.max(jnp.abs(out - ref))
    assert jnp.allclose(out, ref, atol=5e-2, rtol=5e-2), (
        f"Pallas output mismatch vs JAX reference (max abs err = {max_err})")
    print("KERNEL_OK")
</pallas_src>

<mosaic_0001>
module attributes {stable_mosaic.version = 11 : i64} {
  func.func @_pool_bn_lrelu_kernel(%arg0: i32, %arg1: i32, %arg2: memref<1x16x16x128xbf16, #tpu.memory_space<vmem>>, %arg3: memref<1x128xf32, #tpu.memory_space<vmem>>, %arg4: memref<1x128xf32, #tpu.memory_space<vmem>>, %arg5: memref<1x8x8x128xbf16, #tpu.memory_space<vmem>>, %arg6: memref<8x16x128xf32, #tpu.memory_space<vmem>>) attributes {dimension_semantics = [#tpu.dimension_semantics<parallel>, #tpu.dimension_semantics<parallel>], iteration_bounds = array<i64: 2, 1>, scalar_prefetch = 0 : i64, scratch_operands = 1 : i64, tpu.core_type = #tpu.core_type<tc>, window_params = [{transform_indices = @transform_0, window_bounds = array<i64: 1, 16, 16, 128>}, {pipeline_mode = #tpu.pipeline_mode<synchronous>, transform_indices = @transform_1, window_bounds = array<i64: 1, 128>}, {pipeline_mode = #tpu.pipeline_mode<synchronous>, transform_indices = @transform_2, window_bounds = array<i64: 1, 128>}, {transform_indices = @transform_3, window_bounds = array<i64: 1, 8, 8, 128>}]} {
    %c0 = arith.constant 0 : index
    %c0_0 = arith.constant 0 : index
    %c0_1 = arith.constant 0 : index
    %c0_2 = arith.constant 0 : index
    %0 = vector.load %arg2[%c0, %c0_0, %c0_1, %c0_2] : memref<1x16x16x128xbf16, #tpu.memory_space<vmem>>, vector<1x16x16x128xbf16>
    %1 = vector.shape_cast %0 : vector<1x16x16x128xbf16> to vector<16x16x128xbf16>
    %2 = vector.shape_cast %1 : vector<16x16x128xbf16> to vector<8x2x16x128xbf16>
    %cst = arith.constant dense<0xFF80> : vector<8x16x128xbf16>
    %3 = vector.multi_reduction <maximumf>, %2, %cst [1] : vector<8x2x16x128xbf16> to vector<8x16x128xbf16>
    %4 = arith.extf %3 : vector<8x16x128xbf16> to vector<8x16x128xf32>
    %c0_3 = arith.constant 0 : index
    %c0_4 = arith.constant 0 : index
    %c0_5 = arith.constant 0 : index
    %5 = vector.load %arg6[%c0_3, %c0_4, %c0_5] : memref<8x16x128xf32, #tpu.memory_space<vmem>>, vector<8x16x128xf32>
    tpu.vector_store %arg6[%c0_3, %c0_4, %c0_5], %4 {strides = array<i32>} : memref<8x16x128xf32, #tpu.memory_space<vmem>>, vector<8x16x128xf32>,
    %c0_6 = arith.constant 0 : index
    %c0_7 = arith.constant 0 : index
    %c0_8 = arith.constant 0 : index
    %6 = tpu.strided_load %arg6[%c0_6, %c0_7, %c0_8] {strides = array<i32: 1, 2, 1>} : memref<8x16x128xf32, #tpu.memory_space<vmem>>, vector<8x8x128xf32>
    %c0_9 = arith.constant 0 : index
    %c1 = arith.constant 1 : index
    %c0_10 = arith.constant 0 : index
    %7 = tpu.strided_load %arg6[%c0_9, %c1, %c0_10] {strides = array<i32: 1, 2, 1>} : memref<8x16x128xf32, #tpu.memory_space<vmem>>, vector<8x8x128xf32>
    %8 = arith.maximumf %6, %7 : vector<8x8x128xf32>
    %c0_11 = arith.constant 0 : index
    %c0_12 = arith.constant 0 : index
    %9 = vector.load %arg3[%c0_11, %c0_12] : memref<1x128xf32, #tpu.memory_space<vmem>>, vector<1x128xf32>
    %cst_13 = arith.constant 0.001953125 : f32
    %10 = vector.broadcast %cst_13 : f32 to vector<1x128xf32>
    %11 = arith.mulf %9, %10 : vector<1x128xf32>
    %c0_14 = arith.constant 0 : index
    %c0_15 = arith.constant 0 : index
    %12 = vector.load %arg4[%c0_14, %c0_15] : memref<1x128xf32, #tpu.memory_space<vmem>>, vector<1x128xf32>
    %cst_16 = arith.constant 0.001953125 : f32
    %13 = vector.broadcast %cst_16 : f32 to vector<1x128xf32>
    %14 = arith.mulf %12, %13 : vector<1x128xf32>
    %15 = arith.mulf %11, %11 : vector<1x128xf32>
    %16 = arith.subf %14, %15 : vector<1x128xf32>
    %cst_17 = arith.constant 9.99999974E-5 : f32
    %17 = vector.broadcast %cst_17 : f32 to vector<1x128xf32>
    %18 = arith.addf %16, %17 : vector<1x128xf32>
    %19 = math.rsqrt %18 : vector<1x128xf32>
    %20 = vector.shape_cast %11 : vector<1x128xf32> to vector<1x1x128xf32>
    %21 = vector.broadcast %20 : vector<1x1x128xf32> to vector<8x8x128xf32>
    %22 = arith.subf %8, %21 : vector<8x8x128xf32>
    %23 = vector.shape_cast %19 : vector<1x128xf32> to vector<1x1x128xf32>
    %24 = vector.broadcast %23 : vector<1x1x128xf32> to vector<8x8x128xf32>
    %25 = arith.mulf %22, %24 : vector<8x8x128xf32>
    %cst_18 = arith.constant 0.000000e+00 : f32
    %26 = vector.broadcast %cst_18 : f32 to vector<8x8x128xf32>
    %27 = arith.cmpf oge, %25, %26 : vector<8x8x128xf32>
    %cst_19 = arith.constant 0.00999999977 : f32
    %28 = vector.broadcast %cst_19 : f32 to vector<8x8x128xf32>
    %29 = arith.mulf %28, %25 : vector<8x8x128xf32>
    %30 = arith.select %27, %25, %29 : vector<8x8x128xi1>, vector<8x8x128xf32>
    %31 = arith.truncf %30 : vector<8x8x128xf32> to vector<8x8x128xbf16>
    %c0_20 = arith.constant 0 : index
    %c0_21 = arith.constant 0 : index
    %c0_22 = arith.constant 0 : index
    %c0_23 = arith.constant 0 : index
    %32 = vector.load %arg5[%c0_20, %c0_21, %c0_22, %c0_23] : memref<1x8x8x128xbf16, #tpu.memory_space<vmem>>, vector<1x8x8x128xbf16>
    %33 = vector.shape_cast %32 : vector<1x8x8x128xbf16> to vector<8x8x128xbf16>
    %34 = vector.shape_cast %31 : vector<8x8x128xbf16> to vector<1x8x8x128xbf16>
    tpu.vector_store %arg5[%c0_20, %c0_21, %c0_22, %c0_23], %34 {strides = array<i32>} : memref<1x8x8x128xbf16, #tpu.memory_space<vmem>>, vector<1x8x8x128xbf16>,
    return
  }
  func.func @transform_0(%arg0: i32, %arg1: i32) -> (i32, i32, i32, i32) {
    %c0_i32 = arith.constant 0 : i32
    %c0_i32_0 = arith.constant 0 : i32
    %c0_i32_1 = arith.constant 0 : i32
    return %arg0, %arg1, %c0_i32, %c0_i32_0 : i32, i32, i32, i32
  }
  func.func @transform_1(%arg0: i32, %arg1: i32) -> (i32, i32) {
    %c0_i32 = arith.constant 0 : i32
    %c0_i32_0 = arith.constant 0 : i32
    %c0_i32_1 = arith.constant 0 : i32
    return %c0_i32, %c0_i32_0 : i32, i32
  }
  func.func @transform_2(%arg0: i32, %arg1: i32) -> (i32, i32) {
    %c0_i32 = arith.constant 0 : i32
    %c0_i32_0 = arith.constant 0 : i32
    %c0_i32_1 = arith.constant 0 : i32
    return %c0_i32, %c0_i32_0 : i32, i32
  }
  func.func @transform_3(%arg0: i32, %arg1: i32) -> (i32, i32, i32, i32) {
    %c0_i32 = arith.constant 0 : i32
    %c0_i32_0 = arith.constant 0 : i32
    %c0_i32_1 = arith.constant 0 : i32
    return %arg0, %arg1, %c0_i32, %c0_i32_0 : i32, i32, i32, i32
  }
}

module attributes {stable_mosaic.version = 11 : i64} {
  func.func @_conv5x5_kernel(%arg0: i32, %arg1: i32, %arg2: i32, %arg3: memref<1x16x16x15xbf16, #tpu.memory_space<vmem>>, %arg4: memref<5x15x128xbf16, #tpu.memory_space<vmem>>, %arg5: memref<1x16x16x128xbf16, #tpu.memory_space<vmem>>, %arg6: memref<1x1x128xf32, #tpu.memory_space<vmem>>, %arg7: memref<1x1x128xf32, #tpu.memory_space<vmem>>) attributes {dimension_semantics = [#tpu.dimension_semantics<parallel>, #tpu.dimension_semantics<parallel>, #tpu.dimension_semantics<arbitrary>], iteration_bounds = array<i64: 1, 2, 1>, scalar_prefetch = 0 : i64, scratch_operands = 0 : i64, tpu.core_type = #tpu.core_type<tc>, window_params = [{transform_indices = @transform_0, window_bounds = array<i64: 1, 16, 16, 15>}, {transform_indices = @transform_1, window_bounds = array<i64: 5, 15, 128>}, {transform_indices = @transform_2, window_bounds = array<i64: 1, 16, 16, 128>}, {transform_indices = @transform_3, window_bounds = array<i64: 1, 1, 128>}, {transform_indices = @transform_4, window_bounds = array<i64: 1, 1, 128>}]} {
    %c16_i32 = arith.constant 16 : i32
    %0 = arith.muli %arg2, %c16_i32 : i32
    %1 = tpu.assume_multiple %0, 16 : i32
    %2 = tpu.iota {dimensions = array<i32: 1>} : vector<16x16x1xi32>
    %c0_i32 = arith.constant 0 : i32
    %3 = arith.addi %1, %c0_i32 : i32
    %c0 = arith.constant 0 : index
    %4 = arith.index_cast %3 : i32 to index
    %c0_0 = arith.constant 0 : index
    %c0_1 = arith.constant 0 : index
    %5 = vector.load %arg3[%c0, %4, %c0_0, %c0_1] : memref<1x16x16x15xbf16, #tpu.memory_space<vmem>>, vector<1x16x16x15xbf16>
    %6 = vector.shape_cast %5 : vector<1x16x16x15xbf16> to vector<16x16x15xbf16>
    %7 = vector.shape_cast %6 : vector<16x16x15xbf16> to vector<256x15xbf16>
    %c0_2 = arith.constant 0 : index
    %c0_3 = arith.constant 0 : index
    %c0_4 = arith.constant 0 : index
    %8 = vector.load %arg4[%c0_2, %c0_3, %c0_4] : memref<5x15x128xbf16, #tpu.memory_space<vmem>>, vector<1x15x128xbf16>
    %9 = vector.shape_cast %8 : vector<1x15x128xbf16> to vector<15x128xbf16>
    %cst = arith.constant dense<0.000000e+00> : vector<256x128xf32>
    %10 = tpu.matmul %7, %9, %cst {dimension_numbers = #tpu.dot_dimension_numbers<[1], [0], [0], [1], [0, 0, 1, 1], [], []>} : vector<256x15xbf16>, vector<15x128xbf16>, vector<256x128xf32> -> vector<256x128xf32>
    %11 = vector.shape_cast %10 : vector<256x128xf32> to vector<16x16x128xf32>
    %c2_i32 = arith.constant 2 : i32
    %12 = tpu.dynamic_rotate %11 by %c2_i32 dim 1 : vector<16x16x128xf32>, i32 -> vector<16x16x128xf32>
    %c2_i32_5 = arith.constant 2 : i32
    %13 = vector.broadcast %c2_i32_5 : i32 to vector<16x16x1xi32>
    %14 = arith.cmpi sge, %2, %13 : vector<16x16x1xi32>
    %cst_6 = arith.constant 0.000000e+00 : f32
    %15 = vector.shape_cast %14 : vector<16x16x1xi1> to vector<16x16x1xi1>
    %16 = vector.broadcast %15 : vector<16x16x1xi1> to vector<16x16x128xi1>
    %17 = vector.broadcast %cst_6 : f32 to vector<16x16x128xf32>
    %18 = arith.select %16, %12, %17 : vector<16x16x128xi1>, vector<16x16x128xf32>
    %19 = vector.shape_cast %6 : vector<16x16x15xbf16> to vector<256x15xbf16>
    %c1 = arith.constant 1 : index
    %c0_7 = arith.constant 0 : index
    %c0_8 = arith.constant 0 : index
    %20 = vector.load %arg4[%c1, %c0_7, %c0_8] : memref<5x15x128xbf16, #tpu.memory_space<vmem>>, vector<1x15x128xbf16>
    %21 = vector.shape_cast %20 : vector<1x15x128xbf16> to vector<15x128xbf16>
    %cst_9 = arith.constant dense<0.000000e+00> : vector<256x128xf32>
    %22 = tpu.matmul %19, %21, %cst_9 {dimension_numbers = #tpu.dot_dimension_numbers<[1], [0], [0], [1], [0, 0, 1, 1], [], []>} : vector<256x15xbf16>, vector<15x128xbf16>, vector<256x128xf32> -> vector<256x128xf32>
    %23 = vector.shape_cast %22 : vector<256x128xf32> to vector<16x16x128xf32>
    %c1_i32 = arith.constant 1 : i32
    %24 = tpu.dynamic_rotate %23 by %c1_i32 dim 1 : vector<16x16x128xf32>, i32 -> vector<16x16x128xf32>
    %c1_i32_10 = arith.constant 1 : i32
    %25 = vector.broadcast %c1_i32_10 : i32 to vector<16x16x1xi32>
    %26 = arith.cmpi sge, %2, %25 : vector<16x16x1xi32>
    %cst_11 = arith.constant 0.000000e+00 : f32
    %27 = vector.shape_cast %26 : vector<16x16x1xi1> to vector<16x16x1xi1>
    %28 = vector.broadcast %27 : vector<16x16x1xi1> to vector<16x16x128xi1>
    %29 = vector.broadcast %cst_11 : f32 to vector<16x16x128xf32>
    %30 = arith.select %28, %24, %29 : vector<16x16x128xi1>, vector<16x16x128xf32>
    %31 = arith.addf %18, %30 : vector<16x16x128xf32>
    %32 = vector.shape_cast %6 : vector<16x16x15xbf16> to vector<256x15xbf16>
    %c2 = arith.constant 2 : index
    %c0_12 = arith.constant 0 : index
    %c0_13 = arith.constant 0 : index
    %33 = vector.load %arg4[%c2, %c0_12, %c0_13] : memref<5x15x128xbf16, #tpu.memory_space<vmem>>, vector<1x15x128xbf16>
    %34 = vector.shape_cast %33 : vector<1x15x128xbf16> to vector<15x128xbf16>
    %cst_14 = arith.constant dense<0.000000e+00> : vector<256x128xf32>
    %35 = tpu.matmul %32, %34, %cst_14 {dimension_numbers = #tpu.dot_dimension_numbers<[1], [0], [0], [1], [0, 0, 1, 1], [], []>} : vector<256x15xbf16>, vector<15x128xbf16>, vector<256x128xf32> -> vector<256x128xf32>
    %36 = vector.shape_cast %35 : vector<256x128xf32> to vector<16x16x128xf32>
    %37 = arith.addf %31, %36 : vector<16x16x128xf32>
    %38 = vector.shape_cast %6 : vector<16x16x15xbf16> to vector<256x15xbf16>
    %c3 = arith.constant 3 : index
    %c0_15 = arith.constant 0 : index
    %c0_16 = arith.constant 0 : index
    %39 = vector.load %arg4[%c3, %c0_15, %c0_16] : memref<5x15x128xbf16, #tpu.memory_space<vmem>>, vector<1x15x128xbf16>
    %40 = vector.shape_cast %39 : vector<1x15x128xbf16> to vector<15x128xbf16>
    %cst_17 = arith.constant dense<0.000000e+00> : vector<256x128xf32>
    %41 = tpu.matmul %38, %40, %cst_17 {dimension_numbers = #tpu.dot_dimension_numbers<[1], [0], [0], [1], [0, 0, 1, 1], [], []>} : vector<256x15xbf16>, vector<15x128xbf16>, vector<256x128xf32> -> vector<256x128xf32>
    %42 = vector.shape_cast %41 : vector<256x128xf32> to vector<16x16x128xf32>
    %c15_i32 = arith.constant 15 : i32
    %43 = tpu.dynamic_rotate %42 by %c15_i32 dim 1 : vector<16x16x128xf32>, i32 -> vector<16x16x128xf32>
    %c15_i32_18 = arith.constant 15 : i32
    %44 = vector.broadcast %c15_i32_18 : i32 to vector<16x16x1xi32>
    %45 = arith.cmpi slt, %2, %44 : vector<16x16x1xi32>
    %cst_19 = arith.constant 0.000000e+00 : f32
    %46 = vector.shape_cast %45 : vector<16x16x1xi1> to vector<16x16x1xi1>
    %47 = vector.broadcast %46 : vector<16x16x1xi1> to vector<16x16x128xi1>
    %48 = vector.broadcast %cst_19 : f32 to vector<16x16x128xf32>
    %49 = arith.select %47, %43, %48 : vector<16x16x128xi1>, vector<16x16x128xf32>
    %50 = arith.addf %37, %49 : vector<16x16x128xf32>
    %51 = vector.shape_cast %6 : vector<16x16x15xbf16> to vector<256x15xbf16>
    %c4 = arith.constant 4 : index
    %c0_20 = arith.constant 0 : index
    %c0_21 = arith.constant 0 : index
    %52 = vector.load %arg4[%c4, %c0_20, %c0_21] : memref<5x15x128xbf16, #tpu.memory_space<vmem>>, vector<1x15x128xbf16>
    %53 = vector.shape_cast %52 : vector<1x15x128xbf16> to vector<15x128xbf16>
    %cst_22 = arith.constant dense<0.000000e+00> : vector<256x128xf32>
    %54 = tpu.matmul %51, %53, %cst_22 {dimension_numbers = #tpu.dot_dimension_numbers<[1], [0], [0], [1], [0, 0, 1, 1], [], []>} : vector<256x15xbf16>, vector<15x128xbf16>, vector<256x128xf32> -> vector<256x128xf32>
    %55 = vector.shape_cast %54 : vector<256x128xf32> to vector<16x16x128xf32>
    %c14_i32 = arith.constant 14 : i32
    %56 = tpu.dynamic_rotate %55 by %c14_i32 dim 1 : vector<16x16x128xf32>, i32 -> vector<16x16x128xf32>
    %c14_i32_23 = arith.constant 14 : i32
    %57 = vector.broadcast %c14_i32_23 : i32 to vector<16x16x1xi32>
    %58 = arith.cmpi slt, %2, %57 : vector<16x16x1xi32>
    %cst_24 = arith.constant 0.000000e+00 : f32
    %59 = vector.shape_cast %58 : vector<16x16x1xi1> to vector<16x16x1xi1>
    %60 = vector.broadcast %59 : vector<16x16x1xi1> to vector<16x16x128xi1>
    %61 = vector.broadcast %cst_24 : f32 to vector<16x16x128xf32>
    %62 = arith.select %60, %56, %61 : vector<16x16x128xi1>, vector<16x16x128xf32>
    %63 = arith.addf %50, %62 : vector<16x16x128xf32>
    %c0_i32_25 = arith.constant 0 : i32
    %64 = arith.cmpi eq, %arg2, %c0_i32_25 : i32
    %65 = arith.extui %64 : i1 to i32
    %c0_i32_26 = arith.constant 0 : i32
    %66 = arith.cmpi ne, %65, %c0_i32_26 : i32
    scf.if %66 {
      %cst_47 = arith.constant 0.000000e+00 : f32
      %90 = vector.broadcast %cst_47 : f32 to vector<1x128xf32>
      %c0_48 = arith.constant 0 : index
      %c0_49 = arith.constant 0 : index
      %c0_50 = arith.constant 0 : index
      %91 = vector.load %arg6[%c0_48, %c0_49, %c0_50] : memref<1x1x128xf32, #tpu.memory_space<vmem>>, vector<1x1x128xf32>
      %92 = vector.shape_cast %91 : vector<1x1x128xf32> to vector<1x128xf32>
      %93 = vector.shape_cast %90 : vector<1x128xf32> to vector<1x1x128xf32>
      tpu.vector_store %arg6[%c0_48, %c0_49, %c0_50], %93 {strides = array<i32>} : memref<1x1x128xf32, #tpu.memory_space<vmem>>, vector<1x1x128xf32>,
      %cst_51 = arith.constant 0.000000e+00 : f32
      %94 = vector.broadcast %cst_51 : f32 to vector<1x128xf32>
      %c0_52 = arith.constant 0 : index
      %c0_53 = arith.constant 0 : index
      %c0_54 = arith.constant 0 : index
      %95 = vector.load %arg7[%c0_52, %c0_53, %c0_54] : memref<1x1x128xf32, #tpu.memory_space<vmem>>, vector<1x1x128xf32>
      %96 = vector.shape_cast %95 : vector<1x1x128xf32> to vector<1x128xf32>
      %97 = vector.shape_cast %94 : vector<1x128xf32> to vector<1x1x128xf32>
      tpu.vector_store %arg7[%c0_52, %c0_53, %c0_54], %97 {strides = array<i32>} : memref<1x1x128xf32, #tpu.memory_space<vmem>>, vector<1x1x128xf32>,
    } else {
    }
    %c0_27 = arith.constant 0 : index
    %c0_28 = arith.constant 0 : index
    %c0_29 = arith.constant 0 : index
    %67 = vector.load %arg6[%c0_27, %c0_28, %c0_29] : memref<1x1x128xf32, #tpu.memory_space<vmem>>, vector<1x1x128xf32>
    %68 = vector.shape_cast %67 : vector<1x1x128xf32> to vector<1x128xf32>
    %cst_30 = arith.constant dense<0.000000e+00> : vector<16x128xf32>
    %69 = vector.multi_reduction <add>, %63, %cst_30 [0] : vector<16x16x128xf32> to vector<16x128xf32>
    %cst_31 = arith.constant dense<0.000000e+00> : vector<128xf32>
    %70 = vector.multi_reduction <add>, %69, %cst_31 [0] : vector<16x128xf32> to vector<128xf32>
    %71 = vector.shape_cast %70 : vector<128xf32> to vector<1x128xf32>
    %72 = arith.addf %68, %71 : vector<1x128xf32>
    %c0_32 = arith.constant 0 : index
    %c0_33 = arith.constant 0 : index
    %c0_34 = arith.constant 0 : index
    %73 = vector.load %arg6[%c0_32, %c0_33, %c0_34] : memref<1x1x128xf32, #tpu.memory_space<vmem>>, vector<1x1x128xf32>
    %74 = vector.shape_cast %73 : vector<1x1x128xf32> to vector<1x128xf32>
    %75 = vector.shape_cast %72 : vector<1x128xf32> to vector<1x1x128xf32>
    tpu.vector_store %arg6[%c0_32, %c0_33, %c0_34], %75 {strides = array<i32>} : memref<1x1x128xf32, #tpu.memory_space<vmem>>, vector<1x1x128xf32>,
    %c0_35 = arith.constant 0 : index
    %c0_36 = arith.constant 0 : index
    %c0_37 = arith.constant 0 : index
    %76 = vector.load %arg7[%c0_35, %c0_36, %c0_37] : memref<1x1x128xf32, #tpu.memory_space<vmem>>, vector<1x1x128xf32>
    %77 = vector.shape_cast %76 : vector<1x1x128xf32> to vector<1x128xf32>
    %78 = arith.mulf %63, %63 : vector<16x16x128xf32>
    %cst_38 = arith.constant dense<0.000000e+00> : vector<16x128xf32>
    %79 = vector.multi_reduction <add>, %78, %cst_38 [0] : vector<16x16x128xf32> to vector<16x128xf32>
    %cst_39 = arith.constant dense<0.000000e+00> : vector<128xf32>
    %80 = vector.multi_reduction <add>, %79, %cst_39 [0] : vector<16x128xf32> to vector<128xf32>
    %81 = vector.shape_cast %80 : vector<128xf32> to vector<1x128xf32>
    %82 = arith.addf %77, %81 : vector<1x128xf32>
    %c0_40 = arith.constant 0 : index
    %c0_41 = arith.constant 0 : index
    %c0_42 = arith.constant 0 : index
    %83 = vector.load %arg7[%c0_40, %c0_41, %c0_42] : memref<1x1x128xf32, #tpu.memory_space<vmem>>, vector<1x1x128xf32>
    %84 = vector.shape_cast %83 : vector<1x1x128xf32> to vector<1x128xf32>
    %85 = vector.shape_cast %82 : vector<1x128xf32> to vector<1x1x128xf32>
    tpu.vector_store %arg7[%c0_40, %c0_41, %c0_42], %85 {strides = array<i32>} : memref<1x1x128xf32, #tpu.memory_space<vmem>>, vector<1x1x128xf32>,
    %86 = arith.truncf %63 : vector<16x16x128xf32> to vector<16x16x128xbf16>
    %c0_43 = arith.constant 0 : index
    %c0_44 = arith.constant 0 : index
    %c0_45 = arith.constant 0 : index
    %c0_46 = arith.constant 0 : index
    %87 = vector.load %arg5[%c0_43, %c0_44, %c0_45, %c0_46] : memref<1x16x16x128xbf16, #tpu.memory_space<vmem>>, vector<1x16x16x128xbf16>
    %88 = vector.shape_cast %87 : vector<1x16x16x128xbf16> to vector<16x16x128xbf16>
    %89 = vector.shape_cast %86 : vector<16x16x128xbf16> to vector<1x16x16x128xbf16>
    tpu.vector_store %arg5[%c0_43, %c0_44, %c0_45, %c0_46], %89 {strides = array<i32>} : memref<1x16x16x128xbf16, #tpu.memory_space<vmem>>, vector<1x16x16x128xbf16>,
    return
  }
  func.func @transform_0(%arg0: i32, %arg1: i32, %arg2: i32) -> (i32, i32, i32, i32) {
    %c0_i32 = arith.constant 0 : i32
    %c0_i32_0 = arith.constant 0 : i32
    %c0_i32_1 = arith.constant 0 : i32
    %c0_i32_2 = arith.constant 0 : i32
    return %arg1, %c0_i32, %c0_i32_0, %c0_i32_1 : i32, i32, i32, i32
  }
  func.func @transform_1(%arg0: i32, %arg1: i32, %arg2: i32) -> (i32, i32, i32) {
    %c0_i32 = arith.constant 0 : i32
    %c0_i32_0 = arith.constant 0 : i32
    %c0_i32_1 = arith.constant 0 : i32
    return %c0_i32, %c0_i32_0, %arg0 : i32, i32, i32
  }
  func.func @transform_2(%arg0: i32, %arg1: i32, %arg2: i32) -> (i32, i32, i32, i32) {
    %c0_i32 = arith.constant 0 : i32
    %c0_i32_0 = arith.constant 0 : i32
    return %arg1, %arg2, %c0_i32, %arg0 : i32, i32, i32, i32
  }
  func.func @transform_3(%arg0: i32, %arg1: i32, %arg2: i32) -> (i32, i32, i32) {
    %c0_i32 = arith.constant 0 : i32
    %c0_i32_0 = arith.constant 0 : i32
    return %arg1, %c0_i32, %arg0 : i32, i32, i32
  }
  func.func @transform_4(%arg0: i32, %arg1: i32, %arg2: i32) -> (i32, i32, i32) {
    %c0_i32 = arith.constant 0 : i32
    %c0_i32_0 = arith.constant 0 : i32
    return %arg1, %c0_i32, %arg0 : i32, i32, i32
  }
}

module attributes {stable_mosaic.version = 11 : i64} {
  func.func @_conv5x5_kernel(%arg0: i32, %arg1: i32, %arg2: i32, %arg3: memref<1x12x8x128xbf16, #tpu.memory_space<vmem>>, %arg4: memref<5x640x64xbf16, #tpu.memory_space<vmem>>, %arg5: memref<1x8x8x64xbf16, #tpu.memory_space<vmem>>, %arg6: memref<1x1x64xf32, #tpu.memory_space<vmem>>, %arg7: memref<1x1x64xf32, #tpu.memory_space<vmem>>) attributes {dimension_semantics = [#tpu.dimension_semantics<parallel>, #tpu.dimension_semantics<parallel>, #tpu.dimension_semantics<arbitrary>], iteration_bounds = array<i64: 1, 2, 1>, scalar_prefetch = 0 : i64, scratch_operands = 0 : i64, tpu.core_type = #tpu.core_type<tc>, window_params = [{transform_indices = @transform_0, window_bounds = array<i64: 1, 12, 8, 128>}, {transform_indices = @transform_1, window_bounds = array<i64: 5, 640, 64>}, {transform_indices = @transform_2, window_bounds = array<i64: 1, 8, 8, 64>}, {transform_indices = @transform_3, window_bounds = array<i64: 1, 1, 64>}, {transform_indices = @transform_4, window_bounds = array<i64: 1, 1, 64>}]} {
    %c8_i32 = arith.constant 8 : i32
    %0 = arith.muli %arg2, %c8_i32 : i32
    %1 = tpu.assume_multiple %0, 8 : i32
    %2 = tpu.iota {dimensions = array<i32: 1>} : vector<8x8x1xi32>
    %c0_i32 = arith.constant 0 : i32
    %3 = arith.addi %1, %c0_i32 : i32
    %c0 = arith.constant 0 : index
    %4 = arith.index_cast %3 : i32 to index
    %c0_0 = arith.constant 0 : index
    %c0_1 = arith.constant 0 : index
    %5 = vector.load %arg3[%c0, %4, %c0_0, %c0_1] : memref<1x12x8x128xbf16, #tpu.memory_space<vmem>>, vector<1x8x8x128xbf16>
    %6 = vector.shape_cast %5 : vector<1x8x8x128xbf16> to vector<8x8x128xbf16>
    %c1_i32 = arith.constant 1 : i32
    %7 = arith.addi %1, %c1_i32 : i32
    %c0_2 = arith.constant 0 : index
    %8 = arith.index_cast %7 : i32 to index
    %c0_3 = arith.constant 0 : index
    %c0_4 = arith.constant 0 : index
    %9 = vector.load %arg3[%c0_2, %8, %c0_3, %c0_4] : memref<1x12x8x128xbf16, #tpu.memory_space<vmem>>, vector<1x8x8x128xbf16>
    %10 = vector.shape_cast %9 : vector<1x8x8x128xbf16> to vector<8x8x128xbf16>
    %11 = tpu.concatenate %6, %10 in 2 : vector<8x8x128xbf16>, vector<8x8x128xbf16> -> vector<8x8x256xbf16>
    %c2_i32 = arith.constant 2 : i32
    %12 = arith.addi %1, %c2_i32 : i32
    %c0_5 = arith.constant 0 : index
    %13 = arith.index_cast %12 : i32 to index
    %c0_6 = arith.constant 0 : index
    %c0_7 = arith.constant 0 : index
    %14 = vector.load %arg3[%c0_5, %13, %c0_6, %c0_7] : memref<1x12x8x128xbf16, #tpu.memory_space<vmem>>, vector<1x8x8x128xbf16>
    %15 = vector.shape_cast %14 : vector<1x8x8x128xbf16> to vector<8x8x128xbf16>
    %c3_i32 = arith.constant 3 : i32
    %16 = arith.addi %1, %c3_i32 : i32
    %c0_8 = arith.constant 0 : index
    %17 = arith.index_cast %16 : i32 to index
    %c0_9 = arith.constant 0 : index
    %c0_10 = arith.constant 0 : index
    %18 = vector.load %arg3[%c0_8, %17, %c0_9, %c0_10] : memref<1x12x8x128xbf16, #tpu.memory_space<vmem>>, vector<1x8x8x128xbf16>
    %19 = vector.shape_cast %18 : vector<1x8x8x128xbf16> to vector<8x8x128xbf16>
    %20 = tpu.concatenate %15, %19 in 2 : vector<8x8x128xbf16>, vector<8x8x128xbf16> -> vector<8x8x256xbf16>
    %c4_i32 = arith.constant 4 : i32
    %21 = arith.addi %1, %c4_i32 : i32
    %c0_11 = arith.constant 0 : index
    %22 = arith.index_cast %21 : i32 to index
    %c0_12 = arith.constant 0 : index
    %c0_13 = arith.constant 0 : index
    %23 = vector.load %arg3[%c0_11, %22, %c0_12, %c0_13] : memref<1x12x8x128xbf16, #tpu.memory_space<vmem>>, vector<1x8x8x128xbf16>
    %24 = vector.shape_cast %23 : vector<1x8x8x128xbf16> to vector<8x8x128xbf16>
    %25 = vector.shape_cast %11 : vector<8x8x256xbf16> to vector<64x256xbf16>
    %c0_14 = arith.constant 0 : index
    %c0_15 = arith.constant 0 : index
    %c0_16 = arith.constant 0 : index
    %26 = vector.load %arg4[%c0_14, %c0_15, %c0_16] : memref<5x640x64xbf16, #tpu.memory_space<vmem>>, vector<1x256x64xbf16>
    %27 = vector.shape_cast %26 : vector<1x256x64xbf16> to vector<256x64xbf16>
    %cst = arith.constant dense<0.000000e+00> : vector<64x64xf32>
    %28 = tpu.matmul %25, %27, %cst {dimension_numbers = #tpu.dot_dimension_numbers<[1], [0], [0], [1], [0, 0, 1, 1], [], []>} : vector<64x256xbf16>, vector<256x64xbf16>, vector<64x64xf32> -> vector<64x64xf32>
    %29 = vector.shape_cast %20 : vector<8x8x256xbf16> to vector<64x256xbf16>
    %c0_17 = arith.constant 0 : index
    %c256 = arith.constant 256 : index
    %c0_18 = arith.constant 0 : index
    %30 = vector.load %arg4[%c0_17, %c256, %c0_18] : memref<5x640x64xbf16, #tpu.memory_space<vmem>>, vector<1x256x64xbf16>
    %31 = vector.shape_cast %30 : vector<1x256x64xbf16> to vector<256x64xbf16>
    %cst_19 = arith.constant dense<0.000000e+00> : vector<64x64xf32>
    %32 = tpu.matmul %29, %31, %cst_19 {dimension_numbers = #tpu.dot_dimension_numbers<[1], [0], [0], [1], [0, 0, 1, 1], [], []>} : vector<64x256xbf16>, vector<256x64xbf16>, vector<64x64xf32> -> vector<64x64xf32>
    %33 = arith.addf %28, %32 : vector<64x64xf32>
    %34 = vector.shape_cast %24 : vector<8x8x128xbf16> to vector<64x128xbf16>
    %c0_20 = arith.constant 0 : index
    %c512 = arith.constant 512 : index
    %c0_21 = arith.constant 0 : index
    %35 = vector.load %arg4[%c0_20, %c512, %c0_21] : memref<5x640x64xbf16, #tpu.memory_space<vmem>>, vector<1x128x64xbf16>
    %36 = vector.shape_cast %35 : vector<1x128x64xbf16> to vector<128x64xbf16>
    %cst_22 = arith.constant dense<0.000000e+00> : vector<64x64xf32>
    %37 = tpu.matmul %34, %36, %cst_22 {dimension_numbers = #tpu.dot_dimension_numbers<[1], [0], [0], [1], [0, 0, 1, 1], [], []>} : vector<64x128xbf16>, vector<128x64xbf16>, vector<64x64xf32> -> vector<64x64xf32>
    %38 = arith.addf %33, %37 : vector<64x64xf32>
    %39 = vector.shape_cast %38 : vector<64x64xf32> to vector<8x8x64xf32>
    %c2_i32_23 = arith.constant 2 : i32
    %40 = tpu.dynamic_rotate %39 by %c2_i32_23 dim 1 : vector<8x8x64xf32>, i32 -> vector<8x8x64xf32>
    %c2_i32_24 = arith.constant 2 : i32
    %41 = vector.broadcast %c2_i32_24 : i32 to vector<8x8x1xi32>
    %42 = arith.cmpi sge, %2, %41 : vector<8x8x1xi32>
    %cst_25 = arith.constant 0.000000e+00 : f32
    %43 = vector.shape_cast %42 : vector<8x8x1xi1> to vector<8x8x1xi1>
    %44 = vector.broadcast %43 : vector<8x8x1xi1> to vector<8x8x64xi1>
    %45 = vector.broadcast %cst_25 : f32 to vector<8x8x64xf32>
    %46 = arith.select %44, %40, %45 : vector<8x8x64xi1>, vector<8x8x64xf32>
    %47 = vector.shape_cast %11 : vector<8x8x256xbf16> to vector<64x256xbf16>
    %c1 = arith.constant 1 : index
    %c0_26 = arith.constant 0 : index
    %c0_27 = arith.constant 0 : index
    %48 = vector.load %arg4[%c1, %c0_26, %c0_27] : memref<5x640x64xbf16, #tpu.memory_space<vmem>>, vector<1x256x64xbf16>
    %49 = vector.shape_cast %48 : vector<1x256x64xbf16> to vector<256x64xbf16>
    %cst_28 = arith.constant dense<0.000000e+00> : vector<64x64xf32>
    %50 = tpu.matmul %47, %49, %cst_28 {dimension_numbers = #tpu.dot_dimension_numbers<[1], [0], [0], [1], [0, 0, 1, 1], [], []>} : vector<64x256xbf16>, vector<256x64xbf16>, vector<64x64xf32> -> vector<64x64xf32>
    %51 = vector.shape_cast %20 : vector<8x8x256xbf16> to vector<64x256xbf16>
    %c1_29 = arith.constant 1 : index
    %c256_30 = arith.constant 256 : index
    %c0_31 = arith.constant 0 : index
    %52 = vector.load %arg4[%c1_29, %c256_30, %c0_31] : memref<5x640x64xbf16, #tpu.memory_space<vmem>>, vector<1x256x64xbf16>
    %53 = vector.shape_cast %52 : vector<1x256x64xbf16> to vector<256x64xbf16>
    %cst_32 = arith.constant dense<0.000000e+00> : vector<64x64xf32>
    %54 = tpu.matmul %51, %53, %cst_32 {dimension_numbers = #tpu.dot_dimension_numbers<[1], [0], [0], [1], [0, 0, 1, 1], [], []>} : vector<64x256xbf16>, vector<256x64xbf16>, vector<64x64xf32> -> vector<64x64xf32>
    %55 = arith.addf %50, %54 : vector<64x64xf32>
    %56 = vector.shape_cast %24 : vector<8x8x128xbf16> to vector<64x128xbf16>
    %c1_33 = arith.constant 1 : index
    %c512_34 = arith.constant 512 : index
    %c0_35 = arith.constant 0 : index
    %57 = vector.load %arg4[%c1_33, %c512_34, %c0_35] : memref<5x640x64xbf16, #tpu.memory_space<vmem>>, vector<1x128x64xbf16>
    %58 = vector.shape_cast %57 : vector<1x128x64xbf16> to vector<128x64xbf16>
    %cst_36 = arith.constant dense<0.000000e+00> : vector<64x64xf32>
    %59 = tpu.matmul %56, %58, %cst_36 {dimension_numbers = #tpu.dot_dimension_numbers<[1], [0], [0], [1], [0, 0, 1, 1], [], []>} : vector<64x128xbf16>, vector<128x64xbf16>, vector<64x64xf32> -> vector<64x64xf32>
    %60 = arith.addf %55, %59 : vector<64x64xf32>
    %61 = vector.shape_cast %60 : vector<64x64xf32> to vector<8x8x64xf32>
    %c1_i32_37 = arith.constant 1 : i32
    %62 = tpu.dynamic_rotate %61 by %c1_i32_37 dim 1 : vector<8x8x64xf32>, i32 -> vector<8x8x64xf32>
    %c1_i32_38 = arith.constant 1 : i32
    %63 = vector.broadcast %c1_i32_38 : i32 to vector<8x8x1xi32>
    %64 = arith.cmpi sge, %2, %63 : vector<8x8x1xi32>
    %cst_39 = arith.constant 0.000000e+00 : f32
    %65 = vector.shape_cast %64 : vector<8x8x1xi1> to vector<8x8x1xi1>
    %66 = vector.broadcast %65 : vector<8x8x1xi1> to vector<8x8x64xi1>
    %67 = vector.broadcast %cst_39 : f32 to vector<8x8x64xf32>
    %68 = arith.select %66, %62, %67 : vector<8x8x64xi1>, vector<8x8x64xf32>
    %69 = arith.addf %46, %68 : vector<8x8x64xf32>
    %70 = vector.shape_cast %11 : vector<8x8x256xbf16> to vector<64x256xbf16>
    %c2 = arith.constant 2 : index
    %c0_40 = arith.constant 0 : index
    %c0_41 = arith.constant 0 : index
    %71 = vector.load %arg4[%c2, %c0_40, %c0_41] : memref<5x640x64xbf16, #tpu.memory_space<vmem>>, vector<1x256x64xbf16>
    %72 = vector.shape_cast %71 : vector<1x256x64xbf16> to vector<256x64xbf16>
    %cst_42 = arith.constant dense<0.000000e+00> : vector<64x64xf32>
    %73 = tpu.matmul %70, %72, %cst_42 {dimension_numbers = #tpu.dot_dimension_numbers<[1], [0], [0], [1], [0, 0, 1, 1], [], []>} : vector<64x256xbf16>, vector<256x64xbf16>, vector<64x64xf32> -> vector<64x64xf32>
    %74 = vector.shape_cast %20 : vector<8x8x256xbf16> to vector<64x256xbf16>
    %c2_43 = arith.constant 2 : index
    %c256_44 = arith.constant 256 : index
    %c0_45 = arith.constant 0 : index
    %75 = vector.load %arg4[%c2_43, %c256_44, %c0_45] : memref<5x640x64xbf16, #tpu.memory_space<vmem>>, vector<1x256x64xbf16>
    %76 = vector.shape_cast %75 : vector<1x256x64xbf16> to vector<256x64xbf16>
    %cst_46 = arith.constant dense<0.000000e+00> : vector<64x64xf32>
    %77 = tpu.matmul %74, %76, %cst_46 {dimension_numbers = #tpu.dot_dimension_numbers<[1], [0], [0], [1], [0, 0, 1, 1], [], []>} : vector<64x256xbf16>, vector<256x64xbf16>, vector<64x64xf32> -> vector<64x64xf32>
    %78 = arith.addf %73, %77 : vector<64x64xf32>
    %79 = vector.shape_cast %24 : vector<8x8x128xbf16> to vector<64x128xbf16>
    %c2_47 = arith.constant 2 : index
    %c512_48 = arith.constant 512 : index
    %c0_49 = arith.constant 0 : index
    %80 = vector.load %arg4[%c2_47, %c512_48, %c0_49] : memref<5x640x64xbf16, #tpu.memory_space<vmem>>, vector<1x128x64xbf16>
    %81 = vector.shape_cast %80 : vector<1x128x64xbf16> to vector<128x64xbf16>
    %cst_50 = arith.constant dense<0.000000e+00> : vector<64x64xf32>
    %82 = tpu.matmul %79, %81, %cst_50 {dimension_numbers = #tpu.dot_dimension_numbers<[1], [0], [0], [1], [0, 0, 1, 1], [], []>} : vector<64x128xbf16>, vector<128x64xbf16>, vector<64x64xf32> -> vector<64x64xf32>
    %83 = arith.addf %78, %82 : vector<64x64xf32>
    %84 = vector.shape_cast %83 : vector<64x64xf32> to vector<8x8x64xf32>
    %85 = arith.addf %69, %84 : vector<8x8x64xf32>
    %86 = vector.shape_cast %11 : vector<8x8x256xbf16> to vector<64x256xbf16>
    %c3 = arith.constant 3 : index
    %c0_51 = arith.constant 0 : index
    %c0_52 = arith.constant 0 : index
    %87 = vector.load %arg4[%c3, %c0_51, %c0_52] : memref<5x640x64xbf16, #tpu.memory_space<vmem>>, vector<1x256x64xbf16>
    %88 = vector.shape_cast %87 : vector<1x256x64xbf16> to vector<256x64xbf16>
    %cst_53 = arith.constant dense<0.000000e+00> : vector<64x64xf32>
    %89 = tpu.matmul %86, %88, %cst_53 {dimension_numbers = #tpu.dot_dimension_numbers<[1], [0], [0], [1], [0, 0, 1, 1], [], []>} : vector<64x256xbf16>, vector<256x64xbf16>, vector<64x64xf32> -> vector<64x64xf32>
    %90 = vector.shape_cast %20 : vector<8x8x256xbf16> to vector<64x256xbf16>
    %c3_54 = arith.constant 3 : index
    %c256_55 = arith.constant 256 : index
    %c0_56 = arith.constant 0 : index
    %91 = vector.load %arg4[%c3_54, %c256_55, %c0_56] : memref<5x640x64xbf16, #tpu.memory_space<vmem>>, vector<1x256x64xbf16>
    %92 = vector.shape_cast %91 : vector<1x256x64xbf16> to vector<256x64xbf16>
    %cst_57 = arith.constant dense<0.000000e+00> : vector<64x64xf32>
    %93 = tpu.matmul %90, %92, %cst_57 {dimension_numbers = #tpu.dot_dimension_numbers<[1], [0], [0], [1], [0, 0, 1, 1], [], []>} : vector<64x256xbf16>, vector<256x64xbf16>, vector<64x64xf32> -> vector<64x64xf32>
    %94 = arith.addf %89, %93 : vector<64x64xf32>
    %95 = vector.shape_cast %24 : vector<8x8x128xbf16> to vector<64x128xbf16>
    %c3_58 = arith.constant 3 : index
    %c512_59 = arith.constant 512 : index
    %c0_60 = arith.constant 0 : index
    %96 = vector.load %arg4[%c3_58, %c512_59, %c0_60] : memref<5x640x64xbf16, #tpu.memory_space<vmem>>, vector<1x128x64xbf16>
    %97 = vector.shape_cast %96 : vector<1x128x64xbf16> to vector<128x64xbf16>
    %cst_61 = arith.constant dense<0.000000e+00> : vector<64x64xf32>
    %98 = tpu.matmul %95, %97, %cst_61 {dimension_numbers = #tpu.dot_dimension_numbers<[1], [0], [0], [1], [0, 0, 1, 1], [], []>} : vector<64x128xbf16>, vector<128x64xbf16>, vector<64x64xf32> -> vector<64x64xf32>
    %99 = arith.addf %94, %98 : vector<64x64xf32>
    %100 = vector.shape_cast %99 : vector<64x64xf32> to vector<8x8x64xf32>
    %c7_i32 = arith.constant 7 : i32
    %101 = tpu.dynamic_rotate %100 by %c7_i32 dim 1 : vector<8x8x64xf32>, i32 -> vector<8x8x64xf32>
    %c7_i32_62 = arith.constant 7 : i32
    %102 = vector.broadcast %c7_i32_62 : i32 to vector<8x8x1xi32>
    %103 = arith.cmpi slt, %2, %102 : vector<8x8x1xi32>
    %cst_63 = arith.constant 0.000000e+00 : f32
    %104 = vector.shape_cast %103 : vector<8x8x1xi1> to vector<8x8x1xi1>
    %105 = vector.broadcast %104 : vector<8x8x1xi1> to vector<8x8x64xi1>
    %106 = vector.broadcast %cst_63 : f32 to vector<8x8x64xf32>
    %107 = arith.select %105, %101, %106 : vector<8x8x64xi1>, vector<8x8x64xf32>
    %108 = arith.addf %85, %107 : vector<8x8x64xf32>
    %109 = vector.shape_cast %11 : vector<8x8x256xbf16> to vector<64x256xbf16>
    %c4 = arith.constant 4 : index
    %c0_64 = arith.constant 0 : index
    %c0_65 = arith.constant 0 : index
    %110 = vector.load %arg4[%c4, %c0_64, %c0_65] : memref<5x640x64xbf16, #tpu.memory_space<vmem>>, vector<1x256x64xbf16>
    %111 = vector.shape_cast %110 : vector<1x256x64xbf16> to vector<256x64xbf16>
    %cst_66 = arith.constant dense<0.000000e+00> : vector<64x64xf32>
    %112 = tpu.matmul %109, %111, %cst_66 {dimension_numbers = #tpu.dot_dimension_numbers<[1], [0], [0], [1], [0, 0, 1, 1], [], []>} : vector<64x256xbf16>, vector<256x64xbf16>, vector<64x64xf32> -> vector<64x64xf32>
    %113 = vector.shape_cast %20 : vector<8x8x256xbf16> to vector<64x256xbf16>
    %c4_67 = arith.constant 4 : index
    %c256_68 = arith.constant 256 : index
    %c0_69 = arith.constant 0 : index
    %114 = vector.load %arg4[%c4_67, %c256_68, %c0_69] : memref<5x640x64xbf16, #tpu.memory_space<vmem>>, vector<1x256x64xbf16>
    %115 = vector.shape_cast %114 : vector<1x256x64xbf16> to vector<256x64xbf16>
    %cst_70 = arith.constant dense<0.000000e+00> : vector<64x64xf32>
    %116 = tpu.matmul %113, %115, %cst_70 {dimension_numbers = #tpu.dot_dimension_numbers<[1], [0], [0], [1], [0, 0, 1, 1], [], []>} : vector<64x256xbf16>, vector<256x64xbf16>, vector<64x64xf32> -> vector<64x64xf32>
    %117 = arith.addf %112, %116 : vector<64x64xf32>
    %118 = vector.shape_cast %24 : vector<8x8x128xbf16> to vector<64x128xbf16>
    %c4_71 = arith.constant 4 : index
    %c512_72 = arith.constant 512 : index
    %c0_73 = arith.constant 0 : index
    %119 = vector.load %arg4[%c4_71, %c512_72, %c0_73] : memref<5x640x64xbf16, #tpu.memory_space<vmem>>, vector<1x128x64xbf16>
    %120 = vector.shape_cast %119 : vector<1x128x64xbf16> to vector<128x64xbf16>
    %cst_74 = arith.constant dense<0.000000e+00> : vector<64x64xf32>
    %121 = tpu.matmul %118, %120, %cst_74 {dimension_numbers = #tpu.dot_dimension_numbers<[1], [0], [0], [1], [0, 0, 1, 1], [], []>} : vector<64x128xbf16>, vector<128x64xbf16>, vector<64x64xf32> -> vector<64x64xf32>
    %122 = arith.addf %117, %121 : vector<64x64xf32>
    %123 = vector.shape_cast %122 : vector<64x64xf32> to vector<8x8x64xf32>
    %c6_i32 = arith.constant 6 : i32
    %124 = tpu.dynamic_rotate %123 by %c6_i32 dim 1 : vector<8x8x64xf32>, i32 -> vector<8x8x64xf32>
    %c6_i32_75 = arith.constant 6 : i32
    %125 = vector.broadcast %c6_i32_75 : i32 to vector<8x8x1xi32>
    %126 = arith.cmpi slt, %2, %125 : vector<8x8x1xi32>
    %cst_76 = arith.constant 0.000000e+00 : f32
    %127 = vector.shape_cast %126 : vector<8x8x1xi1> to vector<8x8x1xi1>
    %128 = vector.broadcast %127 : vector<8x8x1xi1> to vector<8x8x64xi1>
    %129 = vector.broadcast %cst_76 : f32 to vector<8x8x64xf32>
    %130 = arith.select %128, %124, %129 : vector<8x8x64xi1>, vector<8x8x64xf32>
    %131 = arith.addf %108, %130 : vector<8x8x64xf32>
    %c0_i32_77 = arith.constant 0 : i32
    %132 = arith.cmpi eq, %arg2, %c0_i32_77 : i32
    %133 = arith.extui %132 : i1 to i32
    %c0_i32_78 = arith.constant 0 : i32
    %134 = arith.cmpi ne, %133, %c0_i32_78 : i32
    scf.if %134 {
      %cst_99 = arith.constant 0.000000e+00 : f32
      %158 = vector.broadcast %cst_99 : f32 to vector<1x64xf32>
      %c0_100 = arith.constant 0 : index
      %c0_101 = arith.constant 0 : index
      %c0_102 = arith.constant 0 : index
      %159 = vector.load %arg6[%c0_100, %c0_101, %c0_102] : memref<1x1x64xf32, #tpu.memory_space<vmem>>, vector<1x1x64xf32>
      %160 = vector.shape_cast %159 : vector<1x1x64xf32> to vector<1x64xf32>
      %161 = vector.shape_cast %158 : vector<1x64xf32> to vector<1x1x64xf32>
      tpu.vector_store %arg6[%c0_100, %c0_101, %c0_102], %161 {strides = array<i32>} : memref<1x1x64xf32, #tpu.memory_space<vmem>>, vector<1x1x64xf32>,
      %cst_103 = arith.constant 0.000000e+00 : f32
      %162 = vector.broadcast %cst_103 : f32 to vector<1x64xf32>
      %c0_104 = arith.constant 0 : index
      %c0_105 = arith.constant 0 : index
      %c0_106 = arith.constant 0 : index
      %163 = vector.load %arg7[%c0_104, %c0_105, %c0_106] : memref<1x1x64xf32, #tpu.memory_space<vmem>>, vector<1x1x64xf32>
      %164 = vector.shape_cast %163 : vector<1x1x64xf32> to vector<1x64xf32>
      %165 = vector.shape_cast %162 : vector<1x64xf32> to vector<1x1x64xf32>
      tpu.vector_store %arg7[%c0_104, %c0_105, %c0_106], %165 {strides = array<i32>} : memref<1x1x64xf32, #tpu.memory_space<vmem>>, vector<1x1x64xf32>,
    } else {
    }
    %c0_79 = arith.constant 0 : index
    %c0_80 = arith.constant 0 : index
    %c0_81 = arith.constant 0 : index
    %135 = vector.load %arg6[%c0_79, %c0_80, %c0_81] : memref<1x1x64xf32, #tpu.memory_space<vmem>>, vector<1x1x64xf32>
    %136 = vector.shape_cast %135 : vector<1x1x64xf32> to vector<1x64xf32>
    %cst_82 = arith.constant dense<0.000000e+00> : vector<8x64xf32>
    %137 = vector.multi_reduction <add>, %131, %cst_82 [0] : vector<8x8x64xf32> to vector<8x64xf32>
    %cst_83 = arith.constant dense<0.000000e+00> : vector<64xf32>
    %138 = vector.multi_reduction <add>, %137, %cst_83 [0] : vector<8x64xf32> to vector<64xf32>
    %139 = vector.shape_cast %138 : vector<64xf32> to vector<1x64xf32>
    %140 = arith.addf %136, %139 : vector<1x64xf32>
    %c0_84 = arith.constant 0 : index
    %c0_85 = arith.constant 0 : index
    %c0_86 = arith.constant 0 : index
    %141 = vector.load %arg6[%c0_84, %c0_85, %c0_86] : memref<1x1x64xf32, #tpu.memory_space<vmem>>, vector<1x1x64xf32>
    %142 = vector.shape_cast %141 : vector<1x1x64xf32> to vector<1x64xf32>
    %143 = vector.shape_cast %140 : vector<1x64xf32> to vector<1x1x64xf32>
    tpu.vector_store %arg6[%c0_84, %c0_85, %c0_86], %143 {strides = array<i32>} : memref<1x1x64xf32, #tpu.memory_space<vmem>>, vector<1x1x64xf32>,
    %c0_87 = arith.constant 0 : index
    %c0_88 = arith.constant 0 : index
    %c0_89 = arith.constant 0 : index
    %144 = vector.load %arg7[%c0_87, %c0_88, %c0_89] : memref<1x1x64xf32, #tpu.memory_space<vmem>>, vector<1x1x64xf32>
    %145 = vector.shape_cast %144 : vector<1x1x64xf32> to vector<1x64xf32>
    %146 = arith.mulf %131, %131 : vector<8x8x64xf32>
    %cst_90 = arith.constant dense<0.000000e+00> : vector<8x64xf32>
    %147 = vector.multi_reduction <add>, %146, %cst_90 [0] : vector<8x8x64xf32> to vector<8x64xf32>
    %cst_91 = arith.constant dense<0.000000e+00> : vector<64xf32>
    %148 = vector.multi_reduction <add>, %147, %cst_91 [0] : vector<8x64xf32> to vector<64xf32>
    %149 = vector.shape_cast %148 : vector<64xf32> to vector<1x64xf32>
    %150 = arith.addf %145, %149 : vector<1x64xf32>
    %c0_92 = arith.constant 0 : index
    %c0_93 = arith.constant 0 : index
    %c0_94 = arith.constant 0 : index
    %151 = vector.load %arg7[%c0_92, %c0_93, %c0_94] : memref<1x1x64xf32, #tpu.memory_space<vmem>>, vector<1x1x64xf32>
    %152 = vector.shape_cast %151 : vector<1x1x64xf32> to vector<1x64xf32>
    %153 = vector.shape_cast %150 : vector<1x64xf32> to vector<1x1x64xf32>
    tpu.vector_store %arg7[%c0_92, %c0_93, %c0_94], %153 {strides = array<i32>} : memref<1x1x64xf32, #tpu.memory_space<vmem>>, vector<1x1x64xf32>,
    %154 = arith.truncf %131 : vector<8x8x64xf32> to vector<8x8x64xbf16>
    %c0_95 = arith.constant 0 : index
    %c0_96 = arith.constant 0 : index
    %c0_97 = arith.constant 0 : index
    %c0_98 = arith.constant 0 : index
    %155 = vector.load %arg5[%c0_95, %c0_96, %c0_97, %c0_98] : memref<1x8x8x64xbf16, #tpu.memory_space<vmem>>, vector<1x8x8x64xbf16>
    %156 = vector.shape_cast %155 : vector<1x8x8x64xbf16> to vector<8x8x64xbf16>
    %157 = vector.shape_cast %154 : vector<8x8x64xbf16> to vector<1x8x8x64xbf16>
    tpu.vector_store %arg5[%c0_95, %c0_96, %c0_97, %c0_98], %157 {strides = array<i32>} : memref<1x8x8x64xbf16, #tpu.memory_space<vmem>>, vector<1x8x8x64xbf16>,
    return
  }
  func.func @transform_0(%arg0: i32, %arg1: i32, %arg2: i32) -> (i32, i32, i32, i32) {
    %c0_i32 = arith.constant 0 : i32
    %c0_i32_0 = arith.constant 0 : i32
    %c0_i32_1 = arith.constant 0 : i32
    %c0_i32_2 = arith.constant 0 : i32
    return %arg1, %c0_i32, %c0_i32_0, %c0_i32_1 : i32, i32, i32, i32
  }
  func.func @transform_1(%arg0: i32, %arg1: i32, %arg2: i32) -> (i32, i32, i32) {
    %c0_i32 = arith.constant 0 : i32
    %c0_i32_0 = arith.constant 0 : i32
    %c0_i32_1 = arith.constant 0 : i32
    return %c0_i32, %c0_i32_0, %arg0 : i32, i32, i32
  }
  func.func @transform_2(%arg0: i32, %arg1: i32, %arg2: i32) -> (i32, i32, i32, i32) {
    %c0_i32 = arith.constant 0 : i32
    %c0_i32_0 = arith.constant 0 : i32
    return %arg1, %arg2, %c0_i32, %arg0 : i32, i32, i32, i32
  }
  func.func @transform_3(%arg0: i32, %arg1: i32, %arg2: i32) -> (i32, i32, i32) {
    %c0_i32 = arith.constant 0 : i32
    %c0_i32_0 = arith.constant 0 : i32
    return %arg1, %c0_i32, %arg0 : i32, i32, i32
  }
  func.func @transform_4(%arg0: i32, %arg1: i32, %arg2: i32) -> (i32, i32, i32) {
    %c0_i32 = arith.constant 0 : i32
    %c0_i32_0 = arith.constant 0 : i32
    return %arg1, %c0_i32, %arg0 : i32, i32, i32
  }
}

module attributes {stable_mosaic.version = 11 : i64} {
  func.func @_pool_bn_lrelu_kernel(%arg0: i32, %arg1: i32, %arg2: memref<1x8x8x64xbf16, #tpu.memory_space<vmem>>, %arg3: memref<1x64xf32, #tpu.memory_space<vmem>>, %arg4: memref<1x64xf32, #tpu.memory_space<vmem>>, %arg5: memref<1x4x4x64xbf16, #tpu.memory_space<vmem>>, %arg6: memref<4x8x64xf32, #tpu.memory_space<vmem>>) attributes {dimension_semantics = [#tpu.dimension_semantics<parallel>, #tpu.dimension_semantics<parallel>], iteration_bounds = array<i64: 2, 1>, scalar_prefetch = 0 : i64, scratch_operands = 1 : i64, tpu.core_type = #tpu.core_type<tc>, window_params = [{transform_indices = @transform_0, window_bounds = array<i64: 1, 8, 8, 64>}, {pipeline_mode = #tpu.pipeline_mode<synchronous>, transform_indices = @transform_1, window_bounds = array<i64: 1, 64>}, {pipeline_mode = #tpu.pipeline_mode<synchronous>, transform_indices = @transform_2, window_bounds = array<i64: 1, 64>}, {transform_indices = @transform_3, window_bounds = array<i64: 1, 4, 4, 64>}]} {
    %c0 = arith.constant 0 : index
    %c0_0 = arith.constant 0 : index
    %c0_1 = arith.constant 0 : index
    %c0_2 = arith.constant 0 : index
    %0 = vector.load %arg2[%c0, %c0_0, %c0_1, %c0_2] : memref<1x8x8x64xbf16, #tpu.memory_space<vmem>>, vector<1x8x8x64xbf16>
    %1 = vector.shape_cast %0 : vector<1x8x8x64xbf16> to vector<8x8x64xbf16>
    %2 = vector.shape_cast %1 : vector<8x8x64xbf16> to vector<4x2x8x64xbf16>
    %cst = arith.constant dense<0xFF80> : vector<4x8x64xbf16>
    %3 = vector.multi_reduction <maximumf>, %2, %cst [1] : vector<4x2x8x64xbf16> to vector<4x8x64xbf16>
    %4 = arith.extf %3 : vector<4x8x64xbf16> to vector<4x8x64xf32>
    %c0_3 = arith.constant 0 : index
    %c0_4 = arith.constant 0 : index
    %c0_5 = arith.constant 0 : index
    %5 = vector.load %arg6[%c0_3, %c0_4, %c0_5] : memref<4x8x64xf32, #tpu.memory_space<vmem>>, vector<4x8x64xf32>
    tpu.vector_store %arg6[%c0_3, %c0_4, %c0_5], %4 {strides = array<i32>} : memref<4x8x64xf32, #tpu.memory_space<vmem>>, vector<4x8x64xf32>,
    %c0_6 = arith.constant 0 : index
    %c0_7 = arith.constant 0 : index
    %c0_8 = arith.constant 0 : index
    %6 = tpu.strided_load %arg6[%c0_6, %c0_7, %c0_8] {strides = array<i32: 1, 2, 1>} : memref<4x8x64xf32, #tpu.memory_space<vmem>>, vector<4x4x64xf32>
    %c0_9 = arith.constant 0 : index
    %c1 = arith.constant 1 : index
    %c0_10 = arith.constant 0 : index
    %7 = tpu.strided_load %arg6[%c0_9, %c1, %c0_10] {strides = array<i32: 1, 2, 1>} : memref<4x8x64xf32, #tpu.memory_space<vmem>>, vector<4x4x64xf32>
    %8 = arith.maximumf %6, %7 : vector<4x4x64xf32>
    %c0_11 = arith.constant 0 : index
    %c0_12 = arith.constant 0 : index
    %9 = vector.load %arg3[%c0_11, %c0_12] : memref<1x64xf32, #tpu.memory_space<vmem>>, vector<1x64xf32>
    %cst_13 = arith.constant 7.812500e-03 : f32
    %10 = vector.broadcast %cst_13 : f32 to vector<1x64xf32>
    %11 = arith.mulf %9, %10 : vector<1x64xf32>
    %c0_14 = arith.constant 0 : index
    %c0_15 = arith.constant 0 : index
    %12 = vector.load %arg4[%c0_14, %c0_15] : memref<1x64xf32, #tpu.memory_space<vmem>>, vector<1x64xf32>
    %cst_16 = arith.constant 7.812500e-03 : f32
    %13 = vector.broadcast %cst_16 : f32 to vector<1x64xf32>
    %14 = arith.mulf %12, %13 : vector<1x64xf32>
    %15 = arith.mulf %11, %11 : vector<1x64xf32>
    %16 = arith.subf %14, %15 : vector<1x64xf32>
    %cst_17 = arith.constant 9.99999974E-5 : f32
    %17 = vector.broadcast %cst_17 : f32 to vector<1x64xf32>
    %18 = arith.addf %16, %17 : vector<1x64xf32>
    %19 = math.rsqrt %18 : vector<1x64xf32>
    %20 = vector.shape_cast %11 : vector<1x64xf32> to vector<1x1x64xf32>
    %21 = vector.broadcast %20 : vector<1x1x64xf32> to vector<4x4x64xf32>
    %22 = arith.subf %8, %21 : vector<4x4x64xf32>
    %23 = vector.shape_cast %19 : vector<1x64xf32> to vector<1x1x64xf32>
    %24 = vector.broadcast %23 : vector<1x1x64xf32> to vector<4x4x64xf32>
    %25 = arith.mulf %22, %24 : vector<4x4x64xf32>
    %cst_18 = arith.constant 0.000000e+00 : f32
    %26 = vector.broadcast %cst_18 : f32 to vector<4x4x64xf32>
    %27 = arith.cmpf oge, %25, %26 : vector<4x4x64xf32>
    %cst_19 = arith.constant 0.00999999977 : f32
    %28 = vector.broadcast %cst_19 : f32 to vector<4x4x64xf32>
    %29 = arith.mulf %28, %25 : vector<4x4x64xf32>
    %30 = arith.select %27, %25, %29 : vector<4x4x64xi1>, vector<4x4x64xf32>
    %31 = arith.truncf %30 : vector<4x4x64xf32> to vector<4x4x64xbf16>
    %c0_20 = arith.constant 0 : index
    %c0_21 = arith.constant 0 : index
    %c0_22 = arith.constant 0 : index
    %c0_23 = arith.constant 0 : index
    %32 = vector.load %arg5[%c0_20, %c0_21, %c0_22, %c0_23] : memref<1x4x4x64xbf16, #tpu.memory_space<vmem>>, vector<1x4x4x64xbf16>
    %33 = vector.shape_cast %32 : vector<1x4x4x64xbf16> to vector<4x4x64xbf16>
    %34 = vector.shape_cast %31 : vector<4x4x64xbf16> to vector<1x4x4x64xbf16>
    tpu.vector_store %arg5[%c0_20, %c0_21, %c0_22, %c0_23], %34 {strides = array<i32>} : memref<1x4x4x64xbf16, #tpu.memory_space<vmem>>, vector<1x4x4x64xbf16>,
    return
  }
  func.func @transform_0(%arg0: i32, %arg1: i32) -> (i32, i32, i32, i32) {
    %c0_i32 = arith.constant 0 : i32
    %c0_i32_0 = arith.constant 0 : i32
    %c0_i32_1 = arith.constant 0 : i32
    return %arg0, %arg1, %c0_i32, %c0_i32_0 : i32, i32, i32, i32
  }
  func.func @transform_1(%arg0: i32, %arg1: i32) -> (i32, i32) {
    %c0_i32 = arith.constant 0 : i32
    %c0_i32_0 = arith.constant 0 : i32
    %c0_i32_1 = arith.constant 0 : i32
    return %c0_i32, %c0_i32_0 : i32, i32
  }
  func.func @transform_2(%arg0: i32, %arg1: i32) -> (i32, i32) {
    %c0_i32 = arith.constant 0 : i32
    %c0_i32_0 = arith.constant 0 : i32
    %c0_i32_1 = arith.constant 0 : i32
    return %c0_i32, %c0_i32_0 : i32, i32
  }
  func.func @transform_3(%arg0: i32, %arg1: i32) -> (i32, i32, i32, i32) {
    %c0_i32 = arith.constant 0 : i32
    %c0_i32_0 = arith.constant 0 : i32
    %c0_i32_1 = arith.constant 0 : i32
    return %arg0, %arg1, %c0_i32, %c0_i32_0 : i32, i32, i32, i32
  }
}

module attributes {stable_mosaic.version = 11 : i64} {
  func.func @_fc_kernel(%arg0: i32, %arg1: memref<2x1024xbf16, #tpu.memory_space<vmem>>, %arg2: memref<32x1024xbf16, #tpu.memory_space<vmem>>, %arg3: memref<2x32xf32, #tpu.memory_space<vmem>>, %arg4: memref<2x32xf32, #tpu.memory_space<vmem>>) attributes {dimension_semantics = [#tpu.dimension_semantics<arbitrary>], iteration_bounds = array<i64: 1>, scalar_prefetch = 0 : i64, scratch_operands = 1 : i64, tpu.core_type = #tpu.core_type<tc>, window_params = [{transform_indices = @transform_0, window_bounds = array<i64: 2, 1024>}, {transform_indices = @transform_1, window_bounds = array<i64: 32, 1024>}, {pipeline_mode = #tpu.pipeline_mode<synchronous>, transform_indices = @transform_2, window_bounds = array<i64: 2, 32>}]} {
    %c0_i32 = arith.constant 0 : i32
    %0 = arith.cmpi eq, %arg0, %c0_i32 : i32
    %1 = arith.extui %0 : i1 to i32
    %c0_i32_0 = arith.constant 0 : i32
    %2 = arith.cmpi ne, %1, %c0_i32_0 : i32
    scf.if %2 {
      %cst_10 = arith.constant 0.000000e+00 : f32
      %12 = vector.broadcast %cst_10 : f32 to vector<2x32xf32>
      %c0_11 = arith.constant 0 : index
      %c0_12 = arith.constant 0 : index
      %13 = vector.load %arg4[%c0_11, %c0_12] : memref<2x32xf32, #tpu.memory_space<vmem>>, vector<2x32xf32>
      tpu.vector_store %arg4[%c0_11, %c0_12], %12 {strides = array<i32>} : memref<2x32xf32, #tpu.memory_space<vmem>>, vector<2x32xf32>,
    } else {
    }
    %c0 = arith.constant 0 : index
    %c0_1 = arith.constant 0 : index
    %3 = vector.load %arg4[%c0, %c0_1] : memref<2x32xf32, #tpu.memory_space<vmem>>, vector<2x32xf32>
    %c0_2 = arith.constant 0 : index
    %c0_3 = arith.constant 0 : index
    %4 = vector.load %arg1[%c0_2, %c0_3] : memref<2x1024xbf16, #tpu.memory_space<vmem>>, vector<2x1024xbf16>
    %c0_4 = arith.constant 0 : index
    %c0_5 = arith.constant 0 : index
    %5 = vector.load %arg2[%c0_4, %c0_5] : memref<32x1024xbf16, #tpu.memory_space<vmem>>, vector<32x1024xbf16>
    %cst = arith.constant dense<0.000000e+00> : vector<2x32xf32>
    %6 = tpu.matmul %4, %5, %cst {dimension_numbers = #tpu.dot_dimension_numbers<[1], [1], [0], [0], [0, 0, 1, 0], [], []>} : vector<2x1024xbf16>, vector<32x1024xbf16>, vector<2x32xf32> -> vector<2x32xf32>
    %7 = arith.addf %3, %6 : vector<2x32xf32>
    %c0_6 = arith.constant 0 : index
    %c0_7 = arith.constant 0 : index
    %8 = vector.load %arg4[%c0_6, %c0_7] : memref<2x32xf32, #tpu.memory_space<vmem>>, vector<2x32xf32>
    tpu.vector_store %arg4[%c0_6, %c0_7], %7 {strides = array<i32>} : memref<2x32xf32, #tpu.memory_space<vmem>>, vector<2x32xf32>,
    %c0_i32_8 = arith.constant 0 : i32
    %9 = arith.cmpi eq, %arg0, %c0_i32_8 : i32
    %10 = arith.extui %9 : i1 to i32
    %c0_i32_9 = arith.constant 0 : i32
    %11 = arith.cmpi ne, %10, %c0_i32_9 : i32
    scf.if %11 {
      %c0_10 = arith.constant 0 : index
      %c0_11 = arith.constant 0 : index
      %12 = vector.load %arg4[%c0_10, %c0_11] : memref<2x32xf32, #tpu.memory_space<vmem>>, vector<2x32xf32>
      %c0_12 = arith.constant 0 : index
      %c0_13 = arith.constant 0 : index
      %13 = vector.load %arg3[%c0_12, %c0_13] : memref<2x32xf32, #tpu.memory_space<vmem>>, vector<2x32xf32>
      tpu.vector_store %arg3[%c0_12, %c0_13], %12 {strides = array<i32>} : memref<2x32xf32, #tpu.memory_space<vmem>>, vector<2x32xf32>,
    } else {
    }
    return
  }
  func.func @transform_0(%arg0: i32) -> (i32, i32) {
    %c0_i32 = arith.constant 0 : i32
    %c0_i32_0 = arith.constant 0 : i32
    return %c0_i32, %arg0 : i32, i32
  }
  func.func @transform_1(%arg0: i32) -> (i32, i32) {
    %c0_i32 = arith.constant 0 : i32
    %c0_i32_0 = arith.constant 0 : i32
    return %c0_i32, %arg0 : i32, i32
  }
  func.func @transform_2(%arg0: i32) -> (i32, i32) {
    %c0_i32 = arith.constant 0 : i32
    %c0_i32_0 = arith.constant 0 : i32
    %c0_i32_1 = arith.constant 0 : i32
    return %c0_i32, %c0_i32_0 : i32, i32
  }
}

</mosaic_0001>

<llo_original>
// kernel: deep_svdd_forward.6
$region0: #{deep_svdd_forward.6}
  #allocation0 [shape = 'u32[]', space=smem, size = 0x4, offset = 0x4, fixed_abs, tag = 'smem constant byte address 0x4 - core index']
  #allocation1 [shape = 'u32[72,128]{1,0:T(1,128)}', space=vmem, size = 0x9000, scoped, tag = 'internal scratch']
  #allocation2 [shape = 'f32[8,16,128]{2,1,0:T(8,128)}', space=vmem, size = 0x10000, scoped, tag = 'scratch operand']
  %s0 = inlined_call_operand.vmem [shape: bf16[2,16,16,128], index: 0, kind: input, shape index: {}]
  %s1 = inlined_call_operand.vmem [shape: f32[1,128], index: 1, kind: input, shape index: {}]
  %s2 = inlined_call_operand.vmem [shape: f32[1,128], index: 2, kind: input, shape index: {}]
  %s3 = inlined_call_operand.vmem [shape: bf16[2,8,8,128], index: 3, kind: output, shape index: {}]
  %s4 = sld [smem:[#allocation0]]
  $region45: #{deep_svdd_forward.6} parent=0
    _
  %s6 = ssub.s32 1, %s4
  %s7 = scalar_select 0, %s6, %s4
  loop: start=0, step=1, limit=4
  $region2: #{deep_svdd_forward.6} parent=0 // loop_pre_header
    _
  $region3: #{deep_svdd_forward.6} parent=0 // loop_header
    %s9 = sphi 0, %s13
    %p10 = scmp.ge.s32.totalorder %s9, 4
    %s16 = sphi 0, %s28
    %s17 = sphi 0, %s24
    %s18 = sphi 0, %s16
    %s19 = sphi 0, %s17
    %s20 = sphi 0, %s18
    %s21 = sphi 0, %s19
    %s33 = sphi 0, %s35
    %s36 = sphi 0, %s33
    %s37 = sphi 0, %s36
    %s53 = sphi 0, %s37
    %s57 = sphi 0, %s57
    %s59 = sphi 0, %s57
    %s60 = sphi 0, %s59
    %s74 = sphi 0, %s60
    %s78 = sphi 0, %s78
    %s80 = sphi 0, %s78
    %s81 = sphi 0, %s80
    %s95 = sphi 0, %s81
    %s103 = sphi 0, %s105
    %s106 = sphi 0, %s103
    %s107 = sphi 0, %s106
    %s123 = sphi 0, %s107
  $region4: #{deep_svdd_forward.6} parent=0 // loop_header_branch
    %12 = sbr.rel (%p10) target = $region8
  $region5: #{deep_svdd_forward.6} parent=0 // loop_body
    %s14 = ssub.s32 %s9, 1
    %s15 = ssub.s32 %s9, 2
    %s22 = sadd.s32 1, %s17
    %p23 = scmp.ge.s32.totalorder %s22, 1
    %s24 = scalar_select %p23, 0, %s22
    %s25 = sadd.s32 1, %s16
    %s26 = scalar_select %p23, %s25, %s16
    %p27 = scmp.ge.s32.totalorder %s26, 2
    %s28 = scalar_select %p27, 0, %s26
    %s29 = ssub.s32 %s16, %s28
    %s30 = ssub.s32 %s17, %s24
    %s31 = sor.u32 %s29, %s30
    %p32 = scmp.eq.s32.totalorder %s31, 0
    %s34 = sadd.s32 %s33, 1
    %s35 = scalar_select %p32, %s33, %s34
    %p38 = pneg %p32
    %p39 = scmp.eq.s32.totalorder %s9, 1
    %p40 = por %p38, %p39
    %p41 = scmp.ne.s32.totalorder %s33, %s36
    %p42 = scmp.eq.s32.totalorder %s9, 0
    %p43 = por %p41, %p42
    %p44 = scmp.ne.s32.totalorder %s33, %s36
    %p45 = scmp.eq.s32.totalorder %s14, 1
    %p46 = por %p44, %p45
    %p47 = scmp.ne.s32.totalorder %s36, %s37
    %p48 = scmp.eq.s32.totalorder %s14, 0
    %p49 = por %p47, %p48
    %p50 = scmp.ne.s32.totalorder %s36, %s37
    %p51 = scmp.eq.s32.totalorder %s15, 1
    %p52 = por %p50, %p51
    %p54 = scmp.ne.s32.totalorder %s37, %s53
    %p55 = scmp.eq.s32.totalorder %s15, 0
    %p56 = por %p54, %p55
    %s58 = sadd.s32 %s57, 1
    %p61 = scmp.eq.s32.totalorder %s9, 1
    %p62 = scmp.ne.s32.totalorder %s57, %s59
    %p63 = scmp.eq.s32.totalorder %s9, 0
    %p64 = por %p62, %p63
    %p65 = scmp.ne.s32.totalorder %s57, %s59
    %p66 = scmp.eq.s32.totalorder %s14, 1
    %p67 = por %p65, %p66
    %p68 = scmp.ne.s32.totalorder %s59, %s60
    %p69 = scmp.eq.s32.totalorder %s14, 0
    %p70 = por %p68, %p69
    %p71 = scmp.ne.s32.totalorder %s59, %s60
    %p72 = scmp.eq.s32.totalorder %s15, 1
    %p73 = por %p71, %p72
    %p75 = scmp.ne.s32.totalorder %s60, %s74
    %p76 = scmp.eq.s32.totalorder %s15, 0
    %p77 = por %p75, %p76
    %s79 = sadd.s32 %s78, 1
    %p82 = scmp.eq.s32.totalorder %s9, 1
    %p83 = scmp.ne.s32.totalorder %s78, %s80
    %p84 = scmp.eq.s32.totalorder %s9, 0
    %p85 = por %p83, %p84
    %p86 = scmp.ne.s32.totalorder %s78, %s80
    %p87 = scmp.eq.s32.totalorder %s14, 1
    %p88 = por %p86, %p87
    %p89 = scmp.ne.s32.totalorder %s80, %s81
    %p90 = scmp.eq.s32.totalorder %s14, 0
    %p91 = por %p89, %p90
    %p92 = scmp.ne.s32.totalorder %s80, %s81
    %p93 = scmp.eq.s32.totalorder %s15, 1
    %p94 = por %p92, %p93
    %p96 = scmp.ne.s32.totalorder %s81, %s95
    %p97 = scmp.eq.s32.totalorder %s15, 0
    %p98 = por %p96, %p97
    %s99 = ssub.s32 %s16, %s28
    %s100 = ssub.s32 %s17, %s24
    %s101 = sor.u32 %s99, %s100
    %p102 = scmp.eq.s32.totalorder %s101, 0
    %s104 = sadd.s32 %s103, 1
    %s105 = scalar_select %p102, %s103, %s104
    %p108 = pneg %p102
    %p109 = scmp.eq.s32.totalorder %s9, 1
    %p110 = por %p108, %p109
    %p111 = scmp.ne.s32.totalorder %s103, %s106
    %p112 = scmp.eq.s32.totalorder %s9, 0
    %p113 = por %p111, %p112
    %p114 = scmp.ne.s32.totalorder %s103, %s106
    %p115 = scmp.eq.s32.totalorder %s14, 1
    %p116 = por %p114, %p115
    %p117 = scmp.ne.s32.totalorder %s106, %s107
    %p118 = scmp.eq.s32.totalorder %s14, 0
    %p119 = por %p117, %p118
    %p120 = scmp.ne.s32.totalorder %s106, %s107
    %p121 = scmp.eq.s32.totalorder %s15, 1
    %p122 = por %p120, %p121
    %p124 = scmp.ne.s32.totalorder %s107, %s123
    %p125 = scmp.eq.s32.totalorder %s15, 0
    %p126 = por %p124, %p125
    %p127 = scmp.le.s32.totalorder 1, %s9
    %p128 = scmp.lt.s32.totalorder %s9, 3
    %p129 = pnand %p127, %p128
    %p130 = pneg %p129
    // Predicated region
    $region9: #{deep_svdd_forward.6} parent=5 // pred_check
      _
    $region10: #{deep_svdd_forward.6} parent=5 // pred_check_branch
      %132 = sbr.rel (%p129) target = $region12
    $region11: #{deep_svdd_forward.6} parent=5 // pred_region
      %s133 = ssub.s32 %s9, 1
      // Predicated region
      $region13: #{deep_svdd_forward.6} parent=11 // pred_check
        %p134 = pneg %p70
      $region14: #{deep_svdd_forward.6} parent=11 // pred_check_branch
        %136 = sbr.rel (%p134) target = $region16
      $region15: #{deep_svdd_forward.6} parent=11 // pred_region
        _
      $region16: #{deep_svdd_forward.6} parent=11 // pred_fallthru
        _
      // Predicated region
      $region17: #{deep_svdd_forward.6} parent=11 // pred_check
        %p137 = pneg %p91
      $region18: #{deep_svdd_forward.6} parent=11 // pred_check_branch
        %139 = sbr.rel (%p137) target = $region20
      $region19: #{deep_svdd_forward.6} parent=11 // pred_region
        _
      $region20: #{deep_svdd_forward.6} parent=11 // pred_fallthru
        _
    $region12: #{deep_svdd_forward.6} parent=5 // pred_fallthru
      _
    %p140 = scmp.lt.s32.totalorder %s9, 2
    // Predicated region
    $region21: #{deep_svdd_forward.6} parent=5 // pred_check
      %p141 = pneg %p140
    $region22: #{deep_svdd_forward.6} parent=5 // pred_check_branch
      %143 = sbr.rel (%p141) target = $region24
    $region23: #{deep_svdd_forward.6} parent=5 // pred_region
      // Predicated region
      $region25: #{deep_svdd_forward.6} parent=23 // pred_check
        %p144 = pneg %p43
      $region26: #{deep_svdd_forward.6} parent=23 // pred_check_branch
        %146 = sbr.rel (%p144) target = $region28
      $region27: #{deep_svdd_forward.6} parent=23 // pred_region
        %s147 = smul.u32 16, %s17
        %p148 = scmp.lt.s32.totalorder %s16, 1
        %s149 = scalar_select %p148, %s16, 1
        %p150 = scmp.lt.s32.totalorder %s147, 15
        %s151 = scalar_select %p150, %s147, 15
        %s152 = smul.addr %s151, 2
        %s153 = smul.addr %s149, 32
        %s154 = sadd.s32 %s152, %s153
        %s155 = smul.addr %s154, 4
        %s156 = scalar_lea.vmem %s0, %s155
        %s157 = smul.u32 16, %s17
      $region28: #{deep_svdd_forward.6} parent=23 // pred_fallthru
        _
    $region24: #{deep_svdd_forward.6} parent=5 // pred_fallthru
      _
    %p158 = scmp.le.s32.totalorder 1, %s9
    %p159 = scmp.lt.s32.totalorder %s9, 3
    %p160 = pnand %p158, %p159
    %p161 = pneg %p160
    // Predicated region
    $region29: #{deep_svdd_forward.6} parent=5 // pred_check
      _
    $region30: #{deep_svdd_forward.6} parent=5 // pred_check_branch
      %163 = sbr.rel (%p160) target = $region32
    $region31: #{deep_svdd_forward.6} parent=5 // pred_region
      %s164 = ssub.s32 %s9, 1
      %s165 = smul.u32 16, %s19
      %p166 = scmp.lt.s32.totalorder %s18, 1
      %s167 = scalar_select %p166, %s18, 1
      %p168 = scmp.lt.s32.totalorder %s165, 15
      %s169 = scalar_select %p168, %s165, 15
      %s170 = smul.addr %s169, 2
      %s171 = smul.addr %s167, 32
      %s172 = sadd.s32 %s170, %s171
      %s173 = smul.addr %s172, 4
      %s174 = scalar_lea.vmem %s0, %s173
      %p175 = pneg %p49
      %p176 = pneg %p46
      %p177 = pneg %p70
      %p178 = pneg %p67
      %p179 = pneg %p91
      %p180 = pneg %p88
      %p181 = pneg %p119
      %p182 = pneg %p116
      %s183 = smul.u32 8, %s19
      %p184 = scmp.lt.s32.totalorder %s18, 1
      %s185 = scalar_select %p184, %s18, 1
      %p186 = scmp.lt.s32.totalorder %s183, 7
      %s187 = scalar_select %p186, %s183, 7
      %s188 = smul.addr %s185, 8
      %s189 = sadd.s32 %s187, %s188
      %s190 = smul.addr %s189, 4
      %s191 = scalar_lea.vmem %s3, %s190
      %s192 = smul.u32 16, %s19
      %p193 = scmp.lt.s32.totalorder %s18, 1
      %s194 = scalar_select %p193, %s18, 1
      %p195 = scmp.lt.s32.totalorder %s192, 15
      %s196 = scalar_select %p195, %s192, 15
      %s197 = smul.addr %s196, 2
      %s198 = smul.addr %s194, 32
      %s199 = sadd.s32 %s197, %s198
      %s200 = smul.addr %s199, 4
      %s201 = scalar_lea.vmem %s0, %s200
      %s202 = smul.u32 16, %s19
      %s203 = smul.u32 8, %s19
      %p204 = scmp.lt.s32.totalorder %s18, 1
      %s205 = scalar_select %p204, %s18, 1
      %p206 = scmp.lt.s32.totalorder %s203, 7
      %s207 = scalar_select %p206, %s203, 7
      %s208 = smul.addr %s205, 8
      %s209 = sadd.s32 %s207, %s208
      %s210 = smul.addr %s209, 4
      %s211 = scalar_lea.vmem %s3, %s210
      %s212 = smul.u32 8, %s19
      %v213 = vld [vmem:[%s201] sm:$0xf]
      %v214 = vld [vmem:[%s201 + $0x4] sm:$0xf]
      %v215 = vld [vmem:[%s201 + $0x8] sm:$0xf]
      %v216 = vld [vmem:[%s201 + $0xc] sm:$0xf]
      %v217 = vld [vmem:[%s201 + $0x10] sm:$0xf]
      %v218 = vld [vmem:[%s201 + $0x14] sm:$0xf]
      %v219 = vld [vmem:[%s201 + $0x18] sm:$0xf]
      %v220 = vld [vmem:[%s201 + $0x1c] sm:$0xf]
      %v221 = vld [vmem:[%s201 + $0x20] sm:$0xf]
      %v222 = vld [vmem:[%s201 + $0x24] sm:$0xf]
      %v223 = vld [vmem:[%s201 + $0x28] sm:$0xf]
      %v224 = vld [vmem:[%s201 + $0x2c] sm:$0xf]
      %v225 = vld [vmem:[%s201 + $0x30] sm:$0xf]
      %v226 = vld [vmem:[%s201 + $0x34] sm:$0xf]
      %v227 = vld [vmem:[%s201 + $0x38] sm:$0xf]
      %v228 = vld [vmem:[%s201 + $0x3c] sm:$0xf]
      %v229 = vld [vmem:[%s201 + $0x40] sm:$0xf]
      %v230 = vld [vmem:[%s201 + $0x44] sm:$0xf]
      %v231 = vld [vmem:[%s201 + $0x48] sm:$0xf]
      %v232 = vld [vmem:[%s201 + $0x4c] sm:$0xf]
      %v233 = vld [vmem:[%s201 + $0x50] sm:$0xf]
      %v234 = vld [vmem:[%s201 + $0x54] sm:$0xf]
      %v235 = vld [vmem:[%s201 + $0x58] sm:$0xf]
      %v236 = vld [vmem:[%s201 + $0x5c] sm:$0xf]
      %v237 = vld [vmem:[%s201 + $0x60] sm:$0xf]
      %v238 = vld [vmem:[%s201 + $0x64] sm:$0xf]
      %v239 = vld [vmem:[%s201 + $0x68] sm:$0xf]
      %v240 = vld [vmem:[%s201 + $0x6c] sm:$0xf]
      %v241 = vld [vmem:[%s201 + $0x70] sm:$0xf]
      %v242 = vld [vmem:[%s201 + $0x74] sm:$0xf]
      %v243 = vld [vmem:[%s201 + $0x78] sm:$0xf]
      %v244 = vld [vmem:[%s201 + $0x7c] sm:$0xf]
      %v245 = vunpack.c.l.bf16 %v213
      %v246 = vunpack.c.l.bf16 %v214
      %v247 = vunpack.c.l.bf16 %v215
      %v248 = vunpack.c.l.bf16 %v216
      %v249 = vunpack.c.l.bf16 %v217
      %v250 = vunpack.c.l.bf16 %v218
      %v251 = vunpack.c.l.bf16 %v219
      %v252 = vunpack.c.l.bf16 %v220
      %v253 = vunpack.c.l.bf16 %v221
      %v254 = vunpack.c.l.bf16 %v222
      %v255 = vunpack.c.l.bf16 %v223
      %v256 = vunpack.c.l.bf16 %v224
      %v257 = vunpack.c.l.bf16 %v225
      %v258 = vunpack.c.l.bf16 %v226
      %v259 = vunpack.c.l.bf16 %v227
      %v260 = vunpack.c.l.bf16 %v228
      %v261 = vunpack.c.l.bf16 %v229
      %v262 = vunpack.c.l.bf16 %v230
      %v263 = vunpack.c.l.bf16 %v231
      %v264 = vunpack.c.l.bf16 %v232
      %v265 = vunpack.c.l.bf16 %v233
      %v266 = vunpack.c.l.bf16 %v234
      %v267 = vunpack.c.l.bf16 %v235
      %v268 = vunpack.c.l.bf16 %v236
      %v269 = vunpack.c.l.bf16 %v237
      %v270 = vunpack.c.l.bf16 %v238
      %v271 = vunpack.c.l.bf16 %v239
      %v272 = vunpack.c.l.bf16 %v240
      %v273 = vunpack.c.l.bf16 %v241
      %v274 = vunpack.c.l.bf16 %v242
      %v275 = vunpack.c.l.bf16 %v243
      %v276 = vunpack.c.l.bf16 %v244
      %v277 = vmax.f32 %v245, %v247
      %v278 = vmax.f32 %v246, %v248
      %v279 = vmax.f32 %v249, %v251
      %v280 = vmax.f32 %v250, %v252
      %v281 = vmax.f32 %v253, %v255
      %v282 = vmax.f32 %v254, %v256
      %v283 = vmax.f32 %v257, %v259
      %v284 = vmax.f32 %v258, %v260
      %v285 = vmax.f32 %v261, %v263
      %v286 = vmax.f32 %v262, %v264
      %v287 = vmax.f32 %v265, %v267
      %v288 = vmax.f32 %v266, %v268
      %v289 = vmax.f32 %v269, %v271
      %v290 = vmax.f32 %v270, %v272
      %v291 = vmax.f32 %v273, %v275
      %v292 = vmax.f32 %v274, %v276
      %v293 = vpack.c.bf16 %v277, %v277
      %v294 = vpack.c.bf16 %v278, %v278
      %v295 = vpack.c.bf16 %v279, %v279
      %v296 = vpack.c.bf16 %v280, %v280
      %v297 = vpack.c.bf16 %v281, %v281
      %v298 = vpack.c.bf16 %v282, %v282
      %v299 = vpack.c.bf16 %v283, %v283
      %v300 = vpack.c.bf16 %v284, %v284
      %v301 = vpack.c.bf16 %v285, %v285
      %v302 = vpack.c.bf16 %v286, %v286
      %v303 = vpack.c.bf16 %v287, %v287
      %v304 = vpack.c.bf16 %v288, %v288
      %v305 = vpack.c.bf16 %v289, %v289
      %v306 = vpack.c.bf16 %v290, %v290
      %v307 = vpack.c.bf16 %v291, %v291
      %v308 = vpack.c.bf16 %v292, %v292
      %v309 = vunpack.c.l.bf16 %v293
      %v310 = vunpack.c.l.bf16 %v294
      %v311 = vunpack.c.l.bf16 %v295
      %v312 = vunpack.c.l.bf16 %v296
      %v313 = vunpack.c.l.bf16 %v297
      %v314 = vunpack.c.l.bf16 %v298
      %v315 = vunpack.c.l.bf16 %v299
      %v316 = vunpack.c.l.bf16 %v300
      %v317 = vunpack.c.l.bf16 %v301
      %v318 = vunpack.c.l.bf16 %v302
      %v319 = vunpack.c.l.bf16 %v303
      %v320 = vunpack.c.l.bf16 %v304
      %v321 = vunpack.c.l.bf16 %v305
      %v322 = vunpack.c.l.bf16 %v306
      %v323 = vunpack.c.l.bf16 %v307
      %v324 = vunpack.c.l.bf16 %v308
      %325 = vst [vmem:[#allocation2] sm:$0xff] %v309
      %326 = vst [vmem:[#allocation2 + $0x8] sm:$0xff] %v310
      %327 = vst [vmem:[#allocation2 + $0x10] sm:$0xff] %v311
      %328 = vst [vmem:[#allocation2 + $0x18] sm:$0xff] %v312
      %329 = vst [vmem:[#allocation2 + $0x20] sm:$0xff] %v313
      %330 = vst [vmem:[#allocation2 + $0x28] sm:$0xff] %v314
      %331 = vst [vmem:[#allocation2 + $0x30] sm:$0xff] %v315
      %332 = vst [vmem:[#allocation2 + $0x38] sm:$0xff] %v316
      %333 = vst [vmem:[#allocation2 + $0x40] sm:$0xff] %v317
      %334 = vst [vmem:[#allocation2 + $0x48] sm:$0xff] %v318
      %335 = vst [vmem:[#allocation2 + $0x50] sm:$0xff] %v319
      %336 = vst [vmem:[#allocation2 + $0x58] sm:$0xff] %v320
      %337 = vst [vmem:[#allocation2 + $0x60] sm:$0xff] %v321
      %338 = vst [vmem:[#allocation2 + $0x68] sm:$0xff] %v322
      %339 = vst [vmem:[#allocation2 + $0x70] sm:$0xff] %v323
      %340 = vst [vmem:[#allocation2 + $0x78] sm:$0xff] %v324
      %v341 = vld [vmem:[#allocation2] ss:$2 sm:$0xff]
      %s342 = scalar_lea.vmem [#allocation2], 16
      %v343 = vld [vmem:[%s342] ss:$2 sm:$0xff]
      %s344 = scalar_lea.vmem [#allocation2], 32
      %v345 = vld [vmem:[%s344] ss:$2 sm:$0xff]
      %s346 = scalar_lea.vmem [#allocation2], 48
      %v347 = vld [vmem:[%s346] ss:$2 sm:$0xff]
      %s348 = scalar_lea.vmem [#allocation2], 64
      %v349 = vld [vmem:[%s348] ss:$2 sm:$0xff]
      %s350 = scalar_lea.vmem [#allocation2], 80
      %v351 = vld [vmem:[%s350] ss:$2 sm:$0xff]
      %s352 = scalar_lea.vmem [#allocation2], 96
      %v353 = vld [vmem:[%s352] ss:$2 sm:$0xff]
      %s354 = scalar_lea.vmem [#allocation2], 112
      %v355 = vld [vmem:[%s354] ss:$2 sm:$0xff]
      %s356 = scalar_lea.vmem [#allocation2], 1
      %v357 = vld [vmem:[%s356] ss:$2 sm:$0xff]
      %s358 = scalar_lea.vmem [#allocation2], 17
      %v359 = vld [vmem:[%s358] ss:$2 sm:$0xff]
      %s360 = scalar_lea.vmem [#allocation2], 33
      %v361 = vld [vmem:[%s360] ss:$2 sm:$0xff]
      %s362 = scalar_lea.vmem [#allocation2], 49
      %v363 = vld [vmem:[%s362] ss:$2 sm:$0xff]
      %s364 = scalar_lea.vmem [#allocation2], 65
      %v365 = vld [vmem:[%s364] ss:$2 sm:$0xff]
      %s366 = scalar_lea.vmem [#allocation2], 81
      %v367 = vld [vmem:[%s366] ss:$2 sm:$0xff]
      %s368 = scalar_lea.vmem [#allocation2], 97
      %v369 = vld [vmem:[%s368] ss:$2 sm:$0xff]
      %s370 = scalar_lea.vmem [#allocation2], 113
      %v371 = vld [vmem:[%s370] ss:$2 sm:$0xff]
      %v372 = vmax.f32 %v341, %v357
      %v373 = vmax.f32 %v343, %v359
      %v374 = vmax.f32 %v345, %v361
      %v375 = vmax.f32 %v347, %v363
      %v376 = vmax.f32 %v349, %v365
      %v377 = vmax.f32 %v351, %v367
      %v378 = vmax.f32 %v353, %v369
      %v379 = vmax.f32 %v355, %v371
      %v380 = vld [vmem:[%s1] sm:$0x1]
      %v381 = vmul.f32 %v380, 0.001953125
      %v382 = vld [vmem:[%s2] sm:$0x1]
      %v383 = vmul.f32 %v382, 0.001953125
      %v384 = vmul.f32 %v381, %v381
      %v385 = vsub.f32 %v383, %v384
      %v386 = vadd.f32 %v385, 0.0001
      %v387 = vrsqrt.pop %v386
      %v388 = vmul.f32 %v387, %v386
      %v389 = vmul.f32 %v388, %v387
      %v390 = vmul.f32 0.5, %v389
      %v391 = vsub.f32 1.5, %v390
      %v392 = vmul.f32 %v387, %v391
      %vm393 = vweird.f32 %v386
      %vm394 = vweird.f32 %v387
      %vm395 = vmor %vm393, %vm394
      %v396 = vsel %vm395, %v387, %v392
      %v398 = vperm.slane %v381, 0
      %v400 = vsub.f32 %v372, %v398
      %v401 = vsub.f32 %v373, %v398
      %v402 = vsub.f32 %v374, %v398
      %v403 = vsub.f32 %v375, %v398
      %v404 = vsub.f32 %v376, %v398
      %v405 = vsub.f32 %v377, %v398
      %v406 = vsub.f32 %v378, %v398
      %v407 = vsub.f32 %v379, %v398
      %v409 = vperm.slane %v396, 0
      %v411 = vmul.f32 %v400, %v409
      %v412 = vmul.f32 %v401, %v409
      %v413 = vmul.f32 %v402, %v409
      %v414 = vmul.f32 %v403, %v409
      %v415 = vmul.f32 %v404, %v409
      %v416 = vmul.f32 %v405, %v409
      %v417 = vmul.f32 %v406, %v409
      %v418 = vmul.f32 %v407, %v409
      %vm419 = vcmp.ge.f32.partialorder %v411, 0.0
      %vm420 = vcmp.ge.f32.partialorder %v412, 0.0
      %vm421 = vcmp.ge.f32.partialorder %v413, 0.0
      %vm422 = vcmp.ge.f32.partialorder %v414, 0.0
      %vm423 = vcmp.ge.f32.partialorder %v415, 0.0
      %vm424 = vcmp.ge.f32.partialorder %v416, 0.0
      %vm425 = vcmp.ge.f32.partialorder %v417, 0.0
      %vm426 = vcmp.ge.f32.partialorder %v418, 0.0
      %v427 = vmul.f32 %v411, 0.01
      %v428 = vmul.f32 %v412, 0.01
      %v429 = vmul.f32 %v413, 0.01
      %v430 = vmul.f32 %v414, 0.01
      %v431 = vmul.f32 %v415, 0.01
      %v432 = vmul.f32 %v416, 0.01
      %v433 = vmul.f32 %v417, 0.01
      %v434 = vmul.f32 %v418, 0.01
      %v435 = vsel %vm419, %v411, %v427
      %v436 = vsel %vm420, %v412, %v428
      %v437 = vsel %vm421, %v413, %v429
      %v438 = vsel %vm422, %v414, %v430
      %v439 = vsel %vm423, %v415, %v431
      %v440 = vsel %vm424, %v416, %v432
      %v441 = vsel %vm425, %v417, %v433
      %v442 = vsel %vm426, %v418, %v434
      %v443 = vpack.c.bf16 %v435, %v435
      %v444 = vpack.c.bf16 %v436, %v436
      %v445 = vpack.c.bf16 %v437, %v437
      %v446 = vpack.c.bf16 %v438, %v438
      %v447 = vpack.c.bf16 %v439, %v439
      %v448 = vpack.c.bf16 %v440, %v440
      %v449 = vpack.c.bf16 %v441, %v441
      %v450 = vpack.c.bf16 %v442, %v442
      %451 = vst [vmem:[%s211] sm:$0xf] %v443
      %452 = vst [vmem:[%s211 + $0x4] sm:$0xf] %v444
      %453 = vst [vmem:[%s211 + $0x8] sm:$0xf] %v445
      %454 = vst [vmem:[%s211 + $0xc] sm:$0xf] %v446
      %455 = vst [vmem:[%s211 + $0x10] sm:$0xf] %v447
      %456 = vst [vmem:[%s211 + $0x14] sm:$0xf] %v448
      %457 = vst [vmem:[%s211 + $0x18] sm:$0xf] %v449
      %458 = vst [vmem:[%s211 + $0x1c] sm:$0xf] %v450
      %s459 = smul.u32 8, %s19
      %p460 = scmp.lt.s32.totalorder %s18, 1
      %s461 = scalar_select %p460, %s18, 1
      %p462 = scmp.lt.s32.totalorder %s459, 7
      %s463 = scalar_select %p462, %s459, 7
      %s464 = smul.addr %s461, 8
      %s465 = sadd.s32 %s463, %s464
      %s466 = smul.addr %s465, 4
      %s467 = scalar_lea.vmem %s3, %s466
      // Predicated region
      $region33: #{deep_svdd_forward.6} parent=31 // pred_check
        %p468 = pneg %p116
      $region34: #{deep_svdd_forward.6} parent=31 // pred_check_branch
        %470 = sbr.rel (%p468) target = $region36
      $region35: #{deep_svdd_forward.6} parent=31 // pred_region
        %s471 = smul.u32 8, %s19
      $region36: #{deep_svdd_forward.6} parent=31 // pred_fallthru
        _
    $region32: #{deep_svdd_forward.6} parent=5 // pred_fallthru
      _
    %p472 = scmp.le.s32.totalorder 2, %s9
    // Predicated region
    $region37: #{deep_svdd_forward.6} parent=5 // pred_check
      %p473 = pneg %p472
    $region38: #{deep_svdd_forward.6} parent=5 // pred_check_branch
      %475 = sbr.rel (%p473) target = $region40
    $region39: #{deep_svdd_forward.6} parent=5 // pred_region
      %s476 = ssub.s32 %s9, 2
      // Predicated region
      $region41: #{deep_svdd_forward.6} parent=39 // pred_check
        %p477 = pneg %p122
      $region42: #{deep_svdd_forward.6} parent=39 // pred_check_branch
        %479 = sbr.rel (%p477) target = $region44
      $region43: #{deep_svdd_forward.6} parent=39 // pred_region
        %s480 = smul.u32 8, %s21
        %p481 = scmp.lt.s32.totalorder %s20, 1
        %s482 = scalar_select %p481, %s20, 1
        %p483 = scmp.lt.s32.totalorder %s480, 7
        %s484 = scalar_select %p483, %s480, 7
        %s485 = smul.addr %s482, 8
        %s486 = sadd.s32 %s484, %s485
        %s487 = smul.addr %s486, 4
        %s488 = scalar_lea.vmem %s3, %s487
      $region44: #{deep_svdd_forward.6} parent=39 // pred_fallthru
        _
    $region40: #{deep_svdd_forward.6} parent=5 // pred_fallthru
      _
  $region6: #{deep_svdd_forward.6} parent=0 // loop_footer
    %s13 = sadd.s32 1, %s9
  $region7: #{deep_svdd_forward.6} parent=0 // loop_footer_branch
    %8 = sbr.rel target = $region3
  $region8: #{deep_svdd_forward.6} parent=0 // loop_exit
    _

// kernel: deep_svdd_forward.5
$region0: #{deep_svdd_forward.5}
  #allocation0 [shape = 'u32[]', space=smem, size = 0x4, offset = 0x4, fixed_abs, tag = 'smem constant byte address 0x4 - core index']
  #allocation1 [shape = 'u32[72,128]{1,0:T(1,128)}', space=vmem, size = 0x9000, scoped, tag = 'internal scratch']
  %s0 = inlined_call_operand.vmem [shape: bf16[2,16,16,15], index: 0, kind: input, shape index: {}]
  %s1 = inlined_call_operand.vmem [shape: bf16[5,15,128], index: 1, kind: input, shape index: {}]
  %s2 = inlined_call_operand.vmem [shape: bf16[2,16,16,128], index: 2, kind: output, shape index: {0}]
  %s3 = inlined_call_operand.vmem [shape: f32[2,1,128], index: 3, kind: output, shape index: {1}]
  %s4 = inlined_call_operand.vmem [shape: f32[2,1,128], index: 4, kind: output, shape index: {2}]
  %5 = xla_tuple %s2, %s3, %s4
  %s6 = sld [smem:[#allocation0]]
  $region61: #{deep_svdd_forward.5} parent=0
    _
  %s8 = ssub.s32 1, %s6
  %s9 = scalar_select 0, %s8, %s6
  loop: start=0, step=1, limit=4
  $region2: #{deep_svdd_forward.5} parent=0 // loop_pre_header
    _
  $region3: #{deep_svdd_forward.5} parent=0 // loop_header
    %s11 = sphi 0, %s15
    %p12 = scmp.ge.s32.totalorder %s11, 4
    %s18 = sphi 0, %s37
    %s19 = sphi 0, %s33
    %s20 = sphi 0, %s29
    %s21 = sphi 0, %s18
    %s22 = sphi 0, %s19
    %s23 = sphi 0, %s20
    %s24 = sphi 0, %s21
    %s25 = sphi 0, %s22
    %s26 = sphi 0, %s23
    %s40 = sphi 0, %s42
    %s43 = sphi 0, %s40
    %s44 = sphi 0, %s43
    %s60 = sphi 0, %s44
    %s66 = sphi 0, %s68
    %s69 = sphi 0, %s66
    %s70 = sphi 0, %s69
    %s86 = sphi 0, %s70
    %s96 = sphi 0, %s98
    %s99 = sphi 0, %s96
    %s100 = sphi 0, %s99
    %s116 = sphi 0, %s100
    %s124 = sphi 0, %s126
    %s127 = sphi 0, %s124
    %s128 = sphi 0, %s127
    %s144 = sphi 0, %s128
    %s152 = sphi 0, %s154
    %s155 = sphi 0, %s152
    %s156 = sphi 0, %s155
    %s172 = sphi 0, %s156
  $region4: #{deep_svdd_forward.5} parent=0 // loop_header_branch
    %14 = sbr.rel (%p12) target = $region8
  $region5: #{deep_svdd_forward.5} parent=0 // loop_body
    %s16 = ssub.s32 %s11, 1
    %s17 = ssub.s32 %s11, 2
    %s27 = sadd.s32 1, %s20
    %p28 = scmp.ge.s32.totalorder %s27, 1
    %s29 = scalar_select %p28, 0, %s27
    %s30 = sadd.s32 1, %s19
    %s31 = scalar_select %p28, %s30, %s19
    %p32 = scmp.ge.s32.totalorder %s31, 2
    %s33 = scalar_select %p32, 0, %s31
    %s34 = sadd.s32 1, %s18
    %s35 = scalar_select %p32, %s34, %s18
    %p36 = scmp.ge.s32.totalorder %s35, 1
    %s37 = scalar_select %p36, 0, %s35
    %s38 = ssub.s32 %s19, %s33
    %p39 = scmp.eq.s32.totalorder %s38, 0
    %s41 = sadd.s32 %s40, 1
    %s42 = scalar_select %p39, %s40, %s41
    %p45 = pneg %p39
    %p46 = scmp.eq.s32.totalorder %s11, 1
    %p47 = por %p45, %p46
    %p48 = scmp.ne.s32.totalorder %s40, %s43
    %p49 = scmp.eq.s32.totalorder %s11, 0
    %p50 = por %p48, %p49
    %p51 = scmp.ne.s32.totalorder %s40, %s43
    %p52 = scmp.eq.s32.totalorder %s16, 1
    %p53 = por %p51, %p52
    %p54 = scmp.ne.s32.totalorder %s43, %s44
    %p55 = scmp.eq.s32.totalorder %s16, 0
    %p56 = por %p54, %p55
    %p57 = scmp.ne.s32.totalorder %s43, %s44
    %p58 = scmp.eq.s32.totalorder %s17, 1
    %p59 = por %p57, %p58
    %p61 = scmp.ne.s32.totalorder %s44, %s60
    %p62 = scmp.eq.s32.totalorder %s17, 0
    %p63 = por %p61, %p62
    %s64 = ssub.s32 %s18, %s37
    %p65 = scmp.eq.s32.totalorder %s64, 0
    %s67 = sadd.s32 %s66, 1
    %s68 = scalar_select %p65, %s66, %s67
    %p71 = pneg %p65
    %p72 = scmp.eq.s32.totalorder %s11, 1
    %p73 = por %p71, %p72
    %p74 = scmp.ne.s32.totalorder %s66, %s69
    %p75 = scmp.eq.s32.totalorder %s11, 0
    %p76 = por %p74, %p75
    %p77 = scmp.ne.s32.totalorder %s66, %s69
    %p78 = scmp.eq.s32.totalorder %s16, 1
    %p79 = por %p77, %p78
    %p80 = scmp.ne.s32.totalorder %s69, %s70
    %p81 = scmp.eq.s32.totalorder %s16, 0
    %p82 = por %p80, %p81
    %p83 = scmp.ne.s32.totalorder %s69, %s70
    %p84 = scmp.eq.s32.totalorder %s17, 1
    %p85 = por %p83, %p84
    %p87 = scmp.ne.s32.totalorder %s70, %s86
    %p88 = scmp.eq.s32.totalorder %s17, 0
    %p89 = por %p87, %p88
    %s90 = ssub.s32 %s19, %s33
    %s91 = ssub.s32 %s20, %s29
    %s92 = sor.u32 %s90, %s91
    %s93 = ssub.s32 %s18, %s37
    %s94 = sor.u32 %s92, %s93
    %p95 = scmp.eq.s32.totalorder %s94, 0
    %s97 = sadd.s32 %s96, 1
    %s98 = scalar_select %p95, %s96, %s97
    %p101 = pneg %p95
    %p102 = scmp.eq.s32.totalorder %s11, 1
    %p103 = por %p101, %p102
    %p104 = scmp.ne.s32.totalorder %s96, %s99
    %p105 = scmp.eq.s32.totalorder %s11, 0
    %p106 = por %p104, %p105
    %p107 = scmp.ne.s32.totalorder %s96, %s99
    %p108 = scmp.eq.s32.totalorder %s16, 1
    %p109 = por %p107, %p108
    %p110 = scmp.ne.s32.totalorder %s99, %s100
    %p111 = scmp.eq.s32.totalorder %s16, 0
    %p112 = por %p110, %p111
    %p113 = scmp.ne.s32.totalorder %s99, %s100
    %p114 = scmp.eq.s32.totalorder %s17, 1
    %p115 = por %p113, %p114
    %p117 = scmp.ne.s32.totalorder %s100, %s116
    %p118 = scmp.eq.s32.totalorder %s17, 0
    %p119 = por %p117, %p118
    %s120 = ssub.s32 %s19, %s33
    %s121 = ssub.s32 %s18, %s37
    %s122 = sor.u32 %s120, %s121
    %p123 = scmp.eq.s32.totalorder %s122, 0
    %s125 = sadd.s32 %s124, 1
    %s126 = scalar_select %p123, %s124, %s125
    %p129 = pneg %p123
    %p130 = scmp.eq.s32.totalorder %s11, 1
    %p131 = por %p129, %p130
    %p132 = scmp.ne.s32.totalorder %s124, %s127
    %p133 = scmp.eq.s32.totalorder %s11, 0
    %p134 = por %p132, %p133
    %p135 = scmp.ne.s32.totalorder %s124, %s127
    %p136 = scmp.eq.s32.totalorder %s16, 1
    %p137 = por %p135, %p136
    %p138 = scmp.ne.s32.totalorder %s127, %s128
    %p139 = scmp.eq.s32.totalorder %s16, 0
    %p140 = por %p138, %p139
    %p141 = scmp.ne.s32.totalorder %s127, %s128
    %p142 = scmp.eq.s32.totalorder %s17, 1
    %p143 = por %p141, %p142
    %p145 = scmp.ne.s32.totalorder %s128, %s144
    %p146 = scmp.eq.s32.totalorder %s17, 0
    %p147 = por %p145, %p146
    %s148 = ssub.s32 %s19, %s33
    %s149 = ssub.s32 %s18, %s37
    %s150 = sor.u32 %s148, %s149
    %p151 = scmp.eq.s32.totalorder %s150, 0
    %s153 = sadd.s32 %s152, 1
    %s154 = scalar_select %p151, %s152, %s153
    %p157 = pneg %p151
    %p158 = scmp.eq.s32.totalorder %s11, 1
    %p159 = por %p157, %p158
    %p160 = scmp.ne.s32.totalorder %s152, %s155
    %p161 = scmp.eq.s32.totalorder %s11, 0
    %p162 = por %p160, %p161
    %p163 = scmp.ne.s32.totalorder %s152, %s155
    %p164 = scmp.eq.s32.totalorder %s16, 1
    %p165 = por %p163, %p164
    %p166 = scmp.ne.s32.totalorder %s155, %s156
    %p167 = scmp.eq.s32.totalorder %s16, 0
    %p168 = por %p166, %p167
    %p169 = scmp.ne.s32.totalorder %s155, %s156
    %p170 = scmp.eq.s32.totalorder %s17, 1
    %p171 = por %p169, %p170
    %p173 = scmp.ne.s32.totalorder %s156, %s172
    %p174 = scmp.eq.s32.totalorder %s17, 0
    %p175 = por %p173, %p174
    %p176 = scmp.le.s32.totalorder 1, %s11
    %p177 = scmp.lt.s32.totalorder %s11, 3
    %p178 = pnand %p176, %p177
    %p179 = pneg %p178
    // Predicated region
    $region9: #{deep_svdd_forward.5} parent=5 // pred_check
      _
    $region10: #{deep_svdd_forward.5} parent=5 // pred_check_branch
      %181 = sbr.rel (%p178) target = $region12
    $region11: #{deep_svdd_forward.5} parent=5 // pred_region
      %s182 = ssub.s32 %s11, 1
      // Predicated region
      $region13: #{deep_svdd_forward.5} parent=11 // pred_check
        %p183 = pneg %p82
      $region14: #{deep_svdd_forward.5} parent=11 // pred_check_branch
        %185 = sbr.rel (%p183) target = $region16
      $region15: #{deep_svdd_forward.5} parent=11 // pred_region
        %p186 = scmp.lt.s32.totalorder %s21, 0
        %s187 = scalar_select %p186, %s21, 0
        %s188 = smul.addr %s187, 4
        %s189 = scalar_lea.vmem %s1, %s188
      $region16: #{deep_svdd_forward.5} parent=11 // pred_fallthru
        _
    $region12: #{deep_svdd_forward.5} parent=5 // pred_fallthru
      _
    %p190 = scmp.lt.s32.totalorder %s11, 2
    // Predicated region
    $region17: #{deep_svdd_forward.5} parent=5 // pred_check
      %p191 = pneg %p190
    $region18: #{deep_svdd_forward.5} parent=5 // pred_check_branch
      %193 = sbr.rel (%p191) target = $region20
    $region19: #{deep_svdd_forward.5} parent=5 // pred_region
      // Predicated region
      $region21: #{deep_svdd_forward.5} parent=19 // pred_check
        %p194 = pneg %p50
      $region22: #{deep_svdd_forward.5} parent=19 // pred_check_branch
        %196 = sbr.rel (%p194) target = $region24
      $region23: #{deep_svdd_forward.5} parent=19 // pred_region
        %p197 = scmp.lt.s32.totalorder %s19, 1
        %s198 = scalar_select %p197, %s19, 1
        %s199 = smul.addr %s198, 32
        %s200 = smul.addr %s199, 4
        %s201 = scalar_lea.vmem %s0, %s200
      $region24: #{deep_svdd_forward.5} parent=19 // pred_fallthru
        _
    $region20: #{deep_svdd_forward.5} parent=5 // pred_fallthru
      _
    %p202 = scmp.le.s32.totalorder 1, %s11
    %p203 = scmp.lt.s32.totalorder %s11, 3
    %p204 = pnand %p202, %p203
    %p205 = pneg %p204
    // Predicated region
    $region25: #{deep_svdd_forward.5} parent=5 // pred_check
      _
    $region26: #{deep_svdd_forward.5} parent=5 // pred_check_branch
      %207 = sbr.rel (%p204) target = $region28
    $region27: #{deep_svdd_forward.5} parent=5 // pred_region
      %s208 = ssub.s32 %s11, 1
      %p209 = scmp.lt.s32.totalorder %s22, 1
      %s210 = scalar_select %p209, %s22, 1
      %s211 = smul.addr %s210, 32
      %s212 = smul.addr %s211, 4
      %s213 = scalar_lea.vmem %s0, %s212
      %p214 = pneg %p56
      %p215 = pneg %p53
      %p216 = scmp.lt.s32.totalorder %s21, 0
      %s217 = scalar_select %p216, %s21, 0
      %s218 = smul.addr %s217, 4
      %s219 = scalar_lea.vmem %s1, %s218
      %p220 = pneg %p82
      %p221 = pneg %p79
      %p222 = pneg %p112
      %p223 = pneg %p109
      %s224 = smul.u32 16, %s23
      %p225 = scmp.lt.s32.totalorder %s22, 1
      %s226 = scalar_select %p225, %s22, 1
      %p227 = scmp.lt.s32.totalorder %s224, 15
      %s228 = scalar_select %p227, %s224, 15
      %p229 = scmp.lt.s32.totalorder %s21, 0
      %s230 = scalar_select %p229, %s21, 0
      %s231 = smul.addr %s228, 2
      %s232 = sadd.s32 %s230, %s231
      %s233 = smul.addr %s226, 32
      %s234 = sadd.s32 %s232, %s233
      %s235 = smul.addr %s234, 4
      %s236 = scalar_lea.vmem %s2, %s235
      %p237 = pneg %p140
      %p238 = pneg %p137
      %p239 = scmp.lt.s32.totalorder %s22, 1
      %s240 = scalar_select %p239, %s22, 1
      %p241 = scmp.lt.s32.totalorder %s21, 0
      %s242 = scalar_select %p241, %s21, 0
      %s243 = sadd.s32 %s242, %s240
      %s244 = scalar_lea.vmem %s3, %s243
      %p245 = pneg %p168
      %p246 = pneg %p165
      %p247 = scmp.lt.s32.totalorder %s22, 1
      %s248 = scalar_select %p247, %s22, 1
      %p249 = scmp.lt.s32.totalorder %s21, 0
      %s250 = scalar_select %p249, %s21, 0
      %s251 = sadd.s32 %s250, %s248
      %s252 = scalar_lea.vmem %s4, %s251
      %p253 = scmp.lt.s32.totalorder %s22, 1
      %s254 = scalar_select %p253, %s22, 1
      %s255 = smul.addr %s254, 32
      %s256 = smul.addr %s255, 4
      %s257 = scalar_lea.vmem %s0, %s256
      %p258 = scmp.lt.s32.totalorder %s21, 0
      %s259 = scalar_select %p258, %s21, 0
      %s260 = smul.addr %s259, 4
      %s261 = scalar_lea.vmem %s1, %s260
      %s262 = smul.u32 16, %s23
      %p263 = scmp.lt.s32.totalorder %s22, 1
      %s264 = scalar_select %p263, %s22, 1
      %p265 = scmp.lt.s32.totalorder %s262, 15
      %s266 = scalar_select %p265, %s262, 15
      %p267 = scmp.lt.s32.totalorder %s21, 0
      %s268 = scalar_select %p267, %s21, 0
      %s269 = smul.addr %s266, 2
      %s270 = sadd.s32 %s268, %s269
      %s271 = smul.addr %s264, 32
      %s272 = sadd.s32 %s270, %s271
      %s273 = smul.addr %s272, 4
      %s274 = scalar_lea.vmem %s2, %s273
      %s275 = smul.u32 16, %s23
      %p276 = scmp.lt.s32.totalorder %s22, 1
      %s277 = scalar_select %p276, %s22, 1
      %p278 = scmp.lt.s32.totalorder %s21, 0
      %s279 = scalar_select %p278, %s21, 0
      %s280 = sadd.s32 %s279, %s277
      %s281 = scalar_lea.vmem %s3, %s280
      %p282 = scmp.lt.s32.totalorder %s22, 1
      %s283 = scalar_select %p282, %s22, 1
      %p284 = scmp.lt.s32.totalorder %s21, 0
      %s285 = scalar_select %p284, %s21, 0
      %s286 = sadd.s32 %s285, %s283
      %s287 = scalar_lea.vmem %s4, %s286
      %s289 = smul.u32 %s23, 16
      %v290 = vlaneseq
      %v291 = vshrl.u32 %v290, 7
      %v292 = vadd.s32 %v291, 8
      %s293 = smul.u32 %s289, 2
      %s294 = smul.addr %s293, 4
      %s295 = scalar_lea.vmem %s257, %s294
      %v296 = vld [vmem:[%s295] sm:$0xf]
      %v297 = vld [vmem:[%s295 + $0x4] sm:$0xf]
      %v298 = vld [vmem:[%s295 + $0x8] sm:$0xf]
      %v299 = vld [vmem:[%s295 + $0xc] sm:$0xf]
      %v300 = vld [vmem:[%s295 + $0x10] sm:$0xf]
      %v301 = vld [vmem:[%s295 + $0x14] sm:$0xf]
      %v302 = vld [vmem:[%s295 + $0x18] sm:$0xf]
      %v303 = vld [vmem:[%s295 + $0x1c] sm:$0xf]
      %v304 = vld [vmem:[%s295 + $0x20] sm:$0xf]
      %v305 = vld [vmem:[%s295 + $0x24] sm:$0xf]
      %v306 = vld [vmem:[%s295 + $0x28] sm:$0xf]
      %v307 = vld [vmem:[%s295 + $0x2c] sm:$0xf]
      %v308 = vld [vmem:[%s295 + $0x30] sm:$0xf]
      %v309 = vld [vmem:[%s295 + $0x34] sm:$0xf]
      %v310 = vld [vmem:[%s295 + $0x38] sm:$0xf]
      %v311 = vld [vmem:[%s295 + $0x3c] sm:$0xf]
      %v312 = vld [vmem:[%s295 + $0x40] sm:$0xf]
      %v313 = vld [vmem:[%s295 + $0x44] sm:$0xf]
      %v314 = vld [vmem:[%s295 + $0x48] sm:$0xf]
      %v315 = vld [vmem:[%s295 + $0x4c] sm:$0xf]
      %v316 = vld [vmem:[%s295 + $0x50] sm:$0xf]
      %v317 = vld [vmem:[%s295 + $0x54] sm:$0xf]
      %v318 = vld [vmem:[%s295 + $0x58] sm:$0xf]
      %v319 = vld [vmem:[%s295 + $0x5c] sm:$0xf]
      %v320 = vld [vmem:[%s295 + $0x60] sm:$0xf]
      %v321 = vld [vmem:[%s295 + $0x64] sm:$0xf]
      %v322 = vld [vmem:[%s295 + $0x68] sm:$0xf]
      %v323 = vld [vmem:[%s295 + $0x6c] sm:$0xf]
      %v324 = vld [vmem:[%s295 + $0x70] sm:$0xf]
      %v325 = vld [vmem:[%s295 + $0x74] sm:$0xf]
      %v326 = vld [vmem:[%s295 + $0x78] sm:$0xf]
      %v327 = vld [vmem:[%s295 + $0x7c] sm:$0xf]
      %v328 = vld [vmem:[%s261] sm:$0xf]
      %v329 = vld [vmem:[%s261 + $0x4] sm:$0xf]
      %v362 = vunpack.c.l.b16 %v296
      %v363 = vunpack.c.l.b16 %v297
      %v364 = vunpack.c.l.b16 %v298
      %v365 = vunpack.c.l.b16 %v299
      %v366 = vunpack.c.l.b16 %v300
      %v367 = vunpack.c.l.b16 %v301
      %v368 = vunpack.c.l.b16 %v302
      %v369 = vunpack.c.l.b16 %v303
      %v370 = vunpack.c.l.b16 %v304
      %v371 = vunpack.c.l.b16 %v305
      %v372 = vunpack.c.l.b16 %v306
      %v373 = vunpack.c.l.b16 %v307
      %v374 = vunpack.c.l.b16 %v308
      %v375 = vunpack.c.l.b16 %v309
      %v376 = vunpack.c.l.b16 %v310
      %v377 = vunpack.c.l.b16 %v311
      %v378 = vunpack.c.l.b16 %v312
      %v379 = vunpack.c.l.b16 %v313
      %v380 = vunpack.c.l.b16 %v314
      %v381 = vunpack.c.l.b16 %v315
      %v382 = vunpack.c.l.b16 %v316
      %v383 = vunpack.c.l.b16 %v317
      %v384 = vunpack.c.l.b16 %v318
      %v385 = vunpack.c.l.b16 %v319
      %v386 = vunpack.c.l.b16 %v320
      %v387 = vunpack.c.l.b16 %v321
      %v388 = vunpack.c.l.b16 %v322
      %v389 = vunpack.c.l.b16 %v323
      %v390 = vunpack.c.l.b16 %v324
      %v391 = vunpack.c.l.b16 %v325
      %v392 = vunpack.c.l.b16 %v326
      %v393 = vunpack.c.l.b16 %v327
      %v394 = vpack.c.b16 %v363, %v362
      %v395 = vpack.c.b16 %v365, %v364
      %v396 = vpack.c.b16 %v367, %v366
      %v397 = vpack.c.b16 %v369, %v368
      %v398 = vpack.c.b16 %v371, %v370
      %v399 = vpack.c.b16 %v373, %v372
      %v400 = vpack.c.b16 %v375, %v374
      %v401 = vpack.c.b16 %v377, %v376
      %v402 = vpack.c.b16 %v379, %v378
      %v403 = vpack.c.b16 %v381, %v380
      %v404 = vpack.c.b16 %v383, %v382
      %v405 = vpack.c.b16 %v385, %v384
      %v406 = vpack.c.b16 %v387, %v386
      %v407 = vpack.c.b16 %v389, %v388
      %v408 = vpack.c.b16 %v391, %v390
      %v409 = vpack.c.b16 %v393, %v392
      %v412 = vunpack.c.l.b16 %v328
      %v413 = vunpack.c.l.b16 %v329
      %v414 = vpack.c.b16 %v413, %v412
      %vm415 = vcmask 121856
      %v417 = vsel %vm415, %v394, 0
      %v420 = vsel %vm415, %v395, 0
      %v423 = vsel %vm415, %v396, 0
      %v426 = vsel %vm415, %v397, 0
      %v429 = vsel %vm415, %v398, 0
      %v432 = vsel %vm415, %v399, 0
      %v435 = vsel %vm415, %v400, 0
      %v438 = vsel %vm415, %v401, 0
      %v441 = vsel %vm415, %v402, 0
      %v444 = vsel %vm415, %v403, 0
      %v447 = vsel %vm415, %v404, 0
      %v450 = vsel %vm415, %v405, 0
      %v453 = vsel %vm415, %v406, 0
      %v456 = vsel %vm415, %v407, 0
      %v459 = vsel %vm415, %v408, 0
      %v462 = vsel %vm415, %v409, 0
      %vm464 = vcmask 1046528
      %vm465 = vcmask 1047552
      %v466 = vsel %vm464, 4294967295, 65535
      %v467 = vsel %vm465, %v466, 0
      %v469 = vand.u32 %v414, %v467
      %471 = vmatpush.bf16.msra.mxu0 0
      %472 = vmatpush.bf16.msra.mxu0 0
      %473 = vmatpush.bf16.msra.mxu0 0
      %474 = vmatpush.bf16.msra.mxu0 0
      %475 = vmatpush.bf16.msra.mxu0 0
      %476 = vmatpush.bf16.msra.mxu0 0
      %477 = vmatpush.bf16.msra.mxu0 0
      %478 = vmatpush.bf16.msra.mxu0 %v469
      %479 = vmatmul.bf16.gmra.mxu0 %v417
      %v480 = vpop.f32.mrf.mxu0
      %v481 = vadd.f32 0.0, %v480
      %v482 = vpop.f32.mrf.mxu0
      %v483 = vadd.f32 0.0, %v482
      %484 = vmatmul.bf16.gmra.mxu0 %v420
      %v485 = vpop.f32.mrf.mxu0
      %v486 = vadd.f32 0.0, %v485
      %v487 = vpop.f32.mrf.mxu0
      %v488 = vadd.f32 0.0, %v487
      %489 = vmatmul.bf16.gmra.mxu0 %v423
      %v490 = vpop.f32.mrf.mxu0
      %v491 = vadd.f32 0.0, %v490
      %v492 = vpop.f32.mrf.mxu0
      %v493 = vadd.f32 0.0, %v492
      %494 = vmatmul.bf16.gmra.mxu0 %v426
      %v495 = vpop.f32.mrf.mxu0
      %v496 = vadd.f32 0.0, %v495
      %v497 = vpop.f32.mrf.mxu0
      %v498 = vadd.f32 0.0, %v497
      %499 = vmatmul.bf16.gmra.mxu0 %v429
      %v500 = vpop.f32.mrf.mxu0
      %v501 = vadd.f32 0.0, %v500
      %v502 = vpop.f32.mrf.mxu0
      %v503 = vadd.f32 0.0, %v502
      %504 = vmatmul.bf16.gmra.mxu0 %v432
      %v505 = vpop.f32.mrf.mxu0
      %v506 = vadd.f32 0.0, %v505
      %v507 = vpop.f32.mrf.mxu0
      %v508 = vadd.f32 0.0, %v507
      %509 = vmatmul.bf16.gmra.mxu0 %v435
      %v510 = vpop.f32.mrf.mxu0
      %v511 = vadd.f32 0.0, %v510
      %v512 = vpop.f32.mrf.mxu0
      %v513 = vadd.f32 0.0, %v512
      %514 = vmatmul.bf16.gmra.mxu0 %v438
      %v515 = vpop.f32.mrf.mxu0
      %v516 = vadd.f32 0.0, %v515
      %v517 = vpop.f32.mrf.mxu0
      %v518 = vadd.f32 0.0, %v517
      %519 = vmatmul.bf16.gmra.mxu0 %v441
      %v520 = vpop.f32.mrf.mxu0
      %v521 = vadd.f32 0.0, %v520
      %v522 = vpop.f32.mrf.mxu0
      %v523 = vadd.f32 0.0, %v522
      %524 = vmatmul.bf16.gmra.mxu0 %v444
      %v525 = vpop.f32.mrf.mxu0
      %v526 = vadd.f32 0.0, %v525
      %v527 = vpop.f32.mrf.mxu0
      %v528 = vadd.f32 0.0, %v527
      %529 = vmatmul.bf16.gmra.mxu0 %v447
      %v530 = vpop.f32.mrf.mxu0
      %v531 = vadd.f32 0.0, %v530
      %v532 = vpop.f32.mrf.mxu0
      %v533 = vadd.f32 0.0, %v532
      %534 = vmatmul.bf16.gmra.mxu0 %v450
      %v535 = vpop.f32.mrf.mxu0
      %v536 = vadd.f32 0.0, %v535
      %v537 = vpop.f32.mrf.mxu0
      %v538 = vadd.f32 0.0, %v537
      %539 = vmatmul.bf16.gmra.mxu0 %v453
      %v540 = vpop.f32.mrf.mxu0
      %v541 = vadd.f32 0.0, %v540
      %v542 = vpop.f32.mrf.mxu0
      %v543 = vadd.f32 0.0, %v542
      %544 = vmatmul.bf16.gmra.mxu0 %v456
      %v545 = vpop.f32.mrf.mxu0
      %v546 = vadd.f32 0.0, %v545
      %v547 = vpop.f32.mrf.mxu0
      %v548 = vadd.f32 0.0, %v547
      %549 = vmatmul.bf16.gmra.mxu0 %v459
      %v550 = vpop.f32.mrf.mxu0
      %v551 = vadd.f32 0.0, %v550
      %v552 = vpop.f32.mrf.mxu0
      %v553 = vadd.f32 0.0, %v552
      %554 = vmatmul.bf16.gmra.mxu0 %v462
      %v555 = vpop.f32.mrf.mxu0
      %v556 = vadd.f32 0.0, %v555
      %v557 = vpop.f32.mrf.mxu0
      %v558 = vadd.f32 0.0, %v557
      %559 = vdwg.mxu0
      %v560 = vrot.slane %v481, 6
      %v561 = vrot.slane %v486, 6
      %v562 = vrot.slane %v491, 6
      %v563 = vrot.slane %v496, 6
      %v564 = vrot.slane %v501, 6
      %v565 = vrot.slane %v506, 6
      %v566 = vrot.slane %v511, 6
      %v567 = vrot.slane %v516, 6
      %v568 = vrot.slane %v521, 6
      %v569 = vrot.slane %v526, 6
      %v570 = vrot.slane %v531, 6
      %v571 = vrot.slane %v536, 6
      %v572 = vrot.slane %v541, 6
      %v573 = vrot.slane %v546, 6
      %v574 = vrot.slane %v551, 6
      %v575 = vrot.slane %v556, 6
      %v576 = vrot.slane %v483, 6
      %v577 = vrot.slane %v488, 6
      %v578 = vrot.slane %v493, 6
      %v579 = vrot.slane %v498, 6
      %v580 = vrot.slane %v503, 6
      %v581 = vrot.slane %v508, 6
      %v582 = vrot.slane %v513, 6
      %v583 = vrot.slane %v518, 6
      %v584 = vrot.slane %v523, 6
      %v585 = vrot.slane %v528, 6
      %v586 = vrot.slane %v533, 6
      %v587 = vrot.slane %v538, 6
      %v588 = vrot.slane %v543, 6
      %v589 = vrot.slane %v548, 6
      %v590 = vrot.slane %v553, 6
      %v591 = vrot.slane %v558, 6
      %vm592 = vcmp.lt.s32.totalorder %v291, 2
      %v593 = vsel %vm592, %v560, %v576
      %v594 = vsel %vm592, %v561, %v577
      %v595 = vsel %vm592, %v562, %v578
      %v596 = vsel %vm592, %v563, %v579
      %v597 = vsel %vm592, %v564, %v580
      %v598 = vsel %vm592, %v565, %v581
      %v599 = vsel %vm592, %v566, %v582
      %v600 = vsel %vm592, %v567, %v583
      %v601 = vsel %vm592, %v568, %v584
      %v602 = vsel %vm592, %v569, %v585
      %v603 = vsel %vm592, %v570, %v586
      %v604 = vsel %vm592, %v571, %v587
      %v605 = vsel %vm592, %v572, %v588
      %v606 = vsel %vm592, %v573, %v589
      %v607 = vsel %vm592, %v574, %v590
      %v608 = vsel %vm592, %v575, %v591
      %v609 = vsel %vm592, %v576, %v560
      %v610 = vsel %vm592, %v577, %v561
      %v611 = vsel %vm592, %v578, %v562
      %v612 = vsel %vm592, %v579, %v563
      %v613 = vsel %vm592, %v580, %v564
      %v614 = vsel %vm592, %v581, %v565
      %v615 = vsel %vm592, %v582, %v566
      %v616 = vsel %vm592, %v583, %v567
      %v617 = vsel %vm592, %v584, %v568
      %v618 = vsel %vm592, %v585, %v569
      %v619 = vsel %vm592, %v586, %v570
      %v620 = vsel %vm592, %v587, %v571
      %v621 = vsel %vm592, %v588, %v572
      %v622 = vsel %vm592, %v589, %v573
      %v623 = vsel %vm592, %v590, %v574
      %v624 = vsel %vm592, %v591, %v575
      %vm625 = vcmp.ge.s32.totalorder %v291, 2
      %vm626 = vcmp.ge.s32.totalorder %v292, 2
      %v627 = vsel %vm625, 1, 0
      %v628 = vsel %vm626, 1, 0
      %vm629 = vcmp.eq.s32.totalorder %v627, 1
      %vm630 = vcmp.eq.s32.totalorder %v628, 1
      %v631 = vsel %vm629, %v609, 0.0
      %v632 = vsel %vm630, %v593, 0.0
      %v633 = vsel %vm629, %v610, 0.0
      %v634 = vsel %vm630, %v594, 0.0
      %v635 = vsel %vm629, %v611, 0.0
      %v636 = vsel %vm630, %v595, 0.0
      %v637 = vsel %vm629, %v612, 0.0
      %v638 = vsel %vm630, %v596, 0.0
      %v639 = vsel %vm629, %v613, 0.0
      %v640 = vsel %vm630, %v597, 0.0
      %v641 = vsel %vm629, %v614, 0.0
      %v642 = vsel %vm630, %v598, 0.0
      %v643 = vsel %vm629, %v615, 0.0
      %v644 = vsel %vm630, %v599, 0.0
      %v645 = vsel %vm629, %v616, 0.0
      %v646 = vsel %vm630, %v600, 0.0
      %v647 = vsel %vm629, %v617, 0.0
      %v648 = vsel %vm630, %v601, 0.0
      %v649 = vsel %vm629, %v618, 0.0
      %v650 = vsel %vm630, %v602, 0.0
      %v651 = vsel %vm629, %v619, 0.0
      %v652 = vsel %vm630, %v603, 0.0
      %v653 = vsel %vm629, %v620, 0.0
      %v654 = vsel %vm630, %v604, 0.0
      %v655 = vsel %vm629, %v621, 0.0
      %v656 = vsel %vm630, %v605, 0.0
      %v657 = vsel %vm629, %v622, 0.0
      %v658 = vsel %vm630, %v606, 0.0
      %v659 = vsel %vm629, %v623, 0.0
      %v660 = vsel %vm630, %v607, 0.0
      %v661 = vsel %vm629, %v624, 0.0
      %v662 = vsel %vm630, %v608, 0.0
      %s663 = scalar_lea.vmem %s261, 8
      %v664 = vld [vmem:[%s663] sm:$0xf]
      %v665 = vld [vmem:[%s663 + $0x4] sm:$0xf]
      %v668 = vunpack.c.l.b16 %v664
      %v669 = vunpack.c.l.b16 %v665
      %v670 = vpack.c.b16 %v669, %v668
      %v672 = vand.u32 %v670, %v467
      %674 = vmatpush.bf16.msra.mxu0 0
      %675 = vmatpush.bf16.msra.mxu0 0
      %676 = vmatpush.bf16.msra.mxu0 0
      %677 = vmatpush.bf16.msra.mxu0 0
      %678 = vmatpush.bf16.msra.mxu0 0
      %679 = vmatpush.bf16.msra.mxu0 0
      %680 = vmatpush.bf16.msra.mxu0 0
      %681 = vmatpush.bf16.msra.mxu0 %v672
      %682 = vmatmul.bf16.gmra.mxu0 %v417
      %v683 = vpop.f32.mrf.mxu0
      %v684 = vadd.f32 0.0, %v683
      %v685 = vpop.f32.mrf.mxu0
      %v686 = vadd.f32 0.0, %v685
      %687 = vmatmul.bf16.gmra.mxu0 %v420
      %v688 = vpop.f32.mrf.mxu0
      %v689 = vadd.f32 0.0, %v688
      %v690 = vpop.f32.mrf.mxu0
      %v691 = vadd.f32 0.0, %v690
      %692 = vmatmul.bf16.gmra.mxu0 %v423
      %v693 = vpop.f32.mrf.mxu0
      %v694 = vadd.f32 0.0, %v693
      %v695 = vpop.f32.mrf.mxu0
      %v696 = vadd.f32 0.0, %v695
      %697 = vmatmul.bf16.gmra.mxu0 %v426
      %v698 = vpop.f32.mrf.mxu0
      %v699 = vadd.f32 0.0, %v698
      %v700 = vpop.f32.mrf.mxu0
      %v701 = vadd.f32 0.0, %v700
      %702 = vmatmul.bf16.gmra.mxu0 %v429
      %v703 = vpop.f32.mrf.mxu0
      %v704 = vadd.f32 0.0, %v703
      %v705 = vpop.f32.mrf.mxu0
      %v706 = vadd.f32 0.0, %v705
      %707 = vmatmul.bf16.gmra.mxu0 %v432
      %v708 = vpop.f32.mrf.mxu0
      %v709 = vadd.f32 0.0, %v708
      %v710 = vpop.f32.mrf.mxu0
      %v711 = vadd.f32 0.0, %v710
      %712 = vmatmul.bf16.gmra.mxu0 %v435
      %v713 = vpop.f32.mrf.mxu0
      %v714 = vadd.f32 0.0, %v713
      %v715 = vpop.f32.mrf.mxu0
      %v716 = vadd.f32 0.0, %v715
      %717 = vmatmul.bf16.gmra.mxu0 %v438
      %v718 = vpop.f32.mrf.mxu0
      %v719 = vadd.f32 0.0, %v718
      %v720 = vpop.f32.mrf.mxu0
      %v721 = vadd.f32 0.0, %v720
      %722 = vmatmul.bf16.gmra.mxu0 %v441
      %v723 = vpop.f32.mrf.mxu0
      %v724 = vadd.f32 0.0, %v723
      %v725 = vpop.f32.mrf.mxu0
      %v726 = vadd.f32 0.0, %v725
      %727 = vmatmul.bf16.gmra.mxu0 %v444
      %v728 = vpop.f32.mrf.mxu0
      %v729 = vadd.f32 0.0, %v728
      %v730 = vpop.f32.mrf.mxu0
      %v731 = vadd.f32 0.0, %v730
      %732 = vmatmul.bf16.gmra.mxu0 %v447
      %v733 = vpop.f32.mrf.mxu0
      %v734 = vadd.f32 0.0, %v733
      %v735 = vpop.f32.mrf.mxu0
      %v736 = vadd.f32 0.0, %v735
      %737 = vmatmul.bf16.gmra.mxu0 %v450
      %v738 = vpop.f32.mrf.mxu0
      %v739 = vadd.f32 0.0, %v738
      %v740 = vpop.f32.mrf.mxu0
      %v741 = vadd.f32 0.0, %v740
      %742 = vmatmul.bf16.gmra.mxu0 %v453
      %v743 = vpop.f32.mrf.mxu0
      %v744 = vadd.f32 0.0, %v743
      %v745 = vpop.f32.mrf.mxu0
      %v746 = vadd.f32 0.0, %v745
      %747 = vmatmul.bf16.gmra.mxu0 %v456
      %v748 = vpop.f32.mrf.mxu0
      %v749 = vadd.f32 0.0, %v748
      %v750 = vpop.f32.mrf.mxu0
      %v751 = vadd.f32 0.0, %v750
      %752 = vmatmul.bf16.gmra.mxu0 %v459
      %v753 = vpop.f32.mrf.mxu0
      %v754 = vadd.f32 0.0, %v753
      %v755 = vpop.f32.mrf.mxu0
      %v756 = vadd.f32 0.0, %v755
      %757 = vmatmul.bf16.gmra.mxu0 %v462
      %v758 = vpop.f32.mrf.mxu0
      %v759 = vadd.f32 0.0, %v758
      %v760 = vpop.f32.mrf.mxu0
      %v761 = vadd.f32 0.0, %v760
      %762 = vdwg.mxu0
      %v763 = vrot.slane %v684, 7
      %v764 = vrot.slane %v689, 7
      %v765 = vrot.slane %v694, 7
      %v766 = vrot.slane %v699, 7
      %v767 = vrot.slane %v704, 7
      %v768 = vrot.slane %v709, 7
      %v769 = vrot.slane %v714, 7
      %v770 = vrot.slane %v719, 7
      %v771 = vrot.slane %v724, 7
      %v772 = vrot.slane %v729, 7
      %v773 = vrot.slane %v734, 7
      %v774 = vrot.slane %v739, 7
      %v775 = vrot.slane %v744, 7
      %v776 = vrot.slane %v749, 7
      %v777 = vrot.slane %v754, 7
      %v778 = vrot.slane %v759, 7
      %v779 = vrot.slane %v686, 7
      %v780 = vrot.slane %v691, 7
      %v781 = vrot.slane %v696, 7
      %v782 = vrot.slane %v701, 7
      %v783 = vrot.slane %v706, 7
      %v784 = vrot.slane %v711, 7
      %v785 = vrot.slane %v716, 7
      %v786 = vrot.slane %v721, 7
      %v787 = vrot.slane %v726, 7
      %v788 = vrot.slane %v731, 7
      %v789 = vrot.slane %v736, 7
      %v790 = vrot.slane %v741, 7
      %v791 = vrot.slane %v746, 7
      %v792 = vrot.slane %v751, 7
      %v793 = vrot.slane %v756, 7
      %v794 = vrot.slane %v761, 7
      %vm795 = vcmp.lt.s32.totalorder %v291, 1
      %v796 = vsel %vm795, %v763, %v779
      %v797 = vsel %vm795, %v764, %v780
      %v798 = vsel %vm795, %v765, %v781
      %v799 = vsel %vm795, %v766, %v782
      %v800 = vsel %vm795, %v767, %v783
      %v801 = vsel %vm795, %v768, %v784
      %v802 = vsel %vm795, %v769, %v785
      %v803 = vsel %vm795, %v770, %v786
      %v804 = vsel %vm795, %v771, %v787
      %v805 = vsel %vm795, %v772, %v788
      %v806 = vsel %vm795, %v773, %v789
      %v807 = vsel %vm795, %v774, %v790
      %v808 = vsel %vm795, %v775, %v791
      %v809 = vsel %vm795, %v776, %v792
      %v810 = vsel %vm795, %v777, %v793
      %v811 = vsel %vm795, %v778, %v794
      %v812 = vsel %vm795, %v779, %v763
      %v813 = vsel %vm795, %v780, %v764
      %v814 = vsel %vm795, %v781, %v765
      %v815 = vsel %vm795, %v782, %v766
      %v816 = vsel %vm795, %v783, %v767
      %v817 = vsel %vm795, %v784, %v768
      %v818 = vsel %vm795, %v785, %v769
      %v819 = vsel %vm795, %v786, %v770
      %v820 = vsel %vm795, %v787, %v771
      %v821 = vsel %vm795, %v788, %v772
      %v822 = vsel %vm795, %v789, %v773
      %v823 = vsel %vm795, %v790, %v774
      %v824 = vsel %vm795, %v791, %v775
      %v825 = vsel %vm795, %v792, %v776
      %v826 = vsel %vm795, %v793, %v777
      %v827 = vsel %vm795, %v794, %v778
      %vm828 = vcmp.ge.s32.totalorder %v291, 1
      %vm829 = vcmp.ge.s32.totalorder %v292, 1
      %v830 = vsel %vm828, 1, 0
      %v831 = vsel %vm829, 1, 0
      %vm832 = vcmp.eq.s32.totalorder %v830, 1
      %vm833 = vcmp.eq.s32.totalorder %v831, 1
      %v834 = vsel %vm832, %v812, 0.0
      %v835 = vsel %vm833, %v796, 0.0
      %v836 = vsel %vm832, %v813, 0.0
      %v837 = vsel %vm833, %v797, 0.0
      %v838 = vsel %vm832, %v814, 0.0
      %v839 = vsel %vm833, %v798, 0.0
      %v840 = vsel %vm832, %v815, 0.0
      %v841 = vsel %vm833, %v799, 0.0
      %v842 = vsel %vm832, %v816, 0.0
      %v843 = vsel %vm833, %v800, 0.0
      %v844 = vsel %vm832, %v817, 0.0
      %v845 = vsel %vm833, %v801, 0.0
      %v846 = vsel %vm832, %v818, 0.0
      %v847 = vsel %vm833, %v802, 0.0
      %v848 = vsel %vm832, %v819, 0.0
      %v849 = vsel %vm833, %v803, 0.0
      %v850 = vsel %vm832, %v820, 0.0
      %v851 = vsel %vm833, %v804, 0.0
      %v852 = vsel %vm832, %v821, 0.0
      %v853 = vsel %vm833, %v805, 0.0
      %v854 = vsel %vm832, %v822, 0.0
      %v855 = vsel %vm833, %v806, 0.0
      %v856 = vsel %vm832, %v823, 0.0
      %v857 = vsel %vm833, %v807, 0.0
      %v858 = vsel %vm832, %v824, 0.0
      %v859 = vsel %vm833, %v808, 0.0
      %v860 = vsel %vm832, %v825, 0.0
      %v861 = vsel %vm833, %v809, 0.0
      %v862 = vsel %vm832, %v826, 0.0
      %v863 = vsel %vm833, %v810, 0.0
      %v864 = vsel %vm832, %v827, 0.0
      %v865 = vsel %vm833, %v811, 0.0
      %v866 = vadd.f32 %v631, %v834
      %v867 = vadd.f32 %v632, %v835
      %v868 = vadd.f32 %v633, %v836
      %v869 = vadd.f32 %v634, %v837
      %v870 = vadd.f32 %v635, %v838
      %v871 = vadd.f32 %v636, %v839
      %v872 = vadd.f32 %v637, %v840
      %v873 = vadd.f32 %v638, %v841
      %v874 = vadd.f32 %v639, %v842
      %v875 = vadd.f32 %v640, %v843
      %v876 = vadd.f32 %v641, %v844
      %v877 = vadd.f32 %v642, %v845
      %v878 = vadd.f32 %v643, %v846
      %v879 = vadd.f32 %v644, %v847
      %v880 = vadd.f32 %v645, %v848
      %v881 = vadd.f32 %v646, %v849
      %v882 = vadd.f32 %v647, %v850
      %v883 = vadd.f32 %v648, %v851
      %v884 = vadd.f32 %v649, %v852
      %v885 = vadd.f32 %v650, %v853
      %v886 = vadd.f32 %v651, %v854
      %v887 = vadd.f32 %v652, %v855
      %v888 = vadd.f32 %v653, %v856
      %v889 = vadd.f32 %v654, %v857
      %v890 = vadd.f32 %v655, %v858
      %v891 = vadd.f32 %v656, %v859
      %v892 = vadd.f32 %v657, %v860
      %v893 = vadd.f32 %v658, %v861
      %v894 = vadd.f32 %v659, %v862
      %v895 = vadd.f32 %v660, %v863
      %v896 = vadd.f32 %v661, %v864
      %v897 = vadd.f32 %v662, %v865
      %s898 = scalar_lea.vmem %s261, 16
      %v899 = vld [vmem:[%s898] sm:$0xf]
      %v900 = vld [vmem:[%s898 + $0x4] sm:$0xf]
      %v903 = vunpack.c.l.b16 %v899
      %v904 = vunpack.c.l.b16 %v900
      %v905 = vpack.c.b16 %v904, %v903
      %v907 = vand.u32 %v905, %v467
      %909 = vmatpush.bf16.msra.mxu0 0
      %910 = vmatpush.bf16.msra.mxu0 0
      %911 = vmatpush.bf16.msra.mxu0 0
      %912 = vmatpush.bf16.msra.mxu0 0
      %913 = vmatpush.bf16.msra.mxu0 0
      %914 = vmatpush.bf16.msra.mxu0 0
      %915 = vmatpush.bf16.msra.mxu0 0
      %916 = vmatpush.bf16.msra.mxu0 %v907
      %917 = vmatmul.bf16.gmra.mxu0 %v417
      %v918 = vpop.f32.mrf.mxu0
      %v919 = vadd.f32 0.0, %v918
      %v920 = vpop.f32.mrf.mxu0
      %v921 = vadd.f32 0.0, %v920
      %922 = vmatmul.bf16.gmra.mxu0 %v420
      %v923 = vpop.f32.mrf.mxu0
      %v924 = vadd.f32 0.0, %v923
      %v925 = vpop.f32.mrf.mxu0
      %v926 = vadd.f32 0.0, %v925
      %927 = vmatmul.bf16.gmra.mxu0 %v423
      %v928 = vpop.f32.mrf.mxu0
      %v929 = vadd.f32 0.0, %v928
      %v930 = vpop.f32.mrf.mxu0
      %v931 = vadd.f32 0.0, %v930
      %932 = vmatmul.bf16.gmra.mxu0 %v426
      %v933 = vpop.f32.mrf.mxu0
      %v934 = vadd.f32 0.0, %v933
      %v935 = vpop.f32.mrf.mxu0
      %v936 = vadd.f32 0.0, %v935
      %937 = vmatmul.bf16.gmra.mxu0 %v429
      %v938 = vpop.f32.mrf.mxu0
      %v939 = vadd.f32 0.0, %v938
      %v940 = vpop.f32.mrf.mxu0
      %v941 = vadd.f32 0.0, %v940
      %942 = vmatmul.bf16.gmra.mxu0 %v432
      %v943 = vpop.f32.mrf.mxu0
      %v944 = vadd.f32 0.0, %v943
      %v945 = vpop.f32.mrf.mxu0
      %v946 = vadd.f32 0.0, %v945
      %947 = vmatmul.bf16.gmra.mxu0 %v435
      %v948 = vpop.f32.mrf.mxu0
      %v949 = vadd.f32 0.0, %v948
      %v950 = vpop.f32.mrf.mxu0
      %v951 = vadd.f32 0.0, %v950
      %952 = vmatmul.bf16.gmra.mxu0 %v438
      %v953 = vpop.f32.mrf.mxu0
      %v954 = vadd.f32 0.0, %v953
      %v955 = vpop.f32.mrf.mxu0
      %v956 = vadd.f32 0.0, %v955
      %957 = vmatmul.bf16.gmra.mxu0 %v441
      %v958 = vpop.f32.mrf.mxu0
      %v959 = vadd.f32 0.0, %v958
      %v960 = vpop.f32.mrf.mxu0
      %v961 = vadd.f32 0.0, %v960
      %962 = vmatmul.bf16.gmra.mxu0 %v444
      %v963 = vpop.f32.mrf.mxu0
      %v964 = vadd.f32 0.0, %v963
      %v965 = vpop.f32.mrf.mxu0
      %v966 = vadd.f32 0.0, %v965
      %967 = vmatmul.bf16.gmra.mxu0 %v447
      %v968 = vpop.f32.mrf.mxu0
      %v969 = vadd.f32 0.0, %v968
      %v970 = vpop.f32.mrf.mxu0
      %v971 = vadd.f32 0.0, %v970
      %972 = vmatmul.bf16.gmra.mxu0 %v450
      %v973 = vpop.f32.mrf.mxu0
      %v974 = vadd.f32 0.0, %v973
      %v975 = vpop.f32.mrf.mxu0
      %v976 = vadd.f32 0.0, %v975
      %977 = vmatmul.bf16.gmra.mxu0 %v453
      %v978 = vpop.f32.mrf.mxu0
      %v979 = vadd.f32 0.0, %v978
      %v980 = vpop.f32.mrf.mxu0
      %v981 = vadd.f32 0.0, %v980
      %982 = vmatmul.bf16.gmra.mxu0 %v456
      %v983 = vpop.f32.mrf.mxu0
      %v984 = vadd.f32 0.0, %v983
      %v985 = vpop.f32.mrf.mxu0
      %v986 = vadd.f32 0.0, %v985
      %987 = vmatmul.bf16.gmra.mxu0 %v459
      %v988 = vpop.f32.mrf.mxu0
      %v989 = vadd.f32 0.0, %v988
      %v990 = vpop.f32.mrf.mxu0
      %v991 = vadd.f32 0.0, %v990
      %992 = vmatmul.bf16.gmra.mxu0 %v462
      %v993 = vpop.f32.mrf.mxu0
      %v994 = vadd.f32 0.0, %v993
      %v995 = vpop.f32.mrf.mxu0
      %v996 = vadd.f32 0.0, %v995
      %997 = vdwg.mxu0
      %v998 = vadd.f32 %v866, %v919
      %v999 = vadd.f32 %v867, %v921
      %v1000 = vadd.f32 %v868, %v924
      %v1001 = vadd.f32 %v869, %v926
      %v1002 = vadd.f32 %v870, %v929
      %v1003 = vadd.f32 %v871, %v931
      %v1004 = vadd.f32 %v872, %v934
      %v1005 = vadd.f32 %v873, %v936
      %v1006 = vadd.f32 %v874, %v939
      %v1007 = vadd.f32 %v875, %v941
      %v1008 = vadd.f32 %v876, %v944
      %v1009 = vadd.f32 %v877, %v946
      %v1010 = vadd.f32 %v878, %v949
      %v1011 = vadd.f32 %v879, %v951
      %v1012 = vadd.f32 %v880, %v954
      %v1013 = vadd.f32 %v881, %v956
      %v1014 = vadd.f32 %v882, %v959
      %v1015 = vadd.f32 %v883, %v961
      %v1016 = vadd.f32 %v884, %v964
      %v1017 = vadd.f32 %v885, %v966
      %v1018 = vadd.f32 %v886, %v969
      %v1019 = vadd.f32 %v887, %v971
      %v1020 = vadd.f32 %v888, %v974
      %v1021 = vadd.f32 %v889, %v976
      %v1022 = vadd.f32 %v890, %v979
      %v1023 = vadd.f32 %v891, %v981
      %v1024 = vadd.f32 %v892, %v984
      %v1025 = vadd.f32 %v893, %v986
      %v1026 = vadd.f32 %v894, %v989
      %v1027 = vadd.f32 %v895, %v991
      %v1028 = vadd.f32 %v896, %v994
      %v1029 = vadd.f32 %v897, %v996
      %s1030 = scalar_lea.vmem %s261, 24
      %v1031 = vld [vmem:[%s1030] sm:$0xf]
      %v1032 = vld [vmem:[%s1030 + $0x4] sm:$0xf]
      %v1035 = vunpack.c.l.b16 %v1031
      %v1036 = vunpack.c.l.b16 %v1032
      %v1037 = vpack.c.b16 %v1036, %v1035
      %v1039 = vand.u32 %v1037, %v467
      %1041 = vmatpush.bf16.msra.mxu0 0
      %1042 = vmatpush.bf16.msra.mxu0 0
      %1043 = vmatpush.bf16.msra.mxu0 0
      %1044 = vmatpush.bf16.msra.mxu0 0
      %1045 = vmatpush.bf16.msra.mxu0 0
      %1046 = vmatpush.bf16.msra.mxu0 0
      %1047 = vmatpush.bf16.msra.mxu0 0
      %1048 = vmatpush.bf16.msra.mxu0 %v1039
      %1049 = vmatmul.bf16.gmra.mxu0 %v417
      %v1050 = vpop.f32.mrf.mxu0
      %v1051 = vadd.f32 0.0, %v1050
      %v1052 = vpop.f32.mrf.mxu0
      %v1053 = vadd.f32 0.0, %v1052
      %1054 = vmatmul.bf16.gmra.mxu0 %v420
      %v1055 = vpop.f32.mrf.mxu0
      %v1056 = vadd.f32 0.0, %v1055
      %v1057 = vpop.f32.mrf.mxu0
      %v1058 = vadd.f32 0.0, %v1057
      %1059 = vmatmul.bf16.gmra.mxu0 %v423
      %v1060 = vpop.f32.mrf.mxu0
      %v1061 = vadd.f32 0.0, %v1060
      %v1062 = vpop.f32.mrf.mxu0
      %v1063 = vadd.f32 0.0, %v1062
      %1064 = vmatmul.bf16.gmra.mxu0 %v426
      %v1065 = vpop.f32.mrf.mxu0
      %v1066 = vadd.f32 0.0, %v1065
      %v1067 = vpop.f32.mrf.mxu0
      %v1068 = vadd.f32 0.0, %v1067
      %1069 = vmatmul.bf16.gmra.mxu0 %v429
      %v1070 = vpop.f32.mrf.mxu0
      %v1071 = vadd.f32 0.0, %v1070
      %v1072 = vpop.f32.mrf.mxu0
      %v1073 = vadd.f32 0.0, %v1072
      %1074 = vmatmul.bf16.gmra.mxu0 %v432
      %v1075 = vpop.f32.mrf.mxu0
      %v1076 = vadd.f32 0.0, %v1075
      %v1077 = vpop.f32.mrf.mxu0
      %v1078 = vadd.f32 0.0, %v1077
      %1079 = vmatmul.bf16.gmra.mxu0 %v435
      %v1080 = vpop.f32.mrf.mxu0
      %v1081 = vadd.f32 0.0, %v1080
      %v1082 = vpop.f32.mrf.mxu0
      %v1083 = vadd.f32 0.0, %v1082
      %1084 = vmatmul.bf16.gmra.mxu0 %v438
      %v1085 = vpop.f32.mrf.mxu0
      %v1086 = vadd.f32 0.0, %v1085
      %v1087 = vpop.f32.mrf.mxu0
      %v1088 = vadd.f32 0.0, %v1087
      %1089 = vmatmul.bf16.gmra.mxu0 %v441
      %v1090 = vpop.f32.mrf.mxu0
      %v1091 = vadd.f32 0.0, %v1090
      %v1092 = vpop.f32.mrf.mxu0
      %v1093 = vadd.f32 0.0, %v1092
      %1094 = vmatmul.bf16.gmra.mxu0 %v444
      %v1095 = vpop.f32.mrf.mxu0
      %v1096 = vadd.f32 0.0, %v1095
      %v1097 = vpop.f32.mrf.mxu0
      %v1098 = vadd.f32 0.0, %v1097
      %1099 = vmatmul.bf16.gmra.mxu0 %v447
      %v1100 = vpop.f32.mrf.mxu0
      %v1101 = vadd.f32 0.0, %v1100
      %v1102 = vpop.f32.mrf.mxu0
      %v1103 = vadd.f32 0.0, %v1102
      %1104 = vmatmul.bf16.gmra.mxu0 %v450
      %v1105 = vpop.f32.mrf.mxu0
      %v1106 = vadd.f32 0.0, %v1105
      %v1107 = vpop.f32.mrf.mxu0
      %v1108 = vadd.f32 0.0, %v1107
      %1109 = vmatmul.bf16.gmra.mxu0 %v453
      %v1110 = vpop.f32.mrf.mxu0
      %v1111 = vadd.f32 0.0, %v1110
      %v1112 = vpop.f32.mrf.mxu0
      %v1113 = vadd.f32 0.0, %v1112
      %1114 = vmatmul.bf16.gmra.mxu0 %v456
      %v1115 = vpop.f32.mrf.mxu0
      %v1116 = vadd.f32 0.0, %v1115
      %v1117 = vpop.f32.mrf.mxu0
      %v1118 = vadd.f32 0.0, %v1117
      %1119 = vmatmul.bf16.gmra.mxu0 %v459
      %v1120 = vpop.f32.mrf.mxu0
      %v1121 = vadd.f32 0.0, %v1120
      %v1122 = vpop.f32.mrf.mxu0
      %v1123 = vadd.f32 0.0, %v1122
      %1124 = vmatmul.bf16.gmra.mxu0 %v462
      %v1125 = vpop.f32.mrf.mxu0
      %v1126 = vadd.f32 0.0, %v1125
      %v1127 = vpop.f32.mrf.mxu0
      %v1128 = vadd.f32 0.0, %v1127
      %1129 = vdwg.mxu0
      %v1130 = vrot.slane %v1051, 1
      %v1131 = vrot.slane %v1056, 1
      %v1132 = vrot.slane %v1061, 1
      %v1133 = vrot.slane %v1066, 1
      %v1134 = vrot.slane %v1071, 1
      %v1135 = vrot.slane %v1076, 1
      %v1136 = vrot.slane %v1081, 1
      %v1137 = vrot.slane %v1086, 1
      %v1138 = vrot.slane %v1091, 1
      %v1139 = vrot.slane %v1096, 1
      %v1140 = vrot.slane %v1101, 1
      %v1141 = vrot.slane %v1106, 1
      %v1142 = vrot.slane %v1111, 1
      %v1143 = vrot.slane %v1116, 1
      %v1144 = vrot.slane %v1121, 1
      %v1145 = vrot.slane %v1126, 1
      %v1146 = vrot.slane %v1053, 1
      %v1147 = vrot.slane %v1058, 1
      %v1148 = vrot.slane %v1063, 1
      %v1149 = vrot.slane %v1068, 1
      %v1150 = vrot.slane %v1073, 1
      %v1151 = vrot.slane %v1078, 1
      %v1152 = vrot.slane %v1083, 1
      %v1153 = vrot.slane %v1088, 1
      %v1154 = vrot.slane %v1093, 1
      %v1155 = vrot.slane %v1098, 1
      %v1156 = vrot.slane %v1103, 1
      %v1157 = vrot.slane %v1108, 1
      %v1158 = vrot.slane %v1113, 1
      %v1159 = vrot.slane %v1118, 1
      %v1160 = vrot.slane %v1123, 1
      %v1161 = vrot.slane %v1128, 1
      %vm1162 = vcmp.lt.s32.totalorder %v291, 7
      %v1163 = vsel %vm1162, %v1130, %v1146
      %v1164 = vsel %vm1162, %v1131, %v1147
      %v1165 = vsel %vm1162, %v1132, %v1148
      %v1166 = vsel %vm1162, %v1133, %v1149
      %v1167 = vsel %vm1162, %v1134, %v1150
      %v1168 = vsel %vm1162, %v1135, %v1151
      %v1169 = vsel %vm1162, %v1136, %v1152
      %v1170 = vsel %vm1162, %v1137, %v1153
      %v1171 = vsel %vm1162, %v1138, %v1154
      %v1172 = vsel %vm1162, %v1139, %v1155
      %v1173 = vsel %vm1162, %v1140, %v1156
      %v1174 = vsel %vm1162, %v1141, %v1157
      %v1175 = vsel %vm1162, %v1142, %v1158
      %v1176 = vsel %vm1162, %v1143, %v1159
      %v1177 = vsel %vm1162, %v1144, %v1160
      %v1178 = vsel %vm1162, %v1145, %v1161
      %v1179 = vsel %vm1162, %v1146, %v1130
      %v1180 = vsel %vm1162, %v1147, %v1131
      %v1181 = vsel %vm1162, %v1148, %v1132
      %v1182 = vsel %vm1162, %v1149, %v1133
      %v1183 = vsel %vm1162, %v1150, %v1134
      %v1184 = vsel %vm1162, %v1151, %v1135
      %v1185 = vsel %vm1162, %v1152, %v1136
      %v1186 = vsel %vm1162, %v1153, %v1137
      %v1187 = vsel %vm1162, %v1154, %v1138
      %v1188 = vsel %vm1162, %v1155, %v1139
      %v1189 = vsel %vm1162, %v1156, %v1140
      %v1190 = vsel %vm1162, %v1157, %v1141
      %v1191 = vsel %vm1162, %v1158, %v1142
      %v1192 = vsel %vm1162, %v1159, %v1143
      %v1193 = vsel %vm1162, %v1160, %v1144
      %v1194 = vsel %vm1162, %v1161, %v1145
      %vm1195 = vcmp.lt.s32.totalorder %v291, 15
      %vm1196 = vcmp.lt.s32.totalorder %v292, 15
      %v1197 = vsel %vm1195, 1, 0
      %v1198 = vsel %vm1196, 1, 0
      %vm1199 = vcmp.eq.s32.totalorder %v1197, 1
      %vm1200 = vcmp.eq.s32.totalorder %v1198, 1
      %v1201 = vsel %vm1199, %v1163, 0.0
      %v1202 = vsel %vm1200, %v1179, 0.0
      %v1203 = vsel %vm1199, %v1164, 0.0
      %v1204 = vsel %vm1200, %v1180, 0.0
      %v1205 = vsel %vm1199, %v1165, 0.0
      %v1206 = vsel %vm1200, %v1181, 0.0
      %v1207 = vsel %vm1199, %v1166, 0.0
      %v1208 = vsel %vm1200, %v1182, 0.0
      %v1209 = vsel %vm1199, %v1167, 0.0
      %v1210 = vsel %vm1200, %v1183, 0.0
      %v1211 = vsel %vm1199, %v1168, 0.0
      %v1212 = vsel %vm1200, %v1184, 0.0
      %v1213 = vsel %vm1199, %v1169, 0.0
      %v1214 = vsel %vm1200, %v1185, 0.0
      %v1215 = vsel %vm1199, %v1170, 0.0
      %v1216 = vsel %vm1200, %v1186, 0.0
      %v1217 = vsel %vm1199, %v1171, 0.0
      %v1218 = vsel %vm1200, %v1187, 0.0
      %v1219 = vsel %vm1199, %v1172, 0.0
      %v1220 = vsel %vm1200, %v1188, 0.0
      %v1221 = vsel %vm1199, %v1173, 0.0
      %v1222 = vsel %vm1200, %v1189, 0.0
      %v1223 = vsel %vm1199, %v1174, 0.0
      %v1224 = vsel %vm1200, %v1190, 0.0
      %v1225 = vsel %vm1199, %v1175, 0.0
      %v1226 = vsel %vm1200, %v1191, 0.0
      %v1227 = vsel %vm1199, %v1176, 0.0
      %v1228 = vsel %vm1200, %v1192, 0.0
      %v1229 = vsel %vm1199, %v1177, 0.0
      %v1230 = vsel %vm1200, %v1193, 0.0
      %v1231 = vsel %vm1199, %v1178, 0.0
      %v1232 = vsel %vm1200, %v1194, 0.0
      %v1233 = vadd.f32 %v998, %v1201
      %v1234 = vadd.f32 %v999, %v1202
      %v1235 = vadd.f32 %v1000, %v1203
      %v1236 = vadd.f32 %v1001, %v1204
      %v1237 = vadd.f32 %v1002, %v1205
      %v1238 = vadd.f32 %v1003, %v1206
      %v1239 = vadd.f32 %v1004, %v1207
      %v1240 = vadd.f32 %v1005, %v1208
      %v1241 = vadd.f32 %v1006, %v1209
      %v1242 = vadd.f32 %v1007, %v1210
      %v1243 = vadd.f32 %v1008, %v1211
      %v1244 = vadd.f32 %v1009, %v1212
      %v1245 = vadd.f32 %v1010, %v1213
      %v1246 = vadd.f32 %v1011, %v1214
      %v1247 = vadd.f32 %v1012, %v1215
      %v1248 = vadd.f32 %v1013, %v1216
      %v1249 = vadd.f32 %v1014, %v1217
      %v1250 = vadd.f32 %v1015, %v1218
      %v1251 = vadd.f32 %v1016, %v1219
      %v1252 = vadd.f32 %v1017, %v1220
      %v1253 = vadd.f32 %v1018, %v1221
      %v1254 = vadd.f32 %v1019, %v1222
      %v1255 = vadd.f32 %v1020, %v1223
      %v1256 = vadd.f32 %v1021, %v1224
      %v1257 = vadd.f32 %v1022, %v1225
      %v1258 = vadd.f32 %v1023, %v1226
      %v1259 = vadd.f32 %v1024, %v1227
      %v1260 = vadd.f32 %v1025, %v1228
      %v1261 = vadd.f32 %v1026, %v1229
      %v1262 = vadd.f32 %v1027, %v1230
      %v1263 = vadd.f32 %v1028, %v1231
      %v1264 = vadd.f32 %v1029, %v1232
      %s1265 = scalar_lea.vmem %s261, 32
      %v1266 = vld [vmem:[%s1265] sm:$0xf]
      %v1267 = vld [vmem:[%s1265 + $0x4] sm:$0xf]
      %v1270 = vunpack.c.l.b16 %v1266
      %v1271 = vunpack.c.l.b16 %v1267
      %v1272 = vpack.c.b16 %v1271, %v1270
      %v1274 = vand.u32 %v1272, %v467
      %1276 = vmatpush.bf16.msra.mxu0 0
      %1277 = vmatpush.bf16.msra.mxu0 0
      %1278 = vmatpush.bf16.msra.mxu0 0
      %1279 = vmatpush.bf16.msra.mxu0 0
      %1280 = vmatpush.bf16.msra.mxu0 0
      %1281 = vmatpush.bf16.msra.mxu0 0
      %1282 = vmatpush.bf16.msra.mxu0 0
      %1283 = vmatpush.bf16.msra.mxu0 %v1274
      %1284 = vmatmul.bf16.gmra.mxu0 %v417
      %v1285 = vpop.f32.mrf.mxu0
      %v1286 = vadd.f32 0.0, %v1285
      %v1287 = vpop.f32.mrf.mxu0
      %v1288 = vadd.f32 0.0, %v1287
      %1289 = vmatmul.bf16.gmra.mxu0 %v420
      %v1290 = vpop.f32.mrf.mxu0
      %v1291 = vadd.f32 0.0, %v1290
      %v1292 = vpop.f32.mrf.mxu0
      %v1293 = vadd.f32 0.0, %v1292
      %1294 = vmatmul.bf16.gmra.mxu0 %v423
      %v1295 = vpop.f32.mrf.mxu0
      %v1296 = vadd.f32 0.0, %v1295
      %v1297 = vpop.f32.mrf.mxu0
      %v1298 = vadd.f32 0.0, %v1297
      %1299 = vmatmul.bf16.gmra.mxu0 %v426
      %v1300 = vpop.f32.mrf.mxu0
      %v1301 = vadd.f32 0.0, %v1300
      %v1302 = vpop.f32.mrf.mxu0
      %v1303 = vadd.f32 0.0, %v1302
      %1304 = vmatmul.bf16.gmra.mxu0 %v429
      %v1305 = vpop.f32.mrf.mxu0
      %v1306 = vadd.f32 0.0, %v1305
      %v1307 = vpop.f32.mrf.mxu0
      %v1308 = vadd.f32 0.0, %v1307
      %1309 = vmatmul.bf16.gmra.mxu0 %v432
      %v1310 = vpop.f32.mrf.mxu0
      %v1311 = vadd.f32 0.0, %v1310
      %v1312 = vpop.f32.mrf.mxu0
      %v1313 = vadd.f32 0.0, %v1312
      %1314 = vmatmul.bf16.gmra.mxu0 %v435
      %v1315 = vpop.f32.mrf.mxu0
      %v1316 = vadd.f32 0.0, %v1315
      %v1317 = vpop.f32.mrf.mxu0
      %v1318 = vadd.f32 0.0, %v1317
      %1319 = vmatmul.bf16.gmra.mxu0 %v438
      %v1320 = vpop.f32.mrf.mxu0
      %v1321 = vadd.f32 0.0, %v1320
      %v1322 = vpop.f32.mrf.mxu0
      %v1323 = vadd.f32 0.0, %v1322
      %1324 = vmatmul.bf16.gmra.mxu0 %v441
      %v1325 = vpop.f32.mrf.mxu0
      %v1326 = vadd.f32 0.0, %v1325
      %v1327 = vpop.f32.mrf.mxu0
      %v1328 = vadd.f32 0.0, %v1327
      %1329 = vmatmul.bf16.gmra.mxu0 %v444
      %v1330 = vpop.f32.mrf.mxu0
      %v1331 = vadd.f32 0.0, %v1330
      %v1332 = vpop.f32.mrf.mxu0
      %v1333 = vadd.f32 0.0, %v1332
      %1334 = vmatmul.bf16.gmra.mxu0 %v447
      %v1335 = vpop.f32.mrf.mxu0
      %v1336 = vadd.f32 0.0, %v1335
      %v1337 = vpop.f32.mrf.mxu0
      %v1338 = vadd.f32 0.0, %v1337
      %1339 = vmatmul.bf16.gmra.mxu0 %v450
      %v1340 = vpop.f32.mrf.mxu0
      %v1341 = vadd.f32 0.0, %v1340
      %v1342 = vpop.f32.mrf.mxu0
      %v1343 = vadd.f32 0.0, %v1342
      %1344 = vmatmul.bf16.gmra.mxu0 %v453
      %v1345 = vpop.f32.mrf.mxu0
      %v1346 = vadd.f32 0.0, %v1345
      %v1347 = vpop.f32.mrf.mxu0
      %v1348 = vadd.f32 0.0, %v1347
      %1349 = vmatmul.bf16.gmra.mxu0 %v456
      %v1350 = vpop.f32.mrf.mxu0
      %v1351 = vadd.f32 0.0, %v1350
      %v1352 = vpop.f32.mrf.mxu0
      %v1353 = vadd.f32 0.0, %v1352
      %1354 = vmatmul.bf16.gmra.mxu0 %v459
      %v1355 = vpop.f32.mrf.mxu0
      %v1356 = vadd.f32 0.0, %v1355
      %v1357 = vpop.f32.mrf.mxu0
      %v1358 = vadd.f32 0.0, %v1357
      %1359 = vmatmul.bf16.gmra.mxu0 %v462
      %v1360 = vpop.f32.mrf.mxu0
      %v1361 = vadd.f32 0.0, %v1360
      %v1362 = vpop.f32.mrf.mxu0
      %v1363 = vadd.f32 0.0, %v1362
      %1364 = vdwg.mxu0
      %v1365 = vrot.slane %v1286, 2
      %v1366 = vrot.slane %v1291, 2
      %v1367 = vrot.slane %v1296, 2
      %v1368 = vrot.slane %v1301, 2
      %v1369 = vrot.slane %v1306, 2
      %v1370 = vrot.slane %v1311, 2
      %v1371 = vrot.slane %v1316, 2
      %v1372 = vrot.slane %v1321, 2
      %v1373 = vrot.slane %v1326, 2
      %v1374 = vrot.slane %v1331, 2
      %v1375 = vrot.slane %v1336, 2
      %v1376 = vrot.slane %v1341, 2
      %v1377 = vrot.slane %v1346, 2
      %v1378 = vrot.slane %v1351, 2
      %v1379 = vrot.slane %v1356, 2
      %v1380 = vrot.slane %v1361, 2
      %v1381 = vrot.slane %v1288, 2
      %v1382 = vrot.slane %v1293, 2
      %v1383 = vrot.slane %v1298, 2
      %v1384 = vrot.slane %v1303, 2
      %v1385 = vrot.slane %v1308, 2
      %v1386 = vrot.slane %v1313, 2
      %v1387 = vrot.slane %v1318, 2
      %v1388 = vrot.slane %v1323, 2
      %v1389 = vrot.slane %v1328, 2
      %v1390 = vrot.slane %v1333, 2
      %v1391 = vrot.slane %v1338, 2
      %v1392 = vrot.slane %v1343, 2
      %v1393 = vrot.slane %v1348, 2
      %v1394 = vrot.slane %v1353, 2
      %v1395 = vrot.slane %v1358, 2
      %v1396 = vrot.slane %v1363, 2
      %vm1397 = vcmp.lt.s32.totalorder %v291, 6
      %v1398 = vsel %vm1397, %v1365, %v1381
      %v1399 = vsel %vm1397, %v1366, %v1382
      %v1400 = vsel %vm1397, %v1367, %v1383
      %v1401 = vsel %vm1397, %v1368, %v1384
      %v1402 = vsel %vm1397, %v1369, %v1385
      %v1403 = vsel %vm1397, %v1370, %v1386
      %v1404 = vsel %vm1397, %v1371, %v1387
      %v1405 = vsel %vm1397, %v1372, %v1388
      %v1406 = vsel %vm1397, %v1373, %v1389
      %v1407 = vsel %vm1397, %v1374, %v1390
      %v1408 = vsel %vm1397, %v1375, %v1391
      %v1409 = vsel %vm1397, %v1376, %v1392
      %v1410 = vsel %vm1397, %v1377, %v1393
      %v1411 = vsel %vm1397, %v1378, %v1394
      %v1412 = vsel %vm1397, %v1379, %v1395
      %v1413 = vsel %vm1397, %v1380, %v1396
      %v1414 = vsel %vm1397, %v1381, %v1365
      %v1415 = vsel %vm1397, %v1382, %v1366
      %v1416 = vsel %vm1397, %v1383, %v1367
      %v1417 = vsel %vm1397, %v1384, %v1368
      %v1418 = vsel %vm1397, %v1385, %v1369
      %v1419 = vsel %vm1397, %v1386, %v1370
      %v1420 = vsel %vm1397, %v1387, %v1371
      %v1421 = vsel %vm1397, %v1388, %v1372
      %v1422 = vsel %vm1397, %v1389, %v1373
      %v1423 = vsel %vm1397, %v1390, %v1374
      %v1424 = vsel %vm1397, %v1391, %v1375
      %v1425 = vsel %vm1397, %v1392, %v1376
      %v1426 = vsel %vm1397, %v1393, %v1377
      %v1427 = vsel %vm1397, %v1394, %v1378
      %v1428 = vsel %vm1397, %v1395, %v1379
      %v1429 = vsel %vm1397, %v1396, %v1380
      %vm1430 = vcmp.lt.s32.totalorder %v291, 14
      %vm1431 = vcmp.lt.s32.totalorder %v292, 14
      %v1432 = vsel %vm1430, 1, 0
      %v1433 = vsel %vm1431, 1, 0
      %vm1434 = vcmp.eq.s32.totalorder %v1432, 1
      %vm1435 = vcmp.eq.s32.totalorder %v1433, 1
      %v1436 = vsel %vm1434, %v1398, 0.0
      %v1437 = vsel %vm1435, %v1414, 0.0
      %v1438 = vsel %vm1434, %v1399, 0.0
      %v1439 = vsel %vm1435, %v1415, 0.0
      %v1440 = vsel %vm1434, %v1400, 0.0
      %v1441 = vsel %vm1435, %v1416, 0.0
      %v1442 = vsel %vm1434, %v1401, 0.0
      %v1443 = vsel %vm1435, %v1417, 0.0
      %v1444 = vsel %vm1434, %v1402, 0.0
      %v1445 = vsel %vm1435, %v1418, 0.0
      %v1446 = vsel %vm1434, %v1403, 0.0
      %v1447 = vsel %vm1435, %v1419, 0.0
      %v1448 = vsel %vm1434, %v1404, 0.0
      %v1449 = vsel %vm1435, %v1420, 0.0
      %v1450 = vsel %vm1434, %v1405, 0.0
      %v1451 = vsel %vm1435, %v1421, 0.0
      %v1452 = vsel %vm1434, %v1406, 0.0
      %v1453 = vsel %vm1435, %v1422, 0.0
      %v1454 = vsel %vm1434, %v1407, 0.0
      %v1455 = vsel %vm1435, %v1423, 0.0
      %v1456 = vsel %vm1434, %v1408, 0.0
      %v1457 = vsel %vm1435, %v1424, 0.0
      %v1458 = vsel %vm1434, %v1409, 0.0
      %v1459 = vsel %vm1435, %v1425, 0.0
      %v1460 = vsel %vm1434, %v1410, 0.0
      %v1461 = vsel %vm1435, %v1426, 0.0
      %v1462 = vsel %vm1434, %v1411, 0.0
      %v1463 = vsel %vm1435, %v1427, 0.0
      %v1464 = vsel %vm1434, %v1412, 0.0
      %v1465 = vsel %vm1435, %v1428, 0.0
      %v1466 = vsel %vm1434, %v1413, 0.0
      %v1467 = vsel %vm1435, %v1429, 0.0
      %v1468 = vadd.f32 %v1233, %v1436
      %v1469 = vadd.f32 %v1234, %v1437
      %v1470 = vadd.f32 %v1235, %v1438
      %v1471 = vadd.f32 %v1236, %v1439
      %v1472 = vadd.f32 %v1237, %v1440
      %v1473 = vadd.f32 %v1238, %v1441
      %v1474 = vadd.f32 %v1239, %v1442
      %v1475 = vadd.f32 %v1240, %v1443
      %v1476 = vadd.f32 %v1241, %v1444
      %v1477 = vadd.f32 %v1242, %v1445
      %v1478 = vadd.f32 %v1243, %v1446
      %v1479 = vadd.f32 %v1244, %v1447
      %v1480 = vadd.f32 %v1245, %v1448
      %v1481 = vadd.f32 %v1246, %v1449
      %v1482 = vadd.f32 %v1247, %v1450
      %v1483 = vadd.f32 %v1248, %v1451
      %v1484 = vadd.f32 %v1249, %v1452
      %v1485 = vadd.f32 %v1250, %v1453
      %v1486 = vadd.f32 %v1251, %v1454
      %v1487 = vadd.f32 %v1252, %v1455
      %v1488 = vadd.f32 %v1253, %v1456
      %v1489 = vadd.f32 %v1254, %v1457
      %v1490 = vadd.f32 %v1255, %v1458
      %v1491 = vadd.f32 %v1256, %v1459
      %v1492 = vadd.f32 %v1257, %v1460
      %v1493 = vadd.f32 %v1258, %v1461
      %v1494 = vadd.f32 %v1259, %v1462
      %v1495 = vadd.f32 %v1260, %v1463
      %v1496 = vadd.f32 %v1261, %v1464
      %v1497 = vadd.f32 %v1262, %v1465
      %v1498 = vadd.f32 %v1263, %v1466
      %v1499 = vadd.f32 %v1264, %v1467
      %p1500 = scmp.eq.s32.totalorder %s23, 0
      // Predicated region
      $region29: #{deep_svdd_forward.5} parent=27 // pred_check
        %p1501 = pneg %p1500
      $region30: #{deep_svdd_forward.5} parent=27 // pred_check_branch
        %1503 = sbr.rel (%p1501) target = $region32
      $region31: #{deep_svdd_forward.5} parent=27 // pred_region
        %1504 = vst [vmem:[%s281] sm:$0x1] 0.0
        %1505 = vst [vmem:[%s287] sm:$0x1] 0.0
      $region32: #{deep_svdd_forward.5} parent=27 // pred_fallthru
        _
      %v1506 = vld [vmem:[%s281] sm:$0x1]
      %v1507 = vadd.f32 %v1468, %v1470
      %v1508 = vadd.f32 %v1507, %v1472
      %v1509 = vadd.f32 %v1508, %v1474
      %v1510 = vadd.f32 %v1509, %v1476
      %v1511 = vadd.f32 %v1510, %v1478
      %v1512 = vadd.f32 %v1511, %v1480
      %v1513 = vadd.f32 %v1512, %v1482
      %v1514 = vadd.f32 %v1513, %v1484
      %v1515 = vadd.f32 %v1514, %v1486
      %v1516 = vadd.f32 %v1515, %v1488
      %v1517 = vadd.f32 %v1516, %v1490
      %v1518 = vadd.f32 %v1517, %v1492
      %v1519 = vadd.f32 %v1518, %v1494
      %v1520 = vadd.f32 %v1519, %v1496
      %v1521 = vadd.f32 %v1520, %v1498
      %v1522 = vadd.f32 %v1469, %v1471
      %v1523 = vadd.f32 %v1522, %v1473
      %v1524 = vadd.f32 %v1523, %v1475
      %v1525 = vadd.f32 %v1524, %v1477
      %v1526 = vadd.f32 %v1525, %v1479
      %v1527 = vadd.f32 %v1526, %v1481
      %v1528 = vadd.f32 %v1527, %v1483
      %v1529 = vadd.f32 %v1528, %v1485
      %v1530 = vadd.f32 %v1529, %v1487
      %v1531 = vadd.f32 %v1530, %v1489
      %v1532 = vadd.f32 %v1531, %v1491
      %v1533 = vadd.f32 %v1532, %v1493
      %v1534 = vadd.f32 %v1533, %v1495
      %v1535 = vadd.f32 %v1534, %v1497
      %v1536 = vadd.f32 %v1535, %v1499
      %v1537 = vadd.f32 %v1521, %v1536
      %v1538 = vrot.slane %v1537, 4
      %v1539 = vadd.f32 %v1537, %v1538
      %v1540 = vrot.slane %v1539, 2
      %v1541 = vadd.f32 %v1539, %v1540
      %v1542 = vrot.slane %v1541, 1
      %v1543 = vadd.f32 %v1541, %v1542
      %v1544 = vadd.f32 %v1506, %v1543
      %1545 = vst [vmem:[%s281] sm:$0x1] %v1544
      %v1546 = vld [vmem:[%s287] sm:$0x1]
      %v1547 = vmul.f32 %v1468, %v1468
      %v1548 = vmul.f32 %v1469, %v1469
      %v1549 = vmul.f32 %v1470, %v1470
      %v1550 = vmul.f32 %v1471, %v1471
      %v1551 = vmul.f32 %v1472, %v1472
      %v1552 = vmul.f32 %v1473, %v1473
      %v1553 = vmul.f32 %v1474, %v1474
      %v1554 = vmul.f32 %v1475, %v1475
      %v1555 = vmul.f32 %v1476, %v1476
      %v1556 = vmul.f32 %v1477, %v1477
      %v1557 = vmul.f32 %v1478, %v1478
      %v1558 = vmul.f32 %v1479, %v1479
      %v1559 = vmul.f32 %v1480, %v1480
      %v1560 = vmul.f32 %v1481, %v1481
      %v1561 = vmul.f32 %v1482, %v1482
      %v1562 = vmul.f32 %v1483, %v1483
      %v1563 = vmul.f32 %v1484, %v1484
      %v1564 = vmul.f32 %v1485, %v1485
      %v1565 = vmul.f32 %v1486, %v1486
      %v1566 = vmul.f32 %v1487, %v1487
      %v1567 = vmul.f32 %v1488, %v1488
      %v1568 = vmul.f32 %v1489, %v1489
      %v1569 = vmul.f32 %v1490, %v1490
      %v1570 = vmul.f32 %v1491, %v1491
      %v1571 = vmul.f32 %v1492, %v1492
      %v1572 = vmul.f32 %v1493, %v1493
      %v1573 = vmul.f32 %v1494, %v1494
      %v1574 = vmul.f32 %v1495, %v1495
      %v1575 = vmul.f32 %v1496, %v1496
      %v1576 = vmul.f32 %v1497, %v1497
      %v1577 = vmul.f32 %v1498, %v1498
      %v1578 = vmul.f32 %v1499, %v1499
      %v1579 = vadd.f32 %v1547, %v1549
      %v1580 = vadd.f32 %v1579, %v1551
      %v1581 = vadd.f32 %v1580, %v1553
      %v1582 = vadd.f32 %v1581, %v1555
      %v1583 = vadd.f32 %v1582, %v1557
      %v1584 = vadd.f32 %v1583, %v1559
      %v1585 = vadd.f32 %v1584, %v1561
      %v1586 = vadd.f32 %v1585, %v1563
      %v1587 = vadd.f32 %v1586, %v1565
      %v1588 = vadd.f32 %v1587, %v1567
      %v1589 = vadd.f32 %v1588, %v1569
      %v1590 = vadd.f32 %v1589, %v1571
      %v1591 = vadd.f32 %v1590, %v1573
      %v1592 = vadd.f32 %v1591, %v1575
      %v1593 = vadd.f32 %v1592, %v1577
      %v1594 = vadd.f32 %v1548, %v1550
      %v1595 = vadd.f32 %v1594, %v1552
      %v1596 = vadd.f32 %v1595, %v1554
      %v1597 = vadd.f32 %v1596, %v1556
      %v1598 = vadd.f32 %v1597, %v1558
      %v1599 = vadd.f32 %v1598, %v1560
      %v1600 = vadd.f32 %v1599, %v1562
      %v1601 = vadd.f32 %v1600, %v1564
      %v1602 = vadd.f32 %v1601, %v1566
      %v1603 = vadd.f32 %v1602, %v1568
      %v1604 = vadd.f32 %v1603, %v1570
      %v1605 = vadd.f32 %v1604, %v1572
      %v1606 = vadd.f32 %v1605, %v1574
      %v1607 = vadd.f32 %v1606, %v1576
      %v1608 = vadd.f32 %v1607, %v1578
      %v1609 = vadd.f32 %v1593, %v1608
      %v1610 = vrot.slane %v1609, 4
      %v1611 = vadd.f32 %v1609, %v1610
      %v1612 = vrot.slane %v1611, 2
      %v1613 = vadd.f32 %v1611, %v1612
      %v1614 = vrot.slane %v1613, 1
      %v1615 = vadd.f32 %v1613, %v1614
      %v1616 = vadd.f32 %v1546, %v1615
      %1617 = vst [vmem:[%s287] sm:$0x1] %v1616
      %v1618 = vpack.c.bf16 %v1468, %v1468
      %v1619 = vpack.c.bf16 %v1469, %v1469
      %v1620 = vpack.c.bf16 %v1470, %v1470
      %v1621 = vpack.c.bf16 %v1471, %v1471
      %v1622 = vpack.c.bf16 %v1472, %v1472
      %v1623 = vpack.c.bf16 %v1473, %v1473
      %v1624 = vpack.c.bf16 %v1474, %v1474
      %v1625 = vpack.c.bf16 %v1475, %v1475
      %v1626 = vpack.c.bf16 %v1476, %v1476
      %v1627 = vpack.c.bf16 %v1477, %v1477
      %v1628 = vpack.c.bf16 %v1478, %v1478
      %v1629 = vpack.c.bf16 %v1479, %v1479
      %v1630 = vpack.c.bf16 %v1480, %v1480
      %v1631 = vpack.c.bf16 %v1481, %v1481
      %v1632 = vpack.c.bf16 %v1482, %v1482
      %v1633 = vpack.c.bf16 %v1483, %v1483
      %v1634 = vpack.c.bf16 %v1484, %v1484
      %v1635 = vpack.c.bf16 %v1485, %v1485
      %v1636 = vpack.c.bf16 %v1486, %v1486
      %v1637 = vpack.c.bf16 %v1487, %v1487
      %v1638 = vpack.c.bf16 %v1488, %v1488
      %v1639 = vpack.c.bf16 %v1489, %v1489
      %v1640 = vpack.c.bf16 %v1490, %v1490
      %v1641 = vpack.c.bf16 %v1491, %v1491
      %v1642 = vpack.c.bf16 %v1492, %v1492
      %v1643 = vpack.c.bf16 %v1493, %v1493
      %v1644 = vpack.c.bf16 %v1494, %v1494
      %v1645 = vpack.c.bf16 %v1495, %v1495
      %v1646 = vpack.c.bf16 %v1496, %v1496
      %v1647 = vpack.c.bf16 %v1497, %v1497
      %v1648 = vpack.c.bf16 %v1498, %v1498
      %v1649 = vpack.c.bf16 %v1499, %v1499
      %1650 = vst [vmem:[%s274] sm:$0xf] %v1618
      %1651 = vst [vmem:[%s274 + $0x4] sm:$0xf] %v1619
      %1652 = vst [vmem:[%s274 + $0x8] sm:$0xf] %v1620
      %1653 = vst [vmem:[%s274 + $0xc] sm:$0xf] %v1621
      %1654 = vst [vmem:[%s274 + $0x10] sm:$0xf] %v1622
      %1655 = vst [vmem:[%s274 + $0x14] sm:$0xf] %v1623
      %1656 = vst [vmem:[%s274 + $0x18] sm:$0xf] %v1624
      %1657 = vst [vmem:[%s274 + $0x1c] sm:$0xf] %v1625
      %1658 = vst [vmem:[%s274 + $0x20] sm:$0xf] %v1626
      %1659 = vst [vmem:[%s274 + $0x24] sm:$0xf] %v1627
      %1660 = vst [vmem:[%s274 + $0x28] sm:$0xf] %v1628
      %1661 = vst [vmem:[%s274 + $0x2c] sm:$0xf] %v1629
      %1662 = vst [vmem:[%s274 + $0x30] sm:$0xf] %v1630
      %1663 = vst [vmem:[%s274 + $0x34] sm:$0xf] %v1631
      %1664 = vst [vmem:[%s274 + $0x38] sm:$0xf] %v1632
      %1665 = vst [vmem:[%s274 + $0x3c] sm:$0xf] %v1633
      %1666 = vst [vmem:[%s274 + $0x40] sm:$0xf] %v1634
      %1667 = vst [vmem:[%s274 + $0x44] sm:$0xf] %v1635
      %1668 = vst [vmem:[%s274 + $0x48] sm:$0xf] %v1636
      %1669 = vst [vmem:[%s274 + $0x4c] sm:$0xf] %v1637
      %1670 = vst [vmem:[%s274 + $0x50] sm:$0xf] %v1638
      %1671 = vst [vmem:[%s274 + $0x54] sm:$0xf] %v1639
      %1672 = vst [vmem:[%s274 + $0x58] sm:$0xf] %v1640
      %1673 = vst [vmem:[%s274 + $0x5c] sm:$0xf] %v1641
      %1674 = vst [vmem:[%s274 + $0x60] sm:$0xf] %v1642
      %1675 = vst [vmem:[%s274 + $0x64] sm:$0xf] %v1643
      %1676 = vst [vmem:[%s274 + $0x68] sm:$0xf] %v1644
      %1677 = vst [vmem:[%s274 + $0x6c] sm:$0xf] %v1645
      %1678 = vst [vmem:[%s274 + $0x70] sm:$0xf] %v1646
      %1679 = vst [vmem:[%s274 + $0x74] sm:$0xf] %v1647
      %1680 = vst [vmem:[%s274 + $0x78] sm:$0xf] %v1648
      %1681 = vst [vmem:[%s274 + $0x7c] sm:$0xf] %v1649
      %s1682 = smul.u32 16, %s23
      %p1683 = scmp.lt.s32.totalorder %s22, 1
      %s1684 = scalar_select %p1683, %s22, 1
      %p1685 = scmp.lt.s32.totalorder %s1682, 15
      %s1686 = scalar_select %p1685, %s1682, 15
      %p1687 = scmp.lt.s32.totalorder %s21, 0
      %s1688 = scalar_select %p1687, %s21, 0
      %s1689 = smul.addr %s1686, 2
      %s1690 = sadd.s32 %s1688, %s1689
      %s1691 = smul.addr %s1684, 32
      %s1692 = sadd.s32 %s1690, %s1691
      %s1693 = smul.addr %s1692, 4
      %s1694 = scalar_lea.vmem %s2, %s1693
      %p1695 = scmp.lt.s32.totalorder %s22, 1
      %s1696 = scalar_select %p1695, %s22, 1
      %p1697 = scmp.lt.s32.totalorder %s21, 0
      %s1698 = scalar_select %p1697, %s21, 0
      %s1699 = sadd.s32 %s1698, %s1696
      %s1700 = scalar_lea.vmem %s3, %s1699
      %p1701 = scmp.lt.s32.totalorder %s22, 1
      %s1702 = scalar_select %p1701, %s22, 1
      %p1703 = scmp.lt.s32.totalorder %s21, 0
      %s1704 = scalar_select %p1703, %s21, 0
      %s1705 = sadd.s32 %s1704, %s1702
      %s1706 = scalar_lea.vmem %s4, %s1705
      // Predicated region
      $region33: #{deep_svdd_forward.5} parent=27 // pred_check
        %p1707 = pneg %p109
      $region34: #{deep_svdd_forward.5} parent=27 // pred_check_branch
        %1709 = sbr.rel (%p1707) target = $region36
      $region35: #{deep_svdd_forward.5} parent=27 // pred_region
        %s1710 = smul.u32 16, %s23
      $region36: #{deep_svdd_forward.5} parent=27 // pred_fallthru
        _
      // Predicated region
      $region37: #{deep_svdd_forward.5} parent=27 // pred_check
        %p1711 = pneg %p137
      $region38: #{deep_svdd_forward.5} parent=27 // pred_check_branch
        %1713 = sbr.rel (%p1711) target = $region40
      $region39: #{deep_svdd_forward.5} parent=27 // pred_region
        _
      $region40: #{deep_svdd_forward.5} parent=27 // pred_fallthru
        _
      // Predicated region
      $region41: #{deep_svdd_forward.5} parent=27 // pred_check
        %p1714 = pneg %p165
      $region42: #{deep_svdd_forward.5} parent=27 // pred_check_branch
        %1716 = sbr.rel (%p1714) target = $region44
      $region43: #{deep_svdd_forward.5} parent=27 // pred_region
        _
      $region44: #{deep_svdd_forward.5} parent=27 // pred_fallthru
        _
    $region28: #{deep_svdd_forward.5} parent=5 // pred_fallthru
      _
    %p1717 = scmp.le.s32.totalorder 2, %s11
    // Predicated region
    $region45: #{deep_svdd_forward.5} parent=5 // pred_check
      %p1718 = pneg %p1717
    $region46: #{deep_svdd_forward.5} parent=5 // pred_check_branch
      %1720 = sbr.rel (%p1718) target = $region48
    $region47: #{deep_svdd_forward.5} parent=5 // pred_region
      %s1721 = ssub.s32 %s11, 2
      // Predicated region
      $region49: #{deep_svdd_forward.5} parent=47 // pred_check
        %p1722 = pneg %p115
      $region50: #{deep_svdd_forward.5} parent=47 // pred_check_branch
        %1724 = sbr.rel (%p1722) target = $region52
      $region51: #{deep_svdd_forward.5} parent=47 // pred_region
        %s1725 = smul.u32 16, %s26
        %p1726 = scmp.lt.s32.totalorder %s25, 1
        %s1727 = scalar_select %p1726, %s25, 1
        %p1728 = scmp.lt.s32.totalorder %s1725, 15
        %s1729 = scalar_select %p1728, %s1725, 15
        %p1730 = scmp.lt.s32.totalorder %s24, 0
        %s1731 = scalar_select %p1730, %s24, 0
        %s1732 = smul.addr %s1729, 2
        %s1733 = sadd.s32 %s1731, %s1732
        %s1734 = smul.addr %s1727, 32
        %s1735 = sadd.s32 %s1733, %s1734
        %s1736 = smul.addr %s1735, 4
        %s1737 = scalar_lea.vmem %s2, %s1736
      $region52: #{deep_svdd_forward.5} parent=47 // pred_fallthru
        _
      // Predicated region
      $region53: #{deep_svdd_forward.5} parent=47 // pred_check
        %p1738 = pneg %p143
      $region54: #{deep_svdd_forward.5} parent=47 // pred_check_branch
        %1740 = sbr.rel (%p1738) target = $region56
      $region55: #{deep_svdd_forward.5} parent=47 // pred_region
        %p1741 = scmp.lt.s32.totalorder %s25, 1
        %s1742 = scalar_select %p1741, %s25, 1
        %p1743 = scmp.lt.s32.totalorder %s24, 0
        %s1744 = scalar_select %p1743, %s24, 0
        %s1745 = sadd.s32 %s1744, %s1742
        %s1746 = scalar_lea.vmem %s3, %s1745
      $region56: #{deep_svdd_forward.5} parent=47 // pred_fallthru
        _
      // Predicated region
      $region57: #{deep_svdd_forward.5} parent=47 // pred_check
        %p1747 = pneg %p171
      $region58: #{deep_svdd_forward.5} parent=47 // pred_check_branch
        %1749 = sbr.rel (%p1747) target = $region60
      $region59: #{deep_svdd_forward.5} parent=47 // pred_region
        %p1750 = scmp.lt.s32.totalorder %s25, 1
        %s1751 = scalar_select %p1750, %s25, 1
        %p1752 = scmp.lt.s32.totalorder %s24, 0
        %s1753 = scalar_select %p1752, %s24, 0
        %s1754 = sadd.s32 %s1753, %s1751
        %s1755 = scalar_lea.vmem %s4, %s1754
      $region60: #{deep_svdd_forward.5} parent=47 // pred_fallthru
        _
    $region48: #{deep_svdd_forward.5} parent=5 // pred_fallthru
      _
  $region6: #{deep_svdd_forward.5} parent=0 // loop_footer
    %s15 = sadd.s32 1, %s11
  $region7: #{deep_svdd_forward.5} parent=0 // loop_footer_branch
    %10 = sbr.rel target = $region3
  $region8: #{deep_svdd_forward.5} parent=0 // loop_exit
    _

// kernel: deep_svdd_forward.8
$region0: #{deep_svdd_forward.8}
  #allocation0 [shape = 'u32[]', space=smem, size = 0x4, offset = 0x4, fixed_abs, tag = 'smem constant byte address 0x4 - core index']
  #allocation1 [shape = 'u32[72,128]{1,0:T(1,128)}', space=vmem, size = 0x9000, scoped, tag = 'internal scratch']
  #allocation2 [shape = 'f32[4,8,64]{2,1,0:T(8,128)}', space=vmem, size = 0x4000, scoped, tag = 'scratch operand']
  %s0 = inlined_call_operand.vmem [shape: bf16[2,8,8,64], index: 0, kind: input, shape index: {}]
  %s1 = inlined_call_operand.vmem [shape: f32[1,64], index: 1, kind: input, shape index: {}]
  %s2 = inlined_call_operand.vmem [shape: f32[1,64], index: 2, kind: input, shape index: {}]
  %s3 = inlined_call_operand.vmem [shape: bf16[2,4,4,64], index: 3, kind: output, shape index: {}]
  %s4 = sld [smem:[#allocation0]]
  $region45: #{deep_svdd_forward.8} parent=0
    _
  %s6 = ssub.s32 1, %s4
  %s7 = scalar_select 0, %s6, %s4
  loop: start=0, step=1, limit=4
  $region2: #{deep_svdd_forward.8} parent=0 // loop_pre_header
    _
  $region3: #{deep_svdd_forward.8} parent=0 // loop_header
    %s9 = sphi 0, %s13
    %p10 = scmp.ge.s32.totalorder %s9, 4
    %s16 = sphi 0, %s28
    %s17 = sphi 0, %s24
    %s18 = sphi 0, %s16
    %s19 = sphi 0, %s17
    %s20 = sphi 0, %s18
    %s21 = sphi 0, %s19
    %s33 = sphi 0, %s35
    %s36 = sphi 0, %s33
    %s37 = sphi 0, %s36
    %s53 = sphi 0, %s37
    %s57 = sphi 0, %s57
    %s59 = sphi 0, %s57
    %s60 = sphi 0, %s59
    %s74 = sphi 0, %s60
    %s78 = sphi 0, %s78
    %s80 = sphi 0, %s78
    %s81 = sphi 0, %s80
    %s95 = sphi 0, %s81
    %s103 = sphi 0, %s105
    %s106 = sphi 0, %s103
    %s107 = sphi 0, %s106
    %s123 = sphi 0, %s107
  $region4: #{deep_svdd_forward.8} parent=0 // loop_header_branch
    %12 = sbr.rel (%p10) target = $region8
  $region5: #{deep_svdd_forward.8} parent=0 // loop_body
    %s14 = ssub.s32 %s9, 1
    %s15 = ssub.s32 %s9, 2
    %s22 = sadd.s32 1, %s17
    %p23 = scmp.ge.s32.totalorder %s22, 1
    %s24 = scalar_select %p23, 0, %s22
    %s25 = sadd.s32 1, %s16
    %s26 = scalar_select %p23, %s25, %s16
    %p27 = scmp.ge.s32.totalorder %s26, 2
    %s28 = scalar_select %p27, 0, %s26
    %s29 = ssub.s32 %s16, %s28
    %s30 = ssub.s32 %s17, %s24
    %s31 = sor.u32 %s29, %s30
    %p32 = scmp.eq.s32.totalorder %s31, 0
    %s34 = sadd.s32 %s33, 1
    %s35 = scalar_select %p32, %s33, %s34
    %p38 = pneg %p32
    %p39 = scmp.eq.s32.totalorder %s9, 1
    %p40 = por %p38, %p39
    %p41 = scmp.ne.s32.totalorder %s33, %s36
    %p42 = scmp.eq.s32.totalorder %s9, 0
    %p43 = por %p41, %p42
    %p44 = scmp.ne.s32.totalorder %s33, %s36
    %p45 = scmp.eq.s32.totalorder %s14, 1
    %p46 = por %p44, %p45
    %p47 = scmp.ne.s32.totalorder %s36, %s37
    %p48 = scmp.eq.s32.totalorder %s14, 0
    %p49 = por %p47, %p48
    %p50 = scmp.ne.s32.totalorder %s36, %s37
    %p51 = scmp.eq.s32.totalorder %s15, 1
    %p52 = por %p50, %p51
    %p54 = scmp.ne.s32.totalorder %s37, %s53
    %p55 = scmp.eq.s32.totalorder %s15, 0
    %p56 = por %p54, %p55
    %s58 = sadd.s32 %s57, 1
    %p61 = scmp.eq.s32.totalorder %s9, 1
    %p62 = scmp.ne.s32.totalorder %s57, %s59
    %p63 = scmp.eq.s32.totalorder %s9, 0
    %p64 = por %p62, %p63
    %p65 = scmp.ne.s32.totalorder %s57, %s59
    %p66 = scmp.eq.s32.totalorder %s14, 1
    %p67 = por %p65, %p66
    %p68 = scmp.ne.s32.totalorder %s59, %s60
    %p69 = scmp.eq.s32.totalorder %s14, 0
    %p70 = por %p68, %p69
    %p71 = scmp.ne.s32.totalorder %s59, %s60
    %p72 = scmp.eq.s32.totalorder %s15, 1
    %p73 = por %p71, %p72
    %p75 = scmp.ne.s32.totalorder %s60, %s74
    %p76 = scmp.eq.s32.totalorder %s15, 0
    %p77 = por %p75, %p76
    %s79 = sadd.s32 %s78, 1
    %p82 = scmp.eq.s32.totalorder %s9, 1
    %p83 = scmp.ne.s32.totalorder %s78, %s80
    %p84 = scmp.eq.s32.totalorder %s9, 0
    %p85 = por %p83, %p84
    %p86 = scmp.ne.s32.totalorder %s78, %s80
    %p87 = scmp.eq.s32.totalorder %s14, 1
    %p88 = por %p86, %p87
    %p89 = scmp.ne.s32.totalorder %s80, %s81
    %p90 = scmp.eq.s32.totalorder %s14, 0
    %p91 = por %p89, %p90
    %p92 = scmp.ne.s32.totalorder %s80, %s81
    %p93 = scmp.eq.s32.totalorder %s15, 1
    %p94 = por %p92, %p93
    %p96 = scmp.ne.s32.totalorder %s81, %s95
    %p97 = scmp.eq.s32.totalorder %s15, 0
    %p98 = por %p96, %p97
    %s99 = ssub.s32 %s16, %s28
    %s100 = ssub.s32 %s17, %s24
    %s101 = sor.u32 %s99, %s100
    %p102 = scmp.eq.s32.totalorder %s101, 0
    %s104 = sadd.s32 %s103, 1
    %s105 = scalar_select %p102, %s103, %s104
    %p108 = pneg %p102
    %p109 = scmp.eq.s32.totalorder %s9, 1
    %p110 = por %p108, %p109
    %p111 = scmp.ne.s32.totalorder %s103, %s106
    %p112 = scmp.eq.s32.totalorder %s9, 0
    %p113 = por %p111, %p112
    %p114 = scmp.ne.s32.totalorder %s103, %s106
    %p115 = scmp.eq.s32.totalorder %s14, 1
    %p116 = por %p114, %p115
    %p117 = scmp.ne.s32.totalorder %s106, %s107
    %p118 = scmp.eq.s32.totalorder %s14, 0
    %p119 = por %p117, %p118
    %p120 = scmp.ne.s32.totalorder %s106, %s107
    %p121 = scmp.eq.s32.totalorder %s15, 1
    %p122 = por %p120, %p121
    %p124 = scmp.ne.s32.totalorder %s107, %s123
    %p125 = scmp.eq.s32.totalorder %s15, 0
    %p126 = por %p124, %p125
    %p127 = scmp.le.s32.totalorder 1, %s9
    %p128 = scmp.lt.s32.totalorder %s9, 3
    %p129 = pnand %p127, %p128
    %p130 = pneg %p129
    // Predicated region
    $region9: #{deep_svdd_forward.8} parent=5 // pred_check
      _
    $region10: #{deep_svdd_forward.8} parent=5 // pred_check_branch
      %132 = sbr.rel (%p129) target = $region12
    $region11: #{deep_svdd_forward.8} parent=5 // pred_region
      %s133 = ssub.s32 %s9, 1
      // Predicated region
      $region13: #{deep_svdd_forward.8} parent=11 // pred_check
        %p134 = pneg %p70
      $region14: #{deep_svdd_forward.8} parent=11 // pred_check_branch
        %136 = sbr.rel (%p134) target = $region16
      $region15: #{deep_svdd_forward.8} parent=11 // pred_region
        _
      $region16: #{deep_svdd_forward.8} parent=11 // pred_fallthru
        _
      // Predicated region
      $region17: #{deep_svdd_forward.8} parent=11 // pred_check
        %p137 = pneg %p91
      $region18: #{deep_svdd_forward.8} parent=11 // pred_check_branch
        %139 = sbr.rel (%p137) target = $region20
      $region19: #{deep_svdd_forward.8} parent=11 // pred_region
        _
      $region20: #{deep_svdd_forward.8} parent=11 // pred_fallthru
        _
    $region12: #{deep_svdd_forward.8} parent=5 // pred_fallthru
      _
    %p140 = scmp.lt.s32.totalorder %s9, 2
    // Predicated region
    $region21: #{deep_svdd_forward.8} parent=5 // pred_check
      %p141 = pneg %p140
    $region22: #{deep_svdd_forward.8} parent=5 // pred_check_branch
      %143 = sbr.rel (%p141) target = $region24
    $region23: #{deep_svdd_forward.8} parent=5 // pred_region
      // Predicated region
      $region25: #{deep_svdd_forward.8} parent=23 // pred_check
        %p144 = pneg %p43
      $region26: #{deep_svdd_forward.8} parent=23 // pred_check_branch
        %146 = sbr.rel (%p144) target = $region28
      $region27: #{deep_svdd_forward.8} parent=23 // pred_region
        %s147 = smul.u32 8, %s17
        %p148 = scmp.lt.s32.totalorder %s16, 1
        %s149 = scalar_select %p148, %s16, 1
        %p150 = scmp.lt.s32.totalorder %s147, 7
        %s151 = scalar_select %p150, %s147, 7
        %s152 = smul.addr %s149, 8
        %s153 = sadd.s32 %s151, %s152
        %s154 = smul.addr %s153, 4
        %s155 = scalar_lea.vmem %s0, %s154
        %s156 = smul.u32 8, %s17
      $region28: #{deep_svdd_forward.8} parent=23 // pred_fallthru
        _
    $region24: #{deep_svdd_forward.8} parent=5 // pred_fallthru
      _
    %p157 = scmp.le.s32.totalorder 1, %s9
    %p158 = scmp.lt.s32.totalorder %s9, 3
    %p159 = pnand %p157, %p158
    %p160 = pneg %p159
    // Predicated region
    $region29: #{deep_svdd_forward.8} parent=5 // pred_check
      _
    $region30: #{deep_svdd_forward.8} parent=5 // pred_check_branch
      %162 = sbr.rel (%p159) target = $region32
    $region31: #{deep_svdd_forward.8} parent=5 // pred_region
      %s163 = ssub.s32 %s9, 1
      %s164 = smul.u32 8, %s19
      %p165 = scmp.lt.s32.totalorder %s18, 1
      %s166 = scalar_select %p165, %s18, 1
      %p167 = scmp.lt.s32.totalorder %s164, 7
      %s168 = scalar_select %p167, %s164, 7
      %s169 = smul.addr %s166, 8
      %s170 = sadd.s32 %s168, %s169
      %s171 = smul.addr %s170, 4
      %s172 = scalar_lea.vmem %s0, %s171
      %p173 = pneg %p49
      %p174 = pneg %p46
      %p175 = pneg %p70
      %p176 = pneg %p67
      %p177 = pneg %p91
      %p178 = pneg %p88
      %p179 = pneg %p119
      %p180 = pneg %p116
      %s181 = smul.u32 4, %s19
      %p182 = scmp.lt.s32.totalorder %s18, 1
      %s183 = scalar_select %p182, %s18, 1
      %p184 = scmp.lt.s32.totalorder %s181, 3
      %s185 = scalar_select %p184, %s181, 3
      %s186 = smul.addr %s183, 4
      %s187 = sadd.s32 %s185, %s186
      %s188 = smul.addr %s187, 2
      %s189 = scalar_lea.vmem %s3, %s188
      %s190 = smul.u32 8, %s19
      %p191 = scmp.lt.s32.totalorder %s18, 1
      %s192 = scalar_select %p191, %s18, 1
      %p193 = scmp.lt.s32.totalorder %s190, 7
      %s194 = scalar_select %p193, %s190, 7
      %s195 = smul.addr %s192, 8
      %s196 = sadd.s32 %s194, %s195
      %s197 = smul.addr %s196, 4
      %s198 = scalar_lea.vmem %s0, %s197
      %s199 = smul.u32 8, %s19
      %s200 = smul.u32 4, %s19
      %p201 = scmp.lt.s32.totalorder %s18, 1
      %s202 = scalar_select %p201, %s18, 1
      %p203 = scmp.lt.s32.totalorder %s200, 3
      %s204 = scalar_select %p203, %s200, 3
      %s205 = smul.addr %s202, 4
      %s206 = sadd.s32 %s204, %s205
      %s207 = smul.addr %s206, 2
      %s208 = scalar_lea.vmem %s3, %s207
      %s209 = smul.u32 4, %s19
      %v210 = vld [vmem:[%s198] sm:$0xf]
      %v211 = vld [vmem:[%s198 + $0x4] sm:$0xf]
      %v212 = vld [vmem:[%s198 + $0x8] sm:$0xf]
      %v213 = vld [vmem:[%s198 + $0xc] sm:$0xf]
      %v214 = vld [vmem:[%s198 + $0x10] sm:$0xf]
      %v215 = vld [vmem:[%s198 + $0x14] sm:$0xf]
      %v216 = vld [vmem:[%s198 + $0x18] sm:$0xf]
      %v217 = vld [vmem:[%s198 + $0x1c] sm:$0xf]
      %v218 = vunpack.c.l.bf16 %v210
      %v219 = vunpack.c.l.bf16 %v211
      %v220 = vunpack.c.l.bf16 %v212
      %v221 = vunpack.c.l.bf16 %v213
      %v222 = vunpack.c.l.bf16 %v214
      %v223 = vunpack.c.l.bf16 %v215
      %v224 = vunpack.c.l.bf16 %v216
      %v225 = vunpack.c.l.bf16 %v217
      %vm226 = vcmask 523264
      %v227 = vsel %vm226, %v218, -inf
      %v228 = vsel %vm226, %v219, -inf
      %v229 = vmax.f32 %v227, %v228
      %v230 = vsel %vm226, %v220, -inf
      %v231 = vsel %vm226, %v221, -inf
      %v232 = vmax.f32 %v230, %v231
      %v233 = vsel %vm226, %v222, -inf
      %v234 = vsel %vm226, %v223, -inf
      %v235 = vmax.f32 %v233, %v234
      %v236 = vsel %vm226, %v224, -inf
      %v237 = vsel %vm226, %v225, -inf
      %v238 = vmax.f32 %v236, %v237
      %v239 = vpack.c.bf16 %v229, %v229
      %v240 = vpack.c.bf16 %v232, %v232
      %v241 = vpack.c.bf16 %v235, %v235
      %v242 = vpack.c.bf16 %v238, %v238
      %v243 = vunpack.c.l.bf16 %v239
      %v244 = vunpack.c.l.bf16 %v240
      %v245 = vunpack.c.l.bf16 %v241
      %v246 = vunpack.c.l.bf16 %v242
      %247 = vst.msk [vmem:[#allocation2] sm:$0xff] %vm226, %v243
      %248 = vst.msk [vmem:[#allocation2 + $0x8] sm:$0xff] %vm226, %v244
      %249 = vst.msk [vmem:[#allocation2 + $0x10] sm:$0xff] %vm226, %v245
      %250 = vst.msk [vmem:[#allocation2 + $0x18] sm:$0xff] %vm226, %v246
      %v251 = vld [vmem:[#allocation2] ss:$2 sm:$0xf]
      %s252 = scalar_lea.vmem [#allocation2], 8
      %v253 = vld [vmem:[%s252] ss:$2 sm:$0xf]
      %s254 = scalar_lea.vmem [#allocation2], 16
      %v255 = vld [vmem:[%s254] ss:$2 sm:$0xf]
      %s256 = scalar_lea.vmem [#allocation2], 24
      %v257 = vld [vmem:[%s256] ss:$2 sm:$0xf]
      %s258 = scalar_lea.vmem [#allocation2], 1
      %v259 = vld [vmem:[%s258] ss:$2 sm:$0xf]
      %s260 = scalar_lea.vmem [#allocation2], 9
      %v261 = vld [vmem:[%s260] ss:$2 sm:$0xf]
      %s262 = scalar_lea.vmem [#allocation2], 17
      %v263 = vld [vmem:[%s262] ss:$2 sm:$0xf]
      %s264 = scalar_lea.vmem [#allocation2], 25
      %v265 = vld [vmem:[%s264] ss:$2 sm:$0xf]
      %v266 = vmax.f32 %v251, %v259
      %v267 = vmax.f32 %v253, %v261
      %v268 = vmax.f32 %v255, %v263
      %v269 = vmax.f32 %v257, %v265
      %v270 = vld [vmem:[%s1] sm:$0x1]
      %v271 = vmul.f32 %v270, 0.0078125
      %v272 = vld [vmem:[%s2] sm:$0x1]
      %v273 = vmul.f32 %v272, 0.0078125
      %v274 = vmul.f32 %v271, %v271
      %v275 = vsub.f32 %v273, %v274
      %v276 = vadd.f32 %v275, 0.0001
      %v277 = vrsqrt.pop %v276
      %v278 = vmul.f32 %v277, %v276
      %v279 = vmul.f32 %v278, %v277
      %v280 = vmul.f32 0.5, %v279
      %v281 = vsub.f32 1.5, %v280
      %v282 = vmul.f32 %v277, %v281
      %vm283 = vweird.f32 %v276
      %vm284 = vweird.f32 %v277
      %vm285 = vmor %vm283, %vm284
      %v286 = vsel %vm285, %v277, %v282
      %v288 = vperm.slane %v271, 0
      %v290 = vsub.f32 %v266, %v288
      %v291 = vsub.f32 %v267, %v288
      %v292 = vsub.f32 %v268, %v288
      %v293 = vsub.f32 %v269, %v288
      %v295 = vperm.slane %v286, 0
      %v297 = vmul.f32 %v290, %v295
      %v298 = vmul.f32 %v291, %v295
      %v299 = vmul.f32 %v292, %v295
      %v300 = vmul.f32 %v293, %v295
      %vm301 = vcmp.ge.f32.partialorder %v297, 0.0
      %vm302 = vcmp.ge.f32.partialorder %v298, 0.0
      %vm303 = vcmp.ge.f32.partialorder %v299, 0.0
      %vm304 = vcmp.ge.f32.partialorder %v300, 0.0
      %v305 = vmul.f32 %v297, 0.01
      %v306 = vmul.f32 %v298, 0.01
      %v307 = vmul.f32 %v299, 0.01
      %v308 = vmul.f32 %v300, 0.01
      %v309 = vsel %vm301, %v297, %v305
      %v310 = vsel %vm302, %v298, %v306
      %v311 = vsel %vm303, %v299, %v307
      %v312 = vsel %vm304, %v300, %v308
      %v313 = vpack.c.bf16 %v309, %v309
      %v314 = vpack.c.bf16 %v310, %v310
      %v315 = vpack.c.bf16 %v311, %v311
      %v316 = vpack.c.bf16 %v312, %v312
      %vm317 = vcmask 517120
      %318 = vst.msk [vmem:[%s208] sm:$0x3] %vm317, %v313
      %319 = vst.msk [vmem:[%s208 + $0x2] sm:$0x3] %vm317, %v314
      %320 = vst.msk [vmem:[%s208 + $0x4] sm:$0x3] %vm317, %v315
      %321 = vst.msk [vmem:[%s208 + $0x6] sm:$0x3] %vm317, %v316
      %s322 = smul.u32 4, %s19
      %p323 = scmp.lt.s32.totalorder %s18, 1
      %s324 = scalar_select %p323, %s18, 1
      %p325 = scmp.lt.s32.totalorder %s322, 3
      %s326 = scalar_select %p325, %s322, 3
      %s327 = smul.addr %s324, 4
      %s328 = sadd.s32 %s326, %s327
      %s329 = smul.addr %s328, 2
      %s330 = scalar_lea.vmem %s3, %s329
      // Predicated region
      $region33: #{deep_svdd_forward.8} parent=31 // pred_check
        %p331 = pneg %p116
      $region34: #{deep_svdd_forward.8} parent=31 // pred_check_branch
        %333 = sbr.rel (%p331) target = $region36
      $region35: #{deep_svdd_forward.8} parent=31 // pred_region
        %s334 = smul.u32 4, %s19
      $region36: #{deep_svdd_forward.8} parent=31 // pred_fallthru
        _
    $region32: #{deep_svdd_forward.8} parent=5 // pred_fallthru
      _
    %p335 = scmp.le.s32.totalorder 2, %s9
    // Predicated region
    $region37: #{deep_svdd_forward.8} parent=5 // pred_check
      %p336 = pneg %p335
    $region38: #{deep_svdd_forward.8} parent=5 // pred_check_branch
      %338 = sbr.rel (%p336) target = $region40
    $region39: #{deep_svdd_forward.8} parent=5 // pred_region
      %s339 = ssub.s32 %s9, 2
      // Predicated region
      $region41: #{deep_svdd_forward.8} parent=39 // pred_check
        %p340 = pneg %p122
      $region42: #{deep_svdd_forward.8} parent=39 // pred_check_branch
        %342 = sbr.rel (%p340) target = $region44
      $region43: #{deep_svdd_forward.8} parent=39 // pred_region
        %s343 = smul.u32 4, %s21
        %p344 = scmp.lt.s32.totalorder %s20, 1
        %s345 = scalar_select %p344, %s20, 1
        %p346 = scmp.lt.s32.totalorder %s343, 3
        %s347 = scalar_select %p346, %s343, 3
        %s348 = smul.addr %s345, 4
        %s349 = sadd.s32 %s347, %s348
        %s350 = smul.addr %s349, 2
        %s351 = scalar_lea.vmem %s3, %s350
      $region44: #{deep_svdd_forward.8} parent=39 // pred_fallthru
        _
    $region40: #{deep_svdd_forward.8} parent=5 // pred_fallthru
      _
  $region6: #{deep_svdd_forward.8} parent=0 // loop_footer
    %s13 = sadd.s32 1, %s9
  $region7: #{deep_svdd_forward.8} parent=0 // loop_footer_branch
    %8 = sbr.rel target = $region3
  $region8: #{deep_svdd_forward.8} parent=0 // loop_exit
    _

// kernel: deep_svdd_forward.9
$region0: #{deep_svdd_forward.9}
  #allocation0 [shape = 'u32[]', space=smem, size = 0x4, offset = 0x4, fixed_abs, tag = 'smem constant byte address 0x4 - core index']
  #allocation1 [shape = 'u32[72,128]{1,0:T(1,128)}', space=vmem, size = 0x9000, scoped, tag = 'internal scratch']
  #allocation2 [shape = 'f32[2,32]{1,0:T(2,128)}', space=vmem, size = 0x400, scoped, tag = 'scratch operand']
  %s0 = inlined_call_operand.vmem [shape: bf16[2,1024], index: 0, kind: input, shape index: {}]
  %s1 = inlined_call_operand.vmem [shape: bf16[32,1024], index: 1, kind: input, shape index: {}]
  %s2 = inlined_call_operand.hbm [shape: f32[2,32], index: 2, kind: output, shape index: {}]
  %s3 = sld [smem:[#allocation0]]
  $region26: #{deep_svdd_forward.9} parent=0
    _
  %s5 = ssub.s32 1, %s3
  %s6 = scalar_select 0, %s5, %s3
  $region1: #{deep_svdd_forward.9} parent=0
    #allocation3 [shape = 'u8[1024]{0}', space=vmem, size = 0x400, scoped, tag = 'output window, operand 0, single buffered']
    #allocation4 [shape = 's32[1]{0}', space=sflag, size = 0x4, scoped, tag = 'scoped memory for deep_svdd_forward.9']
    %7 = vsyncpa [#allocation4], 0
    // Predicated region
    $region2: #{deep_svdd_forward.9} parent=1 // pred_check
      _
    $region3: #{deep_svdd_forward.9} parent=1 // pred_check_branch
      %9 = sbr.rel (0) target = $region5
    $region4: #{deep_svdd_forward.9} parent=1 // pred_region
      _
    $region5: #{deep_svdd_forward.9} parent=1 // pred_fallthru
      _
    // Predicated region
    $region6: #{deep_svdd_forward.9} parent=1 // pred_check
      _
    $region7: #{deep_svdd_forward.9} parent=1 // pred_check_branch
      %11 = sbr.rel (0) target = $region9
    $region8: #{deep_svdd_forward.9} parent=1 // pred_region
      _
    $region9: #{deep_svdd_forward.9} parent=1 // pred_fallthru
      _
    %p13 = scmp.eq.s32.totalorder 0, 0
    // Predicated region
    $region10: #{deep_svdd_forward.9} parent=1 // pred_check
      %p14 = pneg %p13
    $region11: #{deep_svdd_forward.9} parent=1 // pred_check_branch
      %16 = sbr.rel (%p14) target = $region13
    $region12: #{deep_svdd_forward.9} parent=1 // pred_region
      %vm17 = vcmask 254976
      %18 = vst.msk [vmem:[#allocation2] sm:$0x3] %vm17, 0.0
    $region13: #{deep_svdd_forward.9} parent=1 // pred_fallthru
      _
    %v19 = vld [vmem:[#allocation2] sm:$0x3]
    %v20 = vld [vmem:[%s0] sm:$0xff]
    %v21 = vld [vmem:[%s1] sm:$0xff]
    %v22 = vld [vmem:[%s1 + $0x8] sm:$0xff]
    %v23 = vld [vmem:[%s1 + $0x10] sm:$0xff]
    %v24 = vld [vmem:[%s1 + $0x18] sm:$0xff]
    %v25 = vld [vmem:[%s1 + $0x20] sm:$0xff]
    %v26 = vld [vmem:[%s1 + $0x28] sm:$0xff]
    %v27 = vld [vmem:[%s1 + $0x30] sm:$0xff]
    %v28 = vld [vmem:[%s1 + $0x38] sm:$0xff]
    %v29 = vld [vmem:[%s1 + $0x40] sm:$0xff]
    %v30 = vld [vmem:[%s1 + $0x48] sm:$0xff]
    %v31 = vld [vmem:[%s1 + $0x50] sm:$0xff]
    %v32 = vld [vmem:[%s1 + $0x58] sm:$0xff]
    %v33 = vld [vmem:[%s1 + $0x60] sm:$0xff]
    %v34 = vld [vmem:[%s1 + $0x68] sm:$0xff]
    %v35 = vld [vmem:[%s1 + $0x70] sm:$0xff]
    %v36 = vld [vmem:[%s1 + $0x78] sm:$0xff]
    %38 = vst [vmem:[#allocation1] ss:$9 sm:$0xff] %v20
    %v39 = vld [vmem:[#allocation1] sm:$0xff]
    %v40 = vld [vmem:[#allocation1 + $0x9] sm:$0xff]
    %v41 = vld [vmem:[#allocation1 + $0x12] sm:$0xff]
    %v42 = vld [vmem:[#allocation1 + $0x1b] sm:$0xff]
    %v43 = vld [vmem:[#allocation1 + $0x24] sm:$0xff]
    %v44 = vld [vmem:[#allocation1 + $0x2d] sm:$0xff]
    %v45 = vld [vmem:[#allocation1 + $0x36] sm:$0xff]
    %v46 = vld [vmem:[#allocation1 + $0x3f] sm:$0xff]
    %v71 = vunpack.c.l.b16 %v21
    %v72 = vunpack.c.h.b16 %v21
    %v73 = vunpack.c.l.b16 %v22
    %v74 = vunpack.c.h.b16 %v22
    %v75 = vunpack.c.l.b16 %v23
    %v76 = vunpack.c.h.b16 %v23
    %v77 = vunpack.c.l.b16 %v24
    %v78 = vunpack.c.h.b16 %v24
    %v79 = vunpack.c.l.b16 %v25
    %v80 = vunpack.c.h.b16 %v25
    %v81 = vunpack.c.l.b16 %v26
    %v82 = vunpack.c.h.b16 %v26
    %v83 = vunpack.c.l.b16 %v27
    %v84 = vunpack.c.h.b16 %v27
    %v85 = vunpack.c.l.b16 %v28
    %v86 = vunpack.c.h.b16 %v28
    %v87 = vunpack.c.l.b16 %v29
    %v88 = vunpack.c.h.b16 %v29
    %v89 = vunpack.c.l.b16 %v30
    %v90 = vunpack.c.h.b16 %v30
    %v91 = vunpack.c.l.b16 %v31
    %v92 = vunpack.c.h.b16 %v31
    %v93 = vunpack.c.l.b16 %v32
    %v94 = vunpack.c.h.b16 %v32
    %v95 = vunpack.c.l.b16 %v33
    %v96 = vunpack.c.h.b16 %v33
    %v97 = vunpack.c.l.b16 %v34
    %v98 = vunpack.c.h.b16 %v34
    %v99 = vunpack.c.l.b16 %v35
    %v100 = vunpack.c.h.b16 %v35
    %v101 = vunpack.c.l.b16 %v36
    %v102 = vunpack.c.h.b16 %v36
    %v103 = vpack.c.b16 %v79, %v71
    %v104 = vpack.c.b16 %v80, %v72
    %v105 = vpack.c.b16 %v81, %v73
    %v106 = vpack.c.b16 %v82, %v74
    %v107 = vpack.c.b16 %v83, %v75
    %v108 = vpack.c.b16 %v84, %v76
    %v109 = vpack.c.b16 %v85, %v77
    %v110 = vpack.c.b16 %v86, %v78
    %v111 = vpack.c.b16 %v95, %v87
    %v112 = vpack.c.b16 %v96, %v88
    %v113 = vpack.c.b16 %v97, %v89
    %v114 = vpack.c.b16 %v98, %v90
    %v115 = vpack.c.b16 %v99, %v91
    %v116 = vpack.c.b16 %v100, %v92
    %v117 = vpack.c.b16 %v101, %v93
    %v118 = vpack.c.b16 %v102, %v94
    %135 = vmatpush.bf16.xpose.msra.mxu0 0
    %136 = vmatpush.bf16.xpose.msra.mxu0 0
    %137 = vmatpush.bf16.xpose.msra.mxu0 0
    %138 = vmatpush.bf16.xpose.msra.mxu0 0
    %139 = vmatpush.bf16.xpose.msra.mxu0 0
    %140 = vmatpush.bf16.xpose.msra.mxu0 0
    %141 = vmatpush.bf16.xpose.msra.mxu0 %v111
    %142 = vmatpush.bf16.xpose.msra.mxu0 %v103
    %143 = vmatmul.bf16.gmra.mxu0 %v39
    %v144 = vpop.f32.mrf.mxu0
    %v145 = vadd.f32 0.0, %v144
    %v146 = vpop.f32.mrf.mxu0
    %147 = vdwg.mxu0
    %148 = vmatpush.bf16.xpose.msra.mxu0 0
    %149 = vmatpush.bf16.xpose.msra.mxu0 0
    %150 = vmatpush.bf16.xpose.msra.mxu0 0
    %151 = vmatpush.bf16.xpose.msra.mxu0 0
    %152 = vmatpush.bf16.xpose.msra.mxu0 0
    %153 = vmatpush.bf16.xpose.msra.mxu0 0
    %154 = vmatpush.bf16.xpose.msra.mxu0 %v112
    %155 = vmatpush.bf16.xpose.msra.mxu0 %v104
    %156 = vmatmul.bf16.gmra.mxu0 %v40
    %v157 = vpop.f32.mrf.mxu0
    %v158 = vadd.f32 %v145, %v157
    %v159 = vpop.f32.mrf.mxu0
    %160 = vdwg.mxu0
    %161 = vmatpush.bf16.xpose.msra.mxu0 0
    %162 = vmatpush.bf16.xpose.msra.mxu0 0
    %163 = vmatpush.bf16.xpose.msra.mxu0 0
    %164 = vmatpush.bf16.xpose.msra.mxu0 0
    %165 = vmatpush.bf16.xpose.msra.mxu0 0
    %166 = vmatpush.bf16.xpose.msra.mxu0 0
    %167 = vmatpush.bf16.xpose.msra.mxu0 %v113
    %168 = vmatpush.bf16.xpose.msra.mxu0 %v105
    %169 = vmatmul.bf16.gmra.mxu0 %v41
    %v170 = vpop.f32.mrf.mxu0
    %v171 = vadd.f32 %v158, %v170
    %v172 = vpop.f32.mrf.mxu0
    %173 = vdwg.mxu0
    %174 = vmatpush.bf16.xpose.msra.mxu0 0
    %175 = vmatpush.bf16.xpose.msra.mxu0 0
    %176 = vmatpush.bf16.xpose.msra.mxu0 0
    %177 = vmatpush.bf16.xpose.msra.mxu0 0
    %178 = vmatpush.bf16.xpose.msra.mxu0 0
    %179 = vmatpush.bf16.xpose.msra.mxu0 0
    %180 = vmatpush.bf16.xpose.msra.mxu0 %v114
    %181 = vmatpush.bf16.xpose.msra.mxu0 %v106
    %182 = vmatmul.bf16.gmra.mxu0 %v42
    %v183 = vpop.f32.mrf.mxu0
    %v184 = vadd.f32 %v171, %v183
    %v185 = vpop.f32.mrf.mxu0
    %186 = vdwg.mxu0
    %187 = vmatpush.bf16.xpose.msra.mxu0 0
    %188 = vmatpush.bf16.xpose.msra.mxu0 0
    %189 = vmatpush.bf16.xpose.msra.mxu0 0
    %190 = vmatpush.bf16.xpose.msra.mxu0 0
    %191 = vmatpush.bf16.xpose.msra.mxu0 0
    %192 = vmatpush.bf16.xpose.msra.mxu0 0
    %193 = vmatpush.bf16.xpose.msra.mxu0 %v115
    %194 = vmatpush.bf16.xpose.msra.mxu0 %v107
    %195 = vmatmul.bf16.gmra.mxu0 %v43
    %v196 = vpop.f32.mrf.mxu0
    %v197 = vadd.f32 %v184, %v196
    %v198 = vpop.f32.mrf.mxu0
    %199 = vdwg.mxu0
    %200 = vmatpush.bf16.xpose.msra.mxu0 0
    %201 = vmatpush.bf16.xpose.msra.mxu0 0
    %202 = vmatpush.bf16.xpose.msra.mxu0 0
    %203 = vmatpush.bf16.xpose.msra.mxu0 0
    %204 = vmatpush.bf16.xpose.msra.mxu0 0
    %205 = vmatpush.bf16.xpose.msra.mxu0 0
    %206 = vmatpush.bf16.xpose.msra.mxu0 %v116
    %207 = vmatpush.bf16.xpose.msra.mxu0 %v108
    %208 = vmatmul.bf16.gmra.mxu0 %v44
    %v209 = vpop.f32.mrf.mxu0
    %v210 = vadd.f32 %v197, %v209
    %v211 = vpop.f32.mrf.mxu0
    %212 = vdwg.mxu0
    %213 = vmatpush.bf16.xpose.msra.mxu0 0
    %214 = vmatpush.bf16.xpose.msra.mxu0 0
    %215 = vmatpush.bf16.xpose.msra.mxu0 0
    %216 = vmatpush.bf16.xpose.msra.mxu0 0
    %217 = vmatpush.bf16.xpose.msra.mxu0 0
    %218 = vmatpush.bf16.xpose.msra.mxu0 0
    %219 = vmatpush.bf16.xpose.msra.mxu0 %v117
    %220 = vmatpush.bf16.xpose.msra.mxu0 %v109
    %221 = vmatmul.bf16.gmra.mxu0 %v45
    %v222 = vpop.f32.mrf.mxu0
    %v223 = vadd.f32 %v210, %v222
    %v224 = vpop.f32.mrf.mxu0
    %225 = vdwg.mxu0
    %226 = vmatpush.bf16.xpose.msra.mxu0 0
    %227 = vmatpush.bf16.xpose.msra.mxu0 0
    %228 = vmatpush.bf16.xpose.msra.mxu0 0
    %229 = vmatpush.bf16.xpose.msra.mxu0 0
    %230 = vmatpush.bf16.xpose.msra.mxu0 0
    %231 = vmatpush.bf16.xpose.msra.mxu0 0
    %232 = vmatpush.bf16.xpose.msra.mxu0 %v118
    %233 = vmatpush.bf16.xpose.msra.mxu0 %v110
    %234 = vmatmul.bf16.gmra.mxu0 %v46
    %v235 = vpop.f32.mrf.mxu0
    %v236 = vadd.f32 %v223, %v235
    %v237 = vpop.f32.mrf.mxu0
    %238 = vdwg.mxu0
    %v239 = vadd.f32 %v19, %v236
    %vm240 = vcmask 254976
    %241 = vst.msk [vmem:[#allocation2] sm:$0x3] %vm240, %v239
    // Predicated region
    $region14: #{deep_svdd_forward.9} parent=1 // pred_check
      %p242 = pneg %p13
    $region15: #{deep_svdd_forward.9} parent=1 // pred_check_branch
      %244 = sbr.rel (%p242) target = $region17
    $region16: #{deep_svdd_forward.9} parent=1 // pred_region
      %v245 = vld [vmem:[#allocation2] sm:$0x3]
      %246 = vst.msk [vmem:[#allocation3] sm:$0x3] %vm240, %v245
    $region17: #{deep_svdd_forward.9} parent=1 // pred_fallthru
      _
    // Predicated region
    $region18: #{deep_svdd_forward.9} parent=1 // pred_check
      _
    $region19: #{deep_svdd_forward.9} parent=1 // pred_check_branch
      %248 = sbr.rel (0) target = $region21
    $region20: #{deep_svdd_forward.9} parent=1 // pred_region
      %250 = vsyncadd [#allocation4], 0
      %s252 = sshll.u32 [#allocation3], 4
      %s253 = int_to_ptr.vmem [resolvable:$true] %s252
      %s254 = sshll.u32 %s2, 4
      %s255 = int_to_ptr.hbm [resolvable:$true] %s254
      %257 = dma.vmem_to_hbm [thread:$0]  %s253, 32, %s255, [#allocation4]
    $region21: #{deep_svdd_forward.9} parent=1 // pred_fallthru
      _
    // Predicated region
    $region22: #{deep_svdd_forward.9} parent=1 // pred_check
      _
    $region23: #{deep_svdd_forward.9} parent=1 // pred_check_branch
      %259 = sbr.rel (0) target = $region25
    $region24: #{deep_svdd_forward.9} parent=1 // pred_region
      %261 = dma.done [#allocation4], 32
    $region25: #{deep_svdd_forward.9} parent=1 // pred_fallthru
      _
    %262 = vsyncpa [#allocation4], 1

// kernel: deep_svdd_forward.7
$region0: #{deep_svdd_forward.7}
  #allocation0 [shape = 'u32[]', space=smem, size = 0x4, offset = 0x4, fixed_abs, tag = 'smem constant byte address 0x4 - core index']
  #allocation1 [shape = 'u32[72,128]{1,0:T(1,128)}', space=vmem, size = 0x9000, scoped, tag = 'internal scratch']
  %s0 = inlined_call_operand.vmem [shape: bf16[2,12,8,128], index: 0, kind: input, shape index: {}]
  %s1 = inlined_call_operand.vmem [shape: bf16[5,640,64], index: 1, kind: input, shape index: {}]
  %s2 = inlined_call_operand.vmem [shape: bf16[2,8,8,64], index: 2, kind: output, shape index: {0}]
  %s3 = inlined_call_operand.vmem [shape: f32[2,1,64], index: 3, kind: output, shape index: {1}]
  %s4 = inlined_call_operand.vmem [shape: f32[2,1,64], index: 4, kind: output, shape index: {2}]
  %5 = xla_tuple %s2, %s3, %s4
  %s6 = sld [smem:[#allocation0]]
  $region61: #{deep_svdd_forward.7} parent=0
    _
  %s8 = ssub.s32 1, %s6
  %s9 = scalar_select 0, %s8, %s6
  loop: start=0, step=1, limit=4
  $region2: #{deep_svdd_forward.7} parent=0 // loop_pre_header
    _
  $region3: #{deep_svdd_forward.7} parent=0 // loop_header
    %s11 = sphi 0, %s15
    %p12 = scmp.ge.s32.totalorder %s11, 4
    %s18 = sphi 0, %s37
    %s19 = sphi 0, %s33
    %s20 = sphi 0, %s29
    %s21 = sphi 0, %s18
    %s22 = sphi 0, %s19
    %s23 = sphi 0, %s20
    %s24 = sphi 0, %s21
    %s25 = sphi 0, %s22
    %s26 = sphi 0, %s23
    %s40 = sphi 0, %s42
    %s43 = sphi 0, %s40
    %s44 = sphi 0, %s43
    %s60 = sphi 0, %s44
    %s66 = sphi 0, %s68
    %s69 = sphi 0, %s66
    %s70 = sphi 0, %s69
    %s86 = sphi 0, %s70
    %s96 = sphi 0, %s98
    %s99 = sphi 0, %s96
    %s100 = sphi 0, %s99
    %s116 = sphi 0, %s100
    %s124 = sphi 0, %s126
    %s127 = sphi 0, %s124
    %s128 = sphi 0, %s127
    %s144 = sphi 0, %s128
    %s152 = sphi 0, %s154
    %s155 = sphi 0, %s152
    %s156 = sphi 0, %s155
    %s172 = sphi 0, %s156
  $region4: #{deep_svdd_forward.7} parent=0 // loop_header_branch
    %14 = sbr.rel (%p12) target = $region8
  $region5: #{deep_svdd_forward.7} parent=0 // loop_body
    %s16 = ssub.s32 %s11, 1
    %s17 = ssub.s32 %s11, 2
    %s27 = sadd.s32 1, %s20
    %p28 = scmp.ge.s32.totalorder %s27, 1
    %s29 = scalar_select %p28, 0, %s27
    %s30 = sadd.s32 1, %s19
    %s31 = scalar_select %p28, %s30, %s19
    %p32 = scmp.ge.s32.totalorder %s31, 2
    %s33 = scalar_select %p32, 0, %s31
    %s34 = sadd.s32 1, %s18
    %s35 = scalar_select %p32, %s34, %s18
    %p36 = scmp.ge.s32.totalorder %s35, 1
    %s37 = scalar_select %p36, 0, %s35
    %s38 = ssub.s32 %s19, %s33
    %p39 = scmp.eq.s32.totalorder %s38, 0
    %s41 = sadd.s32 %s40, 1
    %s42 = scalar_select %p39, %s40, %s41
    %p45 = pneg %p39
    %p46 = scmp.eq.s32.totalorder %s11, 1
    %p47 = por %p45, %p46
    %p48 = scmp.ne.s32.totalorder %s40, %s43
    %p49 = scmp.eq.s32.totalorder %s11, 0
    %p50 = por %p48, %p49
    %p51 = scmp.ne.s32.totalorder %s40, %s43
    %p52 = scmp.eq.s32.totalorder %s16, 1
    %p53 = por %p51, %p52
    %p54 = scmp.ne.s32.totalorder %s43, %s44
    %p55 = scmp.eq.s32.totalorder %s16, 0
    %p56 = por %p54, %p55
    %p57 = scmp.ne.s32.totalorder %s43, %s44
    %p58 = scmp.eq.s32.totalorder %s17, 1
    %p59 = por %p57, %p58
    %p61 = scmp.ne.s32.totalorder %s44, %s60
    %p62 = scmp.eq.s32.totalorder %s17, 0
    %p63 = por %p61, %p62
    %s64 = ssub.s32 %s18, %s37
    %p65 = scmp.eq.s32.totalorder %s64, 0
    %s67 = sadd.s32 %s66, 1
    %s68 = scalar_select %p65, %s66, %s67
    %p71 = pneg %p65
    %p72 = scmp.eq.s32.totalorder %s11, 1
    %p73 = por %p71, %p72
    %p74 = scmp.ne.s32.totalorder %s66, %s69
    %p75 = scmp.eq.s32.totalorder %s11, 0
    %p76 = por %p74, %p75
    %p77 = scmp.ne.s32.totalorder %s66, %s69
    %p78 = scmp.eq.s32.totalorder %s16, 1
    %p79 = por %p77, %p78
    %p80 = scmp.ne.s32.totalorder %s69, %s70
    %p81 = scmp.eq.s32.totalorder %s16, 0
    %p82 = por %p80, %p81
    %p83 = scmp.ne.s32.totalorder %s69, %s70
    %p84 = scmp.eq.s32.totalorder %s17, 1
    %p85 = por %p83, %p84
    %p87 = scmp.ne.s32.totalorder %s70, %s86
    %p88 = scmp.eq.s32.totalorder %s17, 0
    %p89 = por %p87, %p88
    %s90 = ssub.s32 %s19, %s33
    %s91 = ssub.s32 %s20, %s29
    %s92 = sor.u32 %s90, %s91
    %s93 = ssub.s32 %s18, %s37
    %s94 = sor.u32 %s92, %s93
    %p95 = scmp.eq.s32.totalorder %s94, 0
    %s97 = sadd.s32 %s96, 1
    %s98 = scalar_select %p95, %s96, %s97
    %p101 = pneg %p95
    %p102 = scmp.eq.s32.totalorder %s11, 1
    %p103 = por %p101, %p102
    %p104 = scmp.ne.s32.totalorder %s96, %s99
    %p105 = scmp.eq.s32.totalorder %s11, 0
    %p106 = por %p104, %p105
    %p107 = scmp.ne.s32.totalorder %s96, %s99
    %p108 = scmp.eq.s32.totalorder %s16, 1
    %p109 = por %p107, %p108
    %p110 = scmp.ne.s32.totalorder %s99, %s100
    %p111 = scmp.eq.s32.totalorder %s16, 0
    %p112 = por %p110, %p111
    %p113 = scmp.ne.s32.totalorder %s99, %s100
    %p114 = scmp.eq.s32.totalorder %s17, 1
    %p115 = por %p113, %p114
    %p117 = scmp.ne.s32.totalorder %s100, %s116
    %p118 = scmp.eq.s32.totalorder %s17, 0
    %p119 = por %p117, %p118
    %s120 = ssub.s32 %s19, %s33
    %s121 = ssub.s32 %s18, %s37
    %s122 = sor.u32 %s120, %s121
    %p123 = scmp.eq.s32.totalorder %s122, 0
    %s125 = sadd.s32 %s124, 1
    %s126 = scalar_select %p123, %s124, %s125
    %p129 = pneg %p123
    %p130 = scmp.eq.s32.totalorder %s11, 1
    %p131 = por %p129, %p130
    %p132 = scmp.ne.s32.totalorder %s124, %s127
    %p133 = scmp.eq.s32.totalorder %s11, 0
    %p134 = por %p132, %p133
    %p135 = scmp.ne.s32.totalorder %s124, %s127
    %p136 = scmp.eq.s32.totalorder %s16, 1
    %p137 = por %p135, %p136
    %p138 = scmp.ne.s32.totalorder %s127, %s128
    %p139 = scmp.eq.s32.totalorder %s16, 0
    %p140 = por %p138, %p139
    %p141 = scmp.ne.s32.totalorder %s127, %s128
    %p142 = scmp.eq.s32.totalorder %s17, 1
    %p143 = por %p141, %p142
    %p145 = scmp.ne.s32.totalorder %s128, %s144
    %p146 = scmp.eq.s32.totalorder %s17, 0
    %p147 = por %p145, %p146
    %s148 = ssub.s32 %s19, %s33
    %s149 = ssub.s32 %s18, %s37
    %s150 = sor.u32 %s148, %s149
    %p151 = scmp.eq.s32.totalorder %s150, 0
    %s153 = sadd.s32 %s152, 1
    %s154 = scalar_select %p151, %s152, %s153
    %p157 = pneg %p151
    %p158 = scmp.eq.s32.totalorder %s11, 1
    %p159 = por %p157, %p158
    %p160 = scmp.ne.s32.totalorder %s152, %s155
    %p161 = scmp.eq.s32.totalorder %s11, 0
    %p162 = por %p160, %p161
    %p163 = scmp.ne.s32.totalorder %s152, %s155
    %p164 = scmp.eq.s32.totalorder %s16, 1
    %p165 = por %p163, %p164
    %p166 = scmp.ne.s32.totalorder %s155, %s156
    %p167 = scmp.eq.s32.totalorder %s16, 0
    %p168 = por %p166, %p167
    %p169 = scmp.ne.s32.totalorder %s155, %s156
    %p170 = scmp.eq.s32.totalorder %s17, 1
    %p171 = por %p169, %p170
    %p173 = scmp.ne.s32.totalorder %s156, %s172
    %p174 = scmp.eq.s32.totalorder %s17, 0
    %p175 = por %p173, %p174
    %p176 = scmp.le.s32.totalorder 1, %s11
    %p177 = scmp.lt.s32.totalorder %s11, 3
    %p178 = pnand %p176, %p177
    %p179 = pneg %p178
    // Predicated region
    $region9: #{deep_svdd_forward.7} parent=5 // pred_check
      _
    $region10: #{deep_svdd_forward.7} parent=5 // pred_check_branch
      %181 = sbr.rel (%p178) target = $region12
    $region11: #{deep_svdd_forward.7} parent=5 // pred_region
      %s182 = ssub.s32 %s11, 1
      // Predicated region
      $region13: #{deep_svdd_forward.7} parent=11 // pred_check
        %p183 = pneg %p82
      $region14: #{deep_svdd_forward.7} parent=11 // pred_check_branch
        %185 = sbr.rel (%p183) target = $region16
      $region15: #{deep_svdd_forward.7} parent=11 // pred_region
        %p186 = scmp.lt.s32.totalorder %s21, 0
        %s187 = scalar_select %p186, %s21, 0
        %s188 = smul.addr %s187, 4
        %s189 = scalar_lea.vmem %s1, %s188
      $region16: #{deep_svdd_forward.7} parent=11 // pred_fallthru
        _
    $region12: #{deep_svdd_forward.7} parent=5 // pred_fallthru
      _
    %p190 = scmp.lt.s32.totalorder %s11, 2
    // Predicated region
    $region17: #{deep_svdd_forward.7} parent=5 // pred_check
      %p191 = pneg %p190
    $region18: #{deep_svdd_forward.7} parent=5 // pred_check_branch
      %193 = sbr.rel (%p191) target = $region20
    $region19: #{deep_svdd_forward.7} parent=5 // pred_region
      // Predicated region
      $region21: #{deep_svdd_forward.7} parent=19 // pred_check
        %p194 = pneg %p50
      $region22: #{deep_svdd_forward.7} parent=19 // pred_check_branch
        %196 = sbr.rel (%p194) target = $region24
      $region23: #{deep_svdd_forward.7} parent=19 // pred_region
        %p197 = scmp.lt.s32.totalorder %s19, 1
        %s198 = scalar_select %p197, %s19, 1
        %s199 = smul.addr %s198, 12
        %s200 = smul.addr %s199, 4
        %s201 = scalar_lea.vmem %s0, %s200
      $region24: #{deep_svdd_forward.7} parent=19 // pred_fallthru
        _
    $region20: #{deep_svdd_forward.7} parent=5 // pred_fallthru
      _
    %p202 = scmp.le.s32.totalorder 1, %s11
    %p203 = scmp.lt.s32.totalorder %s11, 3
    %p204 = pnand %p202, %p203
    %p205 = pneg %p204
    // Predicated region
    $region25: #{deep_svdd_forward.7} parent=5 // pred_check
      _
    $region26: #{deep_svdd_forward.7} parent=5 // pred_check_branch
      %207 = sbr.rel (%p204) target = $region28
    $region27: #{deep_svdd_forward.7} parent=5 // pred_region
      %s208 = ssub.s32 %s11, 1
      %p209 = scmp.lt.s32.totalorder %s22, 1
      %s210 = scalar_select %p209, %s22, 1
      %s211 = smul.addr %s210, 12
      %s212 = smul.addr %s211, 4
      %s213 = scalar_lea.vmem %s0, %s212
      %p214 = pneg %p56
      %p215 = pneg %p53
      %p216 = scmp.lt.s32.totalorder %s21, 0
      %s217 = scalar_select %p216, %s21, 0
      %s218 = smul.addr %s217, 4
      %s219 = scalar_lea.vmem %s1, %s218
      %p220 = pneg %p82
      %p221 = pneg %p79
      %p222 = pneg %p112
      %p223 = pneg %p109
      %s224 = smul.u32 8, %s23
      %p225 = scmp.lt.s32.totalorder %s22, 1
      %s226 = scalar_select %p225, %s22, 1
      %p227 = scmp.lt.s32.totalorder %s224, 7
      %s228 = scalar_select %p227, %s224, 7
      %p229 = scmp.lt.s32.totalorder %s21, 0
      %s230 = scalar_select %p229, %s21, 0
      %s231 = sadd.s32 %s230, %s228
      %s232 = smul.addr %s226, 8
      %s233 = sadd.s32 %s231, %s232
      %s234 = smul.addr %s233, 4
      %s235 = scalar_lea.vmem %s2, %s234
      %p236 = pneg %p140
      %p237 = pneg %p137
      %p238 = scmp.lt.s32.totalorder %s22, 1
      %s239 = scalar_select %p238, %s22, 1
      %p240 = scmp.lt.s32.totalorder %s21, 0
      %s241 = scalar_select %p240, %s21, 0
      %s242 = sadd.s32 %s241, %s239
      %s243 = scalar_lea.vmem %s3, %s242
      %p244 = pneg %p168
      %p245 = pneg %p165
      %p246 = scmp.lt.s32.totalorder %s22, 1
      %s247 = scalar_select %p246, %s22, 1
      %p248 = scmp.lt.s32.totalorder %s21, 0
      %s249 = scalar_select %p248, %s21, 0
      %s250 = sadd.s32 %s249, %s247
      %s251 = scalar_lea.vmem %s4, %s250
      %p252 = scmp.lt.s32.totalorder %s22, 1
      %s253 = scalar_select %p252, %s22, 1
      %s254 = smul.addr %s253, 12
      %s255 = smul.addr %s254, 4
      %s256 = scalar_lea.vmem %s0, %s255
      %p257 = scmp.lt.s32.totalorder %s21, 0
      %s258 = scalar_select %p257, %s21, 0
      %s259 = smul.addr %s258, 4
      %s260 = scalar_lea.vmem %s1, %s259
      %s261 = smul.u32 8, %s23
      %p262 = scmp.lt.s32.totalorder %s22, 1
      %s263 = scalar_select %p262, %s22, 1
      %p264 = scmp.lt.s32.totalorder %s261, 7
      %s265 = scalar_select %p264, %s261, 7
      %p266 = scmp.lt.s32.totalorder %s21, 0
      %s267 = scalar_select %p266, %s21, 0
      %s268 = sadd.s32 %s267, %s265
      %s269 = smul.addr %s263, 8
      %s270 = sadd.s32 %s268, %s269
      %s271 = smul.addr %s270, 4
      %s272 = scalar_lea.vmem %s2, %s271
      %s273 = smul.u32 8, %s23
      %p274 = scmp.lt.s32.totalorder %s22, 1
      %s275 = scalar_select %p274, %s22, 1
      %p276 = scmp.lt.s32.totalorder %s21, 0
      %s277 = scalar_select %p276, %s21, 0
      %s278 = sadd.s32 %s277, %s275
      %s279 = scalar_lea.vmem %s3, %s278
      %p280 = scmp.lt.s32.totalorder %s22, 1
      %s281 = scalar_select %p280, %s22, 1
      %p282 = scmp.lt.s32.totalorder %s21, 0
      %s283 = scalar_select %p282, %s21, 0
      %s284 = sadd.s32 %s283, %s281
      %s285 = scalar_lea.vmem %s4, %s284
      %s286 = smul.u32 %s23, 8
      %v287 = vlaneseq
      %v288 = vshrl.u32 %v287, 7
      %s289 = smul.addr %s286, 4
      %s290 = scalar_lea.vmem %s256, %s289
      %v291 = vld [vmem:[%s290] sm:$0xf]
      %v292 = vld [vmem:[%s290 + $0x4] sm:$0xf]
      %v293 = vld [vmem:[%s290 + $0x8] sm:$0xf]
      %v294 = vld [vmem:[%s290 + $0xc] sm:$0xf]
      %v295 = vld [vmem:[%s290 + $0x10] sm:$0xf]
      %v296 = vld [vmem:[%s290 + $0x14] sm:$0xf]
      %v297 = vld [vmem:[%s290 + $0x18] sm:$0xf]
      %v298 = vld [vmem:[%s290 + $0x1c] sm:$0xf]
      %s299 = sadd.s32 %s286, 1
      %s300 = smul.addr %s299, 4
      %s301 = scalar_lea.vmem %s256, %s300
      %v302 = vld [vmem:[%s301] sm:$0xf]
      %v303 = vld [vmem:[%s301 + $0x4] sm:$0xf]
      %v304 = vld [vmem:[%s301 + $0x8] sm:$0xf]
      %v305 = vld [vmem:[%s301 + $0xc] sm:$0xf]
      %v306 = vld [vmem:[%s301 + $0x10] sm:$0xf]
      %v307 = vld [vmem:[%s301 + $0x14] sm:$0xf]
      %v308 = vld [vmem:[%s301 + $0x18] sm:$0xf]
      %v309 = vld [vmem:[%s301 + $0x1c] sm:$0xf]
      %s310 = sadd.s32 %s286, 2
      %s311 = smul.addr %s310, 4
      %s312 = scalar_lea.vmem %s256, %s311
      %v313 = vld [vmem:[%s312] sm:$0xf]
      %v314 = vld [vmem:[%s312 + $0x4] sm:$0xf]
      %v315 = vld [vmem:[%s312 + $0x8] sm:$0xf]
      %v316 = vld [vmem:[%s312 + $0xc] sm:$0xf]
      %v317 = vld [vmem:[%s312 + $0x10] sm:$0xf]
      %v318 = vld [vmem:[%s312 + $0x14] sm:$0xf]
      %v319 = vld [vmem:[%s312 + $0x18] sm:$0xf]
      %v320 = vld [vmem:[%s312 + $0x1c] sm:$0xf]
      %s321 = sadd.s32 %s286, 3
      %s322 = smul.addr %s321, 4
      %s323 = scalar_lea.vmem %s256, %s322
      %v324 = vld [vmem:[%s323] sm:$0xf]
      %v325 = vld [vmem:[%s323 + $0x4] sm:$0xf]
      %v326 = vld [vmem:[%s323 + $0x8] sm:$0xf]
      %v327 = vld [vmem:[%s323 + $0xc] sm:$0xf]
      %v328 = vld [vmem:[%s323 + $0x10] sm:$0xf]
      %v329 = vld [vmem:[%s323 + $0x14] sm:$0xf]
      %v330 = vld [vmem:[%s323 + $0x18] sm:$0xf]
      %v331 = vld [vmem:[%s323 + $0x1c] sm:$0xf]
      %s332 = sadd.s32 %s286, 4
      %s333 = smul.addr %s332, 4
      %s334 = scalar_lea.vmem %s256, %s333
      %v335 = vld [vmem:[%s334] sm:$0xf]
      %v336 = vld [vmem:[%s334 + $0x4] sm:$0xf]
      %v337 = vld [vmem:[%s334 + $0x8] sm:$0xf]
      %v338 = vld [vmem:[%s334 + $0xc] sm:$0xf]
      %v339 = vld [vmem:[%s334 + $0x10] sm:$0xf]
      %v340 = vld [vmem:[%s334 + $0x14] sm:$0xf]
      %v341 = vld [vmem:[%s334 + $0x18] sm:$0xf]
      %v342 = vld [vmem:[%s334 + $0x1c] sm:$0xf]
      %v359 = vunpack.c.l.b16 %v291
      %v360 = vunpack.c.l.b16 %v302
      %v361 = vunpack.c.l.b16 %v292
      %v362 = vunpack.c.l.b16 %v303
      %v363 = vunpack.c.l.b16 %v293
      %v364 = vunpack.c.l.b16 %v304
      %v365 = vunpack.c.l.b16 %v294
      %v366 = vunpack.c.l.b16 %v305
      %v367 = vunpack.c.l.b16 %v295
      %v368 = vunpack.c.l.b16 %v306
      %v369 = vunpack.c.l.b16 %v296
      %v370 = vunpack.c.l.b16 %v307
      %v371 = vunpack.c.l.b16 %v297
      %v372 = vunpack.c.l.b16 %v308
      %v373 = vunpack.c.l.b16 %v298
      %v374 = vunpack.c.l.b16 %v309
      %v375 = vld [vmem:[%s260] sm:$0xf]
      %v376 = vld [vmem:[%s260 + $0x4] sm:$0xf]
      %v377 = vld [vmem:[%s260 + $0x8] sm:$0xf]
      %v378 = vld [vmem:[%s260 + $0xc] sm:$0xf]
      %v379 = vld [vmem:[%s260 + $0x10] sm:$0xf]
      %v380 = vld [vmem:[%s260 + $0x14] sm:$0xf]
      %v381 = vld [vmem:[%s260 + $0x18] sm:$0xf]
      %v382 = vld [vmem:[%s260 + $0x1c] sm:$0xf]
      %v383 = vld [vmem:[%s260 + $0x20] sm:$0xf]
      %v384 = vld [vmem:[%s260 + $0x24] sm:$0xf]
      %v385 = vld [vmem:[%s260 + $0x28] sm:$0xf]
      %v386 = vld [vmem:[%s260 + $0x2c] sm:$0xf]
      %v387 = vld [vmem:[%s260 + $0x30] sm:$0xf]
      %v388 = vld [vmem:[%s260 + $0x34] sm:$0xf]
      %v389 = vld [vmem:[%s260 + $0x38] sm:$0xf]
      %v390 = vld [vmem:[%s260 + $0x3c] sm:$0xf]
      %v391 = vld [vmem:[%s260 + $0x40] sm:$0xf]
      %v392 = vld [vmem:[%s260 + $0x44] sm:$0xf]
      %v393 = vld [vmem:[%s260 + $0x48] sm:$0xf]
      %v394 = vld [vmem:[%s260 + $0x4c] sm:$0xf]
      %v395 = vld [vmem:[%s260 + $0x50] sm:$0xf]
      %v396 = vld [vmem:[%s260 + $0x54] sm:$0xf]
      %v397 = vld [vmem:[%s260 + $0x58] sm:$0xf]
      %v398 = vld [vmem:[%s260 + $0x5c] sm:$0xf]
      %v399 = vld [vmem:[%s260 + $0x60] sm:$0xf]
      %v400 = vld [vmem:[%s260 + $0x64] sm:$0xf]
      %v401 = vld [vmem:[%s260 + $0x68] sm:$0xf]
      %v402 = vld [vmem:[%s260 + $0x6c] sm:$0xf]
      %v403 = vld [vmem:[%s260 + $0x70] sm:$0xf]
      %v404 = vld [vmem:[%s260 + $0x74] sm:$0xf]
      %v405 = vld [vmem:[%s260 + $0x78] sm:$0xf]
      %v406 = vld [vmem:[%s260 + $0x7c] sm:$0xf]
      %v423 = vunpack.c.l.b16 %v313
      %v424 = vunpack.c.l.b16 %v324
      %v425 = vunpack.c.l.b16 %v314
      %v426 = vunpack.c.l.b16 %v325
      %v427 = vunpack.c.l.b16 %v315
      %v428 = vunpack.c.l.b16 %v326
      %v429 = vunpack.c.l.b16 %v316
      %v430 = vunpack.c.l.b16 %v327
      %v431 = vunpack.c.l.b16 %v317
      %v432 = vunpack.c.l.b16 %v328
      %v433 = vunpack.c.l.b16 %v318
      %v434 = vunpack.c.l.b16 %v329
      %v435 = vunpack.c.l.b16 %v319
      %v436 = vunpack.c.l.b16 %v330
      %v437 = vunpack.c.l.b16 %v320
      %v438 = vunpack.c.l.b16 %v331
      %v439 = vld [vmem:[%s260 + $0x80] sm:$0xf]
      %v440 = vld [vmem:[%s260 + $0x84] sm:$0xf]
      %v441 = vld [vmem:[%s260 + $0x88] sm:$0xf]
      %v442 = vld [vmem:[%s260 + $0x8c] sm:$0xf]
      %v443 = vld [vmem:[%s260 + $0x90] sm:$0xf]
      %v444 = vld [vmem:[%s260 + $0x94] sm:$0xf]
      %v445 = vld [vmem:[%s260 + $0x98] sm:$0xf]
      %v446 = vld [vmem:[%s260 + $0x9c] sm:$0xf]
      %v447 = vld [vmem:[%s260 + $0xa0] sm:$0xf]
      %v448 = vld [vmem:[%s260 + $0xa4] sm:$0xf]
      %v449 = vld [vmem:[%s260 + $0xa8] sm:$0xf]
      %v450 = vld [vmem:[%s260 + $0xac] sm:$0xf]
      %v451 = vld [vmem:[%s260 + $0xb0] sm:$0xf]
      %v452 = vld [vmem:[%s260 + $0xb4] sm:$0xf]
      %v453 = vld [vmem:[%s260 + $0xb8] sm:$0xf]
      %v454 = vld [vmem:[%s260 + $0xbc] sm:$0xf]
      %v455 = vld [vmem:[%s260 + $0xc0] sm:$0xf]
      %v456 = vld [vmem:[%s260 + $0xc4] sm:$0xf]
      %v457 = vld [vmem:[%s260 + $0xc8] sm:$0xf]
      %v458 = vld [vmem:[%s260 + $0xcc] sm:$0xf]
      %v459 = vld [vmem:[%s260 + $0xd0] sm:$0xf]
      %v460 = vld [vmem:[%s260 + $0xd4] sm:$0xf]
      %v461 = vld [vmem:[%s260 + $0xd8] sm:$0xf]
      %v462 = vld [vmem:[%s260 + $0xdc] sm:$0xf]
      %v463 = vld [vmem:[%s260 + $0xe0] sm:$0xf]
      %v464 = vld [vmem:[%s260 + $0xe4] sm:$0xf]
      %v465 = vld [vmem:[%s260 + $0xe8] sm:$0xf]
      %v466 = vld [vmem:[%s260 + $0xec] sm:$0xf]
      %v467 = vld [vmem:[%s260 + $0xf0] sm:$0xf]
      %v468 = vld [vmem:[%s260 + $0xf4] sm:$0xf]
      %v469 = vld [vmem:[%s260 + $0xf8] sm:$0xf]
      %v470 = vld [vmem:[%s260 + $0xfc] sm:$0xf]
      %v471 = vpack.c.b16 %v425, %v423
      %v472 = vpack.c.b16 %v426, %v424
      %v473 = vpack.c.b16 %v429, %v427
      %v474 = vpack.c.b16 %v430, %v428
      %v475 = vpack.c.b16 %v433, %v431
      %v476 = vpack.c.b16 %v434, %v432
      %v477 = vpack.c.b16 %v437, %v435
      %v478 = vpack.c.b16 %v438, %v436
      %v519 = vunpack.c.l.b16 %v439
      %v520 = vunpack.c.l.b16 %v440
      %v521 = vunpack.c.l.b16 %v441
      %v522 = vunpack.c.l.b16 %v442
      %v523 = vunpack.c.l.b16 %v443
      %v524 = vunpack.c.l.b16 %v444
      %v525 = vunpack.c.l.b16 %v445
      %v526 = vunpack.c.l.b16 %v446
      %v527 = vunpack.c.l.b16 %v447
      %v528 = vunpack.c.l.b16 %v448
      %v529 = vunpack.c.l.b16 %v449
      %v530 = vunpack.c.l.b16 %v450
      %v531 = vunpack.c.l.b16 %v451
      %v532 = vunpack.c.l.b16 %v452
      %v533 = vunpack.c.l.b16 %v453
      %v534 = vunpack.c.l.b16 %v454
      %v535 = vunpack.c.l.b16 %v455
      %v536 = vunpack.c.l.b16 %v456
      %v537 = vunpack.c.l.b16 %v457
      %v538 = vunpack.c.l.b16 %v458
      %v539 = vunpack.c.l.b16 %v459
      %v540 = vunpack.c.l.b16 %v460
      %v541 = vunpack.c.l.b16 %v461
      %v542 = vunpack.c.l.b16 %v462
      %v543 = vunpack.c.l.b16 %v463
      %v544 = vunpack.c.l.b16 %v464
      %v545 = vunpack.c.l.b16 %v465
      %v546 = vunpack.c.l.b16 %v466
      %v547 = vunpack.c.l.b16 %v467
      %v548 = vunpack.c.l.b16 %v468
      %v549 = vunpack.c.l.b16 %v469
      %v550 = vunpack.c.l.b16 %v470
      %v551 = vpack.c.b16 %v520, %v519
      %v552 = vpack.c.b16 %v522, %v521
      %v553 = vpack.c.b16 %v524, %v523
      %v554 = vpack.c.b16 %v526, %v525
      %v555 = vpack.c.b16 %v528, %v527
      %v556 = vpack.c.b16 %v530, %v529
      %v557 = vpack.c.b16 %v532, %v531
      %v558 = vpack.c.b16 %v534, %v533
      %v559 = vpack.c.b16 %v536, %v535
      %v560 = vpack.c.b16 %v538, %v537
      %v561 = vpack.c.b16 %v540, %v539
      %v562 = vpack.c.b16 %v542, %v541
      %v563 = vpack.c.b16 %v544, %v543
      %v564 = vpack.c.b16 %v546, %v545
      %v565 = vpack.c.b16 %v548, %v547
      %v566 = vpack.c.b16 %v550, %v549
      %583 = vmatpush.bf16.msra.mxu0 %v558
      %584 = vmatpush.bf16.msra.mxu0 %v557
      %585 = vmatpush.bf16.msra.mxu0 %v556
      %586 = vmatpush.bf16.msra.mxu0 %v555
      %587 = vmatpush.bf16.msra.mxu0 %v554
      %588 = vmatpush.bf16.msra.mxu0 %v553
      %589 = vmatpush.bf16.msra.mxu0 %v552
      %590 = vmatpush.bf16.msra.mxu0 %v551
      %591 = vmatmul.bf16.gmra.mxu0 %v471
      %v592 = vpop.f32.mrf.mxu0
      %v593 = vadd.f32 0.0, %v592
      %v594 = vpop.f32.mrf.mxu0
      %v595 = vadd.f32 0.0, %v594
      %596 = vmatmul.bf16.gmra.mxu0 %v473
      %v597 = vpop.f32.mrf.mxu0
      %v598 = vadd.f32 0.0, %v597
      %v599 = vpop.f32.mrf.mxu0
      %v600 = vadd.f32 0.0, %v599
      %601 = vmatmul.bf16.gmra.mxu0 %v475
      %v602 = vpop.f32.mrf.mxu0
      %v603 = vadd.f32 0.0, %v602
      %v604 = vpop.f32.mrf.mxu0
      %v605 = vadd.f32 0.0, %v604
      %606 = vmatmul.bf16.gmra.mxu0 %v477
      %v607 = vpop.f32.mrf.mxu0
      %v608 = vadd.f32 0.0, %v607
      %v609 = vpop.f32.mrf.mxu0
      %v610 = vadd.f32 0.0, %v609
      %611 = vdwg.mxu0
      %612 = vmatpush.bf16.msra.mxu0 %v566
      %613 = vmatpush.bf16.msra.mxu0 %v565
      %614 = vmatpush.bf16.msra.mxu0 %v564
      %615 = vmatpush.bf16.msra.mxu0 %v563
      %616 = vmatpush.bf16.msra.mxu0 %v562
      %617 = vmatpush.bf16.msra.mxu0 %v561
      %618 = vmatpush.bf16.msra.mxu0 %v560
      %619 = vmatpush.bf16.msra.mxu0 %v559
      %620 = vmatmul.bf16.gmra.mxu0 %v472
      %v621 = vpop.f32.mrf.mxu0
      %v622 = vadd.f32 %v593, %v621
      %v623 = vpop.f32.mrf.mxu0
      %v624 = vadd.f32 %v595, %v623
      %625 = vmatmul.bf16.gmra.mxu0 %v474
      %v626 = vpop.f32.mrf.mxu0
      %v627 = vadd.f32 %v598, %v626
      %v628 = vpop.f32.mrf.mxu0
      %v629 = vadd.f32 %v600, %v628
      %630 = vmatmul.bf16.gmra.mxu0 %v476
      %v631 = vpop.f32.mrf.mxu0
      %v632 = vadd.f32 %v603, %v631
      %v633 = vpop.f32.mrf.mxu0
      %v634 = vadd.f32 %v605, %v633
      %635 = vmatmul.bf16.gmra.mxu0 %v478
      %v636 = vpop.f32.mrf.mxu0
      %v637 = vadd.f32 %v608, %v636
      %v638 = vpop.f32.mrf.mxu0
      %v639 = vadd.f32 %v610, %v638
      %640 = vdwg.mxu0
      %v641 = vpack.c.b16 %v361, %v359
      %v642 = vpack.c.b16 %v362, %v360
      %v643 = vpack.c.b16 %v365, %v363
      %v644 = vpack.c.b16 %v366, %v364
      %v645 = vpack.c.b16 %v369, %v367
      %v646 = vpack.c.b16 %v370, %v368
      %v647 = vpack.c.b16 %v373, %v371
      %v648 = vpack.c.b16 %v374, %v372
      %v689 = vunpack.c.l.b16 %v375
      %v690 = vunpack.c.l.b16 %v376
      %v691 = vunpack.c.l.b16 %v377
      %v692 = vunpack.c.l.b16 %v378
      %v693 = vunpack.c.l.b16 %v379
      %v694 = vunpack.c.l.b16 %v380
      %v695 = vunpack.c.l.b16 %v381
      %v696 = vunpack.c.l.b16 %v382
      %v697 = vunpack.c.l.b16 %v383
      %v698 = vunpack.c.l.b16 %v384
      %v699 = vunpack.c.l.b16 %v385
      %v700 = vunpack.c.l.b16 %v386
      %v701 = vunpack.c.l.b16 %v387
      %v702 = vunpack.c.l.b16 %v388
      %v703 = vunpack.c.l.b16 %v389
      %v704 = vunpack.c.l.b16 %v390
      %v705 = vunpack.c.l.b16 %v391
      %v706 = vunpack.c.l.b16 %v392
      %v707 = vunpack.c.l.b16 %v393
      %v708 = vunpack.c.l.b16 %v394
      %v709 = vunpack.c.l.b16 %v395
      %v710 = vunpack.c.l.b16 %v396
      %v711 = vunpack.c.l.b16 %v397
      %v712 = vunpack.c.l.b16 %v398
      %v713 = vunpack.c.l.b16 %v399
      %v714 = vunpack.c.l.b16 %v400
      %v715 = vunpack.c.l.b16 %v401
      %v716 = vunpack.c.l.b16 %v402
      %v717 = vunpack.c.l.b16 %v403
      %v718 = vunpack.c.l.b16 %v404
      %v719 = vunpack.c.l.b16 %v405
      %v720 = vunpack.c.l.b16 %v406
      %v721 = vpack.c.b16 %v690, %v689
      %v722 = vpack.c.b16 %v692, %v691
      %v723 = vpack.c.b16 %v694, %v693
      %v724 = vpack.c.b16 %v696, %v695
      %v725 = vpack.c.b16 %v698, %v697
      %v726 = vpack.c.b16 %v700, %v699
      %v727 = vpack.c.b16 %v702, %v701
      %v728 = vpack.c.b16 %v704, %v703
      %v729 = vpack.c.b16 %v706, %v705
      %v730 = vpack.c.b16 %v708, %v707
      %v731 = vpack.c.b16 %v710, %v709
      %v732 = vpack.c.b16 %v712, %v711
      %v733 = vpack.c.b16 %v714, %v713
      %v734 = vpack.c.b16 %v716, %v715
      %v735 = vpack.c.b16 %v718, %v717
      %v736 = vpack.c.b16 %v720, %v719
      %753 = vmatpush.bf16.msra.mxu0 %v728
      %754 = vmatpush.bf16.msra.mxu0 %v727
      %755 = vmatpush.bf16.msra.mxu0 %v726
      %756 = vmatpush.bf16.msra.mxu0 %v725
      %757 = vmatpush.bf16.msra.mxu0 %v724
      %758 = vmatpush.bf16.msra.mxu0 %v723
      %759 = vmatpush.bf16.msra.mxu0 %v722
      %760 = vmatpush.bf16.msra.mxu0 %v721
      %761 = vmatmul.bf16.gmra.mxu0 %v641
      %v762 = vpop.f32.mrf.mxu0
      %v763 = vadd.f32 %v622, %v762
      %v764 = vpop.f32.mrf.mxu0
      %v765 = vadd.f32 %v624, %v764
      %766 = vmatmul.bf16.gmra.mxu0 %v643
      %v767 = vpop.f32.mrf.mxu0
      %v768 = vadd.f32 %v627, %v767
      %v769 = vpop.f32.mrf.mxu0
      %v770 = vadd.f32 %v629, %v769
      %771 = vmatmul.bf16.gmra.mxu0 %v645
      %v772 = vpop.f32.mrf.mxu0
      %v773 = vadd.f32 %v632, %v772
      %v774 = vpop.f32.mrf.mxu0
      %v775 = vadd.f32 %v634, %v774
      %776 = vmatmul.bf16.gmra.mxu0 %v647
      %v777 = vpop.f32.mrf.mxu0
      %v778 = vadd.f32 %v637, %v777
      %v779 = vpop.f32.mrf.mxu0
      %v780 = vadd.f32 %v639, %v779
      %781 = vdwg.mxu0
      %782 = vmatpush.bf16.msra.mxu0 %v736
      %783 = vmatpush.bf16.msra.mxu0 %v735
      %784 = vmatpush.bf16.msra.mxu0 %v734
      %785 = vmatpush.bf16.msra.mxu0 %v733
      %786 = vmatpush.bf16.msra.mxu0 %v732
      %787 = vmatpush.bf16.msra.mxu0 %v731
      %788 = vmatpush.bf16.msra.mxu0 %v730
      %789 = vmatpush.bf16.msra.mxu0 %v729
      %790 = vmatmul.bf16.gmra.mxu0 %v642
      %v791 = vpop.f32.mrf.mxu0
      %v792 = vadd.f32 %v763, %v791
      %v793 = vpop.f32.mrf.mxu0
      %v794 = vadd.f32 %v765, %v793
      %795 = vmatmul.bf16.gmra.mxu0 %v644
      %v796 = vpop.f32.mrf.mxu0
      %v797 = vadd.f32 %v768, %v796
      %v798 = vpop.f32.mrf.mxu0
      %v799 = vadd.f32 %v770, %v798
      %800 = vmatmul.bf16.gmra.mxu0 %v646
      %v801 = vpop.f32.mrf.mxu0
      %v802 = vadd.f32 %v773, %v801
      %v803 = vpop.f32.mrf.mxu0
      %v804 = vadd.f32 %v775, %v803
      %805 = vmatmul.bf16.gmra.mxu0 %v648
      %v806 = vpop.f32.mrf.mxu0
      %v807 = vadd.f32 %v778, %v806
      %v808 = vpop.f32.mrf.mxu0
      %v809 = vadd.f32 %v780, %v808
      %810 = vdwg.mxu0
      %v811 = vld [vmem:[%s260 + $0x100] sm:$0xf]
      %v812 = vld [vmem:[%s260 + $0x104] sm:$0xf]
      %v813 = vld [vmem:[%s260 + $0x108] sm:$0xf]
      %v814 = vld [vmem:[%s260 + $0x10c] sm:$0xf]
      %v815 = vld [vmem:[%s260 + $0x110] sm:$0xf]
      %v816 = vld [vmem:[%s260 + $0x114] sm:$0xf]
      %v817 = vld [vmem:[%s260 + $0x118] sm:$0xf]
      %v818 = vld [vmem:[%s260 + $0x11c] sm:$0xf]
      %v819 = vld [vmem:[%s260 + $0x120] sm:$0xf]
      %v820 = vld [vmem:[%s260 + $0x124] sm:$0xf]
      %v821 = vld [vmem:[%s260 + $0x128] sm:$0xf]
      %v822 = vld [vmem:[%s260 + $0x12c] sm:$0xf]
      %v823 = vld [vmem:[%s260 + $0x130] sm:$0xf]
      %v824 = vld [vmem:[%s260 + $0x134] sm:$0xf]
      %v825 = vld [vmem:[%s260 + $0x138] sm:$0xf]
      %v826 = vld [vmem:[%s260 + $0x13c] sm:$0xf]
      %v835 = vunpack.c.l.b16 %v335
      %v836 = vunpack.c.l.b16 %v336
      %v837 = vunpack.c.l.b16 %v337
      %v838 = vunpack.c.l.b16 %v338
      %v839 = vunpack.c.l.b16 %v339
      %v840 = vunpack.c.l.b16 %v340
      %v841 = vunpack.c.l.b16 %v341
      %v842 = vunpack.c.l.b16 %v342
      %v843 = vpack.c.b16 %v836, %v835
      %v844 = vpack.c.b16 %v838, %v837
      %v845 = vpack.c.b16 %v840, %v839
      %v846 = vpack.c.b16 %v842, %v841
      %v867 = vunpack.c.l.b16 %v811
      %v868 = vunpack.c.l.b16 %v812
      %v869 = vunpack.c.l.b16 %v813
      %v870 = vunpack.c.l.b16 %v814
      %v871 = vunpack.c.l.b16 %v815
      %v872 = vunpack.c.l.b16 %v816
      %v873 = vunpack.c.l.b16 %v817
      %v874 = vunpack.c.l.b16 %v818
      %v875 = vunpack.c.l.b16 %v819
      %v876 = vunpack.c.l.b16 %v820
      %v877 = vunpack.c.l.b16 %v821
      %v878 = vunpack.c.l.b16 %v822
      %v879 = vunpack.c.l.b16 %v823
      %v880 = vunpack.c.l.b16 %v824
      %v881 = vunpack.c.l.b16 %v825
      %v882 = vunpack.c.l.b16 %v826
      %v883 = vpack.c.b16 %v868, %v867
      %v884 = vpack.c.b16 %v870, %v869
      %v885 = vpack.c.b16 %v872, %v871
      %v886 = vpack.c.b16 %v874, %v873
      %v887 = vpack.c.b16 %v876, %v875
      %v888 = vpack.c.b16 %v878, %v877
      %v889 = vpack.c.b16 %v880, %v879
      %v890 = vpack.c.b16 %v882, %v881
      %899 = vmatpush.bf16.msra.mxu0 %v890
      %900 = vmatpush.bf16.msra.mxu0 %v889
      %901 = vmatpush.bf16.msra.mxu0 %v888
      %902 = vmatpush.bf16.msra.mxu0 %v887
      %903 = vmatpush.bf16.msra.mxu0 %v886
      %904 = vmatpush.bf16.msra.mxu0 %v885
      %905 = vmatpush.bf16.msra.mxu0 %v884
      %906 = vmatpush.bf16.msra.mxu0 %v883
      %907 = vmatmul.bf16.gmra.mxu0 %v843
      %v908 = vpop.f32.mrf.mxu0
      %v909 = vadd.f32 0.0, %v908
      %v910 = vpop.f32.mrf.mxu0
      %v911 = vadd.f32 0.0, %v910
      %912 = vmatmul.bf16.gmra.mxu0 %v844
      %v913 = vpop.f32.mrf.mxu0
      %v914 = vadd.f32 0.0, %v913
      %v915 = vpop.f32.mrf.mxu0
      %v916 = vadd.f32 0.0, %v915
      %917 = vmatmul.bf16.gmra.mxu0 %v845
      %v918 = vpop.f32.mrf.mxu0
      %v919 = vadd.f32 0.0, %v918
      %v920 = vpop.f32.mrf.mxu0
      %v921 = vadd.f32 0.0, %v920
      %922 = vmatmul.bf16.gmra.mxu0 %v846
      %v923 = vpop.f32.mrf.mxu0
      %v924 = vadd.f32 0.0, %v923
      %v925 = vpop.f32.mrf.mxu0
      %v926 = vadd.f32 0.0, %v925
      %927 = vdwg.mxu0
      %v928 = vadd.f32 %v792, %v909
      %v929 = vadd.f32 %v794, %v911
      %v930 = vadd.f32 %v797, %v914
      %v931 = vadd.f32 %v799, %v916
      %v932 = vadd.f32 %v802, %v919
      %v933 = vadd.f32 %v804, %v921
      %v934 = vadd.f32 %v807, %v924
      %v935 = vadd.f32 %v809, %v926
      %v936 = vrot.slane %v928, 6
      %v937 = vrot.slane %v929, 6
      %v938 = vrot.slane %v930, 6
      %v939 = vrot.slane %v931, 6
      %v940 = vrot.slane %v932, 6
      %v941 = vrot.slane %v933, 6
      %v942 = vrot.slane %v934, 6
      %v943 = vrot.slane %v935, 6
      %vm944 = vcmp.ge.s32.totalorder %v288, 2
      %v945 = vsel %vm944, 1, 0
      %vm946 = vcmp.eq.s32.totalorder %v945, 1
      %v947 = vsel %vm946, %v936, 0.0
      %v948 = vsel %vm946, %v937, 0.0
      %v949 = vsel %vm946, %v938, 0.0
      %v950 = vsel %vm946, %v939, 0.0
      %v951 = vsel %vm946, %v940, 0.0
      %v952 = vsel %vm946, %v941, 0.0
      %v953 = vsel %vm946, %v942, 0.0
      %v954 = vsel %vm946, %v943, 0.0
      %s955 = scalar_lea.vmem %s260, 320
      %v956 = vld [vmem:[%s955] sm:$0xf]
      %v957 = vld [vmem:[%s955 + $0x4] sm:$0xf]
      %v958 = vld [vmem:[%s955 + $0x8] sm:$0xf]
      %v959 = vld [vmem:[%s955 + $0xc] sm:$0xf]
      %v960 = vld [vmem:[%s955 + $0x10] sm:$0xf]
      %v961 = vld [vmem:[%s955 + $0x14] sm:$0xf]
      %v962 = vld [vmem:[%s955 + $0x18] sm:$0xf]
      %v963 = vld [vmem:[%s955 + $0x1c] sm:$0xf]
      %v964 = vld [vmem:[%s955 + $0x20] sm:$0xf]
      %v965 = vld [vmem:[%s955 + $0x24] sm:$0xf]
      %v966 = vld [vmem:[%s955 + $0x28] sm:$0xf]
      %v967 = vld [vmem:[%s955 + $0x2c] sm:$0xf]
      %v968 = vld [vmem:[%s955 + $0x30] sm:$0xf]
      %v969 = vld [vmem:[%s955 + $0x34] sm:$0xf]
      %v970 = vld [vmem:[%s955 + $0x38] sm:$0xf]
      %v971 = vld [vmem:[%s955 + $0x3c] sm:$0xf]
      %v972 = vld [vmem:[%s955 + $0x40] sm:$0xf]
      %v973 = vld [vmem:[%s955 + $0x44] sm:$0xf]
      %v974 = vld [vmem:[%s955 + $0x48] sm:$0xf]
      %v975 = vld [vmem:[%s955 + $0x4c] sm:$0xf]
      %v976 = vld [vmem:[%s955 + $0x50] sm:$0xf]
      %v977 = vld [vmem:[%s955 + $0x54] sm:$0xf]
      %v978 = vld [vmem:[%s955 + $0x58] sm:$0xf]
      %v979 = vld [vmem:[%s955 + $0x5c] sm:$0xf]
      %v980 = vld [vmem:[%s955 + $0x60] sm:$0xf]
      %v981 = vld [vmem:[%s955 + $0x64] sm:$0xf]
      %v982 = vld [vmem:[%s955 + $0x68] sm:$0xf]
      %v983 = vld [vmem:[%s955 + $0x6c] sm:$0xf]
      %v984 = vld [vmem:[%s955 + $0x70] sm:$0xf]
      %v985 = vld [vmem:[%s955 + $0x74] sm:$0xf]
      %v986 = vld [vmem:[%s955 + $0x78] sm:$0xf]
      %v987 = vld [vmem:[%s955 + $0x7c] sm:$0xf]
      %v988 = vld [vmem:[%s955 + $0x80] sm:$0xf]
      %v989 = vld [vmem:[%s955 + $0x84] sm:$0xf]
      %v990 = vld [vmem:[%s955 + $0x88] sm:$0xf]
      %v991 = vld [vmem:[%s955 + $0x8c] sm:$0xf]
      %v992 = vld [vmem:[%s955 + $0x90] sm:$0xf]
      %v993 = vld [vmem:[%s955 + $0x94] sm:$0xf]
      %v994 = vld [vmem:[%s955 + $0x98] sm:$0xf]
      %v995 = vld [vmem:[%s955 + $0x9c] sm:$0xf]
      %v996 = vld [vmem:[%s955 + $0xa0] sm:$0xf]
      %v997 = vld [vmem:[%s955 + $0xa4] sm:$0xf]
      %v998 = vld [vmem:[%s955 + $0xa8] sm:$0xf]
      %v999 = vld [vmem:[%s955 + $0xac] sm:$0xf]
      %v1000 = vld [vmem:[%s955 + $0xb0] sm:$0xf]
      %v1001 = vld [vmem:[%s955 + $0xb4] sm:$0xf]
      %v1002 = vld [vmem:[%s955 + $0xb8] sm:$0xf]
      %v1003 = vld [vmem:[%s955 + $0xbc] sm:$0xf]
      %v1004 = vld [vmem:[%s955 + $0xc0] sm:$0xf]
      %v1005 = vld [vmem:[%s955 + $0xc4] sm:$0xf]
      %v1006 = vld [vmem:[%s955 + $0xc8] sm:$0xf]
      %v1007 = vld [vmem:[%s955 + $0xcc] sm:$0xf]
      %v1008 = vld [vmem:[%s955 + $0xd0] sm:$0xf]
      %v1009 = vld [vmem:[%s955 + $0xd4] sm:$0xf]
      %v1010 = vld [vmem:[%s955 + $0xd8] sm:$0xf]
      %v1011 = vld [vmem:[%s955 + $0xdc] sm:$0xf]
      %v1012 = vld [vmem:[%s955 + $0xe0] sm:$0xf]
      %v1013 = vld [vmem:[%s955 + $0xe4] sm:$0xf]
      %v1014 = vld [vmem:[%s955 + $0xe8] sm:$0xf]
      %v1015 = vld [vmem:[%s955 + $0xec] sm:$0xf]
      %v1016 = vld [vmem:[%s955 + $0xf0] sm:$0xf]
      %v1017 = vld [vmem:[%s955 + $0xf4] sm:$0xf]
      %v1018 = vld [vmem:[%s955 + $0xf8] sm:$0xf]
      %v1019 = vld [vmem:[%s955 + $0xfc] sm:$0xf]
      %v1052 = vunpack.c.l.b16 %v988
      %v1053 = vunpack.c.l.b16 %v989
      %v1054 = vunpack.c.l.b16 %v990
      %v1055 = vunpack.c.l.b16 %v991
      %v1056 = vunpack.c.l.b16 %v992
      %v1057 = vunpack.c.l.b16 %v993
      %v1058 = vunpack.c.l.b16 %v994
      %v1059 = vunpack.c.l.b16 %v995
      %v1060 = vunpack.c.l.b16 %v996
      %v1061 = vunpack.c.l.b16 %v997
      %v1062 = vunpack.c.l.b16 %v998
      %v1063 = vunpack.c.l.b16 %v999
      %v1064 = vunpack.c.l.b16 %v1000
      %v1065 = vunpack.c.l.b16 %v1001
      %v1066 = vunpack.c.l.b16 %v1002
      %v1067 = vunpack.c.l.b16 %v1003
      %v1068 = vunpack.c.l.b16 %v1004
      %v1069 = vunpack.c.l.b16 %v1005
      %v1070 = vunpack.c.l.b16 %v1006
      %v1071 = vunpack.c.l.b16 %v1007
      %v1072 = vunpack.c.l.b16 %v1008
      %v1073 = vunpack.c.l.b16 %v1009
      %v1074 = vunpack.c.l.b16 %v1010
      %v1075 = vunpack.c.l.b16 %v1011
      %v1076 = vunpack.c.l.b16 %v1012
      %v1077 = vunpack.c.l.b16 %v1013
      %v1078 = vunpack.c.l.b16 %v1014
      %v1079 = vunpack.c.l.b16 %v1015
      %v1080 = vunpack.c.l.b16 %v1016
      %v1081 = vunpack.c.l.b16 %v1017
      %v1082 = vunpack.c.l.b16 %v1018
      %v1083 = vunpack.c.l.b16 %v1019
      %v1084 = vpack.c.b16 %v1053, %v1052
      %v1085 = vpack.c.b16 %v1055, %v1054
      %v1086 = vpack.c.b16 %v1057, %v1056
      %v1087 = vpack.c.b16 %v1059, %v1058
      %v1088 = vpack.c.b16 %v1061, %v1060
      %v1089 = vpack.c.b16 %v1063, %v1062
      %v1090 = vpack.c.b16 %v1065, %v1064
      %v1091 = vpack.c.b16 %v1067, %v1066
      %v1092 = vpack.c.b16 %v1069, %v1068
      %v1093 = vpack.c.b16 %v1071, %v1070
      %v1094 = vpack.c.b16 %v1073, %v1072
      %v1095 = vpack.c.b16 %v1075, %v1074
      %v1096 = vpack.c.b16 %v1077, %v1076
      %v1097 = vpack.c.b16 %v1079, %v1078
      %v1098 = vpack.c.b16 %v1081, %v1080
      %v1099 = vpack.c.b16 %v1083, %v1082
      %1116 = vmatpush.bf16.msra.mxu0 %v1091
      %1117 = vmatpush.bf16.msra.mxu0 %v1090
      %1118 = vmatpush.bf16.msra.mxu0 %v1089
      %1119 = vmatpush.bf16.msra.mxu0 %v1088
      %1120 = vmatpush.bf16.msra.mxu0 %v1087
      %1121 = vmatpush.bf16.msra.mxu0 %v1086
      %1122 = vmatpush.bf16.msra.mxu0 %v1085
      %1123 = vmatpush.bf16.msra.mxu0 %v1084
      %1124 = vmatmul.bf16.gmra.mxu0 %v471
      %v1125 = vpop.f32.mrf.mxu0
      %v1126 = vadd.f32 0.0, %v1125
      %v1127 = vpop.f32.mrf.mxu0
      %v1128 = vadd.f32 0.0, %v1127
      %1129 = vmatmul.bf16.gmra.mxu0 %v473
      %v1130 = vpop.f32.mrf.mxu0
      %v1131 = vadd.f32 0.0, %v1130
      %v1132 = vpop.f32.mrf.mxu0
      %v1133 = vadd.f32 0.0, %v1132
      %1134 = vmatmul.bf16.gmra.mxu0 %v475
      %v1135 = vpop.f32.mrf.mxu0
      %v1136 = vadd.f32 0.0, %v1135
      %v1137 = vpop.f32.mrf.mxu0
      %v1138 = vadd.f32 0.0, %v1137
      %1139 = vmatmul.bf16.gmra.mxu0 %v477
      %v1140 = vpop.f32.mrf.mxu0
      %v1141 = vadd.f32 0.0, %v1140
      %v1142 = vpop.f32.mrf.mxu0
      %v1143 = vadd.f32 0.0, %v1142
      %1144 = vdwg.mxu0
      %1145 = vmatpush.bf16.msra.mxu0 %v1099
      %1146 = vmatpush.bf16.msra.mxu0 %v1098
      %1147 = vmatpush.bf16.msra.mxu0 %v1097
      %1148 = vmatpush.bf16.msra.mxu0 %v1096
      %1149 = vmatpush.bf16.msra.mxu0 %v1095
      %1150 = vmatpush.bf16.msra.mxu0 %v1094
      %1151 = vmatpush.bf16.msra.mxu0 %v1093
      %1152 = vmatpush.bf16.msra.mxu0 %v1092
      %1153 = vmatmul.bf16.gmra.mxu0 %v472
      %v1154 = vpop.f32.mrf.mxu0
      %v1155 = vadd.f32 %v1126, %v1154
      %v1156 = vpop.f32.mrf.mxu0
      %v1157 = vadd.f32 %v1128, %v1156
      %1158 = vmatmul.bf16.gmra.mxu0 %v474
      %v1159 = vpop.f32.mrf.mxu0
      %v1160 = vadd.f32 %v1131, %v1159
      %v1161 = vpop.f32.mrf.mxu0
      %v1162 = vadd.f32 %v1133, %v1161
      %1163 = vmatmul.bf16.gmra.mxu0 %v476
      %v1164 = vpop.f32.mrf.mxu0
      %v1165 = vadd.f32 %v1136, %v1164
      %v1166 = vpop.f32.mrf.mxu0
      %v1167 = vadd.f32 %v1138, %v1166
      %1168 = vmatmul.bf16.gmra.mxu0 %v478
      %v1169 = vpop.f32.mrf.mxu0
      %v1170 = vadd.f32 %v1141, %v1169
      %v1171 = vpop.f32.mrf.mxu0
      %v1172 = vadd.f32 %v1143, %v1171
      %1173 = vdwg.mxu0
      %v1206 = vunpack.c.l.b16 %v956
      %v1207 = vunpack.c.l.b16 %v957
      %v1208 = vunpack.c.l.b16 %v958
      %v1209 = vunpack.c.l.b16 %v959
      %v1210 = vunpack.c.l.b16 %v960
      %v1211 = vunpack.c.l.b16 %v961
      %v1212 = vunpack.c.l.b16 %v962
      %v1213 = vunpack.c.l.b16 %v963
      %v1214 = vunpack.c.l.b16 %v964
      %v1215 = vunpack.c.l.b16 %v965
      %v1216 = vunpack.c.l.b16 %v966
      %v1217 = vunpack.c.l.b16 %v967
      %v1218 = vunpack.c.l.b16 %v968
      %v1219 = vunpack.c.l.b16 %v969
      %v1220 = vunpack.c.l.b16 %v970
      %v1221 = vunpack.c.l.b16 %v971
      %v1222 = vunpack.c.l.b16 %v972
      %v1223 = vunpack.c.l.b16 %v973
      %v1224 = vunpack.c.l.b16 %v974
      %v1225 = vunpack.c.l.b16 %v975
      %v1226 = vunpack.c.l.b16 %v976
      %v1227 = vunpack.c.l.b16 %v977
      %v1228 = vunpack.c.l.b16 %v978
      %v1229 = vunpack.c.l.b16 %v979
      %v1230 = vunpack.c.l.b16 %v980
      %v1231 = vunpack.c.l.b16 %v981
      %v1232 = vunpack.c.l.b16 %v982
      %v1233 = vunpack.c.l.b16 %v983
      %v1234 = vunpack.c.l.b16 %v984
      %v1235 = vunpack.c.l.b16 %v985
      %v1236 = vunpack.c.l.b16 %v986
      %v1237 = vunpack.c.l.b16 %v987
      %v1238 = vpack.c.b16 %v1207, %v1206
      %v1239 = vpack.c.b16 %v1209, %v1208
      %v1240 = vpack.c.b16 %v1211, %v1210
      %v1241 = vpack.c.b16 %v1213, %v1212
      %v1242 = vpack.c.b16 %v1215, %v1214
      %v1243 = vpack.c.b16 %v1217, %v1216
      %v1244 = vpack.c.b16 %v1219, %v1218
      %v1245 = vpack.c.b16 %v1221, %v1220
      %v1246 = vpack.c.b16 %v1223, %v1222
      %v1247 = vpack.c.b16 %v1225, %v1224
      %v1248 = vpack.c.b16 %v1227, %v1226
      %v1249 = vpack.c.b16 %v1229, %v1228
      %v1250 = vpack.c.b16 %v1231, %v1230
      %v1251 = vpack.c.b16 %v1233, %v1232
      %v1252 = vpack.c.b16 %v1235, %v1234
      %v1253 = vpack.c.b16 %v1237, %v1236
      %1270 = vmatpush.bf16.msra.mxu0 %v1245
      %1271 = vmatpush.bf16.msra.mxu0 %v1244
      %1272 = vmatpush.bf16.msra.mxu0 %v1243
      %1273 = vmatpush.bf16.msra.mxu0 %v1242
      %1274 = vmatpush.bf16.msra.mxu0 %v1241
      %1275 = vmatpush.bf16.msra.mxu0 %v1240
      %1276 = vmatpush.bf16.msra.mxu0 %v1239
      %1277 = vmatpush.bf16.msra.mxu0 %v1238
      %1278 = vmatmul.bf16.gmra.mxu0 %v641
      %v1279 = vpop.f32.mrf.mxu0
      %v1280 = vadd.f32 %v1155, %v1279
      %v1281 = vpop.f32.mrf.mxu0
      %v1282 = vadd.f32 %v1157, %v1281
      %1283 = vmatmul.bf16.gmra.mxu0 %v643
      %v1284 = vpop.f32.mrf.mxu0
      %v1285 = vadd.f32 %v1160, %v1284
      %v1286 = vpop.f32.mrf.mxu0
      %v1287 = vadd.f32 %v1162, %v1286
      %1288 = vmatmul.bf16.gmra.mxu0 %v645
      %v1289 = vpop.f32.mrf.mxu0
      %v1290 = vadd.f32 %v1165, %v1289
      %v1291 = vpop.f32.mrf.mxu0
      %v1292 = vadd.f32 %v1167, %v1291
      %1293 = vmatmul.bf16.gmra.mxu0 %v647
      %v1294 = vpop.f32.mrf.mxu0
      %v1295 = vadd.f32 %v1170, %v1294
      %v1296 = vpop.f32.mrf.mxu0
      %v1297 = vadd.f32 %v1172, %v1296
      %1298 = vdwg.mxu0
      %1299 = vmatpush.bf16.msra.mxu0 %v1253
      %1300 = vmatpush.bf16.msra.mxu0 %v1252
      %1301 = vmatpush.bf16.msra.mxu0 %v1251
      %1302 = vmatpush.bf16.msra.mxu0 %v1250
      %1303 = vmatpush.bf16.msra.mxu0 %v1249
      %1304 = vmatpush.bf16.msra.mxu0 %v1248
      %1305 = vmatpush.bf16.msra.mxu0 %v1247
      %1306 = vmatpush.bf16.msra.mxu0 %v1246
      %1307 = vmatmul.bf16.gmra.mxu0 %v642
      %v1308 = vpop.f32.mrf.mxu0
      %v1309 = vadd.f32 %v1280, %v1308
      %v1310 = vpop.f32.mrf.mxu0
      %v1311 = vadd.f32 %v1282, %v1310
      %1312 = vmatmul.bf16.gmra.mxu0 %v644
      %v1313 = vpop.f32.mrf.mxu0
      %v1314 = vadd.f32 %v1285, %v1313
      %v1315 = vpop.f32.mrf.mxu0
      %v1316 = vadd.f32 %v1287, %v1315
      %1317 = vmatmul.bf16.gmra.mxu0 %v646
      %v1318 = vpop.f32.mrf.mxu0
      %v1319 = vadd.f32 %v1290, %v1318
      %v1320 = vpop.f32.mrf.mxu0
      %v1321 = vadd.f32 %v1292, %v1320
      %1322 = vmatmul.bf16.gmra.mxu0 %v648
      %v1323 = vpop.f32.mrf.mxu0
      %v1324 = vadd.f32 %v1295, %v1323
      %v1325 = vpop.f32.mrf.mxu0
      %v1326 = vadd.f32 %v1297, %v1325
      %1327 = vdwg.mxu0
      %v1328 = vld [vmem:[%s955 + $0x100] sm:$0xf]
      %v1329 = vld [vmem:[%s955 + $0x104] sm:$0xf]
      %v1330 = vld [vmem:[%s955 + $0x108] sm:$0xf]
      %v1331 = vld [vmem:[%s955 + $0x10c] sm:$0xf]
      %v1332 = vld [vmem:[%s955 + $0x110] sm:$0xf]
      %v1333 = vld [vmem:[%s955 + $0x114] sm:$0xf]
      %v1334 = vld [vmem:[%s955 + $0x118] sm:$0xf]
      %v1335 = vld [vmem:[%s955 + $0x11c] sm:$0xf]
      %v1336 = vld [vmem:[%s955 + $0x120] sm:$0xf]
      %v1337 = vld [vmem:[%s955 + $0x124] sm:$0xf]
      %v1338 = vld [vmem:[%s955 + $0x128] sm:$0xf]
      %v1339 = vld [vmem:[%s955 + $0x12c] sm:$0xf]
      %v1340 = vld [vmem:[%s955 + $0x130] sm:$0xf]
      %v1341 = vld [vmem:[%s955 + $0x134] sm:$0xf]
      %v1342 = vld [vmem:[%s955 + $0x138] sm:$0xf]
      %v1343 = vld [vmem:[%s955 + $0x13c] sm:$0xf]
      %v1360 = vunpack.c.l.b16 %v1328
      %v1361 = vunpack.c.l.b16 %v1329
      %v1362 = vunpack.c.l.b16 %v1330
      %v1363 = vunpack.c.l.b16 %v1331
      %v1364 = vunpack.c.l.b16 %v1332
      %v1365 = vunpack.c.l.b16 %v1333
      %v1366 = vunpack.c.l.b16 %v1334
      %v1367 = vunpack.c.l.b16 %v1335
      %v1368 = vunpack.c.l.b16 %v1336
      %v1369 = vunpack.c.l.b16 %v1337
      %v1370 = vunpack.c.l.b16 %v1338
      %v1371 = vunpack.c.l.b16 %v1339
      %v1372 = vunpack.c.l.b16 %v1340
      %v1373 = vunpack.c.l.b16 %v1341
      %v1374 = vunpack.c.l.b16 %v1342
      %v1375 = vunpack.c.l.b16 %v1343
      %v1376 = vpack.c.b16 %v1361, %v1360
      %v1377 = vpack.c.b16 %v1363, %v1362
      %v1378 = vpack.c.b16 %v1365, %v1364
      %v1379 = vpack.c.b16 %v1367, %v1366
      %v1380 = vpack.c.b16 %v1369, %v1368
      %v1381 = vpack.c.b16 %v1371, %v1370
      %v1382 = vpack.c.b16 %v1373, %v1372
      %v1383 = vpack.c.b16 %v1375, %v1374
      %1392 = vmatpush.bf16.msra.mxu0 %v1383
      %1393 = vmatpush.bf16.msra.mxu0 %v1382
      %1394 = vmatpush.bf16.msra.mxu0 %v1381
      %1395 = vmatpush.bf16.msra.mxu0 %v1380
      %1396 = vmatpush.bf16.msra.mxu0 %v1379
      %1397 = vmatpush.bf16.msra.mxu0 %v1378
      %1398 = vmatpush.bf16.msra.mxu0 %v1377
      %1399 = vmatpush.bf16.msra.mxu0 %v1376
      %1400 = vmatmul.bf16.gmra.mxu0 %v843
      %v1401 = vpop.f32.mrf.mxu0
      %v1402 = vadd.f32 0.0, %v1401
      %v1403 = vpop.f32.mrf.mxu0
      %v1404 = vadd.f32 0.0, %v1403
      %1405 = vmatmul.bf16.gmra.mxu0 %v844
      %v1406 = vpop.f32.mrf.mxu0
      %v1407 = vadd.f32 0.0, %v1406
      %v1408 = vpop.f32.mrf.mxu0
      %v1409 = vadd.f32 0.0, %v1408
      %1410 = vmatmul.bf16.gmra.mxu0 %v845
      %v1411 = vpop.f32.mrf.mxu0
      %v1412 = vadd.f32 0.0, %v1411
      %v1413 = vpop.f32.mrf.mxu0
      %v1414 = vadd.f32 0.0, %v1413
      %1415 = vmatmul.bf16.gmra.mxu0 %v846
      %v1416 = vpop.f32.mrf.mxu0
      %v1417 = vadd.f32 0.0, %v1416
      %v1418 = vpop.f32.mrf.mxu0
      %v1419 = vadd.f32 0.0, %v1418
      %1420 = vdwg.mxu0
      %v1421 = vadd.f32 %v1309, %v1402
      %v1422 = vadd.f32 %v1311, %v1404
      %v1423 = vadd.f32 %v1314, %v1407
      %v1424 = vadd.f32 %v1316, %v1409
      %v1425 = vadd.f32 %v1319, %v1412
      %v1426 = vadd.f32 %v1321, %v1414
      %v1427 = vadd.f32 %v1324, %v1417
      %v1428 = vadd.f32 %v1326, %v1419
      %v1429 = vrot.slane %v1421, 7
      %v1430 = vrot.slane %v1422, 7
      %v1431 = vrot.slane %v1423, 7
      %v1432 = vrot.slane %v1424, 7
      %v1433 = vrot.slane %v1425, 7
      %v1434 = vrot.slane %v1426, 7
      %v1435 = vrot.slane %v1427, 7
      %v1436 = vrot.slane %v1428, 7
      %vm1437 = vcmp.ge.s32.totalorder %v288, 1
      %v1438 = vsel %vm1437, 1, 0
      %vm1439 = vcmp.eq.s32.totalorder %v1438, 1
      %v1440 = vsel %vm1439, %v1429, 0.0
      %v1441 = vsel %vm1439, %v1430, 0.0
      %v1442 = vsel %vm1439, %v1431, 0.0
      %v1443 = vsel %vm1439, %v1432, 0.0
      %v1444 = vsel %vm1439, %v1433, 0.0
      %v1445 = vsel %vm1439, %v1434, 0.0
      %v1446 = vsel %vm1439, %v1435, 0.0
      %v1447 = vsel %vm1439, %v1436, 0.0
      %v1448 = vadd.f32 %v947, %v1440
      %v1449 = vadd.f32 %v948, %v1441
      %v1450 = vadd.f32 %v949, %v1442
      %v1451 = vadd.f32 %v950, %v1443
      %v1452 = vadd.f32 %v951, %v1444
      %v1453 = vadd.f32 %v952, %v1445
      %v1454 = vadd.f32 %v953, %v1446
      %v1455 = vadd.f32 %v954, %v1447
      %s1456 = scalar_lea.vmem %s260, 640
      %v1457 = vld [vmem:[%s1456] sm:$0xf]
      %v1458 = vld [vmem:[%s1456 + $0x4] sm:$0xf]
      %v1459 = vld [vmem:[%s1456 + $0x8] sm:$0xf]
      %v1460 = vld [vmem:[%s1456 + $0xc] sm:$0xf]
      %v1461 = vld [vmem:[%s1456 + $0x10] sm:$0xf]
      %v1462 = vld [vmem:[%s1456 + $0x14] sm:$0xf]
      %v1463 = vld [vmem:[%s1456 + $0x18] sm:$0xf]
      %v1464 = vld [vmem:[%s1456 + $0x1c] sm:$0xf]
      %v1465 = vld [vmem:[%s1456 + $0x20] sm:$0xf]
      %v1466 = vld [vmem:[%s1456 + $0x24] sm:$0xf]
      %v1467 = vld [vmem:[%s1456 + $0x28] sm:$0xf]
      %v1468 = vld [vmem:[%s1456 + $0x2c] sm:$0xf]
      %v1469 = vld [vmem:[%s1456 + $0x30] sm:$0xf]
      %v1470 = vld [vmem:[%s1456 + $0x34] sm:$0xf]
      %v1471 = vld [vmem:[%s1456 + $0x38] sm:$0xf]
      %v1472 = vld [vmem:[%s1456 + $0x3c] sm:$0xf]
      %v1473 = vld [vmem:[%s1456 + $0x40] sm:$0xf]
      %v1474 = vld [vmem:[%s1456 + $0x44] sm:$0xf]
      %v1475 = vld [vmem:[%s1456 + $0x48] sm:$0xf]
      %v1476 = vld [vmem:[%s1456 + $0x4c] sm:$0xf]
      %v1477 = vld [vmem:[%s1456 + $0x50] sm:$0xf]
      %v1478 = vld [vmem:[%s1456 + $0x54] sm:$0xf]
      %v1479 = vld [vmem:[%s1456 + $0x58] sm:$0xf]
      %v1480 = vld [vmem:[%s1456 + $0x5c] sm:$0xf]
      %v1481 = vld [vmem:[%s1456 + $0x60] sm:$0xf]
      %v1482 = vld [vmem:[%s1456 + $0x64] sm:$0xf]
      %v1483 = vld [vmem:[%s1456 + $0x68] sm:$0xf]
      %v1484 = vld [vmem:[%s1456 + $0x6c] sm:$0xf]
      %v1485 = vld [vmem:[%s1456 + $0x70] sm:$0xf]
      %v1486 = vld [vmem:[%s1456 + $0x74] sm:$0xf]
      %v1487 = vld [vmem:[%s1456 + $0x78] sm:$0xf]
      %v1488 = vld [vmem:[%s1456 + $0x7c] sm:$0xf]
      %v1489 = vld [vmem:[%s1456 + $0x80] sm:$0xf]
      %v1490 = vld [vmem:[%s1456 + $0x84] sm:$0xf]
      %v1491 = vld [vmem:[%s1456 + $0x88] sm:$0xf]
      %v1492 = vld [vmem:[%s1456 + $0x8c] sm:$0xf]
      %v1493 = vld [vmem:[%s1456 + $0x90] sm:$0xf]
      %v1494 = vld [vmem:[%s1456 + $0x94] sm:$0xf]
      %v1495 = vld [vmem:[%s1456 + $0x98] sm:$0xf]
      %v1496 = vld [vmem:[%s1456 + $0x9c] sm:$0xf]
      %v1497 = vld [vmem:[%s1456 + $0xa0] sm:$0xf]
      %v1498 = vld [vmem:[%s1456 + $0xa4] sm:$0xf]
      %v1499 = vld [vmem:[%s1456 + $0xa8] sm:$0xf]
      %v1500 = vld [vmem:[%s1456 + $0xac] sm:$0xf]
      %v1501 = vld [vmem:[%s1456 + $0xb0] sm:$0xf]
      %v1502 = vld [vmem:[%s1456 + $0xb4] sm:$0xf]
      %v1503 = vld [vmem:[%s1456 + $0xb8] sm:$0xf]
      %v1504 = vld [vmem:[%s1456 + $0xbc] sm:$0xf]
      %v1505 = vld [vmem:[%s1456 + $0xc0] sm:$0xf]
      %v1506 = vld [vmem:[%s1456 + $0xc4] sm:$0xf]
      %v1507 = vld [vmem:[%s1456 + $0xc8] sm:$0xf]
      %v1508 = vld [vmem:[%s1456 + $0xcc] sm:$0xf]
      %v1509 = vld [vmem:[%s1456 + $0xd0] sm:$0xf]
      %v1510 = vld [vmem:[%s1456 + $0xd4] sm:$0xf]
      %v1511 = vld [vmem:[%s1456 + $0xd8] sm:$0xf]
      %v1512 = vld [vmem:[%s1456 + $0xdc] sm:$0xf]
      %v1513 = vld [vmem:[%s1456 + $0xe0] sm:$0xf]
      %v1514 = vld [vmem:[%s1456 + $0xe4] sm:$0xf]
      %v1515 = vld [vmem:[%s1456 + $0xe8] sm:$0xf]
      %v1516 = vld [vmem:[%s1456 + $0xec] sm:$0xf]
      %v1517 = vld [vmem:[%s1456 + $0xf0] sm:$0xf]
      %v1518 = vld [vmem:[%s1456 + $0xf4] sm:$0xf]
      %v1519 = vld [vmem:[%s1456 + $0xf8] sm:$0xf]
      %v1520 = vld [vmem:[%s1456 + $0xfc] sm:$0xf]
      %v1553 = vunpack.c.l.b16 %v1489
      %v1554 = vunpack.c.l.b16 %v1490
      %v1555 = vunpack.c.l.b16 %v1491
      %v1556 = vunpack.c.l.b16 %v1492
      %v1557 = vunpack.c.l.b16 %v1493
      %v1558 = vunpack.c.l.b16 %v1494
      %v1559 = vunpack.c.l.b16 %v1495
      %v1560 = vunpack.c.l.b16 %v1496
      %v1561 = vunpack.c.l.b16 %v1497
      %v1562 = vunpack.c.l.b16 %v1498
      %v1563 = vunpack.c.l.b16 %v1499
      %v1564 = vunpack.c.l.b16 %v1500
      %v1565 = vunpack.c.l.b16 %v1501
      %v1566 = vunpack.c.l.b16 %v1502
      %v1567 = vunpack.c.l.b16 %v1503
      %v1568 = vunpack.c.l.b16 %v1504
      %v1569 = vunpack.c.l.b16 %v1505
      %v1570 = vunpack.c.l.b16 %v1506
      %v1571 = vunpack.c.l.b16 %v1507
      %v1572 = vunpack.c.l.b16 %v1508
      %v1573 = vunpack.c.l.b16 %v1509
      %v1574 = vunpack.c.l.b16 %v1510
      %v1575 = vunpack.c.l.b16 %v1511
      %v1576 = vunpack.c.l.b16 %v1512
      %v1577 = vunpack.c.l.b16 %v1513
      %v1578 = vunpack.c.l.b16 %v1514
      %v1579 = vunpack.c.l.b16 %v1515
      %v1580 = vunpack.c.l.b16 %v1516
      %v1581 = vunpack.c.l.b16 %v1517
      %v1582 = vunpack.c.l.b16 %v1518
      %v1583 = vunpack.c.l.b16 %v1519
      %v1584 = vunpack.c.l.b16 %v1520
      %v1585 = vpack.c.b16 %v1554, %v1553
      %v1586 = vpack.c.b16 %v1556, %v1555
      %v1587 = vpack.c.b16 %v1558, %v1557
      %v1588 = vpack.c.b16 %v1560, %v1559
      %v1589 = vpack.c.b16 %v1562, %v1561
      %v1590 = vpack.c.b16 %v1564, %v1563
      %v1591 = vpack.c.b16 %v1566, %v1565
      %v1592 = vpack.c.b16 %v1568, %v1567
      %v1593 = vpack.c.b16 %v1570, %v1569
      %v1594 = vpack.c.b16 %v1572, %v1571
      %v1595 = vpack.c.b16 %v1574, %v1573
      %v1596 = vpack.c.b16 %v1576, %v1575
      %v1597 = vpack.c.b16 %v1578, %v1577
      %v1598 = vpack.c.b16 %v1580, %v1579
      %v1599 = vpack.c.b16 %v1582, %v1581
      %v1600 = vpack.c.b16 %v1584, %v1583
      %1617 = vmatpush.bf16.msra.mxu0 %v1592
      %1618 = vmatpush.bf16.msra.mxu0 %v1591
      %1619 = vmatpush.bf16.msra.mxu0 %v1590
      %1620 = vmatpush.bf16.msra.mxu0 %v1589
      %1621 = vmatpush.bf16.msra.mxu0 %v1588
      %1622 = vmatpush.bf16.msra.mxu0 %v1587
      %1623 = vmatpush.bf16.msra.mxu0 %v1586
      %1624 = vmatpush.bf16.msra.mxu0 %v1585
      %1625 = vmatmul.bf16.gmra.mxu0 %v471
      %v1626 = vpop.f32.mrf.mxu0
      %v1627 = vadd.f32 0.0, %v1626
      %v1628 = vpop.f32.mrf.mxu0
      %v1629 = vadd.f32 0.0, %v1628
      %1630 = vmatmul.bf16.gmra.mxu0 %v473
      %v1631 = vpop.f32.mrf.mxu0
      %v1632 = vadd.f32 0.0, %v1631
      %v1633 = vpop.f32.mrf.mxu0
      %v1634 = vadd.f32 0.0, %v1633
      %1635 = vmatmul.bf16.gmra.mxu0 %v475
      %v1636 = vpop.f32.mrf.mxu0
      %v1637 = vadd.f32 0.0, %v1636
      %v1638 = vpop.f32.mrf.mxu0
      %v1639 = vadd.f32 0.0, %v1638
      %1640 = vmatmul.bf16.gmra.mxu0 %v477
      %v1641 = vpop.f32.mrf.mxu0
      %v1642 = vadd.f32 0.0, %v1641
      %v1643 = vpop.f32.mrf.mxu0
      %v1644 = vadd.f32 0.0, %v1643
      %1645 = vdwg.mxu0
      %1646 = vmatpush.bf16.msra.mxu0 %v1600
      %1647 = vmatpush.bf16.msra.mxu0 %v1599
      %1648 = vmatpush.bf16.msra.mxu0 %v1598
      %1649 = vmatpush.bf16.msra.mxu0 %v1597
      %1650 = vmatpush.bf16.msra.mxu0 %v1596
      %1651 = vmatpush.bf16.msra.mxu0 %v1595
      %1652 = vmatpush.bf16.msra.mxu0 %v1594
      %1653 = vmatpush.bf16.msra.mxu0 %v1593
      %1654 = vmatmul.bf16.gmra.mxu0 %v472
      %v1655 = vpop.f32.mrf.mxu0
      %v1656 = vadd.f32 %v1627, %v1655
      %v1657 = vpop.f32.mrf.mxu0
      %v1658 = vadd.f32 %v1629, %v1657
      %1659 = vmatmul.bf16.gmra.mxu0 %v474
      %v1660 = vpop.f32.mrf.mxu0
      %v1661 = vadd.f32 %v1632, %v1660
      %v1662 = vpop.f32.mrf.mxu0
      %v1663 = vadd.f32 %v1634, %v1662
      %1664 = vmatmul.bf16.gmra.mxu0 %v476
      %v1665 = vpop.f32.mrf.mxu0
      %v1666 = vadd.f32 %v1637, %v1665
      %v1667 = vpop.f32.mrf.mxu0
      %v1668 = vadd.f32 %v1639, %v1667
      %1669 = vmatmul.bf16.gmra.mxu0 %v478
      %v1670 = vpop.f32.mrf.mxu0
      %v1671 = vadd.f32 %v1642, %v1670
      %v1672 = vpop.f32.mrf.mxu0
      %v1673 = vadd.f32 %v1644, %v1672
      %1674 = vdwg.mxu0
      %v1707 = vunpack.c.l.b16 %v1457
      %v1708 = vunpack.c.l.b16 %v1458
      %v1709 = vunpack.c.l.b16 %v1459
      %v1710 = vunpack.c.l.b16 %v1460
      %v1711 = vunpack.c.l.b16 %v1461
      %v1712 = vunpack.c.l.b16 %v1462
      %v1713 = vunpack.c.l.b16 %v1463
      %v1714 = vunpack.c.l.b16 %v1464
      %v1715 = vunpack.c.l.b16 %v1465
      %v1716 = vunpack.c.l.b16 %v1466
      %v1717 = vunpack.c.l.b16 %v1467
      %v1718 = vunpack.c.l.b16 %v1468
      %v1719 = vunpack.c.l.b16 %v1469
      %v1720 = vunpack.c.l.b16 %v1470
      %v1721 = vunpack.c.l.b16 %v1471
      %v1722 = vunpack.c.l.b16 %v1472
      %v1723 = vunpack.c.l.b16 %v1473
      %v1724 = vunpack.c.l.b16 %v1474
      %v1725 = vunpack.c.l.b16 %v1475
      %v1726 = vunpack.c.l.b16 %v1476
      %v1727 = vunpack.c.l.b16 %v1477
      %v1728 = vunpack.c.l.b16 %v1478
      %v1729 = vunpack.c.l.b16 %v1479
      %v1730 = vunpack.c.l.b16 %v1480
      %v1731 = vunpack.c.l.b16 %v1481
      %v1732 = vunpack.c.l.b16 %v1482
      %v1733 = vunpack.c.l.b16 %v1483
      %v1734 = vunpack.c.l.b16 %v1484
      %v1735 = vunpack.c.l.b16 %v1485
      %v1736 = vunpack.c.l.b16 %v1486
      %v1737 = vunpack.c.l.b16 %v1487
      %v1738 = vunpack.c.l.b16 %v1488
      %v1739 = vpack.c.b16 %v1708, %v1707
      %v1740 = vpack.c.b16 %v1710, %v1709
      %v1741 = vpack.c.b16 %v1712, %v1711
      %v1742 = vpack.c.b16 %v1714, %v1713
      %v1743 = vpack.c.b16 %v1716, %v1715
      %v1744 = vpack.c.b16 %v1718, %v1717
      %v1745 = vpack.c.b16 %v1720, %v1719
      %v1746 = vpack.c.b16 %v1722, %v1721
      %v1747 = vpack.c.b16 %v1724, %v1723
      %v1748 = vpack.c.b16 %v1726, %v1725
      %v1749 = vpack.c.b16 %v1728, %v1727
      %v1750 = vpack.c.b16 %v1730, %v1729
      %v1751 = vpack.c.b16 %v1732, %v1731
      %v1752 = vpack.c.b16 %v1734, %v1733
      %v1753 = vpack.c.b16 %v1736, %v1735
      %v1754 = vpack.c.b16 %v1738, %v1737
      %1771 = vmatpush.bf16.msra.mxu0 %v1746
      %1772 = vmatpush.bf16.msra.mxu0 %v1745
      %1773 = vmatpush.bf16.msra.mxu0 %v1744
      %1774 = vmatpush.bf16.msra.mxu0 %v1743
      %1775 = vmatpush.bf16.msra.mxu0 %v1742
      %1776 = vmatpush.bf16.msra.mxu0 %v1741
      %1777 = vmatpush.bf16.msra.mxu0 %v1740
      %1778 = vmatpush.bf16.msra.mxu0 %v1739
      %1779 = vmatmul.bf16.gmra.mxu0 %v641
      %v1780 = vpop.f32.mrf.mxu0
      %v1781 = vadd.f32 %v1656, %v1780
      %v1782 = vpop.f32.mrf.mxu0
      %v1783 = vadd.f32 %v1658, %v1782
      %1784 = vmatmul.bf16.gmra.mxu0 %v643
      %v1785 = vpop.f32.mrf.mxu0
      %v1786 = vadd.f32 %v1661, %v1785
      %v1787 = vpop.f32.mrf.mxu0
      %v1788 = vadd.f32 %v1663, %v1787
      %1789 = vmatmul.bf16.gmra.mxu0 %v645
      %v1790 = vpop.f32.mrf.mxu0
      %v1791 = vadd.f32 %v1666, %v1790
      %v1792 = vpop.f32.mrf.mxu0
      %v1793 = vadd.f32 %v1668, %v1792
      %1794 = vmatmul.bf16.gmra.mxu0 %v647
      %v1795 = vpop.f32.mrf.mxu0
      %v1796 = vadd.f32 %v1671, %v1795
      %v1797 = vpop.f32.mrf.mxu0
      %v1798 = vadd.f32 %v1673, %v1797
      %1799 = vdwg.mxu0
      %1800 = vmatpush.bf16.msra.mxu0 %v1754
      %1801 = vmatpush.bf16.msra.mxu0 %v1753
      %1802 = vmatpush.bf16.msra.mxu0 %v1752
      %1803 = vmatpush.bf16.msra.mxu0 %v1751
      %1804 = vmatpush.bf16.msra.mxu0 %v1750
      %1805 = vmatpush.bf16.msra.mxu0 %v1749
      %1806 = vmatpush.bf16.msra.mxu0 %v1748
      %1807 = vmatpush.bf16.msra.mxu0 %v1747
      %1808 = vmatmul.bf16.gmra.mxu0 %v642
      %v1809 = vpop.f32.mrf.mxu0
      %v1810 = vadd.f32 %v1781, %v1809
      %v1811 = vpop.f32.mrf.mxu0
      %v1812 = vadd.f32 %v1783, %v1811
      %1813 = vmatmul.bf16.gmra.mxu0 %v644
      %v1814 = vpop.f32.mrf.mxu0
      %v1815 = vadd.f32 %v1786, %v1814
      %v1816 = vpop.f32.mrf.mxu0
      %v1817 = vadd.f32 %v1788, %v1816
      %1818 = vmatmul.bf16.gmra.mxu0 %v646
      %v1819 = vpop.f32.mrf.mxu0
      %v1820 = vadd.f32 %v1791, %v1819
      %v1821 = vpop.f32.mrf.mxu0
      %v1822 = vadd.f32 %v1793, %v1821
      %1823 = vmatmul.bf16.gmra.mxu0 %v648
      %v1824 = vpop.f32.mrf.mxu0
      %v1825 = vadd.f32 %v1796, %v1824
      %v1826 = vpop.f32.mrf.mxu0
      %v1827 = vadd.f32 %v1798, %v1826
      %1828 = vdwg.mxu0
      %v1829 = vld [vmem:[%s1456 + $0x100] sm:$0xf]
      %v1830 = vld [vmem:[%s1456 + $0x104] sm:$0xf]
      %v1831 = vld [vmem:[%s1456 + $0x108] sm:$0xf]
      %v1832 = vld [vmem:[%s1456 + $0x10c] sm:$0xf]
      %v1833 = vld [vmem:[%s1456 + $0x110] sm:$0xf]
      %v1834 = vld [vmem:[%s1456 + $0x114] sm:$0xf]
      %v1835 = vld [vmem:[%s1456 + $0x118] sm:$0xf]
      %v1836 = vld [vmem:[%s1456 + $0x11c] sm:$0xf]
      %v1837 = vld [vmem:[%s1456 + $0x120] sm:$0xf]
      %v1838 = vld [vmem:[%s1456 + $0x124] sm:$0xf]
      %v1839 = vld [vmem:[%s1456 + $0x128] sm:$0xf]
      %v1840 = vld [vmem:[%s1456 + $0x12c] sm:$0xf]
      %v1841 = vld [vmem:[%s1456 + $0x130] sm:$0xf]
      %v1842 = vld [vmem:[%s1456 + $0x134] sm:$0xf]
      %v1843 = vld [vmem:[%s1456 + $0x138] sm:$0xf]
      %v1844 = vld [vmem:[%s1456 + $0x13c] sm:$0xf]
      %v1861 = vunpack.c.l.b16 %v1829
      %v1862 = vunpack.c.l.b16 %v1830
      %v1863 = vunpack.c.l.b16 %v1831
      %v1864 = vunpack.c.l.b16 %v1832
      %v1865 = vunpack.c.l.b16 %v1833
      %v1866 = vunpack.c.l.b16 %v1834
      %v1867 = vunpack.c.l.b16 %v1835
      %v1868 = vunpack.c.l.b16 %v1836
      %v1869 = vunpack.c.l.b16 %v1837
      %v1870 = vunpack.c.l.b16 %v1838
      %v1871 = vunpack.c.l.b16 %v1839
      %v1872 = vunpack.c.l.b16 %v1840
      %v1873 = vunpack.c.l.b16 %v1841
      %v1874 = vunpack.c.l.b16 %v1842
      %v1875 = vunpack.c.l.b16 %v1843
      %v1876 = vunpack.c.l.b16 %v1844
      %v1877 = vpack.c.b16 %v1862, %v1861
      %v1878 = vpack.c.b16 %v1864, %v1863
      %v1879 = vpack.c.b16 %v1866, %v1865
      %v1880 = vpack.c.b16 %v1868, %v1867
      %v1881 = vpack.c.b16 %v1870, %v1869
      %v1882 = vpack.c.b16 %v1872, %v1871
      %v1883 = vpack.c.b16 %v1874, %v1873
      %v1884 = vpack.c.b16 %v1876, %v1875
      %1893 = vmatpush.bf16.msra.mxu0 %v1884
      %1894 = vmatpush.bf16.msra.mxu0 %v1883
      %1895 = vmatpush.bf16.msra.mxu0 %v1882
      %1896 = vmatpush.bf16.msra.mxu0 %v1881
      %1897 = vmatpush.bf16.msra.mxu0 %v1880
      %1898 = vmatpush.bf16.msra.mxu0 %v1879
      %1899 = vmatpush.bf16.msra.mxu0 %v1878
      %1900 = vmatpush.bf16.msra.mxu0 %v1877
      %1901 = vmatmul.bf16.gmra.mxu0 %v843
      %v1902 = vpop.f32.mrf.mxu0
      %v1903 = vadd.f32 0.0, %v1902
      %v1904 = vpop.f32.mrf.mxu0
      %v1905 = vadd.f32 0.0, %v1904
      %1906 = vmatmul.bf16.gmra.mxu0 %v844
      %v1907 = vpop.f32.mrf.mxu0
      %v1908 = vadd.f32 0.0, %v1907
      %v1909 = vpop.f32.mrf.mxu0
      %v1910 = vadd.f32 0.0, %v1909
      %1911 = vmatmul.bf16.gmra.mxu0 %v845
      %v1912 = vpop.f32.mrf.mxu0
      %v1913 = vadd.f32 0.0, %v1912
      %v1914 = vpop.f32.mrf.mxu0
      %v1915 = vadd.f32 0.0, %v1914
      %1916 = vmatmul.bf16.gmra.mxu0 %v846
      %v1917 = vpop.f32.mrf.mxu0
      %v1918 = vadd.f32 0.0, %v1917
      %v1919 = vpop.f32.mrf.mxu0
      %v1920 = vadd.f32 0.0, %v1919
      %1921 = vdwg.mxu0
      %v1922 = vadd.f32 %v1810, %v1903
      %v1923 = vadd.f32 %v1812, %v1905
      %v1924 = vadd.f32 %v1815, %v1908
      %v1925 = vadd.f32 %v1817, %v1910
      %v1926 = vadd.f32 %v1820, %v1913
      %v1927 = vadd.f32 %v1822, %v1915
      %v1928 = vadd.f32 %v1825, %v1918
      %v1929 = vadd.f32 %v1827, %v1920
      %v1930 = vadd.f32 %v1448, %v1922
      %v1931 = vadd.f32 %v1449, %v1923
      %v1932 = vadd.f32 %v1450, %v1924
      %v1933 = vadd.f32 %v1451, %v1925
      %v1934 = vadd.f32 %v1452, %v1926
      %v1935 = vadd.f32 %v1453, %v1927
      %v1936 = vadd.f32 %v1454, %v1928
      %v1937 = vadd.f32 %v1455, %v1929
      %s1938 = scalar_lea.vmem %s260, 960
      %v1939 = vld [vmem:[%s1938] sm:$0xf]
      %v1940 = vld [vmem:[%s1938 + $0x4] sm:$0xf]
      %v1941 = vld [vmem:[%s1938 + $0x8] sm:$0xf]
      %v1942 = vld [vmem:[%s1938 + $0xc] sm:$0xf]
      %v1943 = vld [vmem:[%s1938 + $0x10] sm:$0xf]
      %v1944 = vld [vmem:[%s1938 + $0x14] sm:$0xf]
      %v1945 = vld [vmem:[%s1938 + $0x18] sm:$0xf]
      %v1946 = vld [vmem:[%s1938 + $0x1c] sm:$0xf]
      %v1947 = vld [vmem:[%s1938 + $0x20] sm:$0xf]
      %v1948 = vld [vmem:[%s1938 + $0x24] sm:$0xf]
      %v1949 = vld [vmem:[%s1938 + $0x28] sm:$0xf]
      %v1950 = vld [vmem:[%s1938 + $0x2c] sm:$0xf]
      %v1951 = vld [vmem:[%s1938 + $0x30] sm:$0xf]
      %v1952 = vld [vmem:[%s1938 + $0x34] sm:$0xf]
      %v1953 = vld [vmem:[%s1938 + $0x38] sm:$0xf]
      %v1954 = vld [vmem:[%s1938 + $0x3c] sm:$0xf]
      %v1955 = vld [vmem:[%s1938 + $0x40] sm:$0xf]
      %v1956 = vld [vmem:[%s1938 + $0x44] sm:$0xf]
      %v1957 = vld [vmem:[%s1938 + $0x48] sm:$0xf]
      %v1958 = vld [vmem:[%s1938 + $0x4c] sm:$0xf]
      %v1959 = vld [vmem:[%s1938 + $0x50] sm:$0xf]
      %v1960 = vld [vmem:[%s1938 + $0x54] sm:$0xf]
      %v1961 = vld [vmem:[%s1938 + $0x58] sm:$0xf]
      %v1962 = vld [vmem:[%s1938 + $0x5c] sm:$0xf]
      %v1963 = vld [vmem:[%s1938 + $0x60] sm:$0xf]
      %v1964 = vld [vmem:[%s1938 + $0x64] sm:$0xf]
      %v1965 = vld [vmem:[%s1938 + $0x68] sm:$0xf]
      %v1966 = vld [vmem:[%s1938 + $0x6c] sm:$0xf]
      %v1967 = vld [vmem:[%s1938 + $0x70] sm:$0xf]
      %v1968 = vld [vmem:[%s1938 + $0x74] sm:$0xf]
      %v1969 = vld [vmem:[%s1938 + $0x78] sm:$0xf]
      %v1970 = vld [vmem:[%s1938 + $0x7c] sm:$0xf]
      %v1971 = vld [vmem:[%s1938 + $0x80] sm:$0xf]
      %v1972 = vld [vmem:[%s1938 + $0x84] sm:$0xf]
      %v1973 = vld [vmem:[%s1938 + $0x88] sm:$0xf]
      %v1974 = vld [vmem:[%s1938 + $0x8c] sm:$0xf]
      %v1975 = vld [vmem:[%s1938 + $0x90] sm:$0xf]
      %v1976 = vld [vmem:[%s1938 + $0x94] sm:$0xf]
      %v1977 = vld [vmem:[%s1938 + $0x98] sm:$0xf]
      %v1978 = vld [vmem:[%s1938 + $0x9c] sm:$0xf]
      %v1979 = vld [vmem:[%s1938 + $0xa0] sm:$0xf]
      %v1980 = vld [vmem:[%s1938 + $0xa4] sm:$0xf]
      %v1981 = vld [vmem:[%s1938 + $0xa8] sm:$0xf]
      %v1982 = vld [vmem:[%s1938 + $0xac] sm:$0xf]
      %v1983 = vld [vmem:[%s1938 + $0xb0] sm:$0xf]
      %v1984 = vld [vmem:[%s1938 + $0xb4] sm:$0xf]
      %v1985 = vld [vmem:[%s1938 + $0xb8] sm:$0xf]
      %v1986 = vld [vmem:[%s1938 + $0xbc] sm:$0xf]
      %v1987 = vld [vmem:[%s1938 + $0xc0] sm:$0xf]
      %v1988 = vld [vmem:[%s1938 + $0xc4] sm:$0xf]
      %v1989 = vld [vmem:[%s1938 + $0xc8] sm:$0xf]
      %v1990 = vld [vmem:[%s1938 + $0xcc] sm:$0xf]
      %v1991 = vld [vmem:[%s1938 + $0xd0] sm:$0xf]
      %v1992 = vld [vmem:[%s1938 + $0xd4] sm:$0xf]
      %v1993 = vld [vmem:[%s1938 + $0xd8] sm:$0xf]
      %v1994 = vld [vmem:[%s1938 + $0xdc] sm:$0xf]
      %v1995 = vld [vmem:[%s1938 + $0xe0] sm:$0xf]
      %v1996 = vld [vmem:[%s1938 + $0xe4] sm:$0xf]
      %v1997 = vld [vmem:[%s1938 + $0xe8] sm:$0xf]
      %v1998 = vld [vmem:[%s1938 + $0xec] sm:$0xf]
      %v1999 = vld [vmem:[%s1938 + $0xf0] sm:$0xf]
      %v2000 = vld [vmem:[%s1938 + $0xf4] sm:$0xf]
      %v2001 = vld [vmem:[%s1938 + $0xf8] sm:$0xf]
      %v2002 = vld [vmem:[%s1938 + $0xfc] sm:$0xf]
      %v2035 = vunpack.c.l.b16 %v1971
      %v2036 = vunpack.c.l.b16 %v1972
      %v2037 = vunpack.c.l.b16 %v1973
      %v2038 = vunpack.c.l.b16 %v1974
      %v2039 = vunpack.c.l.b16 %v1975
      %v2040 = vunpack.c.l.b16 %v1976
      %v2041 = vunpack.c.l.b16 %v1977
      %v2042 = vunpack.c.l.b16 %v1978
      %v2043 = vunpack.c.l.b16 %v1979
      %v2044 = vunpack.c.l.b16 %v1980
      %v2045 = vunpack.c.l.b16 %v1981
      %v2046 = vunpack.c.l.b16 %v1982
      %v2047 = vunpack.c.l.b16 %v1983
      %v2048 = vunpack.c.l.b16 %v1984
      %v2049 = vunpack.c.l.b16 %v1985
      %v2050 = vunpack.c.l.b16 %v1986
      %v2051 = vunpack.c.l.b16 %v1987
      %v2052 = vunpack.c.l.b16 %v1988
      %v2053 = vunpack.c.l.b16 %v1989
      %v2054 = vunpack.c.l.b16 %v1990
      %v2055 = vunpack.c.l.b16 %v1991
      %v2056 = vunpack.c.l.b16 %v1992
      %v2057 = vunpack.c.l.b16 %v1993
      %v2058 = vunpack.c.l.b16 %v1994
      %v2059 = vunpack.c.l.b16 %v1995
      %v2060 = vunpack.c.l.b16 %v1996
      %v2061 = vunpack.c.l.b16 %v1997
      %v2062 = vunpack.c.l.b16 %v1998
      %v2063 = vunpack.c.l.b16 %v1999
      %v2064 = vunpack.c.l.b16 %v2000
      %v2065 = vunpack.c.l.b16 %v2001
      %v2066 = vunpack.c.l.b16 %v2002
      %v2067 = vpack.c.b16 %v2036, %v2035
      %v2068 = vpack.c.b16 %v2038, %v2037
      %v2069 = vpack.c.b16 %v2040, %v2039
      %v2070 = vpack.c.b16 %v2042, %v2041
      %v2071 = vpack.c.b16 %v2044, %v2043
      %v2072 = vpack.c.b16 %v2046, %v2045
      %v2073 = vpack.c.b16 %v2048, %v2047
      %v2074 = vpack.c.b16 %v2050, %v2049
      %v2075 = vpack.c.b16 %v2052, %v2051
      %v2076 = vpack.c.b16 %v2054, %v2053
      %v2077 = vpack.c.b16 %v2056, %v2055
      %v2078 = vpack.c.b16 %v2058, %v2057
      %v2079 = vpack.c.b16 %v2060, %v2059
      %v2080 = vpack.c.b16 %v2062, %v2061
      %v2081 = vpack.c.b16 %v2064, %v2063
      %v2082 = vpack.c.b16 %v2066, %v2065
      %2099 = vmatpush.bf16.msra.mxu0 %v2074
      %2100 = vmatpush.bf16.msra.mxu0 %v2073
      %2101 = vmatpush.bf16.msra.mxu0 %v2072
      %2102 = vmatpush.bf16.msra.mxu0 %v2071
      %2103 = vmatpush.bf16.msra.mxu0 %v2070
      %2104 = vmatpush.bf16.msra.mxu0 %v2069
      %2105 = vmatpush.bf16.msra.mxu0 %v2068
      %2106 = vmatpush.bf16.msra.mxu0 %v2067
      %2107 = vmatmul.bf16.gmra.mxu0 %v471
      %v2108 = vpop.f32.mrf.mxu0
      %v2109 = vadd.f32 0.0, %v2108
      %v2110 = vpop.f32.mrf.mxu0
      %v2111 = vadd.f32 0.0, %v2110
      %2112 = vmatmul.bf16.gmra.mxu0 %v473
      %v2113 = vpop.f32.mrf.mxu0
      %v2114 = vadd.f32 0.0, %v2113
      %v2115 = vpop.f32.mrf.mxu0
      %v2116 = vadd.f32 0.0, %v2115
      %2117 = vmatmul.bf16.gmra.mxu0 %v475
      %v2118 = vpop.f32.mrf.mxu0
      %v2119 = vadd.f32 0.0, %v2118
      %v2120 = vpop.f32.mrf.mxu0
      %v2121 = vadd.f32 0.0, %v2120
      %2122 = vmatmul.bf16.gmra.mxu0 %v477
      %v2123 = vpop.f32.mrf.mxu0
      %v2124 = vadd.f32 0.0, %v2123
      %v2125 = vpop.f32.mrf.mxu0
      %v2126 = vadd.f32 0.0, %v2125
      %2127 = vdwg.mxu0
      %2128 = vmatpush.bf16.msra.mxu0 %v2082
      %2129 = vmatpush.bf16.msra.mxu0 %v2081
      %2130 = vmatpush.bf16.msra.mxu0 %v2080
      %2131 = vmatpush.bf16.msra.mxu0 %v2079
      %2132 = vmatpush.bf16.msra.mxu0 %v2078
      %2133 = vmatpush.bf16.msra.mxu0 %v2077
      %2134 = vmatpush.bf16.msra.mxu0 %v2076
      %2135 = vmatpush.bf16.msra.mxu0 %v2075
      %2136 = vmatmul.bf16.gmra.mxu0 %v472
      %v2137 = vpop.f32.mrf.mxu0
      %v2138 = vadd.f32 %v2109, %v2137
      %v2139 = vpop.f32.mrf.mxu0
      %v2140 = vadd.f32 %v2111, %v2139
      %2141 = vmatmul.bf16.gmra.mxu0 %v474
      %v2142 = vpop.f32.mrf.mxu0
      %v2143 = vadd.f32 %v2114, %v2142
      %v2144 = vpop.f32.mrf.mxu0
      %v2145 = vadd.f32 %v2116, %v2144
      %2146 = vmatmul.bf16.gmra.mxu0 %v476
      %v2147 = vpop.f32.mrf.mxu0
      %v2148 = vadd.f32 %v2119, %v2147
      %v2149 = vpop.f32.mrf.mxu0
      %v2150 = vadd.f32 %v2121, %v2149
      %2151 = vmatmul.bf16.gmra.mxu0 %v478
      %v2152 = vpop.f32.mrf.mxu0
      %v2153 = vadd.f32 %v2124, %v2152
      %v2154 = vpop.f32.mrf.mxu0
      %v2155 = vadd.f32 %v2126, %v2154
      %2156 = vdwg.mxu0
      %v2189 = vunpack.c.l.b16 %v1939
      %v2190 = vunpack.c.l.b16 %v1940
      %v2191 = vunpack.c.l.b16 %v1941
      %v2192 = vunpack.c.l.b16 %v1942
      %v2193 = vunpack.c.l.b16 %v1943
      %v2194 = vunpack.c.l.b16 %v1944
      %v2195 = vunpack.c.l.b16 %v1945
      %v2196 = vunpack.c.l.b16 %v1946
      %v2197 = vunpack.c.l.b16 %v1947
      %v2198 = vunpack.c.l.b16 %v1948
      %v2199 = vunpack.c.l.b16 %v1949
      %v2200 = vunpack.c.l.b16 %v1950
      %v2201 = vunpack.c.l.b16 %v1951
      %v2202 = vunpack.c.l.b16 %v1952
      %v2203 = vunpack.c.l.b16 %v1953
      %v2204 = vunpack.c.l.b16 %v1954
      %v2205 = vunpack.c.l.b16 %v1955
      %v2206 = vunpack.c.l.b16 %v1956
      %v2207 = vunpack.c.l.b16 %v1957
      %v2208 = vunpack.c.l.b16 %v1958
      %v2209 = vunpack.c.l.b16 %v1959
      %v2210 = vunpack.c.l.b16 %v1960
      %v2211 = vunpack.c.l.b16 %v1961
      %v2212 = vunpack.c.l.b16 %v1962
      %v2213 = vunpack.c.l.b16 %v1963
      %v2214 = vunpack.c.l.b16 %v1964
      %v2215 = vunpack.c.l.b16 %v1965
      %v2216 = vunpack.c.l.b16 %v1966
      %v2217 = vunpack.c.l.b16 %v1967
      %v2218 = vunpack.c.l.b16 %v1968
      %v2219 = vunpack.c.l.b16 %v1969
      %v2220 = vunpack.c.l.b16 %v1970
      %v2221 = vpack.c.b16 %v2190, %v2189
      %v2222 = vpack.c.b16 %v2192, %v2191
      %v2223 = vpack.c.b16 %v2194, %v2193
      %v2224 = vpack.c.b16 %v2196, %v2195
      %v2225 = vpack.c.b16 %v2198, %v2197
      %v2226 = vpack.c.b16 %v2200, %v2199
      %v2227 = vpack.c.b16 %v2202, %v2201
      %v2228 = vpack.c.b16 %v2204, %v2203
      %v2229 = vpack.c.b16 %v2206, %v2205
      %v2230 = vpack.c.b16 %v2208, %v2207
      %v2231 = vpack.c.b16 %v2210, %v2209
      %v2232 = vpack.c.b16 %v2212, %v2211
      %v2233 = vpack.c.b16 %v2214, %v2213
      %v2234 = vpack.c.b16 %v2216, %v2215
      %v2235 = vpack.c.b16 %v2218, %v2217
      %v2236 = vpack.c.b16 %v2220, %v2219
      %2253 = vmatpush.bf16.msra.mxu0 %v2228
      %2254 = vmatpush.bf16.msra.mxu0 %v2227
      %2255 = vmatpush.bf16.msra.mxu0 %v2226
      %2256 = vmatpush.bf16.msra.mxu0 %v2225
      %2257 = vmatpush.bf16.msra.mxu0 %v2224
      %2258 = vmatpush.bf16.msra.mxu0 %v2223
      %2259 = vmatpush.bf16.msra.mxu0 %v2222
      %2260 = vmatpush.bf16.msra.mxu0 %v2221
      %2261 = vmatmul.bf16.gmra.mxu0 %v641
      %v2262 = vpop.f32.mrf.mxu0
      %v2263 = vadd.f32 %v2138, %v2262
      %v2264 = vpop.f32.mrf.mxu0
      %v2265 = vadd.f32 %v2140, %v2264
      %2266 = vmatmul.bf16.gmra.mxu0 %v643
      %v2267 = vpop.f32.mrf.mxu0
      %v2268 = vadd.f32 %v2143, %v2267
      %v2269 = vpop.f32.mrf.mxu0
      %v2270 = vadd.f32 %v2145, %v2269
      %2271 = vmatmul.bf16.gmra.mxu0 %v645
      %v2272 = vpop.f32.mrf.mxu0
      %v2273 = vadd.f32 %v2148, %v2272
      %v2274 = vpop.f32.mrf.mxu0
      %v2275 = vadd.f32 %v2150, %v2274
      %2276 = vmatmul.bf16.gmra.mxu0 %v647
      %v2277 = vpop.f32.mrf.mxu0
      %v2278 = vadd.f32 %v2153, %v2277
      %v2279 = vpop.f32.mrf.mxu0
      %v2280 = vadd.f32 %v2155, %v2279
      %2281 = vdwg.mxu0
      %2282 = vmatpush.bf16.msra.mxu0 %v2236
      %2283 = vmatpush.bf16.msra.mxu0 %v2235
      %2284 = vmatpush.bf16.msra.mxu0 %v2234
      %2285 = vmatpush.bf16.msra.mxu0 %v2233
      %2286 = vmatpush.bf16.msra.mxu0 %v2232
      %2287 = vmatpush.bf16.msra.mxu0 %v2231
      %2288 = vmatpush.bf16.msra.mxu0 %v2230
      %2289 = vmatpush.bf16.msra.mxu0 %v2229
      %2290 = vmatmul.bf16.gmra.mxu0 %v642
      %v2291 = vpop.f32.mrf.mxu0
      %v2292 = vadd.f32 %v2263, %v2291
      %v2293 = vpop.f32.mrf.mxu0
      %v2294 = vadd.f32 %v2265, %v2293
      %2295 = vmatmul.bf16.gmra.mxu0 %v644
      %v2296 = vpop.f32.mrf.mxu0
      %v2297 = vadd.f32 %v2268, %v2296
      %v2298 = vpop.f32.mrf.mxu0
      %v2299 = vadd.f32 %v2270, %v2298
      %2300 = vmatmul.bf16.gmra.mxu0 %v646
      %v2301 = vpop.f32.mrf.mxu0
      %v2302 = vadd.f32 %v2273, %v2301
      %v2303 = vpop.f32.mrf.mxu0
      %v2304 = vadd.f32 %v2275, %v2303
      %2305 = vmatmul.bf16.gmra.mxu0 %v648
      %v2306 = vpop.f32.mrf.mxu0
      %v2307 = vadd.f32 %v2278, %v2306
      %v2308 = vpop.f32.mrf.mxu0
      %v2309 = vadd.f32 %v2280, %v2308
      %2310 = vdwg.mxu0
      %v2311 = vld [vmem:[%s1938 + $0x100] sm:$0xf]
      %v2312 = vld [vmem:[%s1938 + $0x104] sm:$0xf]
      %v2313 = vld [vmem:[%s1938 + $0x108] sm:$0xf]
      %v2314 = vld [vmem:[%s1938 + $0x10c] sm:$0xf]
      %v2315 = vld [vmem:[%s1938 + $0x110] sm:$0xf]
      %v2316 = vld [vmem:[%s1938 + $0x114] sm:$0xf]
      %v2317 = vld [vmem:[%s1938 + $0x118] sm:$0xf]
      %v2318 = vld [vmem:[%s1938 + $0x11c] sm:$0xf]
      %v2319 = vld [vmem:[%s1938 + $0x120] sm:$0xf]
      %v2320 = vld [vmem:[%s1938 + $0x124] sm:$0xf]
      %v2321 = vld [vmem:[%s1938 + $0x128] sm:$0xf]
      %v2322 = vld [vmem:[%s1938 + $0x12c] sm:$0xf]
      %v2323 = vld [vmem:[%s1938 + $0x130] sm:$0xf]
      %v2324 = vld [vmem:[%s1938 + $0x134] sm:$0xf]
      %v2325 = vld [vmem:[%s1938 + $0x138] sm:$0xf]
      %v2326 = vld [vmem:[%s1938 + $0x13c] sm:$0xf]
      %v2343 = vunpack.c.l.b16 %v2311
      %v2344 = vunpack.c.l.b16 %v2312
      %v2345 = vunpack.c.l.b16 %v2313
      %v2346 = vunpack.c.l.b16 %v2314
      %v2347 = vunpack.c.l.b16 %v2315
      %v2348 = vunpack.c.l.b16 %v2316
      %v2349 = vunpack.c.l.b16 %v2317
      %v2350 = vunpack.c.l.b16 %v2318
      %v2351 = vunpack.c.l.b16 %v2319
      %v2352 = vunpack.c.l.b16 %v2320
      %v2353 = vunpack.c.l.b16 %v2321
      %v2354 = vunpack.c.l.b16 %v2322
      %v2355 = vunpack.c.l.b16 %v2323
      %v2356 = vunpack.c.l.b16 %v2324
      %v2357 = vunpack.c.l.b16 %v2325
      %v2358 = vunpack.c.l.b16 %v2326
      %v2359 = vpack.c.b16 %v2344, %v2343
      %v2360 = vpack.c.b16 %v2346, %v2345
      %v2361 = vpack.c.b16 %v2348, %v2347
      %v2362 = vpack.c.b16 %v2350, %v2349
      %v2363 = vpack.c.b16 %v2352, %v2351
      %v2364 = vpack.c.b16 %v2354, %v2353
      %v2365 = vpack.c.b16 %v2356, %v2355
      %v2366 = vpack.c.b16 %v2358, %v2357
      %2375 = vmatpush.bf16.msra.mxu0 %v2366
      %2376 = vmatpush.bf16.msra.mxu0 %v2365
      %2377 = vmatpush.bf16.msra.mxu0 %v2364
      %2378 = vmatpush.bf16.msra.mxu0 %v2363
      %2379 = vmatpush.bf16.msra.mxu0 %v2362
      %2380 = vmatpush.bf16.msra.mxu0 %v2361
      %2381 = vmatpush.bf16.msra.mxu0 %v2360
      %2382 = vmatpush.bf16.msra.mxu0 %v2359
      %2383 = vmatmul.bf16.gmra.mxu0 %v843
      %v2384 = vpop.f32.mrf.mxu0
      %v2385 = vadd.f32 0.0, %v2384
      %v2386 = vpop.f32.mrf.mxu0
      %v2387 = vadd.f32 0.0, %v2386
      %2388 = vmatmul.bf16.gmra.mxu0 %v844
      %v2389 = vpop.f32.mrf.mxu0
      %v2390 = vadd.f32 0.0, %v2389
      %v2391 = vpop.f32.mrf.mxu0
      %v2392 = vadd.f32 0.0, %v2391
      %2393 = vmatmul.bf16.gmra.mxu0 %v845
      %v2394 = vpop.f32.mrf.mxu0
      %v2395 = vadd.f32 0.0, %v2394
      %v2396 = vpop.f32.mrf.mxu0
      %v2397 = vadd.f32 0.0, %v2396
      %2398 = vmatmul.bf16.gmra.mxu0 %v846
      %v2399 = vpop.f32.mrf.mxu0
      %v2400 = vadd.f32 0.0, %v2399
      %v2401 = vpop.f32.mrf.mxu0
      %v2402 = vadd.f32 0.0, %v2401
      %2403 = vdwg.mxu0
      %v2404 = vadd.f32 %v2292, %v2385
      %v2405 = vadd.f32 %v2294, %v2387
      %v2406 = vadd.f32 %v2297, %v2390
      %v2407 = vadd.f32 %v2299, %v2392
      %v2408 = vadd.f32 %v2302, %v2395
      %v2409 = vadd.f32 %v2304, %v2397
      %v2410 = vadd.f32 %v2307, %v2400
      %v2411 = vadd.f32 %v2309, %v2402
      %v2412 = vrot.slane %v2404, 1
      %v2413 = vrot.slane %v2405, 1
      %v2414 = vrot.slane %v2406, 1
      %v2415 = vrot.slane %v2407, 1
      %v2416 = vrot.slane %v2408, 1
      %v2417 = vrot.slane %v2409, 1
      %v2418 = vrot.slane %v2410, 1
      %v2419 = vrot.slane %v2411, 1
      %vm2420 = vcmp.lt.s32.totalorder %v288, 7
      %v2421 = vsel %vm2420, 1, 0
      %vm2422 = vcmp.eq.s32.totalorder %v2421, 1
      %v2423 = vsel %vm2422, %v2412, 0.0
      %v2424 = vsel %vm2422, %v2413, 0.0
      %v2425 = vsel %vm2422, %v2414, 0.0
      %v2426 = vsel %vm2422, %v2415, 0.0
      %v2427 = vsel %vm2422, %v2416, 0.0
      %v2428 = vsel %vm2422, %v2417, 0.0
      %v2429 = vsel %vm2422, %v2418, 0.0
      %v2430 = vsel %vm2422, %v2419, 0.0
      %v2431 = vadd.f32 %v1930, %v2423
      %v2432 = vadd.f32 %v1931, %v2424
      %v2433 = vadd.f32 %v1932, %v2425
      %v2434 = vadd.f32 %v1933, %v2426
      %v2435 = vadd.f32 %v1934, %v2427
      %v2436 = vadd.f32 %v1935, %v2428
      %v2437 = vadd.f32 %v1936, %v2429
      %v2438 = vadd.f32 %v1937, %v2430
      %s2439 = scalar_lea.vmem %s260, 1280
      %v2440 = vld [vmem:[%s2439] sm:$0xf]
      %v2441 = vld [vmem:[%s2439 + $0x4] sm:$0xf]
      %v2442 = vld [vmem:[%s2439 + $0x8] sm:$0xf]
      %v2443 = vld [vmem:[%s2439 + $0xc] sm:$0xf]
      %v2444 = vld [vmem:[%s2439 + $0x10] sm:$0xf]
      %v2445 = vld [vmem:[%s2439 + $0x14] sm:$0xf]
      %v2446 = vld [vmem:[%s2439 + $0x18] sm:$0xf]
      %v2447 = vld [vmem:[%s2439 + $0x1c] sm:$0xf]
      %v2448 = vld [vmem:[%s2439 + $0x20] sm:$0xf]
      %v2449 = vld [vmem:[%s2439 + $0x24] sm:$0xf]
      %v2450 = vld [vmem:[%s2439 + $0x28] sm:$0xf]
      %v2451 = vld [vmem:[%s2439 + $0x2c] sm:$0xf]
      %v2452 = vld [vmem:[%s2439 + $0x30] sm:$0xf]
      %v2453 = vld [vmem:[%s2439 + $0x34] sm:$0xf]
      %v2454 = vld [vmem:[%s2439 + $0x38] sm:$0xf]
      %v2455 = vld [vmem:[%s2439 + $0x3c] sm:$0xf]
      %v2456 = vld [vmem:[%s2439 + $0x40] sm:$0xf]
      %v2457 = vld [vmem:[%s2439 + $0x44] sm:$0xf]
      %v2458 = vld [vmem:[%s2439 + $0x48] sm:$0xf]
      %v2459 = vld [vmem:[%s2439 + $0x4c] sm:$0xf]
      %v2460 = vld [vmem:[%s2439 + $0x50] sm:$0xf]
      %v2461 = vld [vmem:[%s2439 + $0x54] sm:$0xf]
      %v2462 = vld [vmem:[%s2439 + $0x58] sm:$0xf]
      %v2463 = vld [vmem:[%s2439 + $0x5c] sm:$0xf]
      %v2464 = vld [vmem:[%s2439 + $0x60] sm:$0xf]
      %v2465 = vld [vmem:[%s2439 + $0x64] sm:$0xf]
      %v2466 = vld [vmem:[%s2439 + $0x68] sm:$0xf]
      %v2467 = vld [vmem:[%s2439 + $0x6c] sm:$0xf]
      %v2468 = vld [vmem:[%s2439 + $0x70] sm:$0xf]
      %v2469 = vld [vmem:[%s2439 + $0x74] sm:$0xf]
      %v2470 = vld [vmem:[%s2439 + $0x78] sm:$0xf]
      %v2471 = vld [vmem:[%s2439 + $0x7c] sm:$0xf]
      %v2472 = vld [vmem:[%s2439 + $0x80] sm:$0xf]
      %v2473 = vld [vmem:[%s2439 + $0x84] sm:$0xf]
      %v2474 = vld [vmem:[%s2439 + $0x88] sm:$0xf]
      %v2475 = vld [vmem:[%s2439 + $0x8c] sm:$0xf]
      %v2476 = vld [vmem:[%s2439 + $0x90] sm:$0xf]
      %v2477 = vld [vmem:[%s2439 + $0x94] sm:$0xf]
      %v2478 = vld [vmem:[%s2439 + $0x98] sm:$0xf]
      %v2479 = vld [vmem:[%s2439 + $0x9c] sm:$0xf]
      %v2480 = vld [vmem:[%s2439 + $0xa0] sm:$0xf]
      %v2481 = vld [vmem:[%s2439 + $0xa4] sm:$0xf]
      %v2482 = vld [vmem:[%s2439 + $0xa8] sm:$0xf]
      %v2483 = vld [vmem:[%s2439 + $0xac] sm:$0xf]
      %v2484 = vld [vmem:[%s2439 + $0xb0] sm:$0xf]
      %v2485 = vld [vmem:[%s2439 + $0xb4] sm:$0xf]
      %v2486 = vld [vmem:[%s2439 + $0xb8] sm:$0xf]
      %v2487 = vld [vmem:[%s2439 + $0xbc] sm:$0xf]
      %v2488 = vld [vmem:[%s2439 + $0xc0] sm:$0xf]
      %v2489 = vld [vmem:[%s2439 + $0xc4] sm:$0xf]
      %v2490 = vld [vmem:[%s2439 + $0xc8] sm:$0xf]
      %v2491 = vld [vmem:[%s2439 + $0xcc] sm:$0xf]
      %v2492 = vld [vmem:[%s2439 + $0xd0] sm:$0xf]
      %v2493 = vld [vmem:[%s2439 + $0xd4] sm:$0xf]
      %v2494 = vld [vmem:[%s2439 + $0xd8] sm:$0xf]
      %v2495 = vld [vmem:[%s2439 + $0xdc] sm:$0xf]
      %v2496 = vld [vmem:[%s2439 + $0xe0] sm:$0xf]
      %v2497 = vld [vmem:[%s2439 + $0xe4] sm:$0xf]
      %v2498 = vld [vmem:[%s2439 + $0xe8] sm:$0xf]
      %v2499 = vld [vmem:[%s2439 + $0xec] sm:$0xf]
      %v2500 = vld [vmem:[%s2439 + $0xf0] sm:$0xf]
      %v2501 = vld [vmem:[%s2439 + $0xf4] sm:$0xf]
      %v2502 = vld [vmem:[%s2439 + $0xf8] sm:$0xf]
      %v2503 = vld [vmem:[%s2439 + $0xfc] sm:$0xf]
      %v2536 = vunpack.c.l.b16 %v2472
      %v2537 = vunpack.c.l.b16 %v2473
      %v2538 = vunpack.c.l.b16 %v2474
      %v2539 = vunpack.c.l.b16 %v2475
      %v2540 = vunpack.c.l.b16 %v2476
      %v2541 = vunpack.c.l.b16 %v2477
      %v2542 = vunpack.c.l.b16 %v2478
      %v2543 = vunpack.c.l.b16 %v2479
      %v2544 = vunpack.c.l.b16 %v2480
      %v2545 = vunpack.c.l.b16 %v2481
      %v2546 = vunpack.c.l.b16 %v2482
      %v2547 = vunpack.c.l.b16 %v2483
      %v2548 = vunpack.c.l.b16 %v2484
      %v2549 = vunpack.c.l.b16 %v2485
      %v2550 = vunpack.c.l.b16 %v2486
      %v2551 = vunpack.c.l.b16 %v2487
      %v2552 = vunpack.c.l.b16 %v2488
      %v2553 = vunpack.c.l.b16 %v2489
      %v2554 = vunpack.c.l.b16 %v2490
      %v2555 = vunpack.c.l.b16 %v2491
      %v2556 = vunpack.c.l.b16 %v2492
      %v2557 = vunpack.c.l.b16 %v2493
      %v2558 = vunpack.c.l.b16 %v2494
      %v2559 = vunpack.c.l.b16 %v2495
      %v2560 = vunpack.c.l.b16 %v2496
      %v2561 = vunpack.c.l.b16 %v2497
      %v2562 = vunpack.c.l.b16 %v2498
      %v2563 = vunpack.c.l.b16 %v2499
      %v2564 = vunpack.c.l.b16 %v2500
      %v2565 = vunpack.c.l.b16 %v2501
      %v2566 = vunpack.c.l.b16 %v2502
      %v2567 = vunpack.c.l.b16 %v2503
      %v2568 = vpack.c.b16 %v2537, %v2536
      %v2569 = vpack.c.b16 %v2539, %v2538
      %v2570 = vpack.c.b16 %v2541, %v2540
      %v2571 = vpack.c.b16 %v2543, %v2542
      %v2572 = vpack.c.b16 %v2545, %v2544
      %v2573 = vpack.c.b16 %v2547, %v2546
      %v2574 = vpack.c.b16 %v2549, %v2548
      %v2575 = vpack.c.b16 %v2551, %v2550
      %v2576 = vpack.c.b16 %v2553, %v2552
      %v2577 = vpack.c.b16 %v2555, %v2554
      %v2578 = vpack.c.b16 %v2557, %v2556
      %v2579 = vpack.c.b16 %v2559, %v2558
      %v2580 = vpack.c.b16 %v2561, %v2560
      %v2581 = vpack.c.b16 %v2563, %v2562
      %v2582 = vpack.c.b16 %v2565, %v2564
      %v2583 = vpack.c.b16 %v2567, %v2566
      %2600 = vmatpush.bf16.msra.mxu0 %v2575
      %2601 = vmatpush.bf16.msra.mxu0 %v2574
      %2602 = vmatpush.bf16.msra.mxu0 %v2573
      %2603 = vmatpush.bf16.msra.mxu0 %v2572
      %2604 = vmatpush.bf16.msra.mxu0 %v2571
      %2605 = vmatpush.bf16.msra.mxu0 %v2570
      %2606 = vmatpush.bf16.msra.mxu0 %v2569
      %2607 = vmatpush.bf16.msra.mxu0 %v2568
      %2608 = vmatmul.bf16.gmra.mxu0 %v471
      %v2609 = vpop.f32.mrf.mxu0
      %v2610 = vadd.f32 0.0, %v2609
      %v2611 = vpop.f32.mrf.mxu0
      %v2612 = vadd.f32 0.0, %v2611
      %2613 = vmatmul.bf16.gmra.mxu0 %v473
      %v2614 = vpop.f32.mrf.mxu0
      %v2615 = vadd.f32 0.0, %v2614
      %v2616 = vpop.f32.mrf.mxu0
      %v2617 = vadd.f32 0.0, %v2616
      %2618 = vmatmul.bf16.gmra.mxu0 %v475
      %v2619 = vpop.f32.mrf.mxu0
      %v2620 = vadd.f32 0.0, %v2619
      %v2621 = vpop.f32.mrf.mxu0
      %v2622 = vadd.f32 0.0, %v2621
      %2623 = vmatmul.bf16.gmra.mxu0 %v477
      %v2624 = vpop.f32.mrf.mxu0
      %v2625 = vadd.f32 0.0, %v2624
      %v2626 = vpop.f32.mrf.mxu0
      %v2627 = vadd.f32 0.0, %v2626
      %2628 = vdwg.mxu0
      %2629 = vmatpush.bf16.msra.mxu0 %v2583
      %2630 = vmatpush.bf16.msra.mxu0 %v2582
      %2631 = vmatpush.bf16.msra.mxu0 %v2581
      %2632 = vmatpush.bf16.msra.mxu0 %v2580
      %2633 = vmatpush.bf16.msra.mxu0 %v2579
      %2634 = vmatpush.bf16.msra.mxu0 %v2578
      %2635 = vmatpush.bf16.msra.mxu0 %v2577
      %2636 = vmatpush.bf16.msra.mxu0 %v2576
      %2637 = vmatmul.bf16.gmra.mxu0 %v472
      %v2638 = vpop.f32.mrf.mxu0
      %v2639 = vadd.f32 %v2610, %v2638
      %v2640 = vpop.f32.mrf.mxu0
      %v2641 = vadd.f32 %v2612, %v2640
      %2642 = vmatmul.bf16.gmra.mxu0 %v474
      %v2643 = vpop.f32.mrf.mxu0
      %v2644 = vadd.f32 %v2615, %v2643
      %v2645 = vpop.f32.mrf.mxu0
      %v2646 = vadd.f32 %v2617, %v2645
      %2647 = vmatmul.bf16.gmra.mxu0 %v476
      %v2648 = vpop.f32.mrf.mxu0
      %v2649 = vadd.f32 %v2620, %v2648
      %v2650 = vpop.f32.mrf.mxu0
      %v2651 = vadd.f32 %v2622, %v2650
      %2652 = vmatmul.bf16.gmra.mxu0 %v478
      %v2653 = vpop.f32.mrf.mxu0
      %v2654 = vadd.f32 %v2625, %v2653
      %v2655 = vpop.f32.mrf.mxu0
      %v2656 = vadd.f32 %v2627, %v2655
      %2657 = vdwg.mxu0
      %v2690 = vunpack.c.l.b16 %v2440
      %v2691 = vunpack.c.l.b16 %v2441
      %v2692 = vunpack.c.l.b16 %v2442
      %v2693 = vunpack.c.l.b16 %v2443
      %v2694 = vunpack.c.l.b16 %v2444
      %v2695 = vunpack.c.l.b16 %v2445
      %v2696 = vunpack.c.l.b16 %v2446
      %v2697 = vunpack.c.l.b16 %v2447
      %v2698 = vunpack.c.l.b16 %v2448
      %v2699 = vunpack.c.l.b16 %v2449
      %v2700 = vunpack.c.l.b16 %v2450
      %v2701 = vunpack.c.l.b16 %v2451
      %v2702 = vunpack.c.l.b16 %v2452
      %v2703 = vunpack.c.l.b16 %v2453
      %v2704 = vunpack.c.l.b16 %v2454
      %v2705 = vunpack.c.l.b16 %v2455
      %v2706 = vunpack.c.l.b16 %v2456
      %v2707 = vunpack.c.l.b16 %v2457
      %v2708 = vunpack.c.l.b16 %v2458
      %v2709 = vunpack.c.l.b16 %v2459
      %v2710 = vunpack.c.l.b16 %v2460
      %v2711 = vunpack.c.l.b16 %v2461
      %v2712 = vunpack.c.l.b16 %v2462
      %v2713 = vunpack.c.l.b16 %v2463
      %v2714 = vunpack.c.l.b16 %v2464
      %v2715 = vunpack.c.l.b16 %v2465
      %v2716 = vunpack.c.l.b16 %v2466
      %v2717 = vunpack.c.l.b16 %v2467
      %v2718 = vunpack.c.l.b16 %v2468
      %v2719 = vunpack.c.l.b16 %v2469
      %v2720 = vunpack.c.l.b16 %v2470
      %v2721 = vunpack.c.l.b16 %v2471
      %v2722 = vpack.c.b16 %v2691, %v2690
      %v2723 = vpack.c.b16 %v2693, %v2692
      %v2724 = vpack.c.b16 %v2695, %v2694
      %v2725 = vpack.c.b16 %v2697, %v2696
      %v2726 = vpack.c.b16 %v2699, %v2698
      %v2727 = vpack.c.b16 %v2701, %v2700
      %v2728 = vpack.c.b16 %v2703, %v2702
      %v2729 = vpack.c.b16 %v2705, %v2704
      %v2730 = vpack.c.b16 %v2707, %v2706
      %v2731 = vpack.c.b16 %v2709, %v2708
      %v2732 = vpack.c.b16 %v2711, %v2710
      %v2733 = vpack.c.b16 %v2713, %v2712
      %v2734 = vpack.c.b16 %v2715, %v2714
      %v2735 = vpack.c.b16 %v2717, %v2716
      %v2736 = vpack.c.b16 %v2719, %v2718
      %v2737 = vpack.c.b16 %v2721, %v2720
      %2754 = vmatpush.bf16.msra.mxu0 %v2729
      %2755 = vmatpush.bf16.msra.mxu0 %v2728
      %2756 = vmatpush.bf16.msra.mxu0 %v2727
      %2757 = vmatpush.bf16.msra.mxu0 %v2726
      %2758 = vmatpush.bf16.msra.mxu0 %v2725
      %2759 = vmatpush.bf16.msra.mxu0 %v2724
      %2760 = vmatpush.bf16.msra.mxu0 %v2723
      %2761 = vmatpush.bf16.msra.mxu0 %v2722
      %2762 = vmatmul.bf16.gmra.mxu0 %v641
      %v2763 = vpop.f32.mrf.mxu0
      %v2764 = vadd.f32 %v2639, %v2763
      %v2765 = vpop.f32.mrf.mxu0
      %v2766 = vadd.f32 %v2641, %v2765
      %2767 = vmatmul.bf16.gmra.mxu0 %v643
      %v2768 = vpop.f32.mrf.mxu0
      %v2769 = vadd.f32 %v2644, %v2768
      %v2770 = vpop.f32.mrf.mxu0
      %v2771 = vadd.f32 %v2646, %v2770
      %2772 = vmatmul.bf16.gmra.mxu0 %v645
      %v2773 = vpop.f32.mrf.mxu0
      %v2774 = vadd.f32 %v2649, %v2773
      %v2775 = vpop.f32.mrf.mxu0
      %v2776 = vadd.f32 %v2651, %v2775
      %2777 = vmatmul.bf16.gmra.mxu0 %v647
      %v2778 = vpop.f32.mrf.mxu0
      %v2779 = vadd.f32 %v2654, %v2778
      %v2780 = vpop.f32.mrf.mxu0
      %v2781 = vadd.f32 %v2656, %v2780
      %2782 = vdwg.mxu0
      %2783 = vmatpush.bf16.msra.mxu0 %v2737
      %2784 = vmatpush.bf16.msra.mxu0 %v2736
      %2785 = vmatpush.bf16.msra.mxu0 %v2735
      %2786 = vmatpush.bf16.msra.mxu0 %v2734
      %2787 = vmatpush.bf16.msra.mxu0 %v2733
      %2788 = vmatpush.bf16.msra.mxu0 %v2732
      %2789 = vmatpush.bf16.msra.mxu0 %v2731
      %2790 = vmatpush.bf16.msra.mxu0 %v2730
      %2791 = vmatmul.bf16.gmra.mxu0 %v642
      %v2792 = vpop.f32.mrf.mxu0
      %v2793 = vadd.f32 %v2764, %v2792
      %v2794 = vpop.f32.mrf.mxu0
      %v2795 = vadd.f32 %v2766, %v2794
      %2796 = vmatmul.bf16.gmra.mxu0 %v644
      %v2797 = vpop.f32.mrf.mxu0
      %v2798 = vadd.f32 %v2769, %v2797
      %v2799 = vpop.f32.mrf.mxu0
      %v2800 = vadd.f32 %v2771, %v2799
      %2801 = vmatmul.bf16.gmra.mxu0 %v646
      %v2802 = vpop.f32.mrf.mxu0
      %v2803 = vadd.f32 %v2774, %v2802
      %v2804 = vpop.f32.mrf.mxu0
      %v2805 = vadd.f32 %v2776, %v2804
      %2806 = vmatmul.bf16.gmra.mxu0 %v648
      %v2807 = vpop.f32.mrf.mxu0
      %v2808 = vadd.f32 %v2779, %v2807
      %v2809 = vpop.f32.mrf.mxu0
      %v2810 = vadd.f32 %v2781, %v2809
      %2811 = vdwg.mxu0
      %v2812 = vld [vmem:[%s2439 + $0x100] sm:$0xf]
      %v2813 = vld [vmem:[%s2439 + $0x104] sm:$0xf]
      %v2814 = vld [vmem:[%s2439 + $0x108] sm:$0xf]
      %v2815 = vld [vmem:[%s2439 + $0x10c] sm:$0xf]
      %v2816 = vld [vmem:[%s2439 + $0x110] sm:$0xf]
      %v2817 = vld [vmem:[%s2439 + $0x114] sm:$0xf]
      %v2818 = vld [vmem:[%s2439 + $0x118] sm:$0xf]
      %v2819 = vld [vmem:[%s2439 + $0x11c] sm:$0xf]
      %v2820 = vld [vmem:[%s2439 + $0x120] sm:$0xf]
      %v2821 = vld [vmem:[%s2439 + $0x124] sm:$0xf]
      %v2822 = vld [vmem:[%s2439 + $0x128] sm:$0xf]
      %v2823 = vld [vmem:[%s2439 + $0x12c] sm:$0xf]
      %v2824 = vld [vmem:[%s2439 + $0x130] sm:$0xf]
      %v2825 = vld [vmem:[%s2439 + $0x134] sm:$0xf]
      %v2826 = vld [vmem:[%s2439 + $0x138] sm:$0xf]
      %v2827 = vld [vmem:[%s2439 + $0x13c] sm:$0xf]
      %v2844 = vunpack.c.l.b16 %v2812
      %v2845 = vunpack.c.l.b16 %v2813
      %v2846 = vunpack.c.l.b16 %v2814
      %v2847 = vunpack.c.l.b16 %v2815
      %v2848 = vunpack.c.l.b16 %v2816
      %v2849 = vunpack.c.l.b16 %v2817
      %v2850 = vunpack.c.l.b16 %v2818
      %v2851 = vunpack.c.l.b16 %v2819
      %v2852 = vunpack.c.l.b16 %v2820
      %v2853 = vunpack.c.l.b16 %v2821
      %v2854 = vunpack.c.l.b16 %v2822
      %v2855 = vunpack.c.l.b16 %v2823
      %v2856 = vunpack.c.l.b16 %v2824
      %v2857 = vunpack.c.l.b16 %v2825
      %v2858 = vunpack.c.l.b16 %v2826
      %v2859 = vunpack.c.l.b16 %v2827
      %v2860 = vpack.c.b16 %v2845, %v2844
      %v2861 = vpack.c.b16 %v2847, %v2846
      %v2862 = vpack.c.b16 %v2849, %v2848
      %v2863 = vpack.c.b16 %v2851, %v2850
      %v2864 = vpack.c.b16 %v2853, %v2852
      %v2865 = vpack.c.b16 %v2855, %v2854
      %v2866 = vpack.c.b16 %v2857, %v2856
      %v2867 = vpack.c.b16 %v2859, %v2858
      %2876 = vmatpush.bf16.msra.mxu0 %v2867
      %2877 = vmatpush.bf16.msra.mxu0 %v2866
      %2878 = vmatpush.bf16.msra.mxu0 %v2865
      %2879 = vmatpush.bf16.msra.mxu0 %v2864
      %2880 = vmatpush.bf16.msra.mxu0 %v2863
      %2881 = vmatpush.bf16.msra.mxu0 %v2862
      %2882 = vmatpush.bf16.msra.mxu0 %v2861
      %2883 = vmatpush.bf16.msra.mxu0 %v2860
      %2884 = vmatmul.bf16.gmra.mxu0 %v843
      %v2885 = vpop.f32.mrf.mxu0
      %v2886 = vadd.f32 0.0, %v2885
      %v2887 = vpop.f32.mrf.mxu0
      %v2888 = vadd.f32 0.0, %v2887
      %2889 = vmatmul.bf16.gmra.mxu0 %v844
      %v2890 = vpop.f32.mrf.mxu0
      %v2891 = vadd.f32 0.0, %v2890
      %v2892 = vpop.f32.mrf.mxu0
      %v2893 = vadd.f32 0.0, %v2892
      %2894 = vmatmul.bf16.gmra.mxu0 %v845
      %v2895 = vpop.f32.mrf.mxu0
      %v2896 = vadd.f32 0.0, %v2895
      %v2897 = vpop.f32.mrf.mxu0
      %v2898 = vadd.f32 0.0, %v2897
      %2899 = vmatmul.bf16.gmra.mxu0 %v846
      %v2900 = vpop.f32.mrf.mxu0
      %v2901 = vadd.f32 0.0, %v2900
      %v2902 = vpop.f32.mrf.mxu0
      %v2903 = vadd.f32 0.0, %v2902
      %2904 = vdwg.mxu0
      %v2905 = vadd.f32 %v2793, %v2886
      %v2906 = vadd.f32 %v2795, %v2888
      %v2907 = vadd.f32 %v2798, %v2891
      %v2908 = vadd.f32 %v2800, %v2893
      %v2909 = vadd.f32 %v2803, %v2896
      %v2910 = vadd.f32 %v2805, %v2898
      %v2911 = vadd.f32 %v2808, %v2901
      %v2912 = vadd.f32 %v2810, %v2903
      %v2913 = vrot.slane %v2905, 2
      %v2914 = vrot.slane %v2906, 2
      %v2915 = vrot.slane %v2907, 2
      %v2916 = vrot.slane %v2908, 2
      %v2917 = vrot.slane %v2909, 2
      %v2918 = vrot.slane %v2910, 2
      %v2919 = vrot.slane %v2911, 2
      %v2920 = vrot.slane %v2912, 2
      %vm2921 = vcmp.lt.s32.totalorder %v288, 6
      %v2922 = vsel %vm2921, 1, 0
      %vm2923 = vcmp.eq.s32.totalorder %v2922, 1
      %v2924 = vsel %vm2923, %v2913, 0.0
      %v2925 = vsel %vm2923, %v2914, 0.0
      %v2926 = vsel %vm2923, %v2915, 0.0
      %v2927 = vsel %vm2923, %v2916, 0.0
      %v2928 = vsel %vm2923, %v2917, 0.0
      %v2929 = vsel %vm2923, %v2918, 0.0
      %v2930 = vsel %vm2923, %v2919, 0.0
      %v2931 = vsel %vm2923, %v2920, 0.0
      %v2932 = vadd.f32 %v2431, %v2924
      %v2933 = vadd.f32 %v2432, %v2925
      %v2934 = vadd.f32 %v2433, %v2926
      %v2935 = vadd.f32 %v2434, %v2927
      %v2936 = vadd.f32 %v2435, %v2928
      %v2937 = vadd.f32 %v2436, %v2929
      %v2938 = vadd.f32 %v2437, %v2930
      %v2939 = vadd.f32 %v2438, %v2931
      %p2940 = scmp.eq.s32.totalorder %s23, 0
      // Predicated region
      $region29: #{deep_svdd_forward.7} parent=27 // pred_check
        %p2941 = pneg %p2940
      $region30: #{deep_svdd_forward.7} parent=27 // pred_check_branch
        %2943 = sbr.rel (%p2941) target = $region32
      $region31: #{deep_svdd_forward.7} parent=27 // pred_region
        %vm2944 = vcmask 516096
        %2945 = vst.msk [vmem:[%s279] sm:$0x1] %vm2944, 0.0
        %2946 = vst.msk [vmem:[%s285] sm:$0x1] %vm2944, 0.0
      $region32: #{deep_svdd_forward.7} parent=27 // pred_fallthru
        _
      %v2947 = vld [vmem:[%s279] sm:$0x1]
      %vm2948 = vcmask 523264
      %v2949 = vsel %vm2948, %v2932, 0.0
      %v2950 = vsel %vm2948, %v2933, 0.0
      %v2951 = vadd.f32 %v2949, %v2950
      %v2952 = vsel %vm2948, %v2934, 0.0
      %v2953 = vadd.f32 %v2951, %v2952
      %v2954 = vsel %vm2948, %v2935, 0.0
      %v2955 = vadd.f32 %v2953, %v2954
      %v2956 = vsel %vm2948, %v2936, 0.0
      %v2957 = vadd.f32 %v2955, %v2956
      %v2958 = vsel %vm2948, %v2937, 0.0
      %v2959 = vadd.f32 %v2957, %v2958
      %v2960 = vsel %vm2948, %v2938, 0.0
      %v2961 = vadd.f32 %v2959, %v2960
      %v2962 = vsel %vm2948, %v2939, 0.0
      %v2963 = vadd.f32 %v2961, %v2962
      %v2964 = vsel %vm2948, %v2963, 0.0
      %v2965 = vrot.slane %v2964, 4
      %v2966 = vadd.f32 %v2964, %v2965
      %v2967 = vrot.slane %v2966, 2
      %v2968 = vadd.f32 %v2966, %v2967
      %v2969 = vrot.slane %v2968, 1
      %v2970 = vadd.f32 %v2968, %v2969
      %v2971 = vadd.f32 %v2947, %v2970
      %vm2972 = vcmask 516096
      %2973 = vst.msk [vmem:[%s279] sm:$0x1] %vm2972, %v2971
      %v2974 = vld [vmem:[%s285] sm:$0x1]
      %v2975 = vmul.f32 %v2932, %v2932
      %v2976 = vmul.f32 %v2933, %v2933
      %v2977 = vmul.f32 %v2934, %v2934
      %v2978 = vmul.f32 %v2935, %v2935
      %v2979 = vmul.f32 %v2936, %v2936
      %v2980 = vmul.f32 %v2937, %v2937
      %v2981 = vmul.f32 %v2938, %v2938
      %v2982 = vmul.f32 %v2939, %v2939
      %v2983 = vsel %vm2948, %v2975, 0.0
      %v2984 = vsel %vm2948, %v2976, 0.0
      %v2985 = vadd.f32 %v2983, %v2984
      %v2986 = vsel %vm2948, %v2977, 0.0
      %v2987 = vadd.f32 %v2985, %v2986
      %v2988 = vsel %vm2948, %v2978, 0.0
      %v2989 = vadd.f32 %v2987, %v2988
      %v2990 = vsel %vm2948, %v2979, 0.0
      %v2991 = vadd.f32 %v2989, %v2990
      %v2992 = vsel %vm2948, %v2980, 0.0
      %v2993 = vadd.f32 %v2991, %v2992
      %v2994 = vsel %vm2948, %v2981, 0.0
      %v2995 = vadd.f32 %v2993, %v2994
      %v2996 = vsel %vm2948, %v2982, 0.0
      %v2997 = vadd.f32 %v2995, %v2996
      %v2998 = vsel %vm2948, %v2997, 0.0
      %v2999 = vrot.slane %v2998, 4
      %v3000 = vadd.f32 %v2998, %v2999
      %v3001 = vrot.slane %v3000, 2
      %v3002 = vadd.f32 %v3000, %v3001
      %v3003 = vrot.slane %v3002, 1
      %v3004 = vadd.f32 %v3002, %v3003
      %v3005 = vadd.f32 %v2974, %v3004
      %3006 = vst.msk [vmem:[%s285] sm:$0x1] %vm2972, %v3005
      %v3007 = vpack.c.bf16 %v2932, %v2932
      %v3008 = vpack.c.bf16 %v2933, %v2933
      %v3009 = vpack.c.bf16 %v2934, %v2934
      %v3010 = vpack.c.bf16 %v2935, %v2935
      %v3011 = vpack.c.bf16 %v2936, %v2936
      %v3012 = vpack.c.bf16 %v2937, %v2937
      %v3013 = vpack.c.bf16 %v2938, %v2938
      %v3014 = vpack.c.bf16 %v2939, %v2939
      %vm3015 = vcmask 519168
      %3016 = vst.msk [vmem:[%s272] sm:$0xf] %vm3015, %v3007
      %3017 = vst.msk [vmem:[%s272 + $0x4] sm:$0xf] %vm3015, %v3008
      %3018 = vst.msk [vmem:[%s272 + $0x8] sm:$0xf] %vm3015, %v3009
      %3019 = vst.msk [vmem:[%s272 + $0xc] sm:$0xf] %vm3015, %v3010
      %3020 = vst.msk [vmem:[%s272 + $0x10] sm:$0xf] %vm3015, %v3011
      %3021 = vst.msk [vmem:[%s272 + $0x14] sm:$0xf] %vm3015, %v3012
      %3022 = vst.msk [vmem:[%s272 + $0x18] sm:$0xf] %vm3015, %v3013
      %3023 = vst.msk [vmem:[%s272 + $0x1c] sm:$0xf] %vm3015, %v3014
      %s3024 = smul.u32 8, %s23
      %p3025 = scmp.lt.s32.totalorder %s22, 1
      %s3026 = scalar_select %p3025, %s22, 1
      %p3027 = scmp.lt.s32.totalorder %s3024, 7
      %s3028 = scalar_select %p3027, %s3024, 7
      %p3029 = scmp.lt.s32.totalorder %s21, 0
      %s3030 = scalar_select %p3029, %s21, 0
      %s3031 = sadd.s32 %s3030, %s3028
      %s3032 = smul.addr %s3026, 8
      %s3033 = sadd.s32 %s3031, %s3032
      %s3034 = smul.addr %s3033, 4
      %s3035 = scalar_lea.vmem %s2, %s3034
      %p3036 = scmp.lt.s32.totalorder %s22, 1
      %s3037 = scalar_select %p3036, %s22, 1
      %p3038 = scmp.lt.s32.totalorder %s21, 0
      %s3039 = scalar_select %p3038, %s21, 0
      %s3040 = sadd.s32 %s3039, %s3037
      %s3041 = scalar_lea.vmem %s3, %s3040
      %p3042 = scmp.lt.s32.totalorder %s22, 1
      %s3043 = scalar_select %p3042, %s22, 1
      %p3044 = scmp.lt.s32.totalorder %s21, 0
      %s3045 = scalar_select %p3044, %s21, 0
      %s3046 = sadd.s32 %s3045, %s3043
      %s3047 = scalar_lea.vmem %s4, %s3046
      // Predicated region
      $region33: #{deep_svdd_forward.7} parent=27 // pred_check
        %p3048 = pneg %p109
      $region34: #{deep_svdd_forward.7} parent=27 // pred_check_branch
        %3050 = sbr.rel (%p3048) target = $region36
      $region35: #{deep_svdd_forward.7} parent=27 // pred_region
        %s3051 = smul.u32 8, %s23
      $region36: #{deep_svdd_forward.7} parent=27 // pred_fallthru
        _
      // Predicated region
      $region37: #{deep_svdd_forward.7} parent=27 // pred_check
        %p3052 = pneg %p137
      $region38: #{deep_svdd_forward.7} parent=27 // pred_check_branch
        %3054 = sbr.rel (%p3052) target = $region40
      $region39: #{deep_svdd_forward.7} parent=27 // pred_region
        _
      $region40: #{deep_svdd_forward.7} parent=27 // pred_fallthru
        _
      // Predicated region
      $region41: #{deep_svdd_forward.7} parent=27 // pred_check
        %p3055 = pneg %p165
      $region42: #{deep_svdd_forward.7} parent=27 // pred_check_branch
        %3057 = sbr.rel (%p3055) target = $region44
      $region43: #{deep_svdd_forward.7} parent=27 // pred_region
        _
      $region44: #{deep_svdd_forward.7} parent=27 // pred_fallthru
        _
    $region28: #{deep_svdd_forward.7} parent=5 // pred_fallthru
      _
    %p3058 = scmp.le.s32.totalorder 2, %s11
    // Predicated region
    $region45: #{deep_svdd_forward.7} parent=5 // pred_check
      %p3059 = pneg %p3058
    $region46: #{deep_svdd_forward.7} parent=5 // pred_check_branch
      %3061 = sbr.rel (%p3059) target = $region48
    $region47: #{deep_svdd_forward.7} parent=5 // pred_region
      %s3062 = ssub.s32 %s11, 2
      // Predicated region
      $region49: #{deep_svdd_forward.7} parent=47 // pred_check
        %p3063 = pneg %p115
      $region50: #{deep_svdd_forward.7} parent=47 // pred_check_branch
        %3065 = sbr.rel (%p3063) target = $region52
      $region51: #{deep_svdd_forward.7} parent=47 // pred_region
        %s3066 = smul.u32 8, %s26
        %p3067 = scmp.lt.s32.totalorder %s25, 1
        %s3068 = scalar_select %p3067, %s25, 1
        %p3069 = scmp.lt.s32.totalorder %s3066, 7
        %s3070 = scalar_select %p3069, %s3066, 7
        %p3071 = scmp.lt.s32.totalorder %s24, 0
        %s3072 = scalar_select %p3071, %s24, 0
        %s3073 = sadd.s32 %s3072, %s3070
        %s3074 = smul.addr %s3068, 8
        %s3075 = sadd.s32 %s3073, %s3074
        %s3076 = smul.addr %s3075, 4
        %s3077 = scalar_lea.vmem %s2, %s3076
      $region52: #{deep_svdd_forward.7} parent=47 // pred_fallthru
        _
      // Predicated region
      $region53: #{deep_svdd_forward.7} parent=47 // pred_check
        %p3078 = pneg %p143
      $region54: #{deep_svdd_forward.7} parent=47 // pred_check_branch
        %3080 = sbr.rel (%p3078) target = $region56
      $region55: #{deep_svdd_forward.7} parent=47 // pred_region
        %p3081 = scmp.lt.s32.totalorder %s25, 1
        %s3082 = scalar_select %p3081, %s25, 1
        %p3083 = scmp.lt.s32.totalorder %s24, 0
        %s3084 = scalar_select %p3083, %s24, 0
        %s3085 = sadd.s32 %s3084, %s3082
        %s3086 = scalar_lea.vmem %s3, %s3085
      $region56: #{deep_svdd_forward.7} parent=47 // pred_fallthru
        _
      // Predicated region
      $region57: #{deep_svdd_forward.7} parent=47 // pred_check
        %p3087 = pneg %p171
      $region58: #{deep_svdd_forward.7} parent=47 // pred_check_branch
        %3089 = sbr.rel (%p3087) target = $region60
      $region59: #{deep_svdd_forward.7} parent=47 // pred_region
        %p3090 = scmp.lt.s32.totalorder %s25, 1
        %s3091 = scalar_select %p3090, %s25, 1
        %p3092 = scmp.lt.s32.totalorder %s24, 0
        %s3093 = scalar_select %p3092, %s24, 0
        %s3094 = sadd.s32 %s3093, %s3091
        %s3095 = scalar_lea.vmem %s4, %s3094
      $region60: #{deep_svdd_forward.7} parent=47 // pred_fallthru
        _
    $region48: #{deep_svdd_forward.7} parent=5 // pred_fallthru
      _
  $region6: #{deep_svdd_forward.7} parent=0 // loop_footer
    %s15 = sadd.s32 1, %s11
  $region7: #{deep_svdd_forward.7} parent=0 // loop_footer_branch
    %10 = sbr.rel target = $region3
  $region8: #{deep_svdd_forward.7} parent=0 // loop_exit
    _

</llo_original>
